<compile_context>
chip_gen: v7x
topology: tpu7x:2x2x1
jax: 0.10.0
libtpu: 0.0.40
codegen_flags: <defaults>
</compile_context>

<pallas_src>
import functools

import numpy as np

import jax
import jax.numpy as jnp
from jax.experimental import pallas as pl
from jax.experimental.pallas import tpu as pltpu


_EPS = 1e-5          # BatchNorm eps (torch default)
_NEG_SLOPE = 0.2     # LeakyReLU slope
_PADL = 8            # sublane-aligned left margin for the conv halo in scratch


# --------------------------- in-kernel helpers ------------------------------

def _bn_rows(x, gamma, beta):
    """Train-mode BatchNorm over rows of (R, C): biased variance, per-channel affine."""
    mean = jnp.mean(x, axis=0, keepdims=True)
    var = jnp.mean(jnp.square(x - mean), axis=0, keepdims=True)
    scale = gamma * jax.lax.rsqrt(var + _EPS)
    return x * scale + (beta - mean * scale)


def _leaky_relu(x):
    return jnp.where(x > 0, x, _NEG_SLOPE * x)


def _fill_padded(pad_ref, b, rows, h, w):
    """Write an (h*w, C) image into the zeroed scratch at a sublane-aligned offset."""
    pad_ref[b, pl.ds(1, h), pl.ds(_PADL, w), :] = rows.reshape(h, w, rows.shape[-1])


def _conv3x3_rows(pad_ref, w_ref, n, oh, ow, cin, cout):
    """3x3 conv (stride 1, pad 1) from the zero-padded scratch.

    im2col along kw: for each kh, build a (N*OH*OW, 3*Cin) tile by concatenating
    the three kw-shifted views along lanes (Cin = 128 -> aligned concat) and do a
    single MXU matmul against w_ref[kh] of shape (3*Cin, Cout)."""
    acc = None
    for kh in range(3):
        tiles = []
        for b in range(n):
            views = [
                pad_ref[b, pl.ds(kh, oh), pl.ds(_PADL - 1 + kw, ow), :]
                .reshape(oh * ow, cin)
                for kw in range(3)
            ]
            tiles.append(jnp.concatenate(views, axis=1))          # (OH*OW, 3*Cin)
        tile = tiles[0] if n == 1 else jnp.concatenate(tiles, axis=0)
        part = jnp.dot(tile, w_ref[kh], preferred_element_type=jnp.float32)
        acc = part if acc is None else acc + part
    return acc                                                     # (N*OH*OW, Cout)


# ------------------------------ fused kernels -------------------------------

def _block_up_conv_bn_kernel(x_ref, u_ref, w_ref, cb_ref,
                             g_pre_ref, b_pre_ref, g_ref, be_ref,
                             o_ref, pad_ref, *,
                             n, hw, oh, ow, cin, cout, pre_bn):
    """[optional BN] -> bilinear 2x upsample -> Conv3x3 -> BN -> LeakyReLU."""
    x = x_ref[...]                                   # (N*HW, Cin) rows
    if pre_bn:
        x = _bn_rows(x, g_pre_ref[...], b_pre_ref[...])

    # zero halo + upsample each image with the (OH*OW, HW) interpolation matrix
    pad_ref[...] = jnp.zeros_like(pad_ref)
    u = u_ref[...]
    for b in range(n):
        xb = x[b * hw:(b + 1) * hw, :]               # (HW, Cin)
        ub = jnp.dot(u, xb, preferred_element_type=jnp.float32)   # (OH*OW, Cin)
        _fill_padded(pad_ref, b, ub, oh, ow)

    acc = _conv3x3_rows(pad_ref, w_ref, n, oh, ow, cin, cout) + cb_ref[...]
    y = _bn_rows(acc, g_ref[...], be_ref[...])
    o_ref[...] = _leaky_relu(y)


def _conv_tanh_kernel(x_ref, w_ref, cb_ref, o_ref, pad_ref, *,
                      n, hw, h, w, cin, cout):
    """Conv3x3 -> Tanh (final block, Cout padded to 128 for a lane-dense store)."""
    pad_ref[...] = jnp.zeros_like(pad_ref)
    x = x_ref[...]
    for b in range(n):
        _fill_padded(pad_ref, b, x[b * hw:(b + 1) * hw, :], h, w)
    acc = _conv3x3_rows(pad_ref, w_ref, n, h, w, cin, cout) + cb_ref[...]
    o_ref[...] = jnp.tanh(acc)


# ------------------------------ pallas_call wrappers ------------------------

def _full_spec(shape):
    n = len(shape)
    return pl.BlockSpec(tuple(shape), lambda *_: (0,) * n)


_ARB = pltpu.CompilerParams(dimension_semantics=("arbitrary",))


def upsample_conv_bn_block(x, u, w, cb, gamma, beta, g_pre, b_pre, *,
                           n, h, wd, cin, cout, pre_bn):
    hw = h * wd
    oh, ow = 2 * h, 2 * wd
    kern = functools.partial(_block_up_conv_bn_kernel, n=n, hw=hw, oh=oh, ow=ow,
                             cin=cin, cout=cout, pre_bn=pre_bn)
    return pl.pallas_call(
        kern,
        out_shape=jax.ShapeDtypeStruct((n * oh * ow, cout), jnp.float32),
        grid=(1,),
        in_specs=[_full_spec(x.shape), _full_spec(u.shape), _full_spec(w.shape),
                  _full_spec(cb.shape), _full_spec(g_pre.shape),
                  _full_spec(b_pre.shape), _full_spec(gamma.shape),
                  _full_spec(beta.shape)],
        out_specs=_full_spec((n * oh * ow, cout)),
        scratch_shapes=[pltpu.VMEM((n, oh + 2, ow + 2 * _PADL, cin), jnp.float32)],
        compiler_params=_ARB,
    )(x, u, w, cb, g_pre, b_pre, gamma, beta)


def conv_tanh_block(x, w, cb, *, n, h, wd, cin, cout):
    hw = h * wd
    kern = functools.partial(_conv_tanh_kernel, n=n, hw=hw, h=h, w=wd,
                             cin=cin, cout=cout)
    return pl.pallas_call(
        kern,
        out_shape=jax.ShapeDtypeStruct((n * hw, cout), jnp.float32),
        grid=(1,),
        in_specs=[_full_spec(x.shape), _full_spec(w.shape), _full_spec(cb.shape)],
        out_specs=_full_spec((n * hw, cout)),
        scratch_shapes=[pltpu.VMEM((n, h + 2, wd + 2 * _PADL, cin), jnp.float32)],
        compiler_params=_ARB,
    )(x, w, cb)


# ------------------------------ parameters ----------------------------------

def init_generator_params(key, classes, channels, img_size, latent_dim, code_dim):
    s0 = img_size // 4
    d_in = latent_dim + classes + code_dim
    d_out = 128 * s0 * s0
    ks = jax.random.split(key, 8)

    def rnd(k, shape, scale=0.05):
        return (scale * jax.random.normal(k, shape)).astype(jnp.float32)

    return {
        "lin_w": rnd(ks[0], (d_in, d_out)),
        "lin_b": rnd(ks[1], (d_out,)),
        # BatchNorm params (torch init: gamma=1, beta=0)
        "bn0_g": jnp.ones((128,), jnp.float32),
        "bn0_b": jnp.zeros((128,), jnp.float32),
        # conv weights in (kh, kw, Cin, Cout) layout
        "c1_w": rnd(ks[2], (3, 3, 128, 128)),
        "c1_b": rnd(ks[3], (128,)),
        "bn1_g": jnp.ones((128,), jnp.float32),
        "bn1_b": jnp.zeros((128,), jnp.float32),
        "c2_w": rnd(ks[4], (3, 3, 128, 64)),
        "c2_b": rnd(ks[5], (64,)),
        "bn2_g": jnp.ones((64,), jnp.float32),
        "bn2_b": jnp.zeros((64,), jnp.float32),
        "c3_w": rnd(ks[6], (3, 3, 64, channels)),
        "c3_b": rnd(ks[7], (channels,)),
    }


def _upsample_matrix_1d(length):
    """(2L, L) bilinear 2x interpolation matrix, PyTorch align_corners=False."""
    i = np.arange(2 * length, dtype=np.float64)
    src = (i + 0.5) / 2.0 - 0.5
    left = np.floor(src)
    lam = src - left
    li = np.clip(left.astype(np.int64), 0, length - 1)
    ri = np.clip(left.astype(np.int64) + 1, 0, length - 1)
    u = np.zeros((2 * length, length), dtype=np.float64)
    u[np.arange(2 * length), li] += 1.0 - lam
    u[np.arange(2 * length), ri] += lam
    return u


def prepare_generator_params(params, *, channels, img_size):
    """One-time layout prep: upsample matrices, (kw,ci)-flattened conv weights,
    and zero-padding of every channel dim to 128 lanes."""
    s0 = img_size // 4

    u1 = jnp.asarray(np.kron(_upsample_matrix_1d(s0), _upsample_matrix_1d(s0)),
                     dtype=jnp.float32)                       # (4*s0^2, s0^2)
    u2 = jnp.asarray(np.kron(_upsample_matrix_1d(2 * s0), _upsample_matrix_1d(2 * s0)),
                     dtype=jnp.float32)                       # (16*s0^2, 4*s0^2)

    def conv_w(w, cin_pad, cout_pad):
        _, _, ci, co = w.shape
        w = jnp.pad(w, ((0, 0), (0, 0), (0, cin_pad - ci), (0, cout_pad - co)))
        return w.reshape(3, 3 * cin_pad, cout_pad)            # rows = kw*Cin + ci

    def vec(v, cpad):
        v = v.reshape(1, -1)
        return jnp.pad(v, ((0, 0), (0, cpad - v.shape[1])))

    return {
        "lin_w": params["lin_w"],
        "lin_b": params["lin_b"].reshape(1, -1),
        "u1": u1, "u2": u2,
        "bn0_g": vec(params["bn0_g"], 128), "bn0_b": vec(params["bn0_b"], 128),
        "c1_w": conv_w(params["c1_w"], 128, 128), "c1_b": vec(params["c1_b"], 128),
        "bn1_g": vec(params["bn1_g"], 128), "bn1_b": vec(params["bn1_b"], 128),
        "c2_w": conv_w(params["c2_w"], 128, 128), "c2_b": vec(params["c2_b"], 128),
        "bn2_g": vec(params["bn2_g"], 128), "bn2_b": vec(params["bn2_b"], 128),
        "c3_w": conv_w(params["c3_w"], 128, 128), "c3_b": vec(params["c3_b"], 128),
    }


# ------------------------------- forward ------------------------------------

def generator_forward(prep, noise, labels, code, *, channels, img_size):
    s0 = img_size // 4
    batch = noise.shape[0]

    # Stem Linear + torch view (B,128,s0,s0) -> NHWC rows (B*s0*s0, 128).
    # Kept in XLA: at (B=2) x (Din=28) a Pallas call is pure launch overhead.
    z = jnp.concatenate([noise, labels, code], axis=-1)
    z_vec = z @ prep["lin_w"] + prep["lin_b"]
    x = z_vec.reshape(batch, 128, s0, s0).transpose(0, 2, 3, 1)
    x = x.reshape(batch * s0 * s0, 128)

    # block 1: BN(128) -> Upsample2x -> Conv(128->128) -> BN -> LeakyReLU (fused)
    x = upsample_conv_bn_block(
        x, prep["u1"], prep["c1_w"], prep["c1_b"],
        prep["bn1_g"], prep["bn1_b"], prep["bn0_g"], prep["bn0_b"],
        n=batch, h=s0, wd=s0, cin=128, cout=128, pre_bn=True)

    # block 2: Upsample2x -> Conv(128->64, lanes padded to 128) -> BN -> LeakyReLU
    x = upsample_conv_bn_block(
        x, prep["u2"], prep["c2_w"], prep["c2_b"],
        prep["bn2_g"], prep["bn2_b"],
        prep["bn0_g"], prep["bn0_b"],       # unused dummies (pre_bn=False)
        n=batch, h=2 * s0, wd=2 * s0, cin=128, cout=128, pre_bn=False)

    # block 3: Conv(64->channels, lanes padded to 128) -> Tanh
    x = conv_tanh_block(x, prep["c3_w"], prep["c3_b"],
                        n=batch, h=img_size, wd=img_size, cin=128, cout=128)

    # slice the real channels and return NCHW like the PyTorch module
    img = x[:, :channels].reshape(batch, img_size, img_size, channels)
    return img.transpose(0, 3, 1, 2)


# --------------------------------- main --------------------------------------

if __name__ == "__main__":
    classes, channels, img_size, latent_dim, code_dim = 10, 3, 16, 16, 2
    batch = 2

    key = jax.random.PRNGKey(0)
    kp, kn, kl, kc = jax.random.split(key, 4)

    params = init_generator_params(
        kp, classes, channels, img_size, latent_dim, code_dim)
    prep = prepare_generator_params(params, channels=channels, img_size=img_size)

    noise = jax.random.normal(kn, (batch, latent_dim), dtype=jnp.float32)
    label_idx = jax.random.randint(kl, (batch,), 0, classes)
    labels = jax.nn.one_hot(label_idx, classes, dtype=jnp.float32)
    code = jax.random.uniform(kc, (batch, code_dim), minval=-1.0, maxval=1.0)

    fwd = jax.jit(functools.partial(
        generator_forward, channels=channels, img_size=img_size))
    out = fwd(prep, noise, labels, code)
    jax.block_until_ready(out)

    assert out.shape == (batch, channels, img_size, img_size), out.shape
    assert bool(jnp.all(jnp.isfinite(out)))
    print("KERNEL_OK")
</pallas_src>

<mosaic_0001>
module attributes {stable_mosaic.version = 11 : i64} {
  func.func @_block_up_conv_bn_kernel(%arg0: i32, %arg1: memref<32x128xf32, #tpu.memory_space<vmem>>, %arg2: memref<64x16xf32, #tpu.memory_space<vmem>>, %arg3: memref<3x384x128xf32, #tpu.memory_space<vmem>>, %arg4: memref<1x128xf32, #tpu.memory_space<vmem>>, %arg5: memref<1x128xf32, #tpu.memory_space<vmem>>, %arg6: memref<1x128xf32, #tpu.memory_space<vmem>>, %arg7: memref<1x128xf32, #tpu.memory_space<vmem>>, %arg8: memref<1x128xf32, #tpu.memory_space<vmem>>, %arg9: memref<128x128xf32, #tpu.memory_space<vmem>>, %arg10: memref<2x10x24x128xf32, #tpu.memory_space<vmem>>) attributes {dimension_semantics = [#tpu.dimension_semantics<arbitrary>], iteration_bounds = array<i64: 1>, scalar_prefetch = 0 : i64, scratch_operands = 1 : i64, tpu.core_type = #tpu.core_type<tc>, window_params = [{pipeline_mode = #tpu.pipeline_mode<synchronous>, transform_indices = @transform_0, window_bounds = array<i64: 32, 128>}, {pipeline_mode = #tpu.pipeline_mode<synchronous>, transform_indices = @transform_1, window_bounds = array<i64: 64, 16>}, {pipeline_mode = #tpu.pipeline_mode<synchronous>, transform_indices = @transform_2, window_bounds = array<i64: 3, 384, 128>}, {pipeline_mode = #tpu.pipeline_mode<synchronous>, transform_indices = @transform_3, window_bounds = array<i64: 1, 128>}, {pipeline_mode = #tpu.pipeline_mode<synchronous>, transform_indices = @transform_4, window_bounds = array<i64: 1, 128>}, {pipeline_mode = #tpu.pipeline_mode<synchronous>, transform_indices = @transform_5, window_bounds = array<i64: 1, 128>}, {pipeline_mode = #tpu.pipeline_mode<synchronous>, transform_indices = @transform_6, window_bounds = array<i64: 1, 128>}, {pipeline_mode = #tpu.pipeline_mode<synchronous>, transform_indices = @transform_7, window_bounds = array<i64: 1, 128>}, {pipeline_mode = #tpu.pipeline_mode<synchronous>, transform_indices = @transform_8, window_bounds = array<i64: 128, 128>}]} {
    %c0 = arith.constant 0 : index
    %c0_0 = arith.constant 0 : index
    %0 = vector.load %arg1[%c0, %c0_0] : memref<32x128xf32, #tpu.memory_space<vmem>>, vector<32x128xf32>
    %c0_1 = arith.constant 0 : index
    %c0_2 = arith.constant 0 : index
    %1 = vector.load %arg5[%c0_1, %c0_2] : memref<1x128xf32, #tpu.memory_space<vmem>>, vector<1x128xf32>
    %c0_3 = arith.constant 0 : index
    %c0_4 = arith.constant 0 : index
    %2 = vector.load %arg6[%c0_3, %c0_4] : memref<1x128xf32, #tpu.memory_space<vmem>>, vector<1x128xf32>
    %cst = arith.constant dense<0.000000e+00> : vector<128xf32>
    %3 = vector.multi_reduction <add>, %0, %cst [0] : vector<32x128xf32> to vector<128xf32>
    %4 = vector.shape_cast %3 : vector<128xf32> to vector<1x128xf32>
    %cst_5 = arith.constant 3.200000e+01 : f32
    %5 = vector.broadcast %cst_5 : f32 to vector<1x128xf32>
    %6 = arith.divf %4, %5 : vector<1x128xf32>
    %7 = vector.broadcast %6 : vector<1x128xf32> to vector<32x128xf32>
    %8 = arith.subf %0, %7 : vector<32x128xf32>
    %9 = arith.mulf %8, %8 : vector<32x128xf32>
    %cst_6 = arith.constant dense<0.000000e+00> : vector<128xf32>
    %10 = vector.multi_reduction <add>, %9, %cst_6 [0] : vector<32x128xf32> to vector<128xf32>
    %11 = vector.shape_cast %10 : vector<128xf32> to vector<1x128xf32>
    %cst_7 = arith.constant 3.200000e+01 : f32
    %12 = vector.broadcast %cst_7 : f32 to vector<1x128xf32>
    %13 = arith.divf %11, %12 : vector<1x128xf32>
    %cst_8 = arith.constant 9.99999974E-6 : f32
    %14 = vector.broadcast %cst_8 : f32 to vector<1x128xf32>
    %15 = arith.addf %13, %14 : vector<1x128xf32>
    %16 = math.rsqrt %15 : vector<1x128xf32>
    %17 = arith.mulf %1, %16 : vector<1x128xf32>
    %18 = vector.broadcast %17 : vector<1x128xf32> to vector<32x128xf32>
    %19 = arith.mulf %0, %18 : vector<32x128xf32>
    %20 = arith.mulf %6, %17 : vector<1x128xf32>
    %21 = arith.subf %2, %20 : vector<1x128xf32>
    %22 = vector.broadcast %21 : vector<1x128xf32> to vector<32x128xf32>
    %23 = arith.addf %19, %22 : vector<32x128xf32>
    %cst_9 = arith.constant 0.000000e+00 : f32
    %24 = vector.broadcast %cst_9 : f32 to vector<2x10x24x128xf32>
    %c0_10 = arith.constant 0 : index
    %c0_11 = arith.constant 0 : index
    %c0_12 = arith.constant 0 : index
    %c0_13 = arith.constant 0 : index
    %25 = vector.load %arg10[%c0_10, %c0_11, %c0_12, %c0_13] : memref<2x10x24x128xf32, #tpu.memory_space<vmem>>, vector<2x10x24x128xf32>
    tpu.vector_store %arg10[%c0_10, %c0_11, %c0_12, %c0_13], %24 {strides = array<i32>} : memref<2x10x24x128xf32, #tpu.memory_space<vmem>>, vector<2x10x24x128xf32>,
    %c0_14 = arith.constant 0 : index
    %c0_15 = arith.constant 0 : index
    %26 = vector.load %arg2[%c0_14, %c0_15] : memref<64x16xf32, #tpu.memory_space<vmem>>, vector<64x16xf32>
    %27 = vector.extract_strided_slice %23 {offsets = [0, 0], sizes = [16, 128], strides = [1, 1]} : vector<32x128xf32> to vector<16x128xf32>
    %cst_16 = arith.constant dense<0.000000e+00> : vector<64x128xf32>
    %28 = tpu.matmul %26, %27, %cst_16 {dimension_numbers = #tpu.dot_dimension_numbers<[1], [0], [0], [1], [0, 0, 1, 1], [], []>} : vector<64x16xf32>, vector<16x128xf32>, vector<64x128xf32> -> vector<64x128xf32>
    %29 = vector.shape_cast %28 : vector<64x128xf32> to vector<8x8x128xf32>
    %c0_17 = arith.constant 0 : index
    %c1 = arith.constant 1 : index
    %c8 = arith.constant 8 : index
    %c0_18 = arith.constant 0 : index
    %30 = vector.load %arg10[%c0_17, %c1, %c8, %c0_18] : memref<2x10x24x128xf32, #tpu.memory_space<vmem>>, vector<1x8x8x128xf32>
    %31 = vector.shape_cast %30 : vector<1x8x8x128xf32> to vector<8x8x128xf32>
    %32 = vector.shape_cast %29 : vector<8x8x128xf32> to vector<1x8x8x128xf32>
    tpu.vector_store %arg10[%c0_17, %c1, %c8, %c0_18], %32 {strides = array<i32>} : memref<2x10x24x128xf32, #tpu.memory_space<vmem>>, vector<1x8x8x128xf32>,
    %33 = vector.extract_strided_slice %23 {offsets = [16, 0], sizes = [16, 128], strides = [1, 1]} : vector<32x128xf32> to vector<16x128xf32>
    %cst_19 = arith.constant dense<0.000000e+00> : vector<64x128xf32>
    %34 = tpu.matmul %26, %33, %cst_19 {dimension_numbers = #tpu.dot_dimension_numbers<[1], [0], [0], [1], [0, 0, 1, 1], [], []>} : vector<64x16xf32>, vector<16x128xf32>, vector<64x128xf32> -> vector<64x128xf32>
    %35 = vector.shape_cast %34 : vector<64x128xf32> to vector<8x8x128xf32>
    %c1_20 = arith.constant 1 : index
    %c1_21 = arith.constant 1 : index
    %c8_22 = arith.constant 8 : index
    %c0_23 = arith.constant 0 : index
    %36 = vector.load %arg10[%c1_20, %c1_21, %c8_22, %c0_23] : memref<2x10x24x128xf32, #tpu.memory_space<vmem>>, vector<1x8x8x128xf32>
    %37 = vector.shape_cast %36 : vector<1x8x8x128xf32> to vector<8x8x128xf32>
    %38 = vector.shape_cast %35 : vector<8x8x128xf32> to vector<1x8x8x128xf32>
    tpu.vector_store %arg10[%c1_20, %c1_21, %c8_22, %c0_23], %38 {strides = array<i32>} : memref<2x10x24x128xf32, #tpu.memory_space<vmem>>, vector<1x8x8x128xf32>,
    %c0_24 = arith.constant 0 : index
    %c0_25 = arith.constant 0 : index
    %c7 = arith.constant 7 : index
    %c0_26 = arith.constant 0 : index
    %39 = vector.load %arg10[%c0_24, %c0_25, %c7, %c0_26] : memref<2x10x24x128xf32, #tpu.memory_space<vmem>>, vector<1x8x8x128xf32>
    %40 = vector.shape_cast %39 : vector<1x8x8x128xf32> to vector<8x8x128xf32>
    %41 = vector.shape_cast %40 : vector<8x8x128xf32> to vector<64x128xf32>
    %c0_27 = arith.constant 0 : index
    %c0_28 = arith.constant 0 : index
    %c8_29 = arith.constant 8 : index
    %c0_30 = arith.constant 0 : index
    %42 = vector.load %arg10[%c0_27, %c0_28, %c8_29, %c0_30] : memref<2x10x24x128xf32, #tpu.memory_space<vmem>>, vector<1x8x8x128xf32>
    %43 = vector.shape_cast %42 : vector<1x8x8x128xf32> to vector<8x8x128xf32>
    %44 = vector.shape_cast %43 : vector<8x8x128xf32> to vector<64x128xf32>
    %c0_31 = arith.constant 0 : index
    %c0_32 = arith.constant 0 : index
    %c9 = arith.constant 9 : index
    %c0_33 = arith.constant 0 : index
    %45 = vector.load %arg10[%c0_31, %c0_32, %c9, %c0_33] : memref<2x10x24x128xf32, #tpu.memory_space<vmem>>, vector<1x8x8x128xf32>
    %46 = vector.shape_cast %45 : vector<1x8x8x128xf32> to vector<8x8x128xf32>
    %47 = vector.shape_cast %46 : vector<8x8x128xf32> to vector<64x128xf32>
    %48 = tpu.concatenate %41, %44, %47 in 1 : vector<64x128xf32>, vector<64x128xf32>, vector<64x128xf32> -> vector<64x384xf32>
    %c1_34 = arith.constant 1 : index
    %c0_35 = arith.constant 0 : index
    %c7_36 = arith.constant 7 : index
    %c0_37 = arith.constant 0 : index
    %49 = vector.load %arg10[%c1_34, %c0_35, %c7_36, %c0_37] : memref<2x10x24x128xf32, #tpu.memory_space<vmem>>, vector<1x8x8x128xf32>
    %50 = vector.shape_cast %49 : vector<1x8x8x128xf32> to vector<8x8x128xf32>
    %51 = vector.shape_cast %50 : vector<8x8x128xf32> to vector<64x128xf32>
    %c1_38 = arith.constant 1 : index
    %c0_39 = arith.constant 0 : index
    %c8_40 = arith.constant 8 : index
    %c0_41 = arith.constant 0 : index
    %52 = vector.load %arg10[%c1_38, %c0_39, %c8_40, %c0_41] : memref<2x10x24x128xf32, #tpu.memory_space<vmem>>, vector<1x8x8x128xf32>
    %53 = vector.shape_cast %52 : vector<1x8x8x128xf32> to vector<8x8x128xf32>
    %54 = vector.shape_cast %53 : vector<8x8x128xf32> to vector<64x128xf32>
    %c1_42 = arith.constant 1 : index
    %c0_43 = arith.constant 0 : index
    %c9_44 = arith.constant 9 : index
    %c0_45 = arith.constant 0 : index
    %55 = vector.load %arg10[%c1_42, %c0_43, %c9_44, %c0_45] : memref<2x10x24x128xf32, #tpu.memory_space<vmem>>, vector<1x8x8x128xf32>
    %56 = vector.shape_cast %55 : vector<1x8x8x128xf32> to vector<8x8x128xf32>
    %57 = vector.shape_cast %56 : vector<8x8x128xf32> to vector<64x128xf32>
    %58 = tpu.concatenate %51, %54, %57 in 1 : vector<64x128xf32>, vector<64x128xf32>, vector<64x128xf32> -> vector<64x384xf32>
    %59 = tpu.concatenate %48, %58 in 0 : vector<64x384xf32>, vector<64x384xf32> -> vector<128x384xf32>
    %c0_46 = arith.constant 0 : index
    %c0_47 = arith.constant 0 : index
    %c0_48 = arith.constant 0 : index
    %60 = vector.load %arg3[%c0_46, %c0_47, %c0_48] : memref<3x384x128xf32, #tpu.memory_space<vmem>>, vector<1x384x128xf32>
    %61 = vector.shape_cast %60 : vector<1x384x128xf32> to vector<384x128xf32>
    %cst_49 = arith.constant dense<0.000000e+00> : vector<128x128xf32>
    %62 = tpu.matmul %59, %61, %cst_49 {dimension_numbers = #tpu.dot_dimension_numbers<[1], [0], [0], [1], [0, 0, 1, 1], [], []>} : vector<128x384xf32>, vector<384x128xf32>, vector<128x128xf32> -> vector<128x128xf32>
    %c0_50 = arith.constant 0 : index
    %c1_51 = arith.constant 1 : index
    %c7_52 = arith.constant 7 : index
    %c0_53 = arith.constant 0 : index
    %63 = vector.load %arg10[%c0_50, %c1_51, %c7_52, %c0_53] : memref<2x10x24x128xf32, #tpu.memory_space<vmem>>, vector<1x8x8x128xf32>
    %64 = vector.shape_cast %63 : vector<1x8x8x128xf32> to vector<8x8x128xf32>
    %65 = vector.shape_cast %64 : vector<8x8x128xf32> to vector<64x128xf32>
    %c0_54 = arith.constant 0 : index
    %c1_55 = arith.constant 1 : index
    %c8_56 = arith.constant 8 : index
    %c0_57 = arith.constant 0 : index
    %66 = vector.load %arg10[%c0_54, %c1_55, %c8_56, %c0_57] : memref<2x10x24x128xf32, #tpu.memory_space<vmem>>, vector<1x8x8x128xf32>
    %67 = vector.shape_cast %66 : vector<1x8x8x128xf32> to vector<8x8x128xf32>
    %68 = vector.shape_cast %67 : vector<8x8x128xf32> to vector<64x128xf32>
    %c0_58 = arith.constant 0 : index
    %c1_59 = arith.constant 1 : index
    %c9_60 = arith.constant 9 : index
    %c0_61 = arith.constant 0 : index
    %69 = vector.load %arg10[%c0_58, %c1_59, %c9_60, %c0_61] : memref<2x10x24x128xf32, #tpu.memory_space<vmem>>, vector<1x8x8x128xf32>
    %70 = vector.shape_cast %69 : vector<1x8x8x128xf32> to vector<8x8x128xf32>
    %71 = vector.shape_cast %70 : vector<8x8x128xf32> to vector<64x128xf32>
    %72 = tpu.concatenate %65, %68, %71 in 1 : vector<64x128xf32>, vector<64x128xf32>, vector<64x128xf32> -> vector<64x384xf32>
    %c1_62 = arith.constant 1 : index
    %c1_63 = arith.constant 1 : index
    %c7_64 = arith.constant 7 : index
    %c0_65 = arith.constant 0 : index
    %73 = vector.load %arg10[%c1_62, %c1_63, %c7_64, %c0_65] : memref<2x10x24x128xf32, #tpu.memory_space<vmem>>, vector<1x8x8x128xf32>
    %74 = vector.shape_cast %73 : vector<1x8x8x128xf32> to vector<8x8x128xf32>
    %75 = vector.shape_cast %74 : vector<8x8x128xf32> to vector<64x128xf32>
    %c1_66 = arith.constant 1 : index
    %c1_67 = arith.constant 1 : index
    %c8_68 = arith.constant 8 : index
    %c0_69 = arith.constant 0 : index
    %76 = vector.load %arg10[%c1_66, %c1_67, %c8_68, %c0_69] : memref<2x10x24x128xf32, #tpu.memory_space<vmem>>, vector<1x8x8x128xf32>
    %77 = vector.shape_cast %76 : vector<1x8x8x128xf32> to vector<8x8x128xf32>
    %78 = vector.shape_cast %77 : vector<8x8x128xf32> to vector<64x128xf32>
    %c1_70 = arith.constant 1 : index
    %c1_71 = arith.constant 1 : index
    %c9_72 = arith.constant 9 : index
    %c0_73 = arith.constant 0 : index
    %79 = vector.load %arg10[%c1_70, %c1_71, %c9_72, %c0_73] : memref<2x10x24x128xf32, #tpu.memory_space<vmem>>, vector<1x8x8x128xf32>
    %80 = vector.shape_cast %79 : vector<1x8x8x128xf32> to vector<8x8x128xf32>
    %81 = vector.shape_cast %80 : vector<8x8x128xf32> to vector<64x128xf32>
    %82 = tpu.concatenate %75, %78, %81 in 1 : vector<64x128xf32>, vector<64x128xf32>, vector<64x128xf32> -> vector<64x384xf32>
    %83 = tpu.concatenate %72, %82 in 0 : vector<64x384xf32>, vector<64x384xf32> -> vector<128x384xf32>
    %c1_74 = arith.constant 1 : index
    %c0_75 = arith.constant 0 : index
    %c0_76 = arith.constant 0 : index
    %84 = vector.load %arg3[%c1_74, %c0_75, %c0_76] : memref<3x384x128xf32, #tpu.memory_space<vmem>>, vector<1x384x128xf32>
    %85 = vector.shape_cast %84 : vector<1x384x128xf32> to vector<384x128xf32>
    %cst_77 = arith.constant dense<0.000000e+00> : vector<128x128xf32>
    %86 = tpu.matmul %83, %85, %cst_77 {dimension_numbers = #tpu.dot_dimension_numbers<[1], [0], [0], [1], [0, 0, 1, 1], [], []>} : vector<128x384xf32>, vector<384x128xf32>, vector<128x128xf32> -> vector<128x128xf32>
    %87 = arith.addf %62, %86 : vector<128x128xf32>
    %c0_78 = arith.constant 0 : index
    %c2 = arith.constant 2 : index
    %c7_79 = arith.constant 7 : index
    %c0_80 = arith.constant 0 : index
    %88 = vector.load %arg10[%c0_78, %c2, %c7_79, %c0_80] : memref<2x10x24x128xf32, #tpu.memory_space<vmem>>, vector<1x8x8x128xf32>
    %89 = vector.shape_cast %88 : vector<1x8x8x128xf32> to vector<8x8x128xf32>
    %90 = vector.shape_cast %89 : vector<8x8x128xf32> to vector<64x128xf32>
    %c0_81 = arith.constant 0 : index
    %c2_82 = arith.constant 2 : index
    %c8_83 = arith.constant 8 : index
    %c0_84 = arith.constant 0 : index
    %91 = vector.load %arg10[%c0_81, %c2_82, %c8_83, %c0_84] : memref<2x10x24x128xf32, #tpu.memory_space<vmem>>, vector<1x8x8x128xf32>
    %92 = vector.shape_cast %91 : vector<1x8x8x128xf32> to vector<8x8x128xf32>
    %93 = vector.shape_cast %92 : vector<8x8x128xf32> to vector<64x128xf32>
    %c0_85 = arith.constant 0 : index
    %c2_86 = arith.constant 2 : index
    %c9_87 = arith.constant 9 : index
    %c0_88 = arith.constant 0 : index
    %94 = vector.load %arg10[%c0_85, %c2_86, %c9_87, %c0_88] : memref<2x10x24x128xf32, #tpu.memory_space<vmem>>, vector<1x8x8x128xf32>
    %95 = vector.shape_cast %94 : vector<1x8x8x128xf32> to vector<8x8x128xf32>
    %96 = vector.shape_cast %95 : vector<8x8x128xf32> to vector<64x128xf32>
    %97 = tpu.concatenate %90, %93, %96 in 1 : vector<64x128xf32>, vector<64x128xf32>, vector<64x128xf32> -> vector<64x384xf32>
    %c1_89 = arith.constant 1 : index
    %c2_90 = arith.constant 2 : index
    %c7_91 = arith.constant 7 : index
    %c0_92 = arith.constant 0 : index
    %98 = vector.load %arg10[%c1_89, %c2_90, %c7_91, %c0_92] : memref<2x10x24x128xf32, #tpu.memory_space<vmem>>, vector<1x8x8x128xf32>
    %99 = vector.shape_cast %98 : vector<1x8x8x128xf32> to vector<8x8x128xf32>
    %100 = vector.shape_cast %99 : vector<8x8x128xf32> to vector<64x128xf32>
    %c1_93 = arith.constant 1 : index
    %c2_94 = arith.constant 2 : index
    %c8_95 = arith.constant 8 : index
    %c0_96 = arith.constant 0 : index
    %101 = vector.load %arg10[%c1_93, %c2_94, %c8_95, %c0_96] : memref<2x10x24x128xf32, #tpu.memory_space<vmem>>, vector<1x8x8x128xf32>
    %102 = vector.shape_cast %101 : vector<1x8x8x128xf32> to vector<8x8x128xf32>
    %103 = vector.shape_cast %102 : vector<8x8x128xf32> to vector<64x128xf32>
    %c1_97 = arith.constant 1 : index
    %c2_98 = arith.constant 2 : index
    %c9_99 = arith.constant 9 : index
    %c0_100 = arith.constant 0 : index
    %104 = vector.load %arg10[%c1_97, %c2_98, %c9_99, %c0_100] : memref<2x10x24x128xf32, #tpu.memory_space<vmem>>, vector<1x8x8x128xf32>
    %105 = vector.shape_cast %104 : vector<1x8x8x128xf32> to vector<8x8x128xf32>
    %106 = vector.shape_cast %105 : vector<8x8x128xf32> to vector<64x128xf32>
    %107 = tpu.concatenate %100, %103, %106 in 1 : vector<64x128xf32>, vector<64x128xf32>, vector<64x128xf32> -> vector<64x384xf32>
    %108 = tpu.concatenate %97, %107 in 0 : vector<64x384xf32>, vector<64x384xf32> -> vector<128x384xf32>
    %c2_101 = arith.constant 2 : index
    %c0_102 = arith.constant 0 : index
    %c0_103 = arith.constant 0 : index
    %109 = vector.load %arg3[%c2_101, %c0_102, %c0_103] : memref<3x384x128xf32, #tpu.memory_space<vmem>>, vector<1x384x128xf32>
    %110 = vector.shape_cast %109 : vector<1x384x128xf32> to vector<384x128xf32>
    %cst_104 = arith.constant dense<0.000000e+00> : vector<128x128xf32>
    %111 = tpu.matmul %108, %110, %cst_104 {dimension_numbers = #tpu.dot_dimension_numbers<[1], [0], [0], [1], [0, 0, 1, 1], [], []>} : vector<128x384xf32>, vector<384x128xf32>, vector<128x128xf32> -> vector<128x128xf32>
    %112 = arith.addf %87, %111 : vector<128x128xf32>
    %c0_105 = arith.constant 0 : index
    %c0_106 = arith.constant 0 : index
    %113 = vector.load %arg4[%c0_105, %c0_106] : memref<1x128xf32, #tpu.memory_space<vmem>>, vector<1x128xf32>
    %114 = vector.broadcast %113 : vector<1x128xf32> to vector<128x128xf32>
    %115 = arith.addf %112, %114 : vector<128x128xf32>
    %c0_107 = arith.constant 0 : index
    %c0_108 = arith.constant 0 : index
    %116 = vector.load %arg7[%c0_107, %c0_108] : memref<1x128xf32, #tpu.memory_space<vmem>>, vector<1x128xf32>
    %c0_109 = arith.constant 0 : index
    %c0_110 = arith.constant 0 : index
    %117 = vector.load %arg8[%c0_109, %c0_110] : memref<1x128xf32, #tpu.memory_space<vmem>>, vector<1x128xf32>
    %cst_111 = arith.constant dense<0.000000e+00> : vector<128xf32>
    %118 = vector.multi_reduction <add>, %115, %cst_111 [0] : vector<128x128xf32> to vector<128xf32>
    %119 = vector.shape_cast %118 : vector<128xf32> to vector<1x128xf32>
    %cst_112 = arith.constant 1.280000e+02 : f32
    %120 = vector.broadcast %cst_112 : f32 to vector<1x128xf32>
    %121 = arith.divf %119, %120 : vector<1x128xf32>
    %122 = vector.broadcast %121 : vector<1x128xf32> to vector<128x128xf32>
    %123 = arith.subf %115, %122 : vector<128x128xf32>
    %124 = arith.mulf %123, %123 : vector<128x128xf32>
    %cst_113 = arith.constant dense<0.000000e+00> : vector<128xf32>
    %125 = vector.multi_reduction <add>, %124, %cst_113 [0] : vector<128x128xf32> to vector<128xf32>
    %126 = vector.shape_cast %125 : vector<128xf32> to vector<1x128xf32>
    %cst_114 = arith.constant 1.280000e+02 : f32
    %127 = vector.broadcast %cst_114 : f32 to vector<1x128xf32>
    %128 = arith.divf %126, %127 : vector<1x128xf32>
    %cst_115 = arith.constant 9.99999974E-6 : f32
    %129 = vector.broadcast %cst_115 : f32 to vector<1x128xf32>
    %130 = arith.addf %128, %129 : vector<1x128xf32>
    %131 = math.rsqrt %130 : vector<1x128xf32>
    %132 = arith.mulf %116, %131 : vector<1x128xf32>
    %133 = vector.broadcast %132 : vector<1x128xf32> to vector<128x128xf32>
    %134 = arith.mulf %115, %133 : vector<128x128xf32>
    %135 = arith.mulf %121, %132 : vector<1x128xf32>
    %136 = arith.subf %117, %135 : vector<1x128xf32>
    %137 = vector.broadcast %136 : vector<1x128xf32> to vector<128x128xf32>
    %138 = arith.addf %134, %137 : vector<128x128xf32>
    %cst_116 = arith.constant 0.000000e+00 : f32
    %139 = vector.broadcast %cst_116 : f32 to vector<128x128xf32>
    %140 = arith.cmpf ogt, %138, %139 : vector<128x128xf32>
    %cst_117 = arith.constant 2.000000e-01 : f32
    %141 = vector.broadcast %cst_117 : f32 to vector<128x128xf32>
    %142 = arith.mulf %141, %138 : vector<128x128xf32>
    %143 = arith.select %140, %138, %142 : vector<128x128xi1>, vector<128x128xf32>
    %c0_118 = arith.constant 0 : index
    %c0_119 = arith.constant 0 : index
    %144 = vector.load %arg9[%c0_118, %c0_119] : memref<128x128xf32, #tpu.memory_space<vmem>>, vector<128x128xf32>
    tpu.vector_store %arg9[%c0_118, %c0_119], %143 {strides = array<i32>} : memref<128x128xf32, #tpu.memory_space<vmem>>, vector<128x128xf32>,
    return
  }
  func.func @transform_0(%arg0: i32) -> (i32, i32) {
    %c0_i32 = arith.constant 0 : i32
    %c0_i32_0 = arith.constant 0 : i32
    %c0_i32_1 = arith.constant 0 : i32
    return %c0_i32, %c0_i32_0 : i32, i32
  }
  func.func @transform_1(%arg0: i32) -> (i32, i32) {
    %c0_i32 = arith.constant 0 : i32
    %c0_i32_0 = arith.constant 0 : i32
    %c0_i32_1 = arith.constant 0 : i32
    return %c0_i32, %c0_i32_0 : i32, i32
  }
  func.func @transform_2(%arg0: i32) -> (i32, i32, i32) {
    %c0_i32 = arith.constant 0 : i32
    %c0_i32_0 = arith.constant 0 : i32
    %c0_i32_1 = arith.constant 0 : i32
    %c0_i32_2 = arith.constant 0 : i32
    return %c0_i32, %c0_i32_0, %c0_i32_1 : i32, i32, i32
  }
  func.func @transform_3(%arg0: i32) -> (i32, i32) {
    %c0_i32 = arith.constant 0 : i32
    %c0_i32_0 = arith.constant 0 : i32
    %c0_i32_1 = arith.constant 0 : i32
    return %c0_i32, %c0_i32_0 : i32, i32
  }
  func.func @transform_4(%arg0: i32) -> (i32, i32) {
    %c0_i32 = arith.constant 0 : i32
    %c0_i32_0 = arith.constant 0 : i32
    %c0_i32_1 = arith.constant 0 : i32
    return %c0_i32, %c0_i32_0 : i32, i32
  }
  func.func @transform_5(%arg0: i32) -> (i32, i32) {
    %c0_i32 = arith.constant 0 : i32
    %c0_i32_0 = arith.constant 0 : i32
    %c0_i32_1 = arith.constant 0 : i32
    return %c0_i32, %c0_i32_0 : i32, i32
  }
  func.func @transform_6(%arg0: i32) -> (i32, i32) {
    %c0_i32 = arith.constant 0 : i32
    %c0_i32_0 = arith.constant 0 : i32
    %c0_i32_1 = arith.constant 0 : i32
    return %c0_i32, %c0_i32_0 : i32, i32
  }
  func.func @transform_7(%arg0: i32) -> (i32, i32) {
    %c0_i32 = arith.constant 0 : i32
    %c0_i32_0 = arith.constant 0 : i32
    %c0_i32_1 = arith.constant 0 : i32
    return %c0_i32, %c0_i32_0 : i32, i32
  }
  func.func @transform_8(%arg0: i32) -> (i32, i32) {
    %c0_i32 = arith.constant 0 : i32
    %c0_i32_0 = arith.constant 0 : i32
    %c0_i32_1 = arith.constant 0 : i32
    return %c0_i32, %c0_i32_0 : i32, i32
  }
}

module attributes {stable_mosaic.version = 11 : i64} {
  func.func @_conv_tanh_kernel(%arg0: i32, %arg1: memref<512x128xf32, #tpu.memory_space<vmem>>, %arg2: memref<3x384x128xf32, #tpu.memory_space<vmem>>, %arg3: memref<1x128xf32, #tpu.memory_space<vmem>>, %arg4: memref<512x128xf32, #tpu.memory_space<vmem>>, %arg5: memref<2x18x32x128xf32, #tpu.memory_space<vmem>>) attributes {dimension_semantics = [#tpu.dimension_semantics<arbitrary>], iteration_bounds = array<i64: 1>, scalar_prefetch = 0 : i64, scratch_operands = 1 : i64, tpu.core_type = #tpu.core_type<tc>, window_params = [{pipeline_mode = #tpu.pipeline_mode<synchronous>, transform_indices = @transform_0, window_bounds = array<i64: 512, 128>}, {pipeline_mode = #tpu.pipeline_mode<synchronous>, transform_indices = @transform_1, window_bounds = array<i64: 3, 384, 128>}, {pipeline_mode = #tpu.pipeline_mode<synchronous>, transform_indices = @transform_2, window_bounds = array<i64: 1, 128>}, {pipeline_mode = #tpu.pipeline_mode<synchronous>, transform_indices = @transform_3, window_bounds = array<i64: 512, 128>}]} {
    %cst = arith.constant 0.000000e+00 : f32
    %0 = vector.broadcast %cst : f32 to vector<2x18x32x128xf32>
    %c0 = arith.constant 0 : index
    %c0_0 = arith.constant 0 : index
    %c0_1 = arith.constant 0 : index
    %c0_2 = arith.constant 0 : index
    %1 = vector.load %arg5[%c0, %c0_0, %c0_1, %c0_2] : memref<2x18x32x128xf32, #tpu.memory_space<vmem>>, vector<2x18x32x128xf32>
    tpu.vector_store %arg5[%c0, %c0_0, %c0_1, %c0_2], %0 {strides = array<i32>} : memref<2x18x32x128xf32, #tpu.memory_space<vmem>>, vector<2x18x32x128xf32>,
    %c0_3 = arith.constant 0 : index
    %c0_4 = arith.constant 0 : index
    %2 = vector.load %arg1[%c0_3, %c0_4] : memref<512x128xf32, #tpu.memory_space<vmem>>, vector<512x128xf32>
    %3 = vector.extract_strided_slice %2 {offsets = [0, 0], sizes = [256, 128], strides = [1, 1]} : vector<512x128xf32> to vector<256x128xf32>
    %4 = vector.shape_cast %3 : vector<256x128xf32> to vector<16x16x128xf32>
    %c0_5 = arith.constant 0 : index
    %c1 = arith.constant 1 : index
    %c8 = arith.constant 8 : index
    %c0_6 = arith.constant 0 : index
    %5 = vector.load %arg5[%c0_5, %c1, %c8, %c0_6] : memref<2x18x32x128xf32, #tpu.memory_space<vmem>>, vector<1x16x16x128xf32>
    %6 = vector.shape_cast %5 : vector<1x16x16x128xf32> to vector<16x16x128xf32>
    %7 = vector.shape_cast %4 : vector<16x16x128xf32> to vector<1x16x16x128xf32>
    tpu.vector_store %arg5[%c0_5, %c1, %c8, %c0_6], %7 {strides = array<i32>} : memref<2x18x32x128xf32, #tpu.memory_space<vmem>>, vector<1x16x16x128xf32>,
    %8 = vector.extract_strided_slice %2 {offsets = [256, 0], sizes = [256, 128], strides = [1, 1]} : vector<512x128xf32> to vector<256x128xf32>
    %9 = vector.shape_cast %8 : vector<256x128xf32> to vector<16x16x128xf32>
    %c1_7 = arith.constant 1 : index
    %c1_8 = arith.constant 1 : index
    %c8_9 = arith.constant 8 : index
    %c0_10 = arith.constant 0 : index
    %10 = vector.load %arg5[%c1_7, %c1_8, %c8_9, %c0_10] : memref<2x18x32x128xf32, #tpu.memory_space<vmem>>, vector<1x16x16x128xf32>
    %11 = vector.shape_cast %10 : vector<1x16x16x128xf32> to vector<16x16x128xf32>
    %12 = vector.shape_cast %9 : vector<16x16x128xf32> to vector<1x16x16x128xf32>
    tpu.vector_store %arg5[%c1_7, %c1_8, %c8_9, %c0_10], %12 {strides = array<i32>} : memref<2x18x32x128xf32, #tpu.memory_space<vmem>>, vector<1x16x16x128xf32>,
    %c0_11 = arith.constant 0 : index
    %c0_12 = arith.constant 0 : index
    %c7 = arith.constant 7 : index
    %c0_13 = arith.constant 0 : index
    %13 = vector.load %arg5[%c0_11, %c0_12, %c7, %c0_13] : memref<2x18x32x128xf32, #tpu.memory_space<vmem>>, vector<1x16x16x128xf32>
    %14 = vector.shape_cast %13 : vector<1x16x16x128xf32> to vector<16x16x128xf32>
    %15 = vector.shape_cast %14 : vector<16x16x128xf32> to vector<256x128xf32>
    %c0_14 = arith.constant 0 : index
    %c0_15 = arith.constant 0 : index
    %c8_16 = arith.constant 8 : index
    %c0_17 = arith.constant 0 : index
    %16 = vector.load %arg5[%c0_14, %c0_15, %c8_16, %c0_17] : memref<2x18x32x128xf32, #tpu.memory_space<vmem>>, vector<1x16x16x128xf32>
    %17 = vector.shape_cast %16 : vector<1x16x16x128xf32> to vector<16x16x128xf32>
    %18 = vector.shape_cast %17 : vector<16x16x128xf32> to vector<256x128xf32>
    %c0_18 = arith.constant 0 : index
    %c0_19 = arith.constant 0 : index
    %c9 = arith.constant 9 : index
    %c0_20 = arith.constant 0 : index
    %19 = vector.load %arg5[%c0_18, %c0_19, %c9, %c0_20] : memref<2x18x32x128xf32, #tpu.memory_space<vmem>>, vector<1x16x16x128xf32>
    %20 = vector.shape_cast %19 : vector<1x16x16x128xf32> to vector<16x16x128xf32>
    %21 = vector.shape_cast %20 : vector<16x16x128xf32> to vector<256x128xf32>
    %22 = tpu.concatenate %15, %18, %21 in 1 : vector<256x128xf32>, vector<256x128xf32>, vector<256x128xf32> -> vector<256x384xf32>
    %c1_21 = arith.constant 1 : index
    %c0_22 = arith.constant 0 : index
    %c7_23 = arith.constant 7 : index
    %c0_24 = arith.constant 0 : index
    %23 = vector.load %arg5[%c1_21, %c0_22, %c7_23, %c0_24] : memref<2x18x32x128xf32, #tpu.memory_space<vmem>>, vector<1x16x16x128xf32>
    %24 = vector.shape_cast %23 : vector<1x16x16x128xf32> to vector<16x16x128xf32>
    %25 = vector.shape_cast %24 : vector<16x16x128xf32> to vector<256x128xf32>
    %c1_25 = arith.constant 1 : index
    %c0_26 = arith.constant 0 : index
    %c8_27 = arith.constant 8 : index
    %c0_28 = arith.constant 0 : index
    %26 = vector.load %arg5[%c1_25, %c0_26, %c8_27, %c0_28] : memref<2x18x32x128xf32, #tpu.memory_space<vmem>>, vector<1x16x16x128xf32>
    %27 = vector.shape_cast %26 : vector<1x16x16x128xf32> to vector<16x16x128xf32>
    %28 = vector.shape_cast %27 : vector<16x16x128xf32> to vector<256x128xf32>
    %c1_29 = arith.constant 1 : index
    %c0_30 = arith.constant 0 : index
    %c9_31 = arith.constant 9 : index
    %c0_32 = arith.constant 0 : index
    %29 = vector.load %arg5[%c1_29, %c0_30, %c9_31, %c0_32] : memref<2x18x32x128xf32, #tpu.memory_space<vmem>>, vector<1x16x16x128xf32>
    %30 = vector.shape_cast %29 : vector<1x16x16x128xf32> to vector<16x16x128xf32>
    %31 = vector.shape_cast %30 : vector<16x16x128xf32> to vector<256x128xf32>
    %32 = tpu.concatenate %25, %28, %31 in 1 : vector<256x128xf32>, vector<256x128xf32>, vector<256x128xf32> -> vector<256x384xf32>
    %33 = tpu.concatenate %22, %32 in 0 : vector<256x384xf32>, vector<256x384xf32> -> vector<512x384xf32>
    %c0_33 = arith.constant 0 : index
    %c0_34 = arith.constant 0 : index
    %c0_35 = arith.constant 0 : index
    %34 = vector.load %arg2[%c0_33, %c0_34, %c0_35] : memref<3x384x128xf32, #tpu.memory_space<vmem>>, vector<1x384x128xf32>
    %35 = vector.shape_cast %34 : vector<1x384x128xf32> to vector<384x128xf32>
    %cst_36 = arith.constant dense<0.000000e+00> : vector<512x128xf32>
    %36 = tpu.matmul %33, %35, %cst_36 {dimension_numbers = #tpu.dot_dimension_numbers<[1], [0], [0], [1], [0, 0, 1, 1], [], []>} : vector<512x384xf32>, vector<384x128xf32>, vector<512x128xf32> -> vector<512x128xf32>
    %c0_37 = arith.constant 0 : index
    %c1_38 = arith.constant 1 : index
    %c7_39 = arith.constant 7 : index
    %c0_40 = arith.constant 0 : index
    %37 = vector.load %arg5[%c0_37, %c1_38, %c7_39, %c0_40] : memref<2x18x32x128xf32, #tpu.memory_space<vmem>>, vector<1x16x16x128xf32>
    %38 = vector.shape_cast %37 : vector<1x16x16x128xf32> to vector<16x16x128xf32>
    %39 = vector.shape_cast %38 : vector<16x16x128xf32> to vector<256x128xf32>
    %c0_41 = arith.constant 0 : index
    %c1_42 = arith.constant 1 : index
    %c8_43 = arith.constant 8 : index
    %c0_44 = arith.constant 0 : index
    %40 = vector.load %arg5[%c0_41, %c1_42, %c8_43, %c0_44] : memref<2x18x32x128xf32, #tpu.memory_space<vmem>>, vector<1x16x16x128xf32>
    %41 = vector.shape_cast %40 : vector<1x16x16x128xf32> to vector<16x16x128xf32>
    %42 = vector.shape_cast %41 : vector<16x16x128xf32> to vector<256x128xf32>
    %c0_45 = arith.constant 0 : index
    %c1_46 = arith.constant 1 : index
    %c9_47 = arith.constant 9 : index
    %c0_48 = arith.constant 0 : index
    %43 = vector.load %arg5[%c0_45, %c1_46, %c9_47, %c0_48] : memref<2x18x32x128xf32, #tpu.memory_space<vmem>>, vector<1x16x16x128xf32>
    %44 = vector.shape_cast %43 : vector<1x16x16x128xf32> to vector<16x16x128xf32>
    %45 = vector.shape_cast %44 : vector<16x16x128xf32> to vector<256x128xf32>
    %46 = tpu.concatenate %39, %42, %45 in 1 : vector<256x128xf32>, vector<256x128xf32>, vector<256x128xf32> -> vector<256x384xf32>
    %c1_49 = arith.constant 1 : index
    %c1_50 = arith.constant 1 : index
    %c7_51 = arith.constant 7 : index
    %c0_52 = arith.constant 0 : index
    %47 = vector.load %arg5[%c1_49, %c1_50, %c7_51, %c0_52] : memref<2x18x32x128xf32, #tpu.memory_space<vmem>>, vector<1x16x16x128xf32>
    %48 = vector.shape_cast %47 : vector<1x16x16x128xf32> to vector<16x16x128xf32>
    %49 = vector.shape_cast %48 : vector<16x16x128xf32> to vector<256x128xf32>
    %c1_53 = arith.constant 1 : index
    %c1_54 = arith.constant 1 : index
    %c8_55 = arith.constant 8 : index
    %c0_56 = arith.constant 0 : index
    %50 = vector.load %arg5[%c1_53, %c1_54, %c8_55, %c0_56] : memref<2x18x32x128xf32, #tpu.memory_space<vmem>>, vector<1x16x16x128xf32>
    %51 = vector.shape_cast %50 : vector<1x16x16x128xf32> to vector<16x16x128xf32>
    %52 = vector.shape_cast %51 : vector<16x16x128xf32> to vector<256x128xf32>
    %c1_57 = arith.constant 1 : index
    %c1_58 = arith.constant 1 : index
    %c9_59 = arith.constant 9 : index
    %c0_60 = arith.constant 0 : index
    %53 = vector.load %arg5[%c1_57, %c1_58, %c9_59, %c0_60] : memref<2x18x32x128xf32, #tpu.memory_space<vmem>>, vector<1x16x16x128xf32>
    %54 = vector.shape_cast %53 : vector<1x16x16x128xf32> to vector<16x16x128xf32>
    %55 = vector.shape_cast %54 : vector<16x16x128xf32> to vector<256x128xf32>
    %56 = tpu.concatenate %49, %52, %55 in 1 : vector<256x128xf32>, vector<256x128xf32>, vector<256x128xf32> -> vector<256x384xf32>
    %57 = tpu.concatenate %46, %56 in 0 : vector<256x384xf32>, vector<256x384xf32> -> vector<512x384xf32>
    %c1_61 = arith.constant 1 : index
    %c0_62 = arith.constant 0 : index
    %c0_63 = arith.constant 0 : index
    %58 = vector.load %arg2[%c1_61, %c0_62, %c0_63] : memref<3x384x128xf32, #tpu.memory_space<vmem>>, vector<1x384x128xf32>
    %59 = vector.shape_cast %58 : vector<1x384x128xf32> to vector<384x128xf32>
    %cst_64 = arith.constant dense<0.000000e+00> : vector<512x128xf32>
    %60 = tpu.matmul %57, %59, %cst_64 {dimension_numbers = #tpu.dot_dimension_numbers<[1], [0], [0], [1], [0, 0, 1, 1], [], []>} : vector<512x384xf32>, vector<384x128xf32>, vector<512x128xf32> -> vector<512x128xf32>
    %61 = arith.addf %36, %60 : vector<512x128xf32>
    %c0_65 = arith.constant 0 : index
    %c2 = arith.constant 2 : index
    %c7_66 = arith.constant 7 : index
    %c0_67 = arith.constant 0 : index
    %62 = vector.load %arg5[%c0_65, %c2, %c7_66, %c0_67] : memref<2x18x32x128xf32, #tpu.memory_space<vmem>>, vector<1x16x16x128xf32>
    %63 = vector.shape_cast %62 : vector<1x16x16x128xf32> to vector<16x16x128xf32>
    %64 = vector.shape_cast %63 : vector<16x16x128xf32> to vector<256x128xf32>
    %c0_68 = arith.constant 0 : index
    %c2_69 = arith.constant 2 : index
    %c8_70 = arith.constant 8 : index
    %c0_71 = arith.constant 0 : index
    %65 = vector.load %arg5[%c0_68, %c2_69, %c8_70, %c0_71] : memref<2x18x32x128xf32, #tpu.memory_space<vmem>>, vector<1x16x16x128xf32>
    %66 = vector.shape_cast %65 : vector<1x16x16x128xf32> to vector<16x16x128xf32>
    %67 = vector.shape_cast %66 : vector<16x16x128xf32> to vector<256x128xf32>
    %c0_72 = arith.constant 0 : index
    %c2_73 = arith.constant 2 : index
    %c9_74 = arith.constant 9 : index
    %c0_75 = arith.constant 0 : index
    %68 = vector.load %arg5[%c0_72, %c2_73, %c9_74, %c0_75] : memref<2x18x32x128xf32, #tpu.memory_space<vmem>>, vector<1x16x16x128xf32>
    %69 = vector.shape_cast %68 : vector<1x16x16x128xf32> to vector<16x16x128xf32>
    %70 = vector.shape_cast %69 : vector<16x16x128xf32> to vector<256x128xf32>
    %71 = tpu.concatenate %64, %67, %70 in 1 : vector<256x128xf32>, vector<256x128xf32>, vector<256x128xf32> -> vector<256x384xf32>
    %c1_76 = arith.constant 1 : index
    %c2_77 = arith.constant 2 : index
    %c7_78 = arith.constant 7 : index
    %c0_79 = arith.constant 0 : index
    %72 = vector.load %arg5[%c1_76, %c2_77, %c7_78, %c0_79] : memref<2x18x32x128xf32, #tpu.memory_space<vmem>>, vector<1x16x16x128xf32>
    %73 = vector.shape_cast %72 : vector<1x16x16x128xf32> to vector<16x16x128xf32>
    %74 = vector.shape_cast %73 : vector<16x16x128xf32> to vector<256x128xf32>
    %c1_80 = arith.constant 1 : index
    %c2_81 = arith.constant 2 : index
    %c8_82 = arith.constant 8 : index
    %c0_83 = arith.constant 0 : index
    %75 = vector.load %arg5[%c1_80, %c2_81, %c8_82, %c0_83] : memref<2x18x32x128xf32, #tpu.memory_space<vmem>>, vector<1x16x16x128xf32>
    %76 = vector.shape_cast %75 : vector<1x16x16x128xf32> to vector<16x16x128xf32>
    %77 = vector.shape_cast %76 : vector<16x16x128xf32> to vector<256x128xf32>
    %c1_84 = arith.constant 1 : index
    %c2_85 = arith.constant 2 : index
    %c9_86 = arith.constant 9 : index
    %c0_87 = arith.constant 0 : index
    %78 = vector.load %arg5[%c1_84, %c2_85, %c9_86, %c0_87] : memref<2x18x32x128xf32, #tpu.memory_space<vmem>>, vector<1x16x16x128xf32>
    %79 = vector.shape_cast %78 : vector<1x16x16x128xf32> to vector<16x16x128xf32>
    %80 = vector.shape_cast %79 : vector<16x16x128xf32> to vector<256x128xf32>
    %81 = tpu.concatenate %74, %77, %80 in 1 : vector<256x128xf32>, vector<256x128xf32>, vector<256x128xf32> -> vector<256x384xf32>
    %82 = tpu.concatenate %71, %81 in 0 : vector<256x384xf32>, vector<256x384xf32> -> vector<512x384xf32>
    %c2_88 = arith.constant 2 : index
    %c0_89 = arith.constant 0 : index
    %c0_90 = arith.constant 0 : index
    %83 = vector.load %arg2[%c2_88, %c0_89, %c0_90] : memref<3x384x128xf32, #tpu.memory_space<vmem>>, vector<1x384x128xf32>
    %84 = vector.shape_cast %83 : vector<1x384x128xf32> to vector<384x128xf32>
    %cst_91 = arith.constant dense<0.000000e+00> : vector<512x128xf32>
    %85 = tpu.matmul %82, %84, %cst_91 {dimension_numbers = #tpu.dot_dimension_numbers<[1], [0], [0], [1], [0, 0, 1, 1], [], []>} : vector<512x384xf32>, vector<384x128xf32>, vector<512x128xf32> -> vector<512x128xf32>
    %86 = arith.addf %61, %85 : vector<512x128xf32>
    %c0_92 = arith.constant 0 : index
    %c0_93 = arith.constant 0 : index
    %87 = vector.load %arg3[%c0_92, %c0_93] : memref<1x128xf32, #tpu.memory_space<vmem>>, vector<1x128xf32>
    %88 = vector.broadcast %87 : vector<1x128xf32> to vector<512x128xf32>
    %89 = arith.addf %86, %88 : vector<512x128xf32>
    %90 = math.tanh %89 : vector<512x128xf32>
    %c0_94 = arith.constant 0 : index
    %c0_95 = arith.constant 0 : index
    %91 = vector.load %arg4[%c0_94, %c0_95] : memref<512x128xf32, #tpu.memory_space<vmem>>, vector<512x128xf32>
    tpu.vector_store %arg4[%c0_94, %c0_95], %90 {strides = array<i32>} : memref<512x128xf32, #tpu.memory_space<vmem>>, vector<512x128xf32>,
    return
  }
  func.func @transform_0(%arg0: i32) -> (i32, i32) {
    %c0_i32 = arith.constant 0 : i32
    %c0_i32_0 = arith.constant 0 : i32
    %c0_i32_1 = arith.constant 0 : i32
    return %c0_i32, %c0_i32_0 : i32, i32
  }
  func.func @transform_1(%arg0: i32) -> (i32, i32, i32) {
    %c0_i32 = arith.constant 0 : i32
    %c0_i32_0 = arith.constant 0 : i32
    %c0_i32_1 = arith.constant 0 : i32
    %c0_i32_2 = arith.constant 0 : i32
    return %c0_i32, %c0_i32_0, %c0_i32_1 : i32, i32, i32
  }
  func.func @transform_2(%arg0: i32) -> (i32, i32) {
    %c0_i32 = arith.constant 0 : i32
    %c0_i32_0 = arith.constant 0 : i32
    %c0_i32_1 = arith.constant 0 : i32
    return %c0_i32, %c0_i32_0 : i32, i32
  }
  func.func @transform_3(%arg0: i32) -> (i32, i32) {
    %c0_i32 = arith.constant 0 : i32
    %c0_i32_0 = arith.constant 0 : i32
    %c0_i32_1 = arith.constant 0 : i32
    return %c0_i32, %c0_i32_0 : i32, i32
  }
}

module attributes {stable_mosaic.version = 11 : i64} {
  func.func @_block_up_conv_bn_kernel(%arg0: i32, %arg1: memref<128x128xf32, #tpu.memory_space<vmem>>, %arg2: memref<256x64xf32, #tpu.memory_space<vmem>>, %arg3: memref<3x384x128xf32, #tpu.memory_space<vmem>>, %arg4: memref<1x128xf32, #tpu.memory_space<vmem>>, %arg5: memref<1x128xf32, #tpu.memory_space<vmem>>, %arg6: memref<1x128xf32, #tpu.memory_space<vmem>>, %arg7: memref<1x128xf32, #tpu.memory_space<vmem>>, %arg8: memref<1x128xf32, #tpu.memory_space<vmem>>, %arg9: memref<512x128xf32, #tpu.memory_space<vmem>>, %arg10: memref<2x18x32x128xf32, #tpu.memory_space<vmem>>) attributes {dimension_semantics = [#tpu.dimension_semantics<arbitrary>], iteration_bounds = array<i64: 1>, scalar_prefetch = 0 : i64, scratch_operands = 1 : i64, tpu.core_type = #tpu.core_type<tc>, window_params = [{pipeline_mode = #tpu.pipeline_mode<synchronous>, transform_indices = @transform_0, window_bounds = array<i64: 128, 128>}, {pipeline_mode = #tpu.pipeline_mode<synchronous>, transform_indices = @transform_1, window_bounds = array<i64: 256, 64>}, {pipeline_mode = #tpu.pipeline_mode<synchronous>, transform_indices = @transform_2, window_bounds = array<i64: 3, 384, 128>}, {pipeline_mode = #tpu.pipeline_mode<synchronous>, transform_indices = @transform_3, window_bounds = array<i64: 1, 128>}, {pipeline_mode = #tpu.pipeline_mode<synchronous>, transform_indices = @transform_4, window_bounds = array<i64: 1, 128>}, {pipeline_mode = #tpu.pipeline_mode<synchronous>, transform_indices = @transform_5, window_bounds = array<i64: 1, 128>}, {pipeline_mode = #tpu.pipeline_mode<synchronous>, transform_indices = @transform_6, window_bounds = array<i64: 1, 128>}, {pipeline_mode = #tpu.pipeline_mode<synchronous>, transform_indices = @transform_7, window_bounds = array<i64: 1, 128>}, {pipeline_mode = #tpu.pipeline_mode<synchronous>, transform_indices = @transform_8, window_bounds = array<i64: 512, 128>}]} {
    %c0 = arith.constant 0 : index
    %c0_0 = arith.constant 0 : index
    %0 = vector.load %arg1[%c0, %c0_0] : memref<128x128xf32, #tpu.memory_space<vmem>>, vector<128x128xf32>
    %cst = arith.constant 0.000000e+00 : f32
    %1 = vector.broadcast %cst : f32 to vector<2x18x32x128xf32>
    %c0_1 = arith.constant 0 : index
    %c0_2 = arith.constant 0 : index
    %c0_3 = arith.constant 0 : index
    %c0_4 = arith.constant 0 : index
    %2 = vector.load %arg10[%c0_1, %c0_2, %c0_3, %c0_4] : memref<2x18x32x128xf32, #tpu.memory_space<vmem>>, vector<2x18x32x128xf32>
    tpu.vector_store %arg10[%c0_1, %c0_2, %c0_3, %c0_4], %1 {strides = array<i32>} : memref<2x18x32x128xf32, #tpu.memory_space<vmem>>, vector<2x18x32x128xf32>,
    %c0_5 = arith.constant 0 : index
    %c0_6 = arith.constant 0 : index
    %3 = vector.load %arg2[%c0_5, %c0_6] : memref<256x64xf32, #tpu.memory_space<vmem>>, vector<256x64xf32>
    %4 = vector.extract_strided_slice %0 {offsets = [0, 0], sizes = [64, 128], strides = [1, 1]} : vector<128x128xf32> to vector<64x128xf32>
    %cst_7 = arith.constant dense<0.000000e+00> : vector<256x128xf32>
    %5 = tpu.matmul %3, %4, %cst_7 {dimension_numbers = #tpu.dot_dimension_numbers<[1], [0], [0], [1], [0, 0, 1, 1], [], []>} : vector<256x64xf32>, vector<64x128xf32>, vector<256x128xf32> -> vector<256x128xf32>
    %6 = vector.shape_cast %5 : vector<256x128xf32> to vector<16x16x128xf32>
    %c0_8 = arith.constant 0 : index
    %c1 = arith.constant 1 : index
    %c8 = arith.constant 8 : index
    %c0_9 = arith.constant 0 : index
    %7 = vector.load %arg10[%c0_8, %c1, %c8, %c0_9] : memref<2x18x32x128xf32, #tpu.memory_space<vmem>>, vector<1x16x16x128xf32>
    %8 = vector.shape_cast %7 : vector<1x16x16x128xf32> to vector<16x16x128xf32>
    %9 = vector.shape_cast %6 : vector<16x16x128xf32> to vector<1x16x16x128xf32>
    tpu.vector_store %arg10[%c0_8, %c1, %c8, %c0_9], %9 {strides = array<i32>} : memref<2x18x32x128xf32, #tpu.memory_space<vmem>>, vector<1x16x16x128xf32>,
    %10 = vector.extract_strided_slice %0 {offsets = [64, 0], sizes = [64, 128], strides = [1, 1]} : vector<128x128xf32> to vector<64x128xf32>
    %cst_10 = arith.constant dense<0.000000e+00> : vector<256x128xf32>
    %11 = tpu.matmul %3, %10, %cst_10 {dimension_numbers = #tpu.dot_dimension_numbers<[1], [0], [0], [1], [0, 0, 1, 1], [], []>} : vector<256x64xf32>, vector<64x128xf32>, vector<256x128xf32> -> vector<256x128xf32>
    %12 = vector.shape_cast %11 : vector<256x128xf32> to vector<16x16x128xf32>
    %c1_11 = arith.constant 1 : index
    %c1_12 = arith.constant 1 : index
    %c8_13 = arith.constant 8 : index
    %c0_14 = arith.constant 0 : index
    %13 = vector.load %arg10[%c1_11, %c1_12, %c8_13, %c0_14] : memref<2x18x32x128xf32, #tpu.memory_space<vmem>>, vector<1x16x16x128xf32>
    %14 = vector.shape_cast %13 : vector<1x16x16x128xf32> to vector<16x16x128xf32>
    %15 = vector.shape_cast %12 : vector<16x16x128xf32> to vector<1x16x16x128xf32>
    tpu.vector_store %arg10[%c1_11, %c1_12, %c8_13, %c0_14], %15 {strides = array<i32>} : memref<2x18x32x128xf32, #tpu.memory_space<vmem>>, vector<1x16x16x128xf32>,
    %c0_15 = arith.constant 0 : index
    %c0_16 = arith.constant 0 : index
    %c7 = arith.constant 7 : index
    %c0_17 = arith.constant 0 : index
    %16 = vector.load %arg10[%c0_15, %c0_16, %c7, %c0_17] : memref<2x18x32x128xf32, #tpu.memory_space<vmem>>, vector<1x16x16x128xf32>
    %17 = vector.shape_cast %16 : vector<1x16x16x128xf32> to vector<16x16x128xf32>
    %18 = vector.shape_cast %17 : vector<16x16x128xf32> to vector<256x128xf32>
    %c0_18 = arith.constant 0 : index
    %c0_19 = arith.constant 0 : index
    %c8_20 = arith.constant 8 : index
    %c0_21 = arith.constant 0 : index
    %19 = vector.load %arg10[%c0_18, %c0_19, %c8_20, %c0_21] : memref<2x18x32x128xf32, #tpu.memory_space<vmem>>, vector<1x16x16x128xf32>
    %20 = vector.shape_cast %19 : vector<1x16x16x128xf32> to vector<16x16x128xf32>
    %21 = vector.shape_cast %20 : vector<16x16x128xf32> to vector<256x128xf32>
    %c0_22 = arith.constant 0 : index
    %c0_23 = arith.constant 0 : index
    %c9 = arith.constant 9 : index
    %c0_24 = arith.constant 0 : index
    %22 = vector.load %arg10[%c0_22, %c0_23, %c9, %c0_24] : memref<2x18x32x128xf32, #tpu.memory_space<vmem>>, vector<1x16x16x128xf32>
    %23 = vector.shape_cast %22 : vector<1x16x16x128xf32> to vector<16x16x128xf32>
    %24 = vector.shape_cast %23 : vector<16x16x128xf32> to vector<256x128xf32>
    %25 = tpu.concatenate %18, %21, %24 in 1 : vector<256x128xf32>, vector<256x128xf32>, vector<256x128xf32> -> vector<256x384xf32>
    %c1_25 = arith.constant 1 : index
    %c0_26 = arith.constant 0 : index
    %c7_27 = arith.constant 7 : index
    %c0_28 = arith.constant 0 : index
    %26 = vector.load %arg10[%c1_25, %c0_26, %c7_27, %c0_28] : memref<2x18x32x128xf32, #tpu.memory_space<vmem>>, vector<1x16x16x128xf32>
    %27 = vector.shape_cast %26 : vector<1x16x16x128xf32> to vector<16x16x128xf32>
    %28 = vector.shape_cast %27 : vector<16x16x128xf32> to vector<256x128xf32>
    %c1_29 = arith.constant 1 : index
    %c0_30 = arith.constant 0 : index
    %c8_31 = arith.constant 8 : index
    %c0_32 = arith.constant 0 : index
    %29 = vector.load %arg10[%c1_29, %c0_30, %c8_31, %c0_32] : memref<2x18x32x128xf32, #tpu.memory_space<vmem>>, vector<1x16x16x128xf32>
    %30 = vector.shape_cast %29 : vector<1x16x16x128xf32> to vector<16x16x128xf32>
    %31 = vector.shape_cast %30 : vector<16x16x128xf32> to vector<256x128xf32>
    %c1_33 = arith.constant 1 : index
    %c0_34 = arith.constant 0 : index
    %c9_35 = arith.constant 9 : index
    %c0_36 = arith.constant 0 : index
    %32 = vector.load %arg10[%c1_33, %c0_34, %c9_35, %c0_36] : memref<2x18x32x128xf32, #tpu.memory_space<vmem>>, vector<1x16x16x128xf32>
    %33 = vector.shape_cast %32 : vector<1x16x16x128xf32> to vector<16x16x128xf32>
    %34 = vector.shape_cast %33 : vector<16x16x128xf32> to vector<256x128xf32>
    %35 = tpu.concatenate %28, %31, %34 in 1 : vector<256x128xf32>, vector<256x128xf32>, vector<256x128xf32> -> vector<256x384xf32>
    %36 = tpu.concatenate %25, %35 in 0 : vector<256x384xf32>, vector<256x384xf32> -> vector<512x384xf32>
    %c0_37 = arith.constant 0 : index
    %c0_38 = arith.constant 0 : index
    %c0_39 = arith.constant 0 : index
    %37 = vector.load %arg3[%c0_37, %c0_38, %c0_39] : memref<3x384x128xf32, #tpu.memory_space<vmem>>, vector<1x384x128xf32>
    %38 = vector.shape_cast %37 : vector<1x384x128xf32> to vector<384x128xf32>
    %cst_40 = arith.constant dense<0.000000e+00> : vector<512x128xf32>
    %39 = tpu.matmul %36, %38, %cst_40 {dimension_numbers = #tpu.dot_dimension_numbers<[1], [0], [0], [1], [0, 0, 1, 1], [], []>} : vector<512x384xf32>, vector<384x128xf32>, vector<512x128xf32> -> vector<512x128xf32>
    %c0_41 = arith.constant 0 : index
    %c1_42 = arith.constant 1 : index
    %c7_43 = arith.constant 7 : index
    %c0_44 = arith.constant 0 : index
    %40 = vector.load %arg10[%c0_41, %c1_42, %c7_43, %c0_44] : memref<2x18x32x128xf32, #tpu.memory_space<vmem>>, vector<1x16x16x128xf32>
    %41 = vector.shape_cast %40 : vector<1x16x16x128xf32> to vector<16x16x128xf32>
    %42 = vector.shape_cast %41 : vector<16x16x128xf32> to vector<256x128xf32>
    %c0_45 = arith.constant 0 : index
    %c1_46 = arith.constant 1 : index
    %c8_47 = arith.constant 8 : index
    %c0_48 = arith.constant 0 : index
    %43 = vector.load %arg10[%c0_45, %c1_46, %c8_47, %c0_48] : memref<2x18x32x128xf32, #tpu.memory_space<vmem>>, vector<1x16x16x128xf32>
    %44 = vector.shape_cast %43 : vector<1x16x16x128xf32> to vector<16x16x128xf32>
    %45 = vector.shape_cast %44 : vector<16x16x128xf32> to vector<256x128xf32>
    %c0_49 = arith.constant 0 : index
    %c1_50 = arith.constant 1 : index
    %c9_51 = arith.constant 9 : index
    %c0_52 = arith.constant 0 : index
    %46 = vector.load %arg10[%c0_49, %c1_50, %c9_51, %c0_52] : memref<2x18x32x128xf32, #tpu.memory_space<vmem>>, vector<1x16x16x128xf32>
    %47 = vector.shape_cast %46 : vector<1x16x16x128xf32> to vector<16x16x128xf32>
    %48 = vector.shape_cast %47 : vector<16x16x128xf32> to vector<256x128xf32>
    %49 = tpu.concatenate %42, %45, %48 in 1 : vector<256x128xf32>, vector<256x128xf32>, vector<256x128xf32> -> vector<256x384xf32>
    %c1_53 = arith.constant 1 : index
    %c1_54 = arith.constant 1 : index
    %c7_55 = arith.constant 7 : index
    %c0_56 = arith.constant 0 : index
    %50 = vector.load %arg10[%c1_53, %c1_54, %c7_55, %c0_56] : memref<2x18x32x128xf32, #tpu.memory_space<vmem>>, vector<1x16x16x128xf32>
    %51 = vector.shape_cast %50 : vector<1x16x16x128xf32> to vector<16x16x128xf32>
    %52 = vector.shape_cast %51 : vector<16x16x128xf32> to vector<256x128xf32>
    %c1_57 = arith.constant 1 : index
    %c1_58 = arith.constant 1 : index
    %c8_59 = arith.constant 8 : index
    %c0_60 = arith.constant 0 : index
    %53 = vector.load %arg10[%c1_57, %c1_58, %c8_59, %c0_60] : memref<2x18x32x128xf32, #tpu.memory_space<vmem>>, vector<1x16x16x128xf32>
    %54 = vector.shape_cast %53 : vector<1x16x16x128xf32> to vector<16x16x128xf32>
    %55 = vector.shape_cast %54 : vector<16x16x128xf32> to vector<256x128xf32>
    %c1_61 = arith.constant 1 : index
    %c1_62 = arith.constant 1 : index
    %c9_63 = arith.constant 9 : index
    %c0_64 = arith.constant 0 : index
    %56 = vector.load %arg10[%c1_61, %c1_62, %c9_63, %c0_64] : memref<2x18x32x128xf32, #tpu.memory_space<vmem>>, vector<1x16x16x128xf32>
    %57 = vector.shape_cast %56 : vector<1x16x16x128xf32> to vector<16x16x128xf32>
    %58 = vector.shape_cast %57 : vector<16x16x128xf32> to vector<256x128xf32>
    %59 = tpu.concatenate %52, %55, %58 in 1 : vector<256x128xf32>, vector<256x128xf32>, vector<256x128xf32> -> vector<256x384xf32>
    %60 = tpu.concatenate %49, %59 in 0 : vector<256x384xf32>, vector<256x384xf32> -> vector<512x384xf32>
    %c1_65 = arith.constant 1 : index
    %c0_66 = arith.constant 0 : index
    %c0_67 = arith.constant 0 : index
    %61 = vector.load %arg3[%c1_65, %c0_66, %c0_67] : memref<3x384x128xf32, #tpu.memory_space<vmem>>, vector<1x384x128xf32>
    %62 = vector.shape_cast %61 : vector<1x384x128xf32> to vector<384x128xf32>
    %cst_68 = arith.constant dense<0.000000e+00> : vector<512x128xf32>
    %63 = tpu.matmul %60, %62, %cst_68 {dimension_numbers = #tpu.dot_dimension_numbers<[1], [0], [0], [1], [0, 0, 1, 1], [], []>} : vector<512x384xf32>, vector<384x128xf32>, vector<512x128xf32> -> vector<512x128xf32>
    %64 = arith.addf %39, %63 : vector<512x128xf32>
    %c0_69 = arith.constant 0 : index
    %c2 = arith.constant 2 : index
    %c7_70 = arith.constant 7 : index
    %c0_71 = arith.constant 0 : index
    %65 = vector.load %arg10[%c0_69, %c2, %c7_70, %c0_71] : memref<2x18x32x128xf32, #tpu.memory_space<vmem>>, vector<1x16x16x128xf32>
    %66 = vector.shape_cast %65 : vector<1x16x16x128xf32> to vector<16x16x128xf32>
    %67 = vector.shape_cast %66 : vector<16x16x128xf32> to vector<256x128xf32>
    %c0_72 = arith.constant 0 : index
    %c2_73 = arith.constant 2 : index
    %c8_74 = arith.constant 8 : index
    %c0_75 = arith.constant 0 : index
    %68 = vector.load %arg10[%c0_72, %c2_73, %c8_74, %c0_75] : memref<2x18x32x128xf32, #tpu.memory_space<vmem>>, vector<1x16x16x128xf32>
    %69 = vector.shape_cast %68 : vector<1x16x16x128xf32> to vector<16x16x128xf32>
    %70 = vector.shape_cast %69 : vector<16x16x128xf32> to vector<256x128xf32>
    %c0_76 = arith.constant 0 : index
    %c2_77 = arith.constant 2 : index
    %c9_78 = arith.constant 9 : index
    %c0_79 = arith.constant 0 : index
    %71 = vector.load %arg10[%c0_76, %c2_77, %c9_78, %c0_79] : memref<2x18x32x128xf32, #tpu.memory_space<vmem>>, vector<1x16x16x128xf32>
    %72 = vector.shape_cast %71 : vector<1x16x16x128xf32> to vector<16x16x128xf32>
    %73 = vector.shape_cast %72 : vector<16x16x128xf32> to vector<256x128xf32>
    %74 = tpu.concatenate %67, %70, %73 in 1 : vector<256x128xf32>, vector<256x128xf32>, vector<256x128xf32> -> vector<256x384xf32>
    %c1_80 = arith.constant 1 : index
    %c2_81 = arith.constant 2 : index
    %c7_82 = arith.constant 7 : index
    %c0_83 = arith.constant 0 : index
    %75 = vector.load %arg10[%c1_80, %c2_81, %c7_82, %c0_83] : memref<2x18x32x128xf32, #tpu.memory_space<vmem>>, vector<1x16x16x128xf32>
    %76 = vector.shape_cast %75 : vector<1x16x16x128xf32> to vector<16x16x128xf32>
    %77 = vector.shape_cast %76 : vector<16x16x128xf32> to vector<256x128xf32>
    %c1_84 = arith.constant 1 : index
    %c2_85 = arith.constant 2 : index
    %c8_86 = arith.constant 8 : index
    %c0_87 = arith.constant 0 : index
    %78 = vector.load %arg10[%c1_84, %c2_85, %c8_86, %c0_87] : memref<2x18x32x128xf32, #tpu.memory_space<vmem>>, vector<1x16x16x128xf32>
    %79 = vector.shape_cast %78 : vector<1x16x16x128xf32> to vector<16x16x128xf32>
    %80 = vector.shape_cast %79 : vector<16x16x128xf32> to vector<256x128xf32>
    %c1_88 = arith.constant 1 : index
    %c2_89 = arith.constant 2 : index
    %c9_90 = arith.constant 9 : index
    %c0_91 = arith.constant 0 : index
    %81 = vector.load %arg10[%c1_88, %c2_89, %c9_90, %c0_91] : memref<2x18x32x128xf32, #tpu.memory_space<vmem>>, vector<1x16x16x128xf32>
    %82 = vector.shape_cast %81 : vector<1x16x16x128xf32> to vector<16x16x128xf32>
    %83 = vector.shape_cast %82 : vector<16x16x128xf32> to vector<256x128xf32>
    %84 = tpu.concatenate %77, %80, %83 in 1 : vector<256x128xf32>, vector<256x128xf32>, vector<256x128xf32> -> vector<256x384xf32>
    %85 = tpu.concatenate %74, %84 in 0 : vector<256x384xf32>, vector<256x384xf32> -> vector<512x384xf32>
    %c2_92 = arith.constant 2 : index
    %c0_93 = arith.constant 0 : index
    %c0_94 = arith.constant 0 : index
    %86 = vector.load %arg3[%c2_92, %c0_93, %c0_94] : memref<3x384x128xf32, #tpu.memory_space<vmem>>, vector<1x384x128xf32>
    %87 = vector.shape_cast %86 : vector<1x384x128xf32> to vector<384x128xf32>
    %cst_95 = arith.constant dense<0.000000e+00> : vector<512x128xf32>
    %88 = tpu.matmul %85, %87, %cst_95 {dimension_numbers = #tpu.dot_dimension_numbers<[1], [0], [0], [1], [0, 0, 1, 1], [], []>} : vector<512x384xf32>, vector<384x128xf32>, vector<512x128xf32> -> vector<512x128xf32>
    %89 = arith.addf %64, %88 : vector<512x128xf32>
    %c0_96 = arith.constant 0 : index
    %c0_97 = arith.constant 0 : index
    %90 = vector.load %arg4[%c0_96, %c0_97] : memref<1x128xf32, #tpu.memory_space<vmem>>, vector<1x128xf32>
    %91 = vector.broadcast %90 : vector<1x128xf32> to vector<512x128xf32>
    %92 = arith.addf %89, %91 : vector<512x128xf32>
    %c0_98 = arith.constant 0 : index
    %c0_99 = arith.constant 0 : index
    %93 = vector.load %arg7[%c0_98, %c0_99] : memref<1x128xf32, #tpu.memory_space<vmem>>, vector<1x128xf32>
    %c0_100 = arith.constant 0 : index
    %c0_101 = arith.constant 0 : index
    %94 = vector.load %arg8[%c0_100, %c0_101] : memref<1x128xf32, #tpu.memory_space<vmem>>, vector<1x128xf32>
    %cst_102 = arith.constant dense<0.000000e+00> : vector<128xf32>
    %95 = vector.multi_reduction <add>, %92, %cst_102 [0] : vector<512x128xf32> to vector<128xf32>
    %96 = vector.shape_cast %95 : vector<128xf32> to vector<1x128xf32>
    %cst_103 = arith.constant 5.120000e+02 : f32
    %97 = vector.broadcast %cst_103 : f32 to vector<1x128xf32>
    %98 = arith.divf %96, %97 : vector<1x128xf32>
    %99 = vector.broadcast %98 : vector<1x128xf32> to vector<512x128xf32>
    %100 = arith.subf %92, %99 : vector<512x128xf32>
    %101 = arith.mulf %100, %100 : vector<512x128xf32>
    %cst_104 = arith.constant dense<0.000000e+00> : vector<128xf32>
    %102 = vector.multi_reduction <add>, %101, %cst_104 [0] : vector<512x128xf32> to vector<128xf32>
    %103 = vector.shape_cast %102 : vector<128xf32> to vector<1x128xf32>
    %cst_105 = arith.constant 5.120000e+02 : f32
    %104 = vector.broadcast %cst_105 : f32 to vector<1x128xf32>
    %105 = arith.divf %103, %104 : vector<1x128xf32>
    %cst_106 = arith.constant 9.99999974E-6 : f32
    %106 = vector.broadcast %cst_106 : f32 to vector<1x128xf32>
    %107 = arith.addf %105, %106 : vector<1x128xf32>
    %108 = math.rsqrt %107 : vector<1x128xf32>
    %109 = arith.mulf %93, %108 : vector<1x128xf32>
    %110 = vector.broadcast %109 : vector<1x128xf32> to vector<512x128xf32>
    %111 = arith.mulf %92, %110 : vector<512x128xf32>
    %112 = arith.mulf %98, %109 : vector<1x128xf32>
    %113 = arith.subf %94, %112 : vector<1x128xf32>
    %114 = vector.broadcast %113 : vector<1x128xf32> to vector<512x128xf32>
    %115 = arith.addf %111, %114 : vector<512x128xf32>
    %cst_107 = arith.constant 0.000000e+00 : f32
    %116 = vector.broadcast %cst_107 : f32 to vector<512x128xf32>
    %117 = arith.cmpf ogt, %115, %116 : vector<512x128xf32>
    %cst_108 = arith.constant 2.000000e-01 : f32
    %118 = vector.broadcast %cst_108 : f32 to vector<512x128xf32>
    %119 = arith.mulf %118, %115 : vector<512x128xf32>
    %120 = arith.select %117, %115, %119 : vector<512x128xi1>, vector<512x128xf32>
    %c0_109 = arith.constant 0 : index
    %c0_110 = arith.constant 0 : index
    %121 = vector.load %arg9[%c0_109, %c0_110] : memref<512x128xf32, #tpu.memory_space<vmem>>, vector<512x128xf32>
    tpu.vector_store %arg9[%c0_109, %c0_110], %120 {strides = array<i32>} : memref<512x128xf32, #tpu.memory_space<vmem>>, vector<512x128xf32>,
    return
  }
  func.func @transform_0(%arg0: i32) -> (i32, i32) {
    %c0_i32 = arith.constant 0 : i32
    %c0_i32_0 = arith.constant 0 : i32
    %c0_i32_1 = arith.constant 0 : i32
    return %c0_i32, %c0_i32_0 : i32, i32
  }
  func.func @transform_1(%arg0: i32) -> (i32, i32) {
    %c0_i32 = arith.constant 0 : i32
    %c0_i32_0 = arith.constant 0 : i32
    %c0_i32_1 = arith.constant 0 : i32
    return %c0_i32, %c0_i32_0 : i32, i32
  }
  func.func @transform_2(%arg0: i32) -> (i32, i32, i32) {
    %c0_i32 = arith.constant 0 : i32
    %c0_i32_0 = arith.constant 0 : i32
    %c0_i32_1 = arith.constant 0 : i32
    %c0_i32_2 = arith.constant 0 : i32
    return %c0_i32, %c0_i32_0, %c0_i32_1 : i32, i32, i32
  }
  func.func @transform_3(%arg0: i32) -> (i32, i32) {
    %c0_i32 = arith.constant 0 : i32
    %c0_i32_0 = arith.constant 0 : i32
    %c0_i32_1 = arith.constant 0 : i32
    return %c0_i32, %c0_i32_0 : i32, i32
  }
  func.func @transform_4(%arg0: i32) -> (i32, i32) {
    %c0_i32 = arith.constant 0 : i32
    %c0_i32_0 = arith.constant 0 : i32
    %c0_i32_1 = arith.constant 0 : i32
    return %c0_i32, %c0_i32_0 : i32, i32
  }
  func.func @transform_5(%arg0: i32) -> (i32, i32) {
    %c0_i32 = arith.constant 0 : i32
    %c0_i32_0 = arith.constant 0 : i32
    %c0_i32_1 = arith.constant 0 : i32
    return %c0_i32, %c0_i32_0 : i32, i32
  }
  func.func @transform_6(%arg0: i32) -> (i32, i32) {
    %c0_i32 = arith.constant 0 : i32
    %c0_i32_0 = arith.constant 0 : i32
    %c0_i32_1 = arith.constant 0 : i32
    return %c0_i32, %c0_i32_0 : i32, i32
  }
  func.func @transform_7(%arg0: i32) -> (i32, i32) {
    %c0_i32 = arith.constant 0 : i32
    %c0_i32_0 = arith.constant 0 : i32
    %c0_i32_1 = arith.constant 0 : i32
    return %c0_i32, %c0_i32_0 : i32, i32
  }
  func.func @transform_8(%arg0: i32) -> (i32, i32) {
    %c0_i32 = arith.constant 0 : i32
    %c0_i32_0 = arith.constant 0 : i32
    %c0_i32_1 = arith.constant 0 : i32
    return %c0_i32, %c0_i32_0 : i32, i32
  }
}

</mosaic_0001>

<llo_original>
// kernel: generator_forward.3
$region0: #{generator_forward.3}
  #allocation0 [shape = 'u32[]', space=smem, size = 0x4, offset = 0x4, fixed_abs, tag = 'smem constant byte address 0x4 - core index']
  #allocation1 [shape = 'u32[144,128]{1,0:T(1,128)}', space=vmem, size = 0x12000, scoped, tag = 'internal scratch']
  #allocation2 [shape = 'f32[2,10,24,128]{3,2,1,0:T(8,128)}', space=vmem, size = 0x3c000, scoped, tag = 'scratch operand']
  %s0 = inlined_call_operand.vmem [shape: f32[32,128], index: 0, kind: input, shape index: {}]
  %s1 = inlined_call_operand.vmem [shape: f32[64,16], index: 1, kind: input, shape index: {}]
  %s2 = inlined_call_operand.vmem [shape: f32[3,384,128], index: 2, kind: input, shape index: {}]
  %s3 = inlined_call_operand.vmem [shape: f32[1,128], index: 3, kind: input, shape index: {}]
  %s4 = inlined_call_operand.vmem [shape: f32[1,128], index: 4, kind: input, shape index: {}]
  %s5 = inlined_call_operand.vmem [shape: f32[1,128], index: 5, kind: input, shape index: {}]
  %s6 = inlined_call_operand.vmem [shape: f32[1,128], index: 6, kind: input, shape index: {}]
  %s7 = inlined_call_operand.vmem [shape: f32[1,128], index: 7, kind: input, shape index: {}]
  %s8 = inlined_call_operand.vmem [shape: f32[128,128], index: 8, kind: output, shape index: {}]
  %s9 = sld [smem:[#allocation0]]
  $region42: #{generator_forward.3} parent=0
    _
  %s11 = ssub.s32 1, %s9
  %s12 = scalar_select 0, %s11, %s9
  // Predicated region
  $region2: #{generator_forward.3} parent=0 // pred_check
    _
  $region3: #{generator_forward.3} parent=0 // pred_check_branch
    %14 = sbr.rel (0) target = $region5
  $region4: #{generator_forward.3} parent=0 // pred_region
    _
  $region5: #{generator_forward.3} parent=0 // pred_fallthru
    _
  // Predicated region
  $region6: #{generator_forward.3} parent=0 // pred_check
    _
  $region7: #{generator_forward.3} parent=0 // pred_check_branch
    %16 = sbr.rel (0) target = $region9
  $region8: #{generator_forward.3} parent=0 // pred_region
    _
  $region9: #{generator_forward.3} parent=0 // pred_fallthru
    _
  // Predicated region
  $region10: #{generator_forward.3} parent=0 // pred_check
    _
  $region11: #{generator_forward.3} parent=0 // pred_check_branch
    %18 = sbr.rel (0) target = $region13
  $region12: #{generator_forward.3} parent=0 // pred_region
    _
  $region13: #{generator_forward.3} parent=0 // pred_fallthru
    _
  // Predicated region
  $region14: #{generator_forward.3} parent=0 // pred_check
    _
  $region15: #{generator_forward.3} parent=0 // pred_check_branch
    %20 = sbr.rel (0) target = $region17
  $region16: #{generator_forward.3} parent=0 // pred_region
    _
  $region17: #{generator_forward.3} parent=0 // pred_fallthru
    _
  // Predicated region
  $region18: #{generator_forward.3} parent=0 // pred_check
    _
  $region19: #{generator_forward.3} parent=0 // pred_check_branch
    %22 = sbr.rel (0) target = $region21
  $region20: #{generator_forward.3} parent=0 // pred_region
    _
  $region21: #{generator_forward.3} parent=0 // pred_fallthru
    _
  // Predicated region
  $region22: #{generator_forward.3} parent=0 // pred_check
    _
  $region23: #{generator_forward.3} parent=0 // pred_check_branch
    %24 = sbr.rel (0) target = $region25
  $region24: #{generator_forward.3} parent=0 // pred_region
    _
  $region25: #{generator_forward.3} parent=0 // pred_fallthru
    _
  // Predicated region
  $region26: #{generator_forward.3} parent=0 // pred_check
    _
  $region27: #{generator_forward.3} parent=0 // pred_check_branch
    %26 = sbr.rel (0) target = $region29
  $region28: #{generator_forward.3} parent=0 // pred_region
    _
  $region29: #{generator_forward.3} parent=0 // pred_fallthru
    _
  // Predicated region
  $region30: #{generator_forward.3} parent=0 // pred_check
    _
  $region31: #{generator_forward.3} parent=0 // pred_check_branch
    %28 = sbr.rel (0) target = $region33
  $region32: #{generator_forward.3} parent=0 // pred_region
    _
  $region33: #{generator_forward.3} parent=0 // pred_fallthru
    _
  %v29 = vld [vmem:[%s0] sm:$0xff]
  %v30 = vld [vmem:[%s0 + $0x8] sm:$0xff]
  %v31 = vld [vmem:[%s0 + $0x10] sm:$0xff]
  %v32 = vld [vmem:[%s0 + $0x18] sm:$0xff]
  %v33 = vld [vmem:[%s4] sm:$0x1]
  %v34 = vld [vmem:[%s5] sm:$0x1]
  %v35 = vadd.f32 %v29, %v30
  %v36 = vadd.f32 %v35, %v31
  %v37 = vadd.f32 %v36, %v32
  %v38 = vrot.slane %v37, 4
  %v39 = vadd.f32 %v37, %v38
  %v40 = vrot.slane %v39, 2
  %v41 = vadd.f32 %v39, %v40
  %v42 = vrot.slane %v41, 1
  %v43 = vadd.f32 %v41, %v42
  %v44 = vrcp.pop 32.0
  %v45 = vmul.f32 %v43, %v44
  %v46 = vsub.f32 %v29, %v45
  %v47 = vsub.f32 %v30, %v45
  %v48 = vsub.f32 %v31, %v45
  %v49 = vsub.f32 %v32, %v45
  %v50 = vmul.f32 %v46, %v46
  %v51 = vmul.f32 %v47, %v47
  %v52 = vmul.f32 %v48, %v48
  %v53 = vmul.f32 %v49, %v49
  %v54 = vadd.f32 %v50, %v51
  %v55 = vadd.f32 %v54, %v52
  %v56 = vadd.f32 %v55, %v53
  %v57 = vrot.slane %v56, 4
  %v58 = vadd.f32 %v56, %v57
  %v59 = vrot.slane %v58, 2
  %v60 = vadd.f32 %v58, %v59
  %v61 = vrot.slane %v60, 1
  %v62 = vadd.f32 %v60, %v61
  %v63 = vmul.f32 %v62, %v44
  %v64 = vadd.f32 %v63, 1e-05
  %v65 = vrsqrt.pop %v64
  %v66 = vmul.f32 %v33, %v65
  %v68 = vlaneseq
  %v69 = vshrl.u32 %v68, 7
  %v70 = vsub.s32 0, %v69
  %v71 = vrot.slane %v66, %v70
  %v73 = vmul.f32 %v29, %v71
  %v74 = vmul.f32 %v30, %v71
  %v75 = vmul.f32 %v31, %v71
  %v76 = vmul.f32 %v32, %v71
  %v77 = vmul.f32 %v45, %v66
  %v78 = vsub.f32 %v34, %v77
  %v80 = vlaneseq
  %v81 = vshrl.u32 %v80, 7
  %v82 = vsub.s32 0, %v81
  %v83 = vrot.slane %v78, %v82
  %v85 = vadd.f32 %v73, %v83
  %v86 = vadd.f32 %v74, %v83
  %v87 = vadd.f32 %v75, %v83
  %v88 = vadd.f32 %v76, %v83
  %89 = vst [vmem:[#allocation2] sm:$0xff] 0.0
  %90 = vst [vmem:[#allocation2 + $0x8] sm:$0xff] 0.0
  %91 = vst [vmem:[#allocation2 + $0x10] sm:$0xff] 0.0
  %92 = vst [vmem:[#allocation2 + $0x18] sm:$0xff] 0.0
  %93 = vst [vmem:[#allocation2 + $0x20] sm:$0xff] 0.0
  %94 = vst [vmem:[#allocation2 + $0x28] sm:$0xff] 0.0
  %95 = vst [vmem:[#allocation2 + $0x30] sm:$0xff] 0.0
  %96 = vst [vmem:[#allocation2 + $0x38] sm:$0xff] 0.0
  %97 = vst [vmem:[#allocation2 + $0x40] sm:$0xff] 0.0
  %98 = vst [vmem:[#allocation2 + $0x48] sm:$0xff] 0.0
  %99 = vst [vmem:[#allocation2 + $0x50] sm:$0xff] 0.0
  %100 = vst [vmem:[#allocation2 + $0x58] sm:$0xff] 0.0
  %101 = vst [vmem:[#allocation2 + $0x60] sm:$0xff] 0.0
  %102 = vst [vmem:[#allocation2 + $0x68] sm:$0xff] 0.0
  %103 = vst [vmem:[#allocation2 + $0x70] sm:$0xff] 0.0
  %104 = vst [vmem:[#allocation2 + $0x78] sm:$0xff] 0.0
  %105 = vst [vmem:[#allocation2 + $0x80] sm:$0xff] 0.0
  %106 = vst [vmem:[#allocation2 + $0x88] sm:$0xff] 0.0
  %107 = vst [vmem:[#allocation2 + $0x90] sm:$0xff] 0.0
  %108 = vst [vmem:[#allocation2 + $0x98] sm:$0xff] 0.0
  %109 = vst [vmem:[#allocation2 + $0xa0] sm:$0xff] 0.0
  %110 = vst [vmem:[#allocation2 + $0xa8] sm:$0xff] 0.0
  %111 = vst [vmem:[#allocation2 + $0xb0] sm:$0xff] 0.0
  %112 = vst [vmem:[#allocation2 + $0xb8] sm:$0xff] 0.0
  %113 = vst [vmem:[#allocation2 + $0xc0] sm:$0xff] 0.0
  %114 = vst [vmem:[#allocation2 + $0xc8] sm:$0xff] 0.0
  %115 = vst [vmem:[#allocation2 + $0xd0] sm:$0xff] 0.0
  %116 = vst [vmem:[#allocation2 + $0xd8] sm:$0xff] 0.0
  %117 = vst [vmem:[#allocation2 + $0xe0] sm:$0xff] 0.0
  %118 = vst [vmem:[#allocation2 + $0xe8] sm:$0xff] 0.0
  %119 = vst [vmem:[#allocation2 + $0xf0] sm:$0xff] 0.0
  %120 = vst [vmem:[#allocation2 + $0xf8] sm:$0xff] 0.0
  %121 = vst [vmem:[#allocation2 + $0x100] sm:$0xff] 0.0
  %122 = vst [vmem:[#allocation2 + $0x108] sm:$0xff] 0.0
  %123 = vst [vmem:[#allocation2 + $0x110] sm:$0xff] 0.0
  %124 = vst [vmem:[#allocation2 + $0x118] sm:$0xff] 0.0
  %125 = vst [vmem:[#allocation2 + $0x120] sm:$0xff] 0.0
  %126 = vst [vmem:[#allocation2 + $0x128] sm:$0xff] 0.0
  %127 = vst [vmem:[#allocation2 + $0x130] sm:$0xff] 0.0
  %128 = vst [vmem:[#allocation2 + $0x138] sm:$0xff] 0.0
  %129 = vst [vmem:[#allocation2 + $0x140] sm:$0xff] 0.0
  %130 = vst [vmem:[#allocation2 + $0x148] sm:$0xff] 0.0
  %131 = vst [vmem:[#allocation2 + $0x150] sm:$0xff] 0.0
  %132 = vst [vmem:[#allocation2 + $0x158] sm:$0xff] 0.0
  %133 = vst [vmem:[#allocation2 + $0x160] sm:$0xff] 0.0
  %134 = vst [vmem:[#allocation2 + $0x168] sm:$0xff] 0.0
  %135 = vst [vmem:[#allocation2 + $0x170] sm:$0xff] 0.0
  %136 = vst [vmem:[#allocation2 + $0x178] sm:$0xff] 0.0
  %137 = vst [vmem:[#allocation2 + $0x180] sm:$0xff] 0.0
  %138 = vst [vmem:[#allocation2 + $0x188] sm:$0xff] 0.0
  %139 = vst [vmem:[#allocation2 + $0x190] sm:$0xff] 0.0
  %140 = vst [vmem:[#allocation2 + $0x198] sm:$0xff] 0.0
  %141 = vst [vmem:[#allocation2 + $0x1a0] sm:$0xff] 0.0
  %142 = vst [vmem:[#allocation2 + $0x1a8] sm:$0xff] 0.0
  %143 = vst [vmem:[#allocation2 + $0x1b0] sm:$0xff] 0.0
  %144 = vst [vmem:[#allocation2 + $0x1b8] sm:$0xff] 0.0
  %145 = vst [vmem:[#allocation2 + $0x1c0] sm:$0xff] 0.0
  %146 = vst [vmem:[#allocation2 + $0x1c8] sm:$0xff] 0.0
  %147 = vst [vmem:[#allocation2 + $0x1d0] sm:$0xff] 0.0
  %148 = vst [vmem:[#allocation2 + $0x1d8] sm:$0xff] 0.0
  %v149 = vld [vmem:[%s1] sm:$0xff]
  %v150 = vld [vmem:[%s1 + $0x8] sm:$0xff]
  %v151 = vld [vmem:[%s1 + $0x10] sm:$0xff]
  %v152 = vld [vmem:[%s1 + $0x18] sm:$0xff]
  %v153 = vld [vmem:[%s1 + $0x20] sm:$0xff]
  %v154 = vld [vmem:[%s1 + $0x28] sm:$0xff]
  %v155 = vld [vmem:[%s1 + $0x30] sm:$0xff]
  %v156 = vld [vmem:[%s1 + $0x38] sm:$0xff]
  %vm157 = vcmask 130048
  %v159 = vsel %vm157, %v149, 0
  %v162 = vsel %vm157, %v150, 0
  %v165 = vsel %vm157, %v151, 0
  %v168 = vsel %vm157, %v152, 0
  %v171 = vsel %vm157, %v153, 0
  %v174 = vsel %vm157, %v154, 0
  %v177 = vsel %vm157, %v155, 0
  %v180 = vsel %vm157, %v156, 0
  %182 = vmatprep.subr.mxu0 0.0
  %183 = vmatpush1.msra.mxu0 %v85
  %184 = vmatprep.subr.mxu0 0.0
  %185 = vmatpush1.msra.mxu0 %v86
  %186 = vmatprep.subr.mxu0 0.0
  %187 = vmatpush1.msra.mxu0 0.0
  %188 = vmatprep.subr.mxu0 0.0
  %189 = vmatpush1.msra.mxu0 0.0
  %190 = vmatprep.subr.mxu0 0.0
  %191 = vmatpush1.msra.mxu0 0.0
  %192 = vmatprep.subr.mxu0 0.0
  %193 = vmatpush1.msra.mxu0 0.0
  %194 = vmatprep.subr.mxu0 0.0
  %195 = vmatpush1.msra.mxu0 0.0
  %196 = vmatprep.subr.mxu0 0.0
  %197 = vmatpush1.msra.mxu0 0.0
  %198 = vmatprep.subr.mxu0 0.0
  %199 = vmatpush1.msra.mxu0 0.0
  %200 = vmatprep.subr.mxu0 0.0
  %201 = vmatpush1.msra.mxu0 0.0
  %202 = vmatprep.subr.mxu0 0.0
  %203 = vmatpush1.msra.mxu0 0.0
  %204 = vmatprep.subr.mxu0 0.0
  %205 = vmatpush1.msra.mxu0 0.0
  %206 = vmatprep.subr.mxu0 0.0
  %207 = vmatpush1.msra.mxu0 0.0
  %208 = vmatprep.subr.mxu0 0.0
  %209 = vmatpush1.msra.mxu0 0.0
  %210 = vmatprep.subr.mxu0 0.0
  %211 = vmatpush1.msra.mxu0 0.0
  %212 = vmatprep.subr.mxu0 0.0
  %213 = vmatpush1.msra.mxu0 0.0
  %214 = vmatprep.subr.mxu0 0.0
  %215 = vmatpush1.msra.mxu0 0.0
  %216 = vmatprep.subr.mxu0 0.0
  %217 = vmatpush1.msra.mxu0 0.0
  %218 = vmatprep.subr.mxu0 0.0
  %219 = vmatpush1.msra.mxu0 0.0
  %220 = vmatprep.subr.mxu0 0.0
  %221 = vmatpush1.msra.mxu0 0.0
  %222 = vmatprep.subr.mxu0 0.0
  %223 = vmatpush1.msra.mxu0 0.0
  %224 = vmatprep.subr.mxu0 0.0
  %225 = vmatpush1.msra.mxu0 0.0
  %226 = vmatprep.subr.mxu0 0.0
  %227 = vmatpush1.msra.mxu0 0.0
  %228 = vmatprep.subr.mxu0 0.0
  %229 = vmatpush1.msra.mxu0 0.0
  %230 = vmatprep.subr.mxu0 0.0
  %231 = vmatpush1.msra.mxu0 0.0
  %232 = vmatprep.subr.mxu0 0.0
  %233 = vmatpush1.msra.mxu0 0.0
  %234 = vmatprep.subr.mxu0 0.0
  %235 = vmatpush1.msra.mxu0 0.0
  %236 = vmatprep.subr.mxu0 0.0
  %237 = vmatpush1.msra.mxu0 0.0
  %238 = vmatprep.subr.mxu0 0.0
  %239 = vmatpush1.msra.mxu0 0.0
  %240 = vmatprep.subr.mxu0 0.0
  %241 = vmatpush1.msra.mxu0 0.0
  %242 = vmatprep.subr.mxu0 0.0
  %243 = vmatpush1.msra.mxu0 0.0
  %244 = vmatprep.subr.mxu0 0.0
  %245 = vmatpush1.msra.mxu0 0.0
  %246 = vmatprep.mubr.f32.mxu0 0.0
  %247 = vmatmul.mubr.f32.gmra.mrb[0].mxu0 %v159
  %v248 = vpop.f32.mrb[0].mxu0
  %v249 = vadd.f32 0.0, %v248
  %v250 = vpop.f32.mrb[0].mxu0
  %251 = vmatprep.mubr.f32.mxu0 0.0
  %252 = vmatmul.mubr.f32.gmra.mrb[0].mxu0 %v162
  %v253 = vpop.f32.mrb[0].mxu0
  %v254 = vadd.f32 0.0, %v253
  %v255 = vpop.f32.mrb[0].mxu0
  %256 = vmatprep.mubr.f32.mxu0 0.0
  %257 = vmatmul.mubr.f32.gmra.mrb[0].mxu0 %v165
  %v258 = vpop.f32.mrb[0].mxu0
  %v259 = vadd.f32 0.0, %v258
  %v260 = vpop.f32.mrb[0].mxu0
  %261 = vmatprep.mubr.f32.mxu0 0.0
  %262 = vmatmul.mubr.f32.gmra.mrb[0].mxu0 %v168
  %v263 = vpop.f32.mrb[0].mxu0
  %v264 = vadd.f32 0.0, %v263
  %v265 = vpop.f32.mrb[0].mxu0
  %266 = vmatprep.mubr.f32.mxu0 0.0
  %267 = vmatmul.mubr.f32.gmra.mrb[0].mxu0 %v171
  %v268 = vpop.f32.mrb[0].mxu0
  %v269 = vadd.f32 0.0, %v268
  %v270 = vpop.f32.mrb[0].mxu0
  %271 = vmatprep.mubr.f32.mxu0 0.0
  %272 = vmatmul.mubr.f32.gmra.mrb[0].mxu0 %v174
  %v273 = vpop.f32.mrb[0].mxu0
  %v274 = vadd.f32 0.0, %v273
  %v275 = vpop.f32.mrb[0].mxu0
  %276 = vmatprep.mubr.f32.mxu0 0.0
  %277 = vmatmul.mubr.f32.gmra.mrb[0].mxu0 %v177
  %v278 = vpop.f32.mrb[0].mxu0
  %v279 = vadd.f32 0.0, %v278
  %v280 = vpop.f32.mrb[0].mxu0
  %281 = vmatprep.mubr.f32.mxu0 0.0
  %282 = vmatmul.mubr.f32.gmra.mrb[0].mxu0 %v180
  %v283 = vpop.f32.mrb[0].mxu0
  %v284 = vadd.f32 0.0, %v283
  %v285 = vpop.f32.mrb[0].mxu0
  %286 = vdwg.mxu0
  %s287 = scalar_lea.vmem [#allocation2], 24
  %288 = vst [vmem:[%s287 + $0x8] sm:$0xff] %v249
  %289 = vst [vmem:[%s287 + $0x20] sm:$0xff] %v254
  %290 = vst [vmem:[%s287 + $0x38] sm:$0xff] %v259
  %291 = vst [vmem:[%s287 + $0x50] sm:$0xff] %v264
  %292 = vst [vmem:[%s287 + $0x68] sm:$0xff] %v269
  %293 = vst [vmem:[%s287 + $0x80] sm:$0xff] %v274
  %294 = vst [vmem:[%s287 + $0x98] sm:$0xff] %v279
  %295 = vst [vmem:[%s287 + $0xb0] sm:$0xff] %v284
  %296 = vmatprep.subr.mxu0 0.0
  %297 = vmatpush1.msra.mxu0 %v87
  %298 = vmatprep.subr.mxu0 0.0
  %299 = vmatpush1.msra.mxu0 %v88
  %300 = vmatprep.subr.mxu0 0.0
  %301 = vmatpush1.msra.mxu0 0.0
  %302 = vmatprep.subr.mxu0 0.0
  %303 = vmatpush1.msra.mxu0 0.0
  %304 = vmatprep.subr.mxu0 0.0
  %305 = vmatpush1.msra.mxu0 0.0
  %306 = vmatprep.subr.mxu0 0.0
  %307 = vmatpush1.msra.mxu0 0.0
  %308 = vmatprep.subr.mxu0 0.0
  %309 = vmatpush1.msra.mxu0 0.0
  %310 = vmatprep.subr.mxu0 0.0
  %311 = vmatpush1.msra.mxu0 0.0
  %312 = vmatprep.subr.mxu0 0.0
  %313 = vmatpush1.msra.mxu0 0.0
  %314 = vmatprep.subr.mxu0 0.0
  %315 = vmatpush1.msra.mxu0 0.0
  %316 = vmatprep.subr.mxu0 0.0
  %317 = vmatpush1.msra.mxu0 0.0
  %318 = vmatprep.subr.mxu0 0.0
  %319 = vmatpush1.msra.mxu0 0.0
  %320 = vmatprep.subr.mxu0 0.0
  %321 = vmatpush1.msra.mxu0 0.0
  %322 = vmatprep.subr.mxu0 0.0
  %323 = vmatpush1.msra.mxu0 0.0
  %324 = vmatprep.subr.mxu0 0.0
  %325 = vmatpush1.msra.mxu0 0.0
  %326 = vmatprep.subr.mxu0 0.0
  %327 = vmatpush1.msra.mxu0 0.0
  %328 = vmatprep.subr.mxu0 0.0
  %329 = vmatpush1.msra.mxu0 0.0
  %330 = vmatprep.subr.mxu0 0.0
  %331 = vmatpush1.msra.mxu0 0.0
  %332 = vmatprep.subr.mxu0 0.0
  %333 = vmatpush1.msra.mxu0 0.0
  %334 = vmatprep.subr.mxu0 0.0
  %335 = vmatpush1.msra.mxu0 0.0
  %336 = vmatprep.subr.mxu0 0.0
  %337 = vmatpush1.msra.mxu0 0.0
  %338 = vmatprep.subr.mxu0 0.0
  %339 = vmatpush1.msra.mxu0 0.0
  %340 = vmatprep.subr.mxu0 0.0
  %341 = vmatpush1.msra.mxu0 0.0
  %342 = vmatprep.subr.mxu0 0.0
  %343 = vmatpush1.msra.mxu0 0.0
  %344 = vmatprep.subr.mxu0 0.0
  %345 = vmatpush1.msra.mxu0 0.0
  %346 = vmatprep.subr.mxu0 0.0
  %347 = vmatpush1.msra.mxu0 0.0
  %348 = vmatprep.subr.mxu0 0.0
  %349 = vmatpush1.msra.mxu0 0.0
  %350 = vmatprep.subr.mxu0 0.0
  %351 = vmatpush1.msra.mxu0 0.0
  %352 = vmatprep.subr.mxu0 0.0
  %353 = vmatpush1.msra.mxu0 0.0
  %354 = vmatprep.subr.mxu0 0.0
  %355 = vmatpush1.msra.mxu0 0.0
  %356 = vmatprep.subr.mxu0 0.0
  %357 = vmatpush1.msra.mxu0 0.0
  %358 = vmatprep.subr.mxu0 0.0
  %359 = vmatpush1.msra.mxu0 0.0
  %360 = vmatprep.mubr.f32.mxu0 0.0
  %361 = vmatmul.mubr.f32.gmra.mrb[0].mxu0 %v159
  %v362 = vpop.f32.mrb[0].mxu0
  %v363 = vadd.f32 0.0, %v362
  %v364 = vpop.f32.mrb[0].mxu0
  %365 = vmatprep.mubr.f32.mxu0 0.0
  %366 = vmatmul.mubr.f32.gmra.mrb[0].mxu0 %v162
  %v367 = vpop.f32.mrb[0].mxu0
  %v368 = vadd.f32 0.0, %v367
  %v369 = vpop.f32.mrb[0].mxu0
  %370 = vmatprep.mubr.f32.mxu0 0.0
  %371 = vmatmul.mubr.f32.gmra.mrb[0].mxu0 %v165
  %v372 = vpop.f32.mrb[0].mxu0
  %v373 = vadd.f32 0.0, %v372
  %v374 = vpop.f32.mrb[0].mxu0
  %375 = vmatprep.mubr.f32.mxu0 0.0
  %376 = vmatmul.mubr.f32.gmra.mrb[0].mxu0 %v168
  %v377 = vpop.f32.mrb[0].mxu0
  %v378 = vadd.f32 0.0, %v377
  %v379 = vpop.f32.mrb[0].mxu0
  %380 = vmatprep.mubr.f32.mxu0 0.0
  %381 = vmatmul.mubr.f32.gmra.mrb[0].mxu0 %v171
  %v382 = vpop.f32.mrb[0].mxu0
  %v383 = vadd.f32 0.0, %v382
  %v384 = vpop.f32.mrb[0].mxu0
  %385 = vmatprep.mubr.f32.mxu0 0.0
  %386 = vmatmul.mubr.f32.gmra.mrb[0].mxu0 %v174
  %v387 = vpop.f32.mrb[0].mxu0
  %v388 = vadd.f32 0.0, %v387
  %v389 = vpop.f32.mrb[0].mxu0
  %390 = vmatprep.mubr.f32.mxu0 0.0
  %391 = vmatmul.mubr.f32.gmra.mrb[0].mxu0 %v177
  %v392 = vpop.f32.mrb[0].mxu0
  %v393 = vadd.f32 0.0, %v392
  %v394 = vpop.f32.mrb[0].mxu0
  %395 = vmatprep.mubr.f32.mxu0 0.0
  %396 = vmatmul.mubr.f32.gmra.mrb[0].mxu0 %v180
  %v397 = vpop.f32.mrb[0].mxu0
  %v398 = vadd.f32 0.0, %v397
  %v399 = vpop.f32.mrb[0].mxu0
  %400 = vdwg.mxu0
  %s401 = scalar_lea.vmem [#allocation2], 264
  %402 = vst [vmem:[%s401 + $0x8] sm:$0xff] %v363
  %403 = vst [vmem:[%s401 + $0x20] sm:$0xff] %v368
  %404 = vst [vmem:[%s401 + $0x38] sm:$0xff] %v373
  %405 = vst [vmem:[%s401 + $0x50] sm:$0xff] %v378
  %406 = vst [vmem:[%s401 + $0x68] sm:$0xff] %v383
  %407 = vst [vmem:[%s401 + $0x80] sm:$0xff] %v388
  %408 = vst [vmem:[%s401 + $0x98] sm:$0xff] %v393
  %409 = vst [vmem:[%s401 + $0xb0] sm:$0xff] %v398
  %v410 = vld [vmem:[#allocation2 + $0x7] sm:$0xff]
  %v411 = vld [vmem:[#allocation2 + $0x1f] sm:$0xff]
  %v412 = vld [vmem:[#allocation2 + $0x37] sm:$0xff]
  %v413 = vld [vmem:[#allocation2 + $0x4f] sm:$0xff]
  %v414 = vld [vmem:[#allocation2 + $0x67] sm:$0xff]
  %v415 = vld [vmem:[#allocation2 + $0x7f] sm:$0xff]
  %v416 = vld [vmem:[#allocation2 + $0x97] sm:$0xff]
  %v417 = vld [vmem:[#allocation2 + $0xaf] sm:$0xff]
  %v418 = vld [vmem:[#allocation2 + $0x8] sm:$0xff]
  %v419 = vld [vmem:[#allocation2 + $0x20] sm:$0xff]
  %v420 = vld [vmem:[#allocation2 + $0x38] sm:$0xff]
  %v421 = vld [vmem:[#allocation2 + $0x50] sm:$0xff]
  %v422 = vld [vmem:[#allocation2 + $0x68] sm:$0xff]
  %v423 = vld [vmem:[#allocation2 + $0x80] sm:$0xff]
  %v424 = vld [vmem:[#allocation2 + $0x98] sm:$0xff]
  %v425 = vld [vmem:[#allocation2 + $0xb0] sm:$0xff]
  %v426 = vld [vmem:[#allocation2 + $0x9] sm:$0xff]
  %v427 = vld [vmem:[#allocation2 + $0x21] sm:$0xff]
  %v428 = vld [vmem:[#allocation2 + $0x39] sm:$0xff]
  %v429 = vld [vmem:[#allocation2 + $0x51] sm:$0xff]
  %v430 = vld [vmem:[#allocation2 + $0x69] sm:$0xff]
  %v431 = vld [vmem:[#allocation2 + $0x81] sm:$0xff]
  %v432 = vld [vmem:[#allocation2 + $0x99] sm:$0xff]
  %v433 = vld [vmem:[#allocation2 + $0xb1] sm:$0xff]
  %s434 = scalar_lea.vmem [#allocation2], 240
  %v435 = vld [vmem:[%s434 + $0x7] sm:$0xff]
  %v436 = vld [vmem:[%s434 + $0x1f] sm:$0xff]
  %v437 = vld [vmem:[%s434 + $0x37] sm:$0xff]
  %v438 = vld [vmem:[%s434 + $0x4f] sm:$0xff]
  %v439 = vld [vmem:[%s434 + $0x67] sm:$0xff]
  %v440 = vld [vmem:[%s434 + $0x7f] sm:$0xff]
  %v441 = vld [vmem:[%s434 + $0x97] sm:$0xff]
  %v442 = vld [vmem:[%s434 + $0xaf] sm:$0xff]
  %v443 = vld [vmem:[%s434 + $0x8] sm:$0xff]
  %v444 = vld [vmem:[%s434 + $0x20] sm:$0xff]
  %v445 = vld [vmem:[%s434 + $0x38] sm:$0xff]
  %v446 = vld [vmem:[%s434 + $0x50] sm:$0xff]
  %v447 = vld [vmem:[%s434 + $0x68] sm:$0xff]
  %v448 = vld [vmem:[%s434 + $0x80] sm:$0xff]
  %v449 = vld [vmem:[%s434 + $0x98] sm:$0xff]
  %v450 = vld [vmem:[%s434 + $0xb0] sm:$0xff]
  %v451 = vld [vmem:[%s434 + $0x9] sm:$0xff]
  %v452 = vld [vmem:[%s434 + $0x21] sm:$0xff]
  %v453 = vld [vmem:[%s434 + $0x39] sm:$0xff]
  %v454 = vld [vmem:[%s434 + $0x51] sm:$0xff]
  %v455 = vld [vmem:[%s434 + $0x69] sm:$0xff]
  %v456 = vld [vmem:[%s434 + $0x81] sm:$0xff]
  %v457 = vld [vmem:[%s434 + $0x99] sm:$0xff]
  %v458 = vld [vmem:[%s434 + $0xb1] sm:$0xff]
  %v459 = vld [vmem:[%s2] sm:$0xff]
  %v460 = vld [vmem:[%s2 + $0x8] sm:$0xff]
  %v461 = vld [vmem:[%s2 + $0x10] sm:$0xff]
  %v462 = vld [vmem:[%s2 + $0x18] sm:$0xff]
  %v463 = vld [vmem:[%s2 + $0x20] sm:$0xff]
  %v464 = vld [vmem:[%s2 + $0x28] sm:$0xff]
  %v465 = vld [vmem:[%s2 + $0x30] sm:$0xff]
  %v466 = vld [vmem:[%s2 + $0x38] sm:$0xff]
  %v467 = vld [vmem:[%s2 + $0x40] sm:$0xff]
  %v468 = vld [vmem:[%s2 + $0x48] sm:$0xff]
  %v469 = vld [vmem:[%s2 + $0x50] sm:$0xff]
  %v470 = vld [vmem:[%s2 + $0x58] sm:$0xff]
  %v471 = vld [vmem:[%s2 + $0x60] sm:$0xff]
  %v472 = vld [vmem:[%s2 + $0x68] sm:$0xff]
  %v473 = vld [vmem:[%s2 + $0x70] sm:$0xff]
  %v474 = vld [vmem:[%s2 + $0x78] sm:$0xff]
  %v475 = vld [vmem:[%s2 + $0x80] sm:$0xff]
  %v476 = vld [vmem:[%s2 + $0x88] sm:$0xff]
  %v477 = vld [vmem:[%s2 + $0x90] sm:$0xff]
  %v478 = vld [vmem:[%s2 + $0x98] sm:$0xff]
  %v479 = vld [vmem:[%s2 + $0xa0] sm:$0xff]
  %v480 = vld [vmem:[%s2 + $0xa8] sm:$0xff]
  %v481 = vld [vmem:[%s2 + $0xb0] sm:$0xff]
  %v482 = vld [vmem:[%s2 + $0xb8] sm:$0xff]
  %v483 = vld [vmem:[%s2 + $0xc0] sm:$0xff]
  %v484 = vld [vmem:[%s2 + $0xc8] sm:$0xff]
  %v485 = vld [vmem:[%s2 + $0xd0] sm:$0xff]
  %v486 = vld [vmem:[%s2 + $0xd8] sm:$0xff]
  %v487 = vld [vmem:[%s2 + $0xe0] sm:$0xff]
  %v488 = vld [vmem:[%s2 + $0xe8] sm:$0xff]
  %v489 = vld [vmem:[%s2 + $0xf0] sm:$0xff]
  %v490 = vld [vmem:[%s2 + $0xf8] sm:$0xff]
  %v491 = vld [vmem:[%s2 + $0x100] sm:$0xff]
  %v492 = vld [vmem:[%s2 + $0x108] sm:$0xff]
  %v493 = vld [vmem:[%s2 + $0x110] sm:$0xff]
  %v494 = vld [vmem:[%s2 + $0x118] sm:$0xff]
  %v495 = vld [vmem:[%s2 + $0x120] sm:$0xff]
  %v496 = vld [vmem:[%s2 + $0x128] sm:$0xff]
  %v497 = vld [vmem:[%s2 + $0x130] sm:$0xff]
  %v498 = vld [vmem:[%s2 + $0x138] sm:$0xff]
  %v499 = vld [vmem:[%s2 + $0x140] sm:$0xff]
  %v500 = vld [vmem:[%s2 + $0x148] sm:$0xff]
  %v501 = vld [vmem:[%s2 + $0x150] sm:$0xff]
  %v502 = vld [vmem:[%s2 + $0x158] sm:$0xff]
  %v503 = vld [vmem:[%s2 + $0x160] sm:$0xff]
  %v504 = vld [vmem:[%s2 + $0x168] sm:$0xff]
  %v505 = vld [vmem:[%s2 + $0x170] sm:$0xff]
  %v506 = vld [vmem:[%s2 + $0x178] sm:$0xff]
  %v507 = vld [vmem:[%s287 + $0x7] sm:$0xff]
  %v508 = vld [vmem:[%s287 + $0x1f] sm:$0xff]
  %v509 = vld [vmem:[%s287 + $0x37] sm:$0xff]
  %v510 = vld [vmem:[%s287 + $0x4f] sm:$0xff]
  %v511 = vld [vmem:[%s287 + $0x67] sm:$0xff]
  %v512 = vld [vmem:[%s287 + $0x7f] sm:$0xff]
  %v513 = vld [vmem:[%s287 + $0x97] sm:$0xff]
  %v514 = vld [vmem:[%s287 + $0xaf] sm:$0xff]
  %v515 = vld [vmem:[%s287 + $0x8] sm:$0xff]
  %v516 = vld [vmem:[%s287 + $0x20] sm:$0xff]
  %v517 = vld [vmem:[%s287 + $0x38] sm:$0xff]
  %v518 = vld [vmem:[%s287 + $0x50] sm:$0xff]
  %v519 = vld [vmem:[%s287 + $0x68] sm:$0xff]
  %v520 = vld [vmem:[%s287 + $0x80] sm:$0xff]
  %v521 = vld [vmem:[%s287 + $0x98] sm:$0xff]
  %v522 = vld [vmem:[%s287 + $0xb0] sm:$0xff]
  %v523 = vld [vmem:[%s287 + $0x9] sm:$0xff]
  %v524 = vld [vmem:[%s287 + $0x21] sm:$0xff]
  %v525 = vld [vmem:[%s287 + $0x39] sm:$0xff]
  %v526 = vld [vmem:[%s287 + $0x51] sm:$0xff]
  %v527 = vld [vmem:[%s287 + $0x69] sm:$0xff]
  %v528 = vld [vmem:[%s287 + $0x81] sm:$0xff]
  %v529 = vld [vmem:[%s287 + $0x99] sm:$0xff]
  %v530 = vld [vmem:[%s287 + $0xb1] sm:$0xff]
  %v531 = vld [vmem:[%s401 + $0x7] sm:$0xff]
  %v532 = vld [vmem:[%s401 + $0x1f] sm:$0xff]
  %v533 = vld [vmem:[%s401 + $0x37] sm:$0xff]
  %v534 = vld [vmem:[%s401 + $0x4f] sm:$0xff]
  %v535 = vld [vmem:[%s401 + $0x67] sm:$0xff]
  %v536 = vld [vmem:[%s401 + $0x7f] sm:$0xff]
  %v537 = vld [vmem:[%s401 + $0x97] sm:$0xff]
  %v538 = vld [vmem:[%s401 + $0xaf] sm:$0xff]
  %v539 = vld [vmem:[%s401 + $0x8] sm:$0xff]
  %v540 = vld [vmem:[%s401 + $0x20] sm:$0xff]
  %v541 = vld [vmem:[%s401 + $0x38] sm:$0xff]
  %v542 = vld [vmem:[%s401 + $0x50] sm:$0xff]
  %v543 = vld [vmem:[%s401 + $0x68] sm:$0xff]
  %v544 = vld [vmem:[%s401 + $0x80] sm:$0xff]
  %v545 = vld [vmem:[%s401 + $0x98] sm:$0xff]
  %v546 = vld [vmem:[%s401 + $0xb0] sm:$0xff]
  %v547 = vld [vmem:[%s401 + $0x9] sm:$0xff]
  %v548 = vld [vmem:[%s401 + $0x21] sm:$0xff]
  %v549 = vld [vmem:[%s401 + $0x39] sm:$0xff]
  %v550 = vld [vmem:[%s401 + $0x51] sm:$0xff]
  %v551 = vld [vmem:[%s401 + $0x69] sm:$0xff]
  %v552 = vld [vmem:[%s401 + $0x81] sm:$0xff]
  %v553 = vld [vmem:[%s401 + $0x99] sm:$0xff]
  %v554 = vld [vmem:[%s401 + $0xb1] sm:$0xff]
  %s555 = scalar_lea.vmem %s2, 384
  %v556 = vld [vmem:[%s555] sm:$0xff]
  %v557 = vld [vmem:[%s555 + $0x8] sm:$0xff]
  %v558 = vld [vmem:[%s555 + $0x10] sm:$0xff]
  %v559 = vld [vmem:[%s555 + $0x18] sm:$0xff]
  %v560 = vld [vmem:[%s555 + $0x20] sm:$0xff]
  %v561 = vld [vmem:[%s555 + $0x28] sm:$0xff]
  %v562 = vld [vmem:[%s555 + $0x30] sm:$0xff]
  %v563 = vld [vmem:[%s555 + $0x38] sm:$0xff]
  %v564 = vld [vmem:[%s555 + $0x40] sm:$0xff]
  %v565 = vld [vmem:[%s555 + $0x48] sm:$0xff]
  %v566 = vld [vmem:[%s555 + $0x50] sm:$0xff]
  %v567 = vld [vmem:[%s555 + $0x58] sm:$0xff]
  %v568 = vld [vmem:[%s555 + $0x60] sm:$0xff]
  %v569 = vld [vmem:[%s555 + $0x68] sm:$0xff]
  %v570 = vld [vmem:[%s555 + $0x70] sm:$0xff]
  %v571 = vld [vmem:[%s555 + $0x78] sm:$0xff]
  %v572 = vld [vmem:[%s555 + $0x80] sm:$0xff]
  %v573 = vld [vmem:[%s555 + $0x88] sm:$0xff]
  %v574 = vld [vmem:[%s555 + $0x90] sm:$0xff]
  %v575 = vld [vmem:[%s555 + $0x98] sm:$0xff]
  %v576 = vld [vmem:[%s555 + $0xa0] sm:$0xff]
  %v577 = vld [vmem:[%s555 + $0xa8] sm:$0xff]
  %v578 = vld [vmem:[%s555 + $0xb0] sm:$0xff]
  %v579 = vld [vmem:[%s555 + $0xb8] sm:$0xff]
  %v580 = vld [vmem:[%s555 + $0xc0] sm:$0xff]
  %v581 = vld [vmem:[%s555 + $0xc8] sm:$0xff]
  %v582 = vld [vmem:[%s555 + $0xd0] sm:$0xff]
  %v583 = vld [vmem:[%s555 + $0xd8] sm:$0xff]
  %v584 = vld [vmem:[%s555 + $0xe0] sm:$0xff]
  %v585 = vld [vmem:[%s555 + $0xe8] sm:$0xff]
  %v586 = vld [vmem:[%s555 + $0xf0] sm:$0xff]
  %v587 = vld [vmem:[%s555 + $0xf8] sm:$0xff]
  %v588 = vld [vmem:[%s555 + $0x100] sm:$0xff]
  %v589 = vld [vmem:[%s555 + $0x108] sm:$0xff]
  %v590 = vld [vmem:[%s555 + $0x110] sm:$0xff]
  %v591 = vld [vmem:[%s555 + $0x118] sm:$0xff]
  %v592 = vld [vmem:[%s555 + $0x120] sm:$0xff]
  %v593 = vld [vmem:[%s555 + $0x128] sm:$0xff]
  %v594 = vld [vmem:[%s555 + $0x130] sm:$0xff]
  %v595 = vld [vmem:[%s555 + $0x138] sm:$0xff]
  %v596 = vld [vmem:[%s555 + $0x140] sm:$0xff]
  %v597 = vld [vmem:[%s555 + $0x148] sm:$0xff]
  %v598 = vld [vmem:[%s555 + $0x150] sm:$0xff]
  %v599 = vld [vmem:[%s555 + $0x158] sm:$0xff]
  %v600 = vld [vmem:[%s555 + $0x160] sm:$0xff]
  %v601 = vld [vmem:[%s555 + $0x168] sm:$0xff]
  %v602 = vld [vmem:[%s555 + $0x170] sm:$0xff]
  %v603 = vld [vmem:[%s555 + $0x178] sm:$0xff]
  %604 = vmatprep.subr.mxu0 0.0
  %605 = vmatpush1.msra.mxu0 %v556
  %606 = vmatprep.subr.mxu0 0.0
  %607 = vmatpush1.msra.mxu0 %v557
  %608 = vmatprep.subr.mxu0 0.0
  %609 = vmatpush1.msra.mxu0 %v558
  %610 = vmatprep.subr.mxu0 0.0
  %611 = vmatpush1.msra.mxu0 %v559
  %612 = vmatprep.subr.mxu0 0.0
  %613 = vmatpush1.msra.mxu0 %v560
  %614 = vmatprep.subr.mxu0 0.0
  %615 = vmatpush1.msra.mxu0 %v561
  %616 = vmatprep.subr.mxu0 0.0
  %617 = vmatpush1.msra.mxu0 %v562
  %618 = vmatprep.subr.mxu0 0.0
  %619 = vmatpush1.msra.mxu0 %v563
  %620 = vmatprep.subr.mxu0 0.0
  %621 = vmatpush1.msra.mxu0 %v564
  %622 = vmatprep.subr.mxu0 0.0
  %623 = vmatpush1.msra.mxu0 %v565
  %624 = vmatprep.subr.mxu0 0.0
  %625 = vmatpush1.msra.mxu0 %v566
  %626 = vmatprep.subr.mxu0 0.0
  %627 = vmatpush1.msra.mxu0 %v567
  %628 = vmatprep.subr.mxu0 0.0
  %629 = vmatpush1.msra.mxu0 %v568
  %630 = vmatprep.subr.mxu0 0.0
  %631 = vmatpush1.msra.mxu0 %v569
  %632 = vmatprep.subr.mxu0 0.0
  %633 = vmatpush1.msra.mxu0 %v570
  %634 = vmatprep.subr.mxu0 0.0
  %635 = vmatpush1.msra.mxu0 %v571
  %636 = vmatprep.subr.mxu0 0.0
  %637 = vmatpush1.msra.mxu0 %v572
  %638 = vmatprep.subr.mxu0 0.0
  %639 = vmatpush1.msra.mxu0 %v573
  %640 = vmatprep.subr.mxu0 0.0
  %641 = vmatpush1.msra.mxu0 %v574
  %642 = vmatprep.subr.mxu0 0.0
  %643 = vmatpush1.msra.mxu0 %v575
  %644 = vmatprep.subr.mxu0 0.0
  %645 = vmatpush1.msra.mxu0 %v576
  %646 = vmatprep.subr.mxu0 0.0
  %647 = vmatpush1.msra.mxu0 %v577
  %648 = vmatprep.subr.mxu0 0.0
  %649 = vmatpush1.msra.mxu0 %v578
  %650 = vmatprep.subr.mxu0 0.0
  %651 = vmatpush1.msra.mxu0 %v579
  %652 = vmatprep.subr.mxu0 0.0
  %653 = vmatpush1.msra.mxu0 %v580
  %654 = vmatprep.subr.mxu0 0.0
  %655 = vmatpush1.msra.mxu0 %v581
  %656 = vmatprep.subr.mxu0 0.0
  %657 = vmatpush1.msra.mxu0 %v582
  %658 = vmatprep.subr.mxu0 0.0
  %659 = vmatpush1.msra.mxu0 %v583
  %660 = vmatprep.subr.mxu0 0.0
  %661 = vmatpush1.msra.mxu0 %v584
  %662 = vmatprep.subr.mxu0 0.0
  %663 = vmatpush1.msra.mxu0 %v585
  %664 = vmatprep.subr.mxu0 0.0
  %665 = vmatpush1.msra.mxu0 %v586
  %666 = vmatprep.subr.mxu0 0.0
  %667 = vmatpush1.msra.mxu0 %v587
  %668 = vmatprep.mubr.f32.mxu0 %v515
  %669 = vmatmul.mubr.f32.gmra.mrb[0].mxu0 %v507
  %v670 = vpop.f32.mrb[0].mxu0
  %v671 = vadd.f32 0.0, %v670
  %v672 = vpop.f32.mrb[0].mxu0
  %673 = vmatprep.mubr.f32.mxu0 %v516
  %674 = vmatmul.mubr.f32.gmra.mrb[0].mxu0 %v508
  %v675 = vpop.f32.mrb[0].mxu0
  %v676 = vadd.f32 0.0, %v675
  %v677 = vpop.f32.mrb[0].mxu0
  %678 = vmatprep.mubr.f32.mxu0 %v517
  %679 = vmatmul.mubr.f32.gmra.mrb[0].mxu0 %v509
  %v680 = vpop.f32.mrb[0].mxu0
  %v681 = vadd.f32 0.0, %v680
  %v682 = vpop.f32.mrb[0].mxu0
  %683 = vmatprep.mubr.f32.mxu0 %v518
  %684 = vmatmul.mubr.f32.gmra.mrb[0].mxu0 %v510
  %v685 = vpop.f32.mrb[0].mxu0
  %v686 = vadd.f32 0.0, %v685
  %v687 = vpop.f32.mrb[0].mxu0
  %688 = vmatprep.mubr.f32.mxu0 %v519
  %689 = vmatmul.mubr.f32.gmra.mrb[0].mxu0 %v511
  %v690 = vpop.f32.mrb[0].mxu0
  %v691 = vadd.f32 0.0, %v690
  %v692 = vpop.f32.mrb[0].mxu0
  %693 = vmatprep.mubr.f32.mxu0 %v520
  %694 = vmatmul.mubr.f32.gmra.mrb[0].mxu0 %v512
  %v695 = vpop.f32.mrb[0].mxu0
  %v696 = vadd.f32 0.0, %v695
  %v697 = vpop.f32.mrb[0].mxu0
  %698 = vmatprep.mubr.f32.mxu0 %v521
  %699 = vmatmul.mubr.f32.gmra.mrb[0].mxu0 %v513
  %v700 = vpop.f32.mrb[0].mxu0
  %v701 = vadd.f32 0.0, %v700
  %v702 = vpop.f32.mrb[0].mxu0
  %703 = vmatprep.mubr.f32.mxu0 %v522
  %704 = vmatmul.mubr.f32.gmra.mrb[0].mxu0 %v514
  %v705 = vpop.f32.mrb[0].mxu0
  %v706 = vadd.f32 0.0, %v705
  %v707 = vpop.f32.mrb[0].mxu0
  %708 = vmatprep.mubr.f32.mxu0 %v539
  %709 = vmatmul.mubr.f32.gmra.mrb[0].mxu0 %v531
  %v710 = vpop.f32.mrb[0].mxu0
  %v711 = vadd.f32 0.0, %v710
  %v712 = vpop.f32.mrb[0].mxu0
  %713 = vmatprep.mubr.f32.mxu0 %v540
  %714 = vmatmul.mubr.f32.gmra.mrb[0].mxu0 %v532
  %v715 = vpop.f32.mrb[0].mxu0
  %v716 = vadd.f32 0.0, %v715
  %v717 = vpop.f32.mrb[0].mxu0
  %718 = vmatprep.mubr.f32.mxu0 %v541
  %719 = vmatmul.mubr.f32.gmra.mrb[0].mxu0 %v533
  %v720 = vpop.f32.mrb[0].mxu0
  %v721 = vadd.f32 0.0, %v720
  %v722 = vpop.f32.mrb[0].mxu0
  %723 = vmatprep.mubr.f32.mxu0 %v542
  %724 = vmatmul.mubr.f32.gmra.mrb[0].mxu0 %v534
  %v725 = vpop.f32.mrb[0].mxu0
  %v726 = vadd.f32 0.0, %v725
  %v727 = vpop.f32.mrb[0].mxu0
  %728 = vmatprep.mubr.f32.mxu0 %v543
  %729 = vmatmul.mubr.f32.gmra.mrb[0].mxu0 %v535
  %v730 = vpop.f32.mrb[0].mxu0
  %v731 = vadd.f32 0.0, %v730
  %v732 = vpop.f32.mrb[0].mxu0
  %733 = vmatprep.mubr.f32.mxu0 %v544
  %734 = vmatmul.mubr.f32.gmra.mrb[0].mxu0 %v536
  %v735 = vpop.f32.mrb[0].mxu0
  %v736 = vadd.f32 0.0, %v735
  %v737 = vpop.f32.mrb[0].mxu0
  %738 = vmatprep.mubr.f32.mxu0 %v545
  %739 = vmatmul.mubr.f32.gmra.mrb[0].mxu0 %v537
  %v740 = vpop.f32.mrb[0].mxu0
  %v741 = vadd.f32 0.0, %v740
  %v742 = vpop.f32.mrb[0].mxu0
  %743 = vmatprep.mubr.f32.mxu0 %v546
  %744 = vmatmul.mubr.f32.gmra.mrb[0].mxu0 %v538
  %v745 = vpop.f32.mrb[0].mxu0
  %v746 = vadd.f32 0.0, %v745
  %v747 = vpop.f32.mrb[0].mxu0
  %748 = vdwg.mxu0
  %749 = vmatprep.subr.mxu0 0.0
  %750 = vmatpush1.msra.mxu0 %v588
  %751 = vmatprep.subr.mxu0 0.0
  %752 = vmatpush1.msra.mxu0 %v589
  %753 = vmatprep.subr.mxu0 0.0
  %754 = vmatpush1.msra.mxu0 %v590
  %755 = vmatprep.subr.mxu0 0.0
  %756 = vmatpush1.msra.mxu0 %v591
  %757 = vmatprep.subr.mxu0 0.0
  %758 = vmatpush1.msra.mxu0 %v592
  %759 = vmatprep.subr.mxu0 0.0
  %760 = vmatpush1.msra.mxu0 %v593
  %761 = vmatprep.subr.mxu0 0.0
  %762 = vmatpush1.msra.mxu0 %v594
  %763 = vmatprep.subr.mxu0 0.0
  %764 = vmatpush1.msra.mxu0 %v595
  %765 = vmatprep.subr.mxu0 0.0
  %766 = vmatpush1.msra.mxu0 %v596
  %767 = vmatprep.subr.mxu0 0.0
  %768 = vmatpush1.msra.mxu0 %v597
  %769 = vmatprep.subr.mxu0 0.0
  %770 = vmatpush1.msra.mxu0 %v598
  %771 = vmatprep.subr.mxu0 0.0
  %772 = vmatpush1.msra.mxu0 %v599
  %773 = vmatprep.subr.mxu0 0.0
  %774 = vmatpush1.msra.mxu0 %v600
  %775 = vmatprep.subr.mxu0 0.0
  %776 = vmatpush1.msra.mxu0 %v601
  %777 = vmatprep.subr.mxu0 0.0
  %778 = vmatpush1.msra.mxu0 %v602
  %779 = vmatprep.subr.mxu0 0.0
  %780 = vmatpush1.msra.mxu0 %v603
  %781 = vmatprep.subr.mxu0 0.0
  %782 = vmatpush1.msra.mxu0 0.0
  %783 = vmatprep.subr.mxu0 0.0
  %784 = vmatpush1.msra.mxu0 0.0
  %785 = vmatprep.subr.mxu0 0.0
  %786 = vmatpush1.msra.mxu0 0.0
  %787 = vmatprep.subr.mxu0 0.0
  %788 = vmatpush1.msra.mxu0 0.0
  %789 = vmatprep.subr.mxu0 0.0
  %790 = vmatpush1.msra.mxu0 0.0
  %791 = vmatprep.subr.mxu0 0.0
  %792 = vmatpush1.msra.mxu0 0.0
  %793 = vmatprep.subr.mxu0 0.0
  %794 = vmatpush1.msra.mxu0 0.0
  %795 = vmatprep.subr.mxu0 0.0
  %796 = vmatpush1.msra.mxu0 0.0
  %797 = vmatprep.subr.mxu0 0.0
  %798 = vmatpush1.msra.mxu0 0.0
  %799 = vmatprep.subr.mxu0 0.0
  %800 = vmatpush1.msra.mxu0 0.0
  %801 = vmatprep.subr.mxu0 0.0
  %802 = vmatpush1.msra.mxu0 0.0
  %803 = vmatprep.subr.mxu0 0.0
  %804 = vmatpush1.msra.mxu0 0.0
  %805 = vmatprep.subr.mxu0 0.0
  %806 = vmatpush1.msra.mxu0 0.0
  %807 = vmatprep.subr.mxu0 0.0
  %808 = vmatpush1.msra.mxu0 0.0
  %809 = vmatprep.subr.mxu0 0.0
  %810 = vmatpush1.msra.mxu0 0.0
  %811 = vmatprep.subr.mxu0 0.0
  %812 = vmatpush1.msra.mxu0 0.0
  %813 = vmatprep.mubr.f32.mxu0 0.0
  %814 = vmatmul.mubr.f32.gmra.mrb[0].mxu0 %v523
  %v815 = vpop.f32.mrb[0].mxu0
  %v816 = vadd.f32 %v671, %v815
  %v817 = vpop.f32.mrb[0].mxu0
  %818 = vmatprep.mubr.f32.mxu0 0.0
  %819 = vmatmul.mubr.f32.gmra.mrb[0].mxu0 %v524
  %v820 = vpop.f32.mrb[0].mxu0
  %v821 = vadd.f32 %v676, %v820
  %v822 = vpop.f32.mrb[0].mxu0
  %823 = vmatprep.mubr.f32.mxu0 0.0
  %824 = vmatmul.mubr.f32.gmra.mrb[0].mxu0 %v525
  %v825 = vpop.f32.mrb[0].mxu0
  %v826 = vadd.f32 %v681, %v825
  %v827 = vpop.f32.mrb[0].mxu0
  %828 = vmatprep.mubr.f32.mxu0 0.0
  %829 = vmatmul.mubr.f32.gmra.mrb[0].mxu0 %v526
  %v830 = vpop.f32.mrb[0].mxu0
  %v831 = vadd.f32 %v686, %v830
  %v832 = vpop.f32.mrb[0].mxu0
  %833 = vmatprep.mubr.f32.mxu0 0.0
  %834 = vmatmul.mubr.f32.gmra.mrb[0].mxu0 %v527
  %v835 = vpop.f32.mrb[0].mxu0
  %v836 = vadd.f32 %v691, %v835
  %v837 = vpop.f32.mrb[0].mxu0
  %838 = vmatprep.mubr.f32.mxu0 0.0
  %839 = vmatmul.mubr.f32.gmra.mrb[0].mxu0 %v528
  %v840 = vpop.f32.mrb[0].mxu0
  %v841 = vadd.f32 %v696, %v840
  %v842 = vpop.f32.mrb[0].mxu0
  %843 = vmatprep.mubr.f32.mxu0 0.0
  %844 = vmatmul.mubr.f32.gmra.mrb[0].mxu0 %v529
  %v845 = vpop.f32.mrb[0].mxu0
  %v846 = vadd.f32 %v701, %v845
  %v847 = vpop.f32.mrb[0].mxu0
  %848 = vmatprep.mubr.f32.mxu0 0.0
  %849 = vmatmul.mubr.f32.gmra.mrb[0].mxu0 %v530
  %v850 = vpop.f32.mrb[0].mxu0
  %v851 = vadd.f32 %v706, %v850
  %v852 = vpop.f32.mrb[0].mxu0
  %853 = vmatprep.mubr.f32.mxu0 0.0
  %854 = vmatmul.mubr.f32.gmra.mrb[0].mxu0 %v547
  %v855 = vpop.f32.mrb[0].mxu0
  %v856 = vadd.f32 %v711, %v855
  %v857 = vpop.f32.mrb[0].mxu0
  %858 = vmatprep.mubr.f32.mxu0 0.0
  %859 = vmatmul.mubr.f32.gmra.mrb[0].mxu0 %v548
  %v860 = vpop.f32.mrb[0].mxu0
  %v861 = vadd.f32 %v716, %v860
  %v862 = vpop.f32.mrb[0].mxu0
  %863 = vmatprep.mubr.f32.mxu0 0.0
  %864 = vmatmul.mubr.f32.gmra.mrb[0].mxu0 %v549
  %v865 = vpop.f32.mrb[0].mxu0
  %v866 = vadd.f32 %v721, %v865
  %v867 = vpop.f32.mrb[0].mxu0
  %868 = vmatprep.mubr.f32.mxu0 0.0
  %869 = vmatmul.mubr.f32.gmra.mrb[0].mxu0 %v550
  %v870 = vpop.f32.mrb[0].mxu0
  %v871 = vadd.f32 %v726, %v870
  %v872 = vpop.f32.mrb[0].mxu0
  %873 = vmatprep.mubr.f32.mxu0 0.0
  %874 = vmatmul.mubr.f32.gmra.mrb[0].mxu0 %v551
  %v875 = vpop.f32.mrb[0].mxu0
  %v876 = vadd.f32 %v731, %v875
  %v877 = vpop.f32.mrb[0].mxu0
  %878 = vmatprep.mubr.f32.mxu0 0.0
  %879 = vmatmul.mubr.f32.gmra.mrb[0].mxu0 %v552
  %v880 = vpop.f32.mrb[0].mxu0
  %v881 = vadd.f32 %v736, %v880
  %v882 = vpop.f32.mrb[0].mxu0
  %883 = vmatprep.mubr.f32.mxu0 0.0
  %884 = vmatmul.mubr.f32.gmra.mrb[0].mxu0 %v553
  %v885 = vpop.f32.mrb[0].mxu0
  %v886 = vadd.f32 %v741, %v885
  %v887 = vpop.f32.mrb[0].mxu0
  %888 = vmatprep.mubr.f32.mxu0 0.0
  %889 = vmatmul.mubr.f32.gmra.mrb[0].mxu0 %v554
  %v890 = vpop.f32.mrb[0].mxu0
  %v891 = vadd.f32 %v746, %v890
  %v892 = vpop.f32.mrb[0].mxu0
  %893 = vdwg.mxu0
  %894 = vmatprep.subr.mxu0 0.0
  %895 = vmatpush1.msra.mxu0 %v459
  %896 = vmatprep.subr.mxu0 0.0
  %897 = vmatpush1.msra.mxu0 %v460
  %898 = vmatprep.subr.mxu0 0.0
  %899 = vmatpush1.msra.mxu0 %v461
  %900 = vmatprep.subr.mxu0 0.0
  %901 = vmatpush1.msra.mxu0 %v462
  %902 = vmatprep.subr.mxu0 0.0
  %903 = vmatpush1.msra.mxu0 %v463
  %904 = vmatprep.subr.mxu0 0.0
  %905 = vmatpush1.msra.mxu0 %v464
  %906 = vmatprep.subr.mxu0 0.0
  %907 = vmatpush1.msra.mxu0 %v465
  %908 = vmatprep.subr.mxu0 0.0
  %909 = vmatpush1.msra.mxu0 %v466
  %910 = vmatprep.subr.mxu0 0.0
  %911 = vmatpush1.msra.mxu0 %v467
  %912 = vmatprep.subr.mxu0 0.0
  %913 = vmatpush1.msra.mxu0 %v468
  %914 = vmatprep.subr.mxu0 0.0
  %915 = vmatpush1.msra.mxu0 %v469
  %916 = vmatprep.subr.mxu0 0.0
  %917 = vmatpush1.msra.mxu0 %v470
  %918 = vmatprep.subr.mxu0 0.0
  %919 = vmatpush1.msra.mxu0 %v471
  %920 = vmatprep.subr.mxu0 0.0
  %921 = vmatpush1.msra.mxu0 %v472
  %922 = vmatprep.subr.mxu0 0.0
  %923 = vmatpush1.msra.mxu0 %v473
  %924 = vmatprep.subr.mxu0 0.0
  %925 = vmatpush1.msra.mxu0 %v474
  %926 = vmatprep.subr.mxu0 0.0
  %927 = vmatpush1.msra.mxu0 %v475
  %928 = vmatprep.subr.mxu0 0.0
  %929 = vmatpush1.msra.mxu0 %v476
  %930 = vmatprep.subr.mxu0 0.0
  %931 = vmatpush1.msra.mxu0 %v477
  %932 = vmatprep.subr.mxu0 0.0
  %933 = vmatpush1.msra.mxu0 %v478
  %934 = vmatprep.subr.mxu0 0.0
  %935 = vmatpush1.msra.mxu0 %v479
  %936 = vmatprep.subr.mxu0 0.0
  %937 = vmatpush1.msra.mxu0 %v480
  %938 = vmatprep.subr.mxu0 0.0
  %939 = vmatpush1.msra.mxu0 %v481
  %940 = vmatprep.subr.mxu0 0.0
  %941 = vmatpush1.msra.mxu0 %v482
  %942 = vmatprep.subr.mxu0 0.0
  %943 = vmatpush1.msra.mxu0 %v483
  %944 = vmatprep.subr.mxu0 0.0
  %945 = vmatpush1.msra.mxu0 %v484
  %946 = vmatprep.subr.mxu0 0.0
  %947 = vmatpush1.msra.mxu0 %v485
  %948 = vmatprep.subr.mxu0 0.0
  %949 = vmatpush1.msra.mxu0 %v486
  %950 = vmatprep.subr.mxu0 0.0
  %951 = vmatpush1.msra.mxu0 %v487
  %952 = vmatprep.subr.mxu0 0.0
  %953 = vmatpush1.msra.mxu0 %v488
  %954 = vmatprep.subr.mxu0 0.0
  %955 = vmatpush1.msra.mxu0 %v489
  %956 = vmatprep.subr.mxu0 0.0
  %957 = vmatpush1.msra.mxu0 %v490
  %958 = vmatprep.mubr.f32.mxu0 %v418
  %959 = vmatmul.mubr.f32.gmra.mrb[0].mxu0 %v410
  %v960 = vpop.f32.mrb[0].mxu0
  %v961 = vadd.f32 %v816, %v960
  %v962 = vpop.f32.mrb[0].mxu0
  %963 = vmatprep.mubr.f32.mxu0 %v419
  %964 = vmatmul.mubr.f32.gmra.mrb[0].mxu0 %v411
  %v965 = vpop.f32.mrb[0].mxu0
  %v966 = vadd.f32 %v821, %v965
  %v967 = vpop.f32.mrb[0].mxu0
  %968 = vmatprep.mubr.f32.mxu0 %v420
  %969 = vmatmul.mubr.f32.gmra.mrb[0].mxu0 %v412
  %v970 = vpop.f32.mrb[0].mxu0
  %v971 = vadd.f32 %v826, %v970
  %v972 = vpop.f32.mrb[0].mxu0
  %973 = vmatprep.mubr.f32.mxu0 %v421
  %974 = vmatmul.mubr.f32.gmra.mrb[0].mxu0 %v413
  %v975 = vpop.f32.mrb[0].mxu0
  %v976 = vadd.f32 %v831, %v975
  %v977 = vpop.f32.mrb[0].mxu0
  %978 = vmatprep.mubr.f32.mxu0 %v422
  %979 = vmatmul.mubr.f32.gmra.mrb[0].mxu0 %v414
  %v980 = vpop.f32.mrb[0].mxu0
  %v981 = vadd.f32 %v836, %v980
  %v982 = vpop.f32.mrb[0].mxu0
  %983 = vmatprep.mubr.f32.mxu0 %v423
  %984 = vmatmul.mubr.f32.gmra.mrb[0].mxu0 %v415
  %v985 = vpop.f32.mrb[0].mxu0
  %v986 = vadd.f32 %v841, %v985
  %v987 = vpop.f32.mrb[0].mxu0
  %988 = vmatprep.mubr.f32.mxu0 %v424
  %989 = vmatmul.mubr.f32.gmra.mrb[0].mxu0 %v416
  %v990 = vpop.f32.mrb[0].mxu0
  %v991 = vadd.f32 %v846, %v990
  %v992 = vpop.f32.mrb[0].mxu0
  %993 = vmatprep.mubr.f32.mxu0 %v425
  %994 = vmatmul.mubr.f32.gmra.mrb[0].mxu0 %v417
  %v995 = vpop.f32.mrb[0].mxu0
  %v996 = vadd.f32 %v851, %v995
  %v997 = vpop.f32.mrb[0].mxu0
  %998 = vmatprep.mubr.f32.mxu0 %v443
  %999 = vmatmul.mubr.f32.gmra.mrb[0].mxu0 %v435
  %v1000 = vpop.f32.mrb[0].mxu0
  %v1001 = vadd.f32 %v856, %v1000
  %v1002 = vpop.f32.mrb[0].mxu0
  %1003 = vmatprep.mubr.f32.mxu0 %v444
  %1004 = vmatmul.mubr.f32.gmra.mrb[0].mxu0 %v436
  %v1005 = vpop.f32.mrb[0].mxu0
  %v1006 = vadd.f32 %v861, %v1005
  %v1007 = vpop.f32.mrb[0].mxu0
  %1008 = vmatprep.mubr.f32.mxu0 %v445
  %1009 = vmatmul.mubr.f32.gmra.mrb[0].mxu0 %v437
  %v1010 = vpop.f32.mrb[0].mxu0
  %v1011 = vadd.f32 %v866, %v1010
  %v1012 = vpop.f32.mrb[0].mxu0
  %1013 = vmatprep.mubr.f32.mxu0 %v446
  %1014 = vmatmul.mubr.f32.gmra.mrb[0].mxu0 %v438
  %v1015 = vpop.f32.mrb[0].mxu0
  %v1016 = vadd.f32 %v871, %v1015
  %v1017 = vpop.f32.mrb[0].mxu0
  %1018 = vmatprep.mubr.f32.mxu0 %v447
  %1019 = vmatmul.mubr.f32.gmra.mrb[0].mxu0 %v439
  %v1020 = vpop.f32.mrb[0].mxu0
  %v1021 = vadd.f32 %v876, %v1020
  %v1022 = vpop.f32.mrb[0].mxu0
  %1023 = vmatprep.mubr.f32.mxu0 %v448
  %1024 = vmatmul.mubr.f32.gmra.mrb[0].mxu0 %v440
  %v1025 = vpop.f32.mrb[0].mxu0
  %v1026 = vadd.f32 %v881, %v1025
  %v1027 = vpop.f32.mrb[0].mxu0
  %1028 = vmatprep.mubr.f32.mxu0 %v449
  %1029 = vmatmul.mubr.f32.gmra.mrb[0].mxu0 %v441
  %v1030 = vpop.f32.mrb[0].mxu0
  %v1031 = vadd.f32 %v886, %v1030
  %v1032 = vpop.f32.mrb[0].mxu0
  %1033 = vmatprep.mubr.f32.mxu0 %v450
  %1034 = vmatmul.mubr.f32.gmra.mrb[0].mxu0 %v442
  %v1035 = vpop.f32.mrb[0].mxu0
  %v1036 = vadd.f32 %v891, %v1035
  %v1037 = vpop.f32.mrb[0].mxu0
  %1038 = vdwg.mxu0
  %1039 = vmatprep.subr.mxu0 0.0
  %1040 = vmatpush1.msra.mxu0 %v491
  %1041 = vmatprep.subr.mxu0 0.0
  %1042 = vmatpush1.msra.mxu0 %v492
  %1043 = vmatprep.subr.mxu0 0.0
  %1044 = vmatpush1.msra.mxu0 %v493
  %1045 = vmatprep.subr.mxu0 0.0
  %1046 = vmatpush1.msra.mxu0 %v494
  %1047 = vmatprep.subr.mxu0 0.0
  %1048 = vmatpush1.msra.mxu0 %v495
  %1049 = vmatprep.subr.mxu0 0.0
  %1050 = vmatpush1.msra.mxu0 %v496
  %1051 = vmatprep.subr.mxu0 0.0
  %1052 = vmatpush1.msra.mxu0 %v497
  %1053 = vmatprep.subr.mxu0 0.0
  %1054 = vmatpush1.msra.mxu0 %v498
  %1055 = vmatprep.subr.mxu0 0.0
  %1056 = vmatpush1.msra.mxu0 %v499
  %1057 = vmatprep.subr.mxu0 0.0
  %1058 = vmatpush1.msra.mxu0 %v500
  %1059 = vmatprep.subr.mxu0 0.0
  %1060 = vmatpush1.msra.mxu0 %v501
  %1061 = vmatprep.subr.mxu0 0.0
  %1062 = vmatpush1.msra.mxu0 %v502
  %1063 = vmatprep.subr.mxu0 0.0
  %1064 = vmatpush1.msra.mxu0 %v503
  %1065 = vmatprep.subr.mxu0 0.0
  %1066 = vmatpush1.msra.mxu0 %v504
  %1067 = vmatprep.subr.mxu0 0.0
  %1068 = vmatpush1.msra.mxu0 %v505
  %1069 = vmatprep.subr.mxu0 0.0
  %1070 = vmatpush1.msra.mxu0 %v506
  %1071 = vmatprep.subr.mxu0 0.0
  %1072 = vmatpush1.msra.mxu0 0.0
  %1073 = vmatprep.subr.mxu0 0.0
  %1074 = vmatpush1.msra.mxu0 0.0
  %1075 = vmatprep.subr.mxu0 0.0
  %1076 = vmatpush1.msra.mxu0 0.0
  %1077 = vmatprep.subr.mxu0 0.0
  %1078 = vmatpush1.msra.mxu0 0.0
  %1079 = vmatprep.subr.mxu0 0.0
  %1080 = vmatpush1.msra.mxu0 0.0
  %1081 = vmatprep.subr.mxu0 0.0
  %1082 = vmatpush1.msra.mxu0 0.0
  %1083 = vmatprep.subr.mxu0 0.0
  %1084 = vmatpush1.msra.mxu0 0.0
  %1085 = vmatprep.subr.mxu0 0.0
  %1086 = vmatpush1.msra.mxu0 0.0
  %1087 = vmatprep.subr.mxu0 0.0
  %1088 = vmatpush1.msra.mxu0 0.0
  %1089 = vmatprep.subr.mxu0 0.0
  %1090 = vmatpush1.msra.mxu0 0.0
  %1091 = vmatprep.subr.mxu0 0.0
  %1092 = vmatpush1.msra.mxu0 0.0
  %1093 = vmatprep.subr.mxu0 0.0
  %1094 = vmatpush1.msra.mxu0 0.0
  %1095 = vmatprep.subr.mxu0 0.0
  %1096 = vmatpush1.msra.mxu0 0.0
  %1097 = vmatprep.subr.mxu0 0.0
  %1098 = vmatpush1.msra.mxu0 0.0
  %1099 = vmatprep.subr.mxu0 0.0
  %1100 = vmatpush1.msra.mxu0 0.0
  %1101 = vmatprep.subr.mxu0 0.0
  %1102 = vmatpush1.msra.mxu0 0.0
  %1103 = vmatprep.mubr.f32.mxu0 0.0
  %1104 = vmatmul.mubr.f32.gmra.mrb[0].mxu0 %v426
  %v1105 = vpop.f32.mrb[0].mxu0
  %v1106 = vadd.f32 %v961, %v1105
  %v1107 = vpop.f32.mrb[0].mxu0
  %1108 = vmatprep.mubr.f32.mxu0 0.0
  %1109 = vmatmul.mubr.f32.gmra.mrb[0].mxu0 %v427
  %v1110 = vpop.f32.mrb[0].mxu0
  %v1111 = vadd.f32 %v966, %v1110
  %v1112 = vpop.f32.mrb[0].mxu0
  %1113 = vmatprep.mubr.f32.mxu0 0.0
  %1114 = vmatmul.mubr.f32.gmra.mrb[0].mxu0 %v428
  %v1115 = vpop.f32.mrb[0].mxu0
  %v1116 = vadd.f32 %v971, %v1115
  %v1117 = vpop.f32.mrb[0].mxu0
  %1118 = vmatprep.mubr.f32.mxu0 0.0
  %1119 = vmatmul.mubr.f32.gmra.mrb[0].mxu0 %v429
  %v1120 = vpop.f32.mrb[0].mxu0
  %v1121 = vadd.f32 %v976, %v1120
  %v1122 = vpop.f32.mrb[0].mxu0
  %1123 = vmatprep.mubr.f32.mxu0 0.0
  %1124 = vmatmul.mubr.f32.gmra.mrb[0].mxu0 %v430
  %v1125 = vpop.f32.mrb[0].mxu0
  %v1126 = vadd.f32 %v981, %v1125
  %v1127 = vpop.f32.mrb[0].mxu0
  %1128 = vmatprep.mubr.f32.mxu0 0.0
  %1129 = vmatmul.mubr.f32.gmra.mrb[0].mxu0 %v431
  %v1130 = vpop.f32.mrb[0].mxu0
  %v1131 = vadd.f32 %v986, %v1130
  %v1132 = vpop.f32.mrb[0].mxu0
  %1133 = vmatprep.mubr.f32.mxu0 0.0
  %1134 = vmatmul.mubr.f32.gmra.mrb[0].mxu0 %v432
  %v1135 = vpop.f32.mrb[0].mxu0
  %v1136 = vadd.f32 %v991, %v1135
  %v1137 = vpop.f32.mrb[0].mxu0
  %1138 = vmatprep.mubr.f32.mxu0 0.0
  %1139 = vmatmul.mubr.f32.gmra.mrb[0].mxu0 %v433
  %v1140 = vpop.f32.mrb[0].mxu0
  %v1141 = vadd.f32 %v996, %v1140
  %v1142 = vpop.f32.mrb[0].mxu0
  %1143 = vmatprep.mubr.f32.mxu0 0.0
  %1144 = vmatmul.mubr.f32.gmra.mrb[0].mxu0 %v451
  %v1145 = vpop.f32.mrb[0].mxu0
  %v1146 = vadd.f32 %v1001, %v1145
  %v1147 = vpop.f32.mrb[0].mxu0
  %1148 = vmatprep.mubr.f32.mxu0 0.0
  %1149 = vmatmul.mubr.f32.gmra.mrb[0].mxu0 %v452
  %v1150 = vpop.f32.mrb[0].mxu0
  %v1151 = vadd.f32 %v1006, %v1150
  %v1152 = vpop.f32.mrb[0].mxu0
  %1153 = vmatprep.mubr.f32.mxu0 0.0
  %1154 = vmatmul.mubr.f32.gmra.mrb[0].mxu0 %v453
  %v1155 = vpop.f32.mrb[0].mxu0
  %v1156 = vadd.f32 %v1011, %v1155
  %v1157 = vpop.f32.mrb[0].mxu0
  %1158 = vmatprep.mubr.f32.mxu0 0.0
  %1159 = vmatmul.mubr.f32.gmra.mrb[0].mxu0 %v454
  %v1160 = vpop.f32.mrb[0].mxu0
  %v1161 = vadd.f32 %v1016, %v1160
  %v1162 = vpop.f32.mrb[0].mxu0
  %1163 = vmatprep.mubr.f32.mxu0 0.0
  %1164 = vmatmul.mubr.f32.gmra.mrb[0].mxu0 %v455
  %v1165 = vpop.f32.mrb[0].mxu0
  %v1166 = vadd.f32 %v1021, %v1165
  %v1167 = vpop.f32.mrb[0].mxu0
  %1168 = vmatprep.mubr.f32.mxu0 0.0
  %1169 = vmatmul.mubr.f32.gmra.mrb[0].mxu0 %v456
  %v1170 = vpop.f32.mrb[0].mxu0
  %v1171 = vadd.f32 %v1026, %v1170
  %v1172 = vpop.f32.mrb[0].mxu0
  %1173 = vmatprep.mubr.f32.mxu0 0.0
  %1174 = vmatmul.mubr.f32.gmra.mrb[0].mxu0 %v457
  %v1175 = vpop.f32.mrb[0].mxu0
  %v1176 = vadd.f32 %v1031, %v1175
  %v1177 = vpop.f32.mrb[0].mxu0
  %1178 = vmatprep.mubr.f32.mxu0 0.0
  %1179 = vmatmul.mubr.f32.gmra.mrb[0].mxu0 %v458
  %v1180 = vpop.f32.mrb[0].mxu0
  %v1181 = vadd.f32 %v1036, %v1180
  %v1182 = vpop.f32.mrb[0].mxu0
  %1183 = vdwg.mxu0
  %s1184 = scalar_lea.vmem [#allocation2], 48
  %v1185 = vld [vmem:[%s1184 + $0x7] sm:$0xff]
  %v1186 = vld [vmem:[%s1184 + $0x1f] sm:$0xff]
  %v1187 = vld [vmem:[%s1184 + $0x37] sm:$0xff]
  %v1188 = vld [vmem:[%s1184 + $0x4f] sm:$0xff]
  %v1189 = vld [vmem:[%s1184 + $0x67] sm:$0xff]
  %v1190 = vld [vmem:[%s1184 + $0x7f] sm:$0xff]
  %v1191 = vld [vmem:[%s1184 + $0x97] sm:$0xff]
  %v1192 = vld [vmem:[%s1184 + $0xaf] sm:$0xff]
  %v1193 = vld [vmem:[%s1184 + $0x8] sm:$0xff]
  %v1194 = vld [vmem:[%s1184 + $0x20] sm:$0xff]
  %v1195 = vld [vmem:[%s1184 + $0x38] sm:$0xff]
  %v1196 = vld [vmem:[%s1184 + $0x50] sm:$0xff]
  %v1197 = vld [vmem:[%s1184 + $0x68] sm:$0xff]
  %v1198 = vld [vmem:[%s1184 + $0x80] sm:$0xff]
  %v1199 = vld [vmem:[%s1184 + $0x98] sm:$0xff]
  %v1200 = vld [vmem:[%s1184 + $0xb0] sm:$0xff]
  %v1201 = vld [vmem:[%s1184 + $0x9] sm:$0xff]
  %v1202 = vld [vmem:[%s1184 + $0x21] sm:$0xff]
  %v1203 = vld [vmem:[%s1184 + $0x39] sm:$0xff]
  %v1204 = vld [vmem:[%s1184 + $0x51] sm:$0xff]
  %v1205 = vld [vmem:[%s1184 + $0x69] sm:$0xff]
  %v1206 = vld [vmem:[%s1184 + $0x81] sm:$0xff]
  %v1207 = vld [vmem:[%s1184 + $0x99] sm:$0xff]
  %v1208 = vld [vmem:[%s1184 + $0xb1] sm:$0xff]
  %s1209 = scalar_lea.vmem [#allocation2], 288
  %v1210 = vld [vmem:[%s1209 + $0x7] sm:$0xff]
  %v1211 = vld [vmem:[%s1209 + $0x1f] sm:$0xff]
  %v1212 = vld [vmem:[%s1209 + $0x37] sm:$0xff]
  %v1213 = vld [vmem:[%s1209 + $0x4f] sm:$0xff]
  %v1214 = vld [vmem:[%s1209 + $0x67] sm:$0xff]
  %v1215 = vld [vmem:[%s1209 + $0x7f] sm:$0xff]
  %v1216 = vld [vmem:[%s1209 + $0x97] sm:$0xff]
  %v1217 = vld [vmem:[%s1209 + $0xaf] sm:$0xff]
  %v1218 = vld [vmem:[%s1209 + $0x8] sm:$0xff]
  %v1219 = vld [vmem:[%s1209 + $0x20] sm:$0xff]
  %v1220 = vld [vmem:[%s1209 + $0x38] sm:$0xff]
  %v1221 = vld [vmem:[%s1209 + $0x50] sm:$0xff]
  %v1222 = vld [vmem:[%s1209 + $0x68] sm:$0xff]
  %v1223 = vld [vmem:[%s1209 + $0x80] sm:$0xff]
  %v1224 = vld [vmem:[%s1209 + $0x98] sm:$0xff]
  %v1225 = vld [vmem:[%s1209 + $0xb0] sm:$0xff]
  %v1226 = vld [vmem:[%s1209 + $0x9] sm:$0xff]
  %v1227 = vld [vmem:[%s1209 + $0x21] sm:$0xff]
  %v1228 = vld [vmem:[%s1209 + $0x39] sm:$0xff]
  %v1229 = vld [vmem:[%s1209 + $0x51] sm:$0xff]
  %v1230 = vld [vmem:[%s1209 + $0x69] sm:$0xff]
  %v1231 = vld [vmem:[%s1209 + $0x81] sm:$0xff]
  %v1232 = vld [vmem:[%s1209 + $0x99] sm:$0xff]
  %v1233 = vld [vmem:[%s1209 + $0xb1] sm:$0xff]
  %s1234 = scalar_lea.vmem %s2, 768
  %v1235 = vld [vmem:[%s1234] sm:$0xff]
  %v1236 = vld [vmem:[%s1234 + $0x8] sm:$0xff]
  %v1237 = vld [vmem:[%s1234 + $0x10] sm:$0xff]
  %v1238 = vld [vmem:[%s1234 + $0x18] sm:$0xff]
  %v1239 = vld [vmem:[%s1234 + $0x20] sm:$0xff]
  %v1240 = vld [vmem:[%s1234 + $0x28] sm:$0xff]
  %v1241 = vld [vmem:[%s1234 + $0x30] sm:$0xff]
  %v1242 = vld [vmem:[%s1234 + $0x38] sm:$0xff]
  %v1243 = vld [vmem:[%s1234 + $0x40] sm:$0xff]
  %v1244 = vld [vmem:[%s1234 + $0x48] sm:$0xff]
  %v1245 = vld [vmem:[%s1234 + $0x50] sm:$0xff]
  %v1246 = vld [vmem:[%s1234 + $0x58] sm:$0xff]
  %v1247 = vld [vmem:[%s1234 + $0x60] sm:$0xff]
  %v1248 = vld [vmem:[%s1234 + $0x68] sm:$0xff]
  %v1249 = vld [vmem:[%s1234 + $0x70] sm:$0xff]
  %v1250 = vld [vmem:[%s1234 + $0x78] sm:$0xff]
  %v1251 = vld [vmem:[%s1234 + $0x80] sm:$0xff]
  %v1252 = vld [vmem:[%s1234 + $0x88] sm:$0xff]
  %v1253 = vld [vmem:[%s1234 + $0x90] sm:$0xff]
  %v1254 = vld [vmem:[%s1234 + $0x98] sm:$0xff]
  %v1255 = vld [vmem:[%s1234 + $0xa0] sm:$0xff]
  %v1256 = vld [vmem:[%s1234 + $0xa8] sm:$0xff]
  %v1257 = vld [vmem:[%s1234 + $0xb0] sm:$0xff]
  %v1258 = vld [vmem:[%s1234 + $0xb8] sm:$0xff]
  %v1259 = vld [vmem:[%s1234 + $0xc0] sm:$0xff]
  %v1260 = vld [vmem:[%s1234 + $0xc8] sm:$0xff]
  %v1261 = vld [vmem:[%s1234 + $0xd0] sm:$0xff]
  %v1262 = vld [vmem:[%s1234 + $0xd8] sm:$0xff]
  %v1263 = vld [vmem:[%s1234 + $0xe0] sm:$0xff]
  %v1264 = vld [vmem:[%s1234 + $0xe8] sm:$0xff]
  %v1265 = vld [vmem:[%s1234 + $0xf0] sm:$0xff]
  %v1266 = vld [vmem:[%s1234 + $0xf8] sm:$0xff]
  %v1267 = vld [vmem:[%s1234 + $0x100] sm:$0xff]
  %v1268 = vld [vmem:[%s1234 + $0x108] sm:$0xff]
  %v1269 = vld [vmem:[%s1234 + $0x110] sm:$0xff]
  %v1270 = vld [vmem:[%s1234 + $0x118] sm:$0xff]
  %v1271 = vld [vmem:[%s1234 + $0x120] sm:$0xff]
  %v1272 = vld [vmem:[%s1234 + $0x128] sm:$0xff]
  %v1273 = vld [vmem:[%s1234 + $0x130] sm:$0xff]
  %v1274 = vld [vmem:[%s1234 + $0x138] sm:$0xff]
  %v1275 = vld [vmem:[%s1234 + $0x140] sm:$0xff]
  %v1276 = vld [vmem:[%s1234 + $0x148] sm:$0xff]
  %v1277 = vld [vmem:[%s1234 + $0x150] sm:$0xff]
  %v1278 = vld [vmem:[%s1234 + $0x158] sm:$0xff]
  %v1279 = vld [vmem:[%s1234 + $0x160] sm:$0xff]
  %v1280 = vld [vmem:[%s1234 + $0x168] sm:$0xff]
  %v1281 = vld [vmem:[%s1234 + $0x170] sm:$0xff]
  %v1282 = vld [vmem:[%s1234 + $0x178] sm:$0xff]
  %1283 = vmatprep.subr.mxu0 0.0
  %1284 = vmatpush1.msra.mxu0 %v1235
  %1285 = vmatprep.subr.mxu0 0.0
  %1286 = vmatpush1.msra.mxu0 %v1236
  %1287 = vmatprep.subr.mxu0 0.0
  %1288 = vmatpush1.msra.mxu0 %v1237
  %1289 = vmatprep.subr.mxu0 0.0
  %1290 = vmatpush1.msra.mxu0 %v1238
  %1291 = vmatprep.subr.mxu0 0.0
  %1292 = vmatpush1.msra.mxu0 %v1239
  %1293 = vmatprep.subr.mxu0 0.0
  %1294 = vmatpush1.msra.mxu0 %v1240
  %1295 = vmatprep.subr.mxu0 0.0
  %1296 = vmatpush1.msra.mxu0 %v1241
  %1297 = vmatprep.subr.mxu0 0.0
  %1298 = vmatpush1.msra.mxu0 %v1242
  %1299 = vmatprep.subr.mxu0 0.0
  %1300 = vmatpush1.msra.mxu0 %v1243
  %1301 = vmatprep.subr.mxu0 0.0
  %1302 = vmatpush1.msra.mxu0 %v1244
  %1303 = vmatprep.subr.mxu0 0.0
  %1304 = vmatpush1.msra.mxu0 %v1245
  %1305 = vmatprep.subr.mxu0 0.0
  %1306 = vmatpush1.msra.mxu0 %v1246
  %1307 = vmatprep.subr.mxu0 0.0
  %1308 = vmatpush1.msra.mxu0 %v1247
  %1309 = vmatprep.subr.mxu0 0.0
  %1310 = vmatpush1.msra.mxu0 %v1248
  %1311 = vmatprep.subr.mxu0 0.0
  %1312 = vmatpush1.msra.mxu0 %v1249
  %1313 = vmatprep.subr.mxu0 0.0
  %1314 = vmatpush1.msra.mxu0 %v1250
  %1315 = vmatprep.subr.mxu0 0.0
  %1316 = vmatpush1.msra.mxu0 %v1251
  %1317 = vmatprep.subr.mxu0 0.0
  %1318 = vmatpush1.msra.mxu0 %v1252
  %1319 = vmatprep.subr.mxu0 0.0
  %1320 = vmatpush1.msra.mxu0 %v1253
  %1321 = vmatprep.subr.mxu0 0.0
  %1322 = vmatpush1.msra.mxu0 %v1254
  %1323 = vmatprep.subr.mxu0 0.0
  %1324 = vmatpush1.msra.mxu0 %v1255
  %1325 = vmatprep.subr.mxu0 0.0
  %1326 = vmatpush1.msra.mxu0 %v1256
  %1327 = vmatprep.subr.mxu0 0.0
  %1328 = vmatpush1.msra.mxu0 %v1257
  %1329 = vmatprep.subr.mxu0 0.0
  %1330 = vmatpush1.msra.mxu0 %v1258
  %1331 = vmatprep.subr.mxu0 0.0
  %1332 = vmatpush1.msra.mxu0 %v1259
  %1333 = vmatprep.subr.mxu0 0.0
  %1334 = vmatpush1.msra.mxu0 %v1260
  %1335 = vmatprep.subr.mxu0 0.0
  %1336 = vmatpush1.msra.mxu0 %v1261
  %1337 = vmatprep.subr.mxu0 0.0
  %1338 = vmatpush1.msra.mxu0 %v1262
  %1339 = vmatprep.subr.mxu0 0.0
  %1340 = vmatpush1.msra.mxu0 %v1263
  %1341 = vmatprep.subr.mxu0 0.0
  %1342 = vmatpush1.msra.mxu0 %v1264
  %1343 = vmatprep.subr.mxu0 0.0
  %1344 = vmatpush1.msra.mxu0 %v1265
  %1345 = vmatprep.subr.mxu0 0.0
  %1346 = vmatpush1.msra.mxu0 %v1266
  %1347 = vmatprep.mubr.f32.mxu0 %v1193
  %1348 = vmatmul.mubr.f32.gmra.mrb[0].mxu0 %v1185
  %v1349 = vpop.f32.mrb[0].mxu0
  %v1350 = vadd.f32 0.0, %v1349
  %v1351 = vpop.f32.mrb[0].mxu0
  %1352 = vmatprep.mubr.f32.mxu0 %v1194
  %1353 = vmatmul.mubr.f32.gmra.mrb[0].mxu0 %v1186
  %v1354 = vpop.f32.mrb[0].mxu0
  %v1355 = vadd.f32 0.0, %v1354
  %v1356 = vpop.f32.mrb[0].mxu0
  %1357 = vmatprep.mubr.f32.mxu0 %v1195
  %1358 = vmatmul.mubr.f32.gmra.mrb[0].mxu0 %v1187
  %v1359 = vpop.f32.mrb[0].mxu0
  %v1360 = vadd.f32 0.0, %v1359
  %v1361 = vpop.f32.mrb[0].mxu0
  %1362 = vmatprep.mubr.f32.mxu0 %v1196
  %1363 = vmatmul.mubr.f32.gmra.mrb[0].mxu0 %v1188
  %v1364 = vpop.f32.mrb[0].mxu0
  %v1365 = vadd.f32 0.0, %v1364
  %v1366 = vpop.f32.mrb[0].mxu0
  %1367 = vmatprep.mubr.f32.mxu0 %v1197
  %1368 = vmatmul.mubr.f32.gmra.mrb[0].mxu0 %v1189
  %v1369 = vpop.f32.mrb[0].mxu0
  %v1370 = vadd.f32 0.0, %v1369
  %v1371 = vpop.f32.mrb[0].mxu0
  %1372 = vmatprep.mubr.f32.mxu0 %v1198
  %1373 = vmatmul.mubr.f32.gmra.mrb[0].mxu0 %v1190
  %v1374 = vpop.f32.mrb[0].mxu0
  %v1375 = vadd.f32 0.0, %v1374
  %v1376 = vpop.f32.mrb[0].mxu0
  %1377 = vmatprep.mubr.f32.mxu0 %v1199
  %1378 = vmatmul.mubr.f32.gmra.mrb[0].mxu0 %v1191
  %v1379 = vpop.f32.mrb[0].mxu0
  %v1380 = vadd.f32 0.0, %v1379
  %v1381 = vpop.f32.mrb[0].mxu0
  %1382 = vmatprep.mubr.f32.mxu0 %v1200
  %1383 = vmatmul.mubr.f32.gmra.mrb[0].mxu0 %v1192
  %v1384 = vpop.f32.mrb[0].mxu0
  %v1385 = vadd.f32 0.0, %v1384
  %v1386 = vpop.f32.mrb[0].mxu0
  %1387 = vmatprep.mubr.f32.mxu0 %v1218
  %1388 = vmatmul.mubr.f32.gmra.mrb[0].mxu0 %v1210
  %v1389 = vpop.f32.mrb[0].mxu0
  %v1390 = vadd.f32 0.0, %v1389
  %v1391 = vpop.f32.mrb[0].mxu0
  %1392 = vmatprep.mubr.f32.mxu0 %v1219
  %1393 = vmatmul.mubr.f32.gmra.mrb[0].mxu0 %v1211
  %v1394 = vpop.f32.mrb[0].mxu0
  %v1395 = vadd.f32 0.0, %v1394
  %v1396 = vpop.f32.mrb[0].mxu0
  %1397 = vmatprep.mubr.f32.mxu0 %v1220
  %1398 = vmatmul.mubr.f32.gmra.mrb[0].mxu0 %v1212
  %v1399 = vpop.f32.mrb[0].mxu0
  %v1400 = vadd.f32 0.0, %v1399
  %v1401 = vpop.f32.mrb[0].mxu0
  %1402 = vmatprep.mubr.f32.mxu0 %v1221
  %1403 = vmatmul.mubr.f32.gmra.mrb[0].mxu0 %v1213
  %v1404 = vpop.f32.mrb[0].mxu0
  %v1405 = vadd.f32 0.0, %v1404
  %v1406 = vpop.f32.mrb[0].mxu0
  %1407 = vmatprep.mubr.f32.mxu0 %v1222
  %1408 = vmatmul.mubr.f32.gmra.mrb[0].mxu0 %v1214
  %v1409 = vpop.f32.mrb[0].mxu0
  %v1410 = vadd.f32 0.0, %v1409
  %v1411 = vpop.f32.mrb[0].mxu0
  %1412 = vmatprep.mubr.f32.mxu0 %v1223
  %1413 = vmatmul.mubr.f32.gmra.mrb[0].mxu0 %v1215
  %v1414 = vpop.f32.mrb[0].mxu0
  %v1415 = vadd.f32 0.0, %v1414
  %v1416 = vpop.f32.mrb[0].mxu0
  %1417 = vmatprep.mubr.f32.mxu0 %v1224
  %1418 = vmatmul.mubr.f32.gmra.mrb[0].mxu0 %v1216
  %v1419 = vpop.f32.mrb[0].mxu0
  %v1420 = vadd.f32 0.0, %v1419
  %v1421 = vpop.f32.mrb[0].mxu0
  %1422 = vmatprep.mubr.f32.mxu0 %v1225
  %1423 = vmatmul.mubr.f32.gmra.mrb[0].mxu0 %v1217
  %v1424 = vpop.f32.mrb[0].mxu0
  %v1425 = vadd.f32 0.0, %v1424
  %v1426 = vpop.f32.mrb[0].mxu0
  %1427 = vdwg.mxu0
  %1428 = vmatprep.subr.mxu0 0.0
  %1429 = vmatpush1.msra.mxu0 %v1267
  %1430 = vmatprep.subr.mxu0 0.0
  %1431 = vmatpush1.msra.mxu0 %v1268
  %1432 = vmatprep.subr.mxu0 0.0
  %1433 = vmatpush1.msra.mxu0 %v1269
  %1434 = vmatprep.subr.mxu0 0.0
  %1435 = vmatpush1.msra.mxu0 %v1270
  %1436 = vmatprep.subr.mxu0 0.0
  %1437 = vmatpush1.msra.mxu0 %v1271
  %1438 = vmatprep.subr.mxu0 0.0
  %1439 = vmatpush1.msra.mxu0 %v1272
  %1440 = vmatprep.subr.mxu0 0.0
  %1441 = vmatpush1.msra.mxu0 %v1273
  %1442 = vmatprep.subr.mxu0 0.0
  %1443 = vmatpush1.msra.mxu0 %v1274
  %1444 = vmatprep.subr.mxu0 0.0
  %1445 = vmatpush1.msra.mxu0 %v1275
  %1446 = vmatprep.subr.mxu0 0.0
  %1447 = vmatpush1.msra.mxu0 %v1276
  %1448 = vmatprep.subr.mxu0 0.0
  %1449 = vmatpush1.msra.mxu0 %v1277
  %1450 = vmatprep.subr.mxu0 0.0
  %1451 = vmatpush1.msra.mxu0 %v1278
  %1452 = vmatprep.subr.mxu0 0.0
  %1453 = vmatpush1.msra.mxu0 %v1279
  %1454 = vmatprep.subr.mxu0 0.0
  %1455 = vmatpush1.msra.mxu0 %v1280
  %1456 = vmatprep.subr.mxu0 0.0
  %1457 = vmatpush1.msra.mxu0 %v1281
  %1458 = vmatprep.subr.mxu0 0.0
  %1459 = vmatpush1.msra.mxu0 %v1282
  %1460 = vmatprep.subr.mxu0 0.0
  %1461 = vmatpush1.msra.mxu0 0.0
  %1462 = vmatprep.subr.mxu0 0.0
  %1463 = vmatpush1.msra.mxu0 0.0
  %1464 = vmatprep.subr.mxu0 0.0
  %1465 = vmatpush1.msra.mxu0 0.0
  %1466 = vmatprep.subr.mxu0 0.0
  %1467 = vmatpush1.msra.mxu0 0.0
  %1468 = vmatprep.subr.mxu0 0.0
  %1469 = vmatpush1.msra.mxu0 0.0
  %1470 = vmatprep.subr.mxu0 0.0
  %1471 = vmatpush1.msra.mxu0 0.0
  %1472 = vmatprep.subr.mxu0 0.0
  %1473 = vmatpush1.msra.mxu0 0.0
  %1474 = vmatprep.subr.mxu0 0.0
  %1475 = vmatpush1.msra.mxu0 0.0
  %1476 = vmatprep.subr.mxu0 0.0
  %1477 = vmatpush1.msra.mxu0 0.0
  %1478 = vmatprep.subr.mxu0 0.0
  %1479 = vmatpush1.msra.mxu0 0.0
  %1480 = vmatprep.subr.mxu0 0.0
  %1481 = vmatpush1.msra.mxu0 0.0
  %1482 = vmatprep.subr.mxu0 0.0
  %1483 = vmatpush1.msra.mxu0 0.0
  %1484 = vmatprep.subr.mxu0 0.0
  %1485 = vmatpush1.msra.mxu0 0.0
  %1486 = vmatprep.subr.mxu0 0.0
  %1487 = vmatpush1.msra.mxu0 0.0
  %1488 = vmatprep.subr.mxu0 0.0
  %1489 = vmatpush1.msra.mxu0 0.0
  %1490 = vmatprep.subr.mxu0 0.0
  %1491 = vmatpush1.msra.mxu0 0.0
  %1492 = vmatprep.mubr.f32.mxu0 0.0
  %1493 = vmatmul.mubr.f32.gmra.mrb[0].mxu0 %v1201
  %v1494 = vpop.f32.mrb[0].mxu0
  %v1495 = vadd.f32 %v1350, %v1494
  %v1496 = vpop.f32.mrb[0].mxu0
  %1497 = vmatprep.mubr.f32.mxu0 0.0
  %1498 = vmatmul.mubr.f32.gmra.mrb[0].mxu0 %v1202
  %v1499 = vpop.f32.mrb[0].mxu0
  %v1500 = vadd.f32 %v1355, %v1499
  %v1501 = vpop.f32.mrb[0].mxu0
  %1502 = vmatprep.mubr.f32.mxu0 0.0
  %1503 = vmatmul.mubr.f32.gmra.mrb[0].mxu0 %v1203
  %v1504 = vpop.f32.mrb[0].mxu0
  %v1505 = vadd.f32 %v1360, %v1504
  %v1506 = vpop.f32.mrb[0].mxu0
  %1507 = vmatprep.mubr.f32.mxu0 0.0
  %1508 = vmatmul.mubr.f32.gmra.mrb[0].mxu0 %v1204
  %v1509 = vpop.f32.mrb[0].mxu0
  %v1510 = vadd.f32 %v1365, %v1509
  %v1511 = vpop.f32.mrb[0].mxu0
  %1512 = vmatprep.mubr.f32.mxu0 0.0
  %1513 = vmatmul.mubr.f32.gmra.mrb[0].mxu0 %v1205
  %v1514 = vpop.f32.mrb[0].mxu0
  %v1515 = vadd.f32 %v1370, %v1514
  %v1516 = vpop.f32.mrb[0].mxu0
  %1517 = vmatprep.mubr.f32.mxu0 0.0
  %1518 = vmatmul.mubr.f32.gmra.mrb[0].mxu0 %v1206
  %v1519 = vpop.f32.mrb[0].mxu0
  %v1520 = vadd.f32 %v1375, %v1519
  %v1521 = vpop.f32.mrb[0].mxu0
  %1522 = vmatprep.mubr.f32.mxu0 0.0
  %1523 = vmatmul.mubr.f32.gmra.mrb[0].mxu0 %v1207
  %v1524 = vpop.f32.mrb[0].mxu0
  %v1525 = vadd.f32 %v1380, %v1524
  %v1526 = vpop.f32.mrb[0].mxu0
  %1527 = vmatprep.mubr.f32.mxu0 0.0
  %1528 = vmatmul.mubr.f32.gmra.mrb[0].mxu0 %v1208
  %v1529 = vpop.f32.mrb[0].mxu0
  %v1530 = vadd.f32 %v1385, %v1529
  %v1531 = vpop.f32.mrb[0].mxu0
  %1532 = vmatprep.mubr.f32.mxu0 0.0
  %1533 = vmatmul.mubr.f32.gmra.mrb[0].mxu0 %v1226
  %v1534 = vpop.f32.mrb[0].mxu0
  %v1535 = vadd.f32 %v1390, %v1534
  %v1536 = vpop.f32.mrb[0].mxu0
  %1537 = vmatprep.mubr.f32.mxu0 0.0
  %1538 = vmatmul.mubr.f32.gmra.mrb[0].mxu0 %v1227
  %v1539 = vpop.f32.mrb[0].mxu0
  %v1540 = vadd.f32 %v1395, %v1539
  %v1541 = vpop.f32.mrb[0].mxu0
  %1542 = vmatprep.mubr.f32.mxu0 0.0
  %1543 = vmatmul.mubr.f32.gmra.mrb[0].mxu0 %v1228
  %v1544 = vpop.f32.mrb[0].mxu0
  %v1545 = vadd.f32 %v1400, %v1544
  %v1546 = vpop.f32.mrb[0].mxu0
  %1547 = vmatprep.mubr.f32.mxu0 0.0
  %1548 = vmatmul.mubr.f32.gmra.mrb[0].mxu0 %v1229
  %v1549 = vpop.f32.mrb[0].mxu0
  %v1550 = vadd.f32 %v1405, %v1549
  %v1551 = vpop.f32.mrb[0].mxu0
  %1552 = vmatprep.mubr.f32.mxu0 0.0
  %1553 = vmatmul.mubr.f32.gmra.mrb[0].mxu0 %v1230
  %v1554 = vpop.f32.mrb[0].mxu0
  %v1555 = vadd.f32 %v1410, %v1554
  %v1556 = vpop.f32.mrb[0].mxu0
  %1557 = vmatprep.mubr.f32.mxu0 0.0
  %1558 = vmatmul.mubr.f32.gmra.mrb[0].mxu0 %v1231
  %v1559 = vpop.f32.mrb[0].mxu0
  %v1560 = vadd.f32 %v1415, %v1559
  %v1561 = vpop.f32.mrb[0].mxu0
  %1562 = vmatprep.mubr.f32.mxu0 0.0
  %1563 = vmatmul.mubr.f32.gmra.mrb[0].mxu0 %v1232
  %v1564 = vpop.f32.mrb[0].mxu0
  %v1565 = vadd.f32 %v1420, %v1564
  %v1566 = vpop.f32.mrb[0].mxu0
  %1567 = vmatprep.mubr.f32.mxu0 0.0
  %1568 = vmatmul.mubr.f32.gmra.mrb[0].mxu0 %v1233
  %v1569 = vpop.f32.mrb[0].mxu0
  %v1570 = vadd.f32 %v1425, %v1569
  %v1571 = vpop.f32.mrb[0].mxu0
  %1572 = vdwg.mxu0
  %v1573 = vadd.f32 %v1106, %v1495
  %v1574 = vadd.f32 %v1111, %v1500
  %v1575 = vadd.f32 %v1116, %v1505
  %v1576 = vadd.f32 %v1121, %v1510
  %v1577 = vadd.f32 %v1126, %v1515
  %v1578 = vadd.f32 %v1131, %v1520
  %v1579 = vadd.f32 %v1136, %v1525
  %v1580 = vadd.f32 %v1141, %v1530
  %v1581 = vadd.f32 %v1146, %v1535
  %v1582 = vadd.f32 %v1151, %v1540
  %v1583 = vadd.f32 %v1156, %v1545
  %v1584 = vadd.f32 %v1161, %v1550
  %v1585 = vadd.f32 %v1166, %v1555
  %v1586 = vadd.f32 %v1171, %v1560
  %v1587 = vadd.f32 %v1176, %v1565
  %v1588 = vadd.f32 %v1181, %v1570
  %v1589 = vld [vmem:[%s3] sm:$0x1]
  %v1591 = vlaneseq
  %v1592 = vshrl.u32 %v1591, 7
  %v1593 = vsub.s32 0, %v1592
  %v1594 = vrot.slane %v1589, %v1593
  %v1596 = vadd.f32 %v1573, %v1594
  %v1597 = vadd.f32 %v1574, %v1594
  %v1598 = vadd.f32 %v1575, %v1594
  %v1599 = vadd.f32 %v1576, %v1594
  %v1600 = vadd.f32 %v1577, %v1594
  %v1601 = vadd.f32 %v1578, %v1594
  %v1602 = vadd.f32 %v1579, %v1594
  %v1603 = vadd.f32 %v1580, %v1594
  %v1604 = vadd.f32 %v1581, %v1594
  %v1605 = vadd.f32 %v1582, %v1594
  %v1606 = vadd.f32 %v1583, %v1594
  %v1607 = vadd.f32 %v1584, %v1594
  %v1608 = vadd.f32 %v1585, %v1594
  %v1609 = vadd.f32 %v1586, %v1594
  %v1610 = vadd.f32 %v1587, %v1594
  %v1611 = vadd.f32 %v1588, %v1594
  %v1612 = vld [vmem:[%s6] sm:$0x1]
  %v1613 = vld [vmem:[%s7] sm:$0x1]
  %v1614 = vadd.f32 %v1596, %v1597
  %v1615 = vadd.f32 %v1614, %v1598
  %v1616 = vadd.f32 %v1615, %v1599
  %v1617 = vadd.f32 %v1616, %v1600
  %v1618 = vadd.f32 %v1617, %v1601
  %v1619 = vadd.f32 %v1618, %v1602
  %v1620 = vadd.f32 %v1619, %v1603
  %v1621 = vadd.f32 %v1620, %v1604
  %v1622 = vadd.f32 %v1621, %v1605
  %v1623 = vadd.f32 %v1622, %v1606
  %v1624 = vadd.f32 %v1623, %v1607
  %v1625 = vadd.f32 %v1624, %v1608
  %v1626 = vadd.f32 %v1625, %v1609
  %v1627 = vadd.f32 %v1626, %v1610
  %v1628 = vadd.f32 %v1627, %v1611
  %v1629 = vrot.slane %v1628, 4
  %v1630 = vadd.f32 %v1628, %v1629
  %v1631 = vrot.slane %v1630, 2
  %v1632 = vadd.f32 %v1630, %v1631
  %v1633 = vrot.slane %v1632, 1
  %v1634 = vadd.f32 %v1632, %v1633
  %v1635 = vrcp.pop 128.0
  %v1636 = vmul.f32 %v1634, %v1635
  %v1637 = vsub.f32 %v1596, %v1636
  %v1638 = vsub.f32 %v1597, %v1636
  %v1639 = vsub.f32 %v1598, %v1636
  %v1640 = vsub.f32 %v1599, %v1636
  %v1641 = vsub.f32 %v1600, %v1636
  %v1642 = vsub.f32 %v1601, %v1636
  %v1643 = vsub.f32 %v1602, %v1636
  %v1644 = vsub.f32 %v1603, %v1636
  %v1645 = vsub.f32 %v1604, %v1636
  %v1646 = vsub.f32 %v1605, %v1636
  %v1647 = vsub.f32 %v1606, %v1636
  %v1648 = vsub.f32 %v1607, %v1636
  %v1649 = vsub.f32 %v1608, %v1636
  %v1650 = vsub.f32 %v1609, %v1636
  %v1651 = vsub.f32 %v1610, %v1636
  %v1652 = vsub.f32 %v1611, %v1636
  %v1653 = vmul.f32 %v1637, %v1637
  %v1654 = vmul.f32 %v1638, %v1638
  %v1655 = vmul.f32 %v1639, %v1639
  %v1656 = vmul.f32 %v1640, %v1640
  %v1657 = vmul.f32 %v1641, %v1641
  %v1658 = vmul.f32 %v1642, %v1642
  %v1659 = vmul.f32 %v1643, %v1643
  %v1660 = vmul.f32 %v1644, %v1644
  %v1661 = vmul.f32 %v1645, %v1645
  %v1662 = vmul.f32 %v1646, %v1646
  %v1663 = vmul.f32 %v1647, %v1647
  %v1664 = vmul.f32 %v1648, %v1648
  %v1665 = vmul.f32 %v1649, %v1649
  %v1666 = vmul.f32 %v1650, %v1650
  %v1667 = vmul.f32 %v1651, %v1651
  %v1668 = vmul.f32 %v1652, %v1652
  %v1669 = vadd.f32 %v1653, %v1654
  %v1670 = vadd.f32 %v1669, %v1655
  %v1671 = vadd.f32 %v1670, %v1656
  %v1672 = vadd.f32 %v1671, %v1657
  %v1673 = vadd.f32 %v1672, %v1658
  %v1674 = vadd.f32 %v1673, %v1659
  %v1675 = vadd.f32 %v1674, %v1660
  %v1676 = vadd.f32 %v1675, %v1661
  %v1677 = vadd.f32 %v1676, %v1662
  %v1678 = vadd.f32 %v1677, %v1663
  %v1679 = vadd.f32 %v1678, %v1664
  %v1680 = vadd.f32 %v1679, %v1665
  %v1681 = vadd.f32 %v1680, %v1666
  %v1682 = vadd.f32 %v1681, %v1667
  %v1683 = vadd.f32 %v1682, %v1668
  %v1684 = vrot.slane %v1683, 4
  %v1685 = vadd.f32 %v1683, %v1684
  %v1686 = vrot.slane %v1685, 2
  %v1687 = vadd.f32 %v1685, %v1686
  %v1688 = vrot.slane %v1687, 1
  %v1689 = vadd.f32 %v1687, %v1688
  %v1690 = vmul.f32 %v1689, %v1635
  %v1691 = vadd.f32 %v1690, 1e-05
  %v1692 = vrsqrt.pop %v1691
  %v1693 = vmul.f32 %v1612, %v1692
  %v1695 = vlaneseq
  %v1696 = vshrl.u32 %v1695, 7
  %v1697 = vsub.s32 0, %v1696
  %v1698 = vrot.slane %v1693, %v1697
  %v1700 = vmul.f32 %v1596, %v1698
  %v1701 = vmul.f32 %v1597, %v1698
  %v1702 = vmul.f32 %v1598, %v1698
  %v1703 = vmul.f32 %v1599, %v1698
  %v1704 = vmul.f32 %v1600, %v1698
  %v1705 = vmul.f32 %v1601, %v1698
  %v1706 = vmul.f32 %v1602, %v1698
  %v1707 = vmul.f32 %v1603, %v1698
  %v1708 = vmul.f32 %v1604, %v1698
  %v1709 = vmul.f32 %v1605, %v1698
  %v1710 = vmul.f32 %v1606, %v1698
  %v1711 = vmul.f32 %v1607, %v1698
  %v1712 = vmul.f32 %v1608, %v1698
  %v1713 = vmul.f32 %v1609, %v1698
  %v1714 = vmul.f32 %v1610, %v1698
  %v1715 = vmul.f32 %v1611, %v1698
  %v1716 = vmul.f32 %v1636, %v1693
  %v1717 = vsub.f32 %v1613, %v1716
  %v1719 = vlaneseq
  %v1720 = vshrl.u32 %v1719, 7
  %v1721 = vsub.s32 0, %v1720
  %v1722 = vrot.slane %v1717, %v1721
  %v1724 = vadd.f32 %v1700, %v1722
  %v1725 = vadd.f32 %v1701, %v1722
  %v1726 = vadd.f32 %v1702, %v1722
  %v1727 = vadd.f32 %v1703, %v1722
  %v1728 = vadd.f32 %v1704, %v1722
  %v1729 = vadd.f32 %v1705, %v1722
  %v1730 = vadd.f32 %v1706, %v1722
  %v1731 = vadd.f32 %v1707, %v1722
  %v1732 = vadd.f32 %v1708, %v1722
  %v1733 = vadd.f32 %v1709, %v1722
  %v1734 = vadd.f32 %v1710, %v1722
  %v1735 = vadd.f32 %v1711, %v1722
  %v1736 = vadd.f32 %v1712, %v1722
  %v1737 = vadd.f32 %v1713, %v1722
  %v1738 = vadd.f32 %v1714, %v1722
  %v1739 = vadd.f32 %v1715, %v1722
  %vm1740 = vcmp.gt.f32.partialorder %v1724, 0.0
  %vm1741 = vcmp.gt.f32.partialorder %v1725, 0.0
  %vm1742 = vcmp.gt.f32.partialorder %v1726, 0.0
  %vm1743 = vcmp.gt.f32.partialorder %v1727, 0.0
  %vm1744 = vcmp.gt.f32.partialorder %v1728, 0.0
  %vm1745 = vcmp.gt.f32.partialorder %v1729, 0.0
  %vm1746 = vcmp.gt.f32.partialorder %v1730, 0.0
  %vm1747 = vcmp.gt.f32.partialorder %v1731, 0.0
  %vm1748 = vcmp.gt.f32.partialorder %v1732, 0.0
  %vm1749 = vcmp.gt.f32.partialorder %v1733, 0.0
  %vm1750 = vcmp.gt.f32.partialorder %v1734, 0.0
  %vm1751 = vcmp.gt.f32.partialorder %v1735, 0.0
  %vm1752 = vcmp.gt.f32.partialorder %v1736, 0.0
  %vm1753 = vcmp.gt.f32.partialorder %v1737, 0.0
  %vm1754 = vcmp.gt.f32.partialorder %v1738, 0.0
  %vm1755 = vcmp.gt.f32.partialorder %v1739, 0.0
  %v1756 = vmul.f32 %v1724, 0.2
  %v1757 = vmul.f32 %v1725, 0.2
  %v1758 = vmul.f32 %v1726, 0.2
  %v1759 = vmul.f32 %v1727, 0.2
  %v1760 = vmul.f32 %v1728, 0.2
  %v1761 = vmul.f32 %v1729, 0.2
  %v1762 = vmul.f32 %v1730, 0.2
  %v1763 = vmul.f32 %v1731, 0.2
  %v1764 = vmul.f32 %v1732, 0.2
  %v1765 = vmul.f32 %v1733, 0.2
  %v1766 = vmul.f32 %v1734, 0.2
  %v1767 = vmul.f32 %v1735, 0.2
  %v1768 = vmul.f32 %v1736, 0.2
  %v1769 = vmul.f32 %v1737, 0.2
  %v1770 = vmul.f32 %v1738, 0.2
  %v1771 = vmul.f32 %v1739, 0.2
  %v1772 = vsel %vm1740, %v1724, %v1756
  %v1773 = vsel %vm1741, %v1725, %v1757
  %v1774 = vsel %vm1742, %v1726, %v1758
  %v1775 = vsel %vm1743, %v1727, %v1759
  %v1776 = vsel %vm1744, %v1728, %v1760
  %v1777 = vsel %vm1745, %v1729, %v1761
  %v1778 = vsel %vm1746, %v1730, %v1762
  %v1779 = vsel %vm1747, %v1731, %v1763
  %v1780 = vsel %vm1748, %v1732, %v1764
  %v1781 = vsel %vm1749, %v1733, %v1765
  %v1782 = vsel %vm1750, %v1734, %v1766
  %v1783 = vsel %vm1751, %v1735, %v1767
  %v1784 = vsel %vm1752, %v1736, %v1768
  %v1785 = vsel %vm1753, %v1737, %v1769
  %v1786 = vsel %vm1754, %v1738, %v1770
  %v1787 = vsel %vm1755, %v1739, %v1771
  %1788 = vst [vmem:[%s8] sm:$0xff] %v1772
  %1789 = vst [vmem:[%s8 + $0x8] sm:$0xff] %v1773
  %1790 = vst [vmem:[%s8 + $0x10] sm:$0xff] %v1774
  %1791 = vst [vmem:[%s8 + $0x18] sm:$0xff] %v1775
  %1792 = vst [vmem:[%s8 + $0x20] sm:$0xff] %v1776
  %1793 = vst [vmem:[%s8 + $0x28] sm:$0xff] %v1777
  %1794 = vst [vmem:[%s8 + $0x30] sm:$0xff] %v1778
  %1795 = vst [vmem:[%s8 + $0x38] sm:$0xff] %v1779
  %1796 = vst [vmem:[%s8 + $0x40] sm:$0xff] %v1780
  %1797 = vst [vmem:[%s8 + $0x48] sm:$0xff] %v1781
  %1798 = vst [vmem:[%s8 + $0x50] sm:$0xff] %v1782
  %1799 = vst [vmem:[%s8 + $0x58] sm:$0xff] %v1783
  %1800 = vst [vmem:[%s8 + $0x60] sm:$0xff] %v1784
  %1801 = vst [vmem:[%s8 + $0x68] sm:$0xff] %v1785
  %1802 = vst [vmem:[%s8 + $0x70] sm:$0xff] %v1786
  %1803 = vst [vmem:[%s8 + $0x78] sm:$0xff] %v1787
  // Predicated region
  $region34: #{generator_forward.3} parent=0 // pred_check
    _
  $region35: #{generator_forward.3} parent=0 // pred_check_branch
    %1805 = sbr.rel (0) target = $region37
  $region36: #{generator_forward.3} parent=0 // pred_region
    _
  $region37: #{generator_forward.3} parent=0 // pred_fallthru
    _
  // Predicated region
  $region38: #{generator_forward.3} parent=0 // pred_check
    _
  $region39: #{generator_forward.3} parent=0 // pred_check_branch
    %1807 = sbr.rel (0) target = $region41
  $region40: #{generator_forward.3} parent=0 // pred_region
    _
  $region41: #{generator_forward.3} parent=0 // pred_fallthru
    _

// kernel: generator_forward.5
$region0: #{generator_forward.5}
  #allocation0 [shape = 'u32[]', space=smem, size = 0x4, offset = 0x4, fixed_abs, tag = 'smem constant byte address 0x4 - core index']
  #allocation1 [shape = 'u32[144,128]{1,0:T(1,128)}', space=vmem, size = 0x12000, scoped, tag = 'internal scratch']
  #allocation2 [shape = 'f32[2,18,32,128]{3,2,1,0:T(8,128)}', space=vmem, size = 0x90000, scoped, tag = 'scratch operand']
  %s0 = inlined_call_operand.vmem [shape: f32[512,128], index: 0, kind: input, shape index: {}]
  %s1 = inlined_call_operand.vmem [shape: f32[3,384,128], index: 1, kind: input, shape index: {}]
  %s2 = inlined_call_operand.vmem [shape: f32[1,128], index: 2, kind: input, shape index: {}]
  %s3 = inlined_call_operand.vmem [shape: f32[512,128], index: 3, kind: output, shape index: {}]
  %s4 = sld [smem:[#allocation0]]
  $region22: #{generator_forward.5} parent=0
    _
  %s6 = ssub.s32 1, %s4
  %s7 = scalar_select 0, %s6, %s4
  // Predicated region
  $region2: #{generator_forward.5} parent=0 // pred_check
    _
  $region3: #{generator_forward.5} parent=0 // pred_check_branch
    %9 = sbr.rel (0) target = $region5
  $region4: #{generator_forward.5} parent=0 // pred_region
    _
  $region5: #{generator_forward.5} parent=0 // pred_fallthru
    _
  // Predicated region
  $region6: #{generator_forward.5} parent=0 // pred_check
    _
  $region7: #{generator_forward.5} parent=0 // pred_check_branch
    %11 = sbr.rel (0) target = $region9
  $region8: #{generator_forward.5} parent=0 // pred_region
    _
  $region9: #{generator_forward.5} parent=0 // pred_fallthru
    _
  // Predicated region
  $region10: #{generator_forward.5} parent=0 // pred_check
    _
  $region11: #{generator_forward.5} parent=0 // pred_check_branch
    %13 = sbr.rel (0) target = $region13
  $region12: #{generator_forward.5} parent=0 // pred_region
    _
  $region13: #{generator_forward.5} parent=0 // pred_fallthru
    _
  %14 = vst [vmem:[#allocation2] sm:$0xff] 0.0
  %15 = vst [vmem:[#allocation2 + $0x8] sm:$0xff] 0.0
  %16 = vst [vmem:[#allocation2 + $0x10] sm:$0xff] 0.0
  %17 = vst [vmem:[#allocation2 + $0x18] sm:$0xff] 0.0
  %18 = vst [vmem:[#allocation2 + $0x20] sm:$0xff] 0.0
  %19 = vst [vmem:[#allocation2 + $0x28] sm:$0xff] 0.0
  %20 = vst [vmem:[#allocation2 + $0x30] sm:$0xff] 0.0
  %21 = vst [vmem:[#allocation2 + $0x38] sm:$0xff] 0.0
  %22 = vst [vmem:[#allocation2 + $0x40] sm:$0xff] 0.0
  %23 = vst [vmem:[#allocation2 + $0x48] sm:$0xff] 0.0
  %24 = vst [vmem:[#allocation2 + $0x50] sm:$0xff] 0.0
  %25 = vst [vmem:[#allocation2 + $0x58] sm:$0xff] 0.0
  %26 = vst [vmem:[#allocation2 + $0x60] sm:$0xff] 0.0
  %27 = vst [vmem:[#allocation2 + $0x68] sm:$0xff] 0.0
  %28 = vst [vmem:[#allocation2 + $0x70] sm:$0xff] 0.0
  %29 = vst [vmem:[#allocation2 + $0x78] sm:$0xff] 0.0
  %30 = vst [vmem:[#allocation2 + $0x80] sm:$0xff] 0.0
  %31 = vst [vmem:[#allocation2 + $0x88] sm:$0xff] 0.0
  %32 = vst [vmem:[#allocation2 + $0x90] sm:$0xff] 0.0
  %33 = vst [vmem:[#allocation2 + $0x98] sm:$0xff] 0.0
  %34 = vst [vmem:[#allocation2 + $0xa0] sm:$0xff] 0.0
  %35 = vst [vmem:[#allocation2 + $0xa8] sm:$0xff] 0.0
  %36 = vst [vmem:[#allocation2 + $0xb0] sm:$0xff] 0.0
  %37 = vst [vmem:[#allocation2 + $0xb8] sm:$0xff] 0.0
  %38 = vst [vmem:[#allocation2 + $0xc0] sm:$0xff] 0.0
  %39 = vst [vmem:[#allocation2 + $0xc8] sm:$0xff] 0.0
  %40 = vst [vmem:[#allocation2 + $0xd0] sm:$0xff] 0.0
  %41 = vst [vmem:[#allocation2 + $0xd8] sm:$0xff] 0.0
  %42 = vst [vmem:[#allocation2 + $0xe0] sm:$0xff] 0.0
  %43 = vst [vmem:[#allocation2 + $0xe8] sm:$0xff] 0.0
  %44 = vst [vmem:[#allocation2 + $0xf0] sm:$0xff] 0.0
  %45 = vst [vmem:[#allocation2 + $0xf8] sm:$0xff] 0.0
  %46 = vst [vmem:[#allocation2 + $0x100] sm:$0xff] 0.0
  %47 = vst [vmem:[#allocation2 + $0x108] sm:$0xff] 0.0
  %48 = vst [vmem:[#allocation2 + $0x110] sm:$0xff] 0.0
  %49 = vst [vmem:[#allocation2 + $0x118] sm:$0xff] 0.0
  %50 = vst [vmem:[#allocation2 + $0x120] sm:$0xff] 0.0
  %51 = vst [vmem:[#allocation2 + $0x128] sm:$0xff] 0.0
  %52 = vst [vmem:[#allocation2 + $0x130] sm:$0xff] 0.0
  %53 = vst [vmem:[#allocation2 + $0x138] sm:$0xff] 0.0
  %54 = vst [vmem:[#allocation2 + $0x140] sm:$0xff] 0.0
  %55 = vst [vmem:[#allocation2 + $0x148] sm:$0xff] 0.0
  %56 = vst [vmem:[#allocation2 + $0x150] sm:$0xff] 0.0
  %57 = vst [vmem:[#allocation2 + $0x158] sm:$0xff] 0.0
  %58 = vst [vmem:[#allocation2 + $0x160] sm:$0xff] 0.0
  %59 = vst [vmem:[#allocation2 + $0x168] sm:$0xff] 0.0
  %60 = vst [vmem:[#allocation2 + $0x170] sm:$0xff] 0.0
  %61 = vst [vmem:[#allocation2 + $0x178] sm:$0xff] 0.0
  %62 = vst [vmem:[#allocation2 + $0x180] sm:$0xff] 0.0
  %63 = vst [vmem:[#allocation2 + $0x188] sm:$0xff] 0.0
  %64 = vst [vmem:[#allocation2 + $0x190] sm:$0xff] 0.0
  %65 = vst [vmem:[#allocation2 + $0x198] sm:$0xff] 0.0
  %66 = vst [vmem:[#allocation2 + $0x1a0] sm:$0xff] 0.0
  %67 = vst [vmem:[#allocation2 + $0x1a8] sm:$0xff] 0.0
  %68 = vst [vmem:[#allocation2 + $0x1b0] sm:$0xff] 0.0
  %69 = vst [vmem:[#allocation2 + $0x1b8] sm:$0xff] 0.0
  %70 = vst [vmem:[#allocation2 + $0x1c0] sm:$0xff] 0.0
  %71 = vst [vmem:[#allocation2 + $0x1c8] sm:$0xff] 0.0
  %72 = vst [vmem:[#allocation2 + $0x1d0] sm:$0xff] 0.0
  %73 = vst [vmem:[#allocation2 + $0x1d8] sm:$0xff] 0.0
  %74 = vst [vmem:[#allocation2 + $0x1e0] sm:$0xff] 0.0
  %75 = vst [vmem:[#allocation2 + $0x1e8] sm:$0xff] 0.0
  %76 = vst [vmem:[#allocation2 + $0x1f0] sm:$0xff] 0.0
  %77 = vst [vmem:[#allocation2 + $0x1f8] sm:$0xff] 0.0
  %78 = vst [vmem:[#allocation2 + $0x200] sm:$0xff] 0.0
  %79 = vst [vmem:[#allocation2 + $0x208] sm:$0xff] 0.0
  %80 = vst [vmem:[#allocation2 + $0x210] sm:$0xff] 0.0
  %81 = vst [vmem:[#allocation2 + $0x218] sm:$0xff] 0.0
  %82 = vst [vmem:[#allocation2 + $0x220] sm:$0xff] 0.0
  %83 = vst [vmem:[#allocation2 + $0x228] sm:$0xff] 0.0
  %84 = vst [vmem:[#allocation2 + $0x230] sm:$0xff] 0.0
  %85 = vst [vmem:[#allocation2 + $0x238] sm:$0xff] 0.0
  %86 = vst [vmem:[#allocation2 + $0x240] sm:$0xff] 0.0
  %87 = vst [vmem:[#allocation2 + $0x248] sm:$0xff] 0.0
  %88 = vst [vmem:[#allocation2 + $0x250] sm:$0xff] 0.0
  %89 = vst [vmem:[#allocation2 + $0x258] sm:$0xff] 0.0
  %90 = vst [vmem:[#allocation2 + $0x260] sm:$0xff] 0.0
  %91 = vst [vmem:[#allocation2 + $0x268] sm:$0xff] 0.0
  %92 = vst [vmem:[#allocation2 + $0x270] sm:$0xff] 0.0
  %93 = vst [vmem:[#allocation2 + $0x278] sm:$0xff] 0.0
  %94 = vst [vmem:[#allocation2 + $0x280] sm:$0xff] 0.0
  %95 = vst [vmem:[#allocation2 + $0x288] sm:$0xff] 0.0
  %96 = vst [vmem:[#allocation2 + $0x290] sm:$0xff] 0.0
  %97 = vst [vmem:[#allocation2 + $0x298] sm:$0xff] 0.0
  %98 = vst [vmem:[#allocation2 + $0x2a0] sm:$0xff] 0.0
  %99 = vst [vmem:[#allocation2 + $0x2a8] sm:$0xff] 0.0
  %100 = vst [vmem:[#allocation2 + $0x2b0] sm:$0xff] 0.0
  %101 = vst [vmem:[#allocation2 + $0x2b8] sm:$0xff] 0.0
  %102 = vst [vmem:[#allocation2 + $0x2c0] sm:$0xff] 0.0
  %103 = vst [vmem:[#allocation2 + $0x2c8] sm:$0xff] 0.0
  %104 = vst [vmem:[#allocation2 + $0x2d0] sm:$0xff] 0.0
  %105 = vst [vmem:[#allocation2 + $0x2d8] sm:$0xff] 0.0
  %106 = vst [vmem:[#allocation2 + $0x2e0] sm:$0xff] 0.0
  %107 = vst [vmem:[#allocation2 + $0x2e8] sm:$0xff] 0.0
  %108 = vst [vmem:[#allocation2 + $0x2f0] sm:$0xff] 0.0
  %109 = vst [vmem:[#allocation2 + $0x2f8] sm:$0xff] 0.0
  %110 = vst [vmem:[#allocation2 + $0x300] sm:$0xff] 0.0
  %111 = vst [vmem:[#allocation2 + $0x308] sm:$0xff] 0.0
  %112 = vst [vmem:[#allocation2 + $0x310] sm:$0xff] 0.0
  %113 = vst [vmem:[#allocation2 + $0x318] sm:$0xff] 0.0
  %114 = vst [vmem:[#allocation2 + $0x320] sm:$0xff] 0.0
  %115 = vst [vmem:[#allocation2 + $0x328] sm:$0xff] 0.0
  %116 = vst [vmem:[#allocation2 + $0x330] sm:$0xff] 0.0
  %117 = vst [vmem:[#allocation2 + $0x338] sm:$0xff] 0.0
  %118 = vst [vmem:[#allocation2 + $0x340] sm:$0xff] 0.0
  %119 = vst [vmem:[#allocation2 + $0x348] sm:$0xff] 0.0
  %120 = vst [vmem:[#allocation2 + $0x350] sm:$0xff] 0.0
  %121 = vst [vmem:[#allocation2 + $0x358] sm:$0xff] 0.0
  %122 = vst [vmem:[#allocation2 + $0x360] sm:$0xff] 0.0
  %123 = vst [vmem:[#allocation2 + $0x368] sm:$0xff] 0.0
  %124 = vst [vmem:[#allocation2 + $0x370] sm:$0xff] 0.0
  %125 = vst [vmem:[#allocation2 + $0x378] sm:$0xff] 0.0
  %126 = vst [vmem:[#allocation2 + $0x380] sm:$0xff] 0.0
  %127 = vst [vmem:[#allocation2 + $0x388] sm:$0xff] 0.0
  %128 = vst [vmem:[#allocation2 + $0x390] sm:$0xff] 0.0
  %129 = vst [vmem:[#allocation2 + $0x398] sm:$0xff] 0.0
  %130 = vst [vmem:[#allocation2 + $0x3a0] sm:$0xff] 0.0
  %131 = vst [vmem:[#allocation2 + $0x3a8] sm:$0xff] 0.0
  %132 = vst [vmem:[#allocation2 + $0x3b0] sm:$0xff] 0.0
  %133 = vst [vmem:[#allocation2 + $0x3b8] sm:$0xff] 0.0
  %134 = vst [vmem:[#allocation2 + $0x3c0] sm:$0xff] 0.0
  %135 = vst [vmem:[#allocation2 + $0x3c8] sm:$0xff] 0.0
  %136 = vst [vmem:[#allocation2 + $0x3d0] sm:$0xff] 0.0
  %137 = vst [vmem:[#allocation2 + $0x3d8] sm:$0xff] 0.0
  %138 = vst [vmem:[#allocation2 + $0x3e0] sm:$0xff] 0.0
  %139 = vst [vmem:[#allocation2 + $0x3e8] sm:$0xff] 0.0
  %140 = vst [vmem:[#allocation2 + $0x3f0] sm:$0xff] 0.0
  %141 = vst [vmem:[#allocation2 + $0x3f8] sm:$0xff] 0.0
  %142 = vst [vmem:[#allocation2 + $0x400] sm:$0xff] 0.0
  %143 = vst [vmem:[#allocation2 + $0x408] sm:$0xff] 0.0
  %144 = vst [vmem:[#allocation2 + $0x410] sm:$0xff] 0.0
  %145 = vst [vmem:[#allocation2 + $0x418] sm:$0xff] 0.0
  %146 = vst [vmem:[#allocation2 + $0x420] sm:$0xff] 0.0
  %147 = vst [vmem:[#allocation2 + $0x428] sm:$0xff] 0.0
  %148 = vst [vmem:[#allocation2 + $0x430] sm:$0xff] 0.0
  %149 = vst [vmem:[#allocation2 + $0x438] sm:$0xff] 0.0
  %150 = vst [vmem:[#allocation2 + $0x440] sm:$0xff] 0.0
  %151 = vst [vmem:[#allocation2 + $0x448] sm:$0xff] 0.0
  %152 = vst [vmem:[#allocation2 + $0x450] sm:$0xff] 0.0
  %153 = vst [vmem:[#allocation2 + $0x458] sm:$0xff] 0.0
  %154 = vst [vmem:[#allocation2 + $0x460] sm:$0xff] 0.0
  %155 = vst [vmem:[#allocation2 + $0x468] sm:$0xff] 0.0
  %156 = vst [vmem:[#allocation2 + $0x470] sm:$0xff] 0.0
  %157 = vst [vmem:[#allocation2 + $0x478] sm:$0xff] 0.0
  %v158 = vld [vmem:[%s0] sm:$0xff]
  %v159 = vld [vmem:[%s0 + $0x8] sm:$0xff]
  %v160 = vld [vmem:[%s0 + $0x10] sm:$0xff]
  %v161 = vld [vmem:[%s0 + $0x18] sm:$0xff]
  %v162 = vld [vmem:[%s0 + $0x20] sm:$0xff]
  %v163 = vld [vmem:[%s0 + $0x28] sm:$0xff]
  %v164 = vld [vmem:[%s0 + $0x30] sm:$0xff]
  %v165 = vld [vmem:[%s0 + $0x38] sm:$0xff]
  %v166 = vld [vmem:[%s0 + $0x40] sm:$0xff]
  %v167 = vld [vmem:[%s0 + $0x48] sm:$0xff]
  %v168 = vld [vmem:[%s0 + $0x50] sm:$0xff]
  %v169 = vld [vmem:[%s0 + $0x58] sm:$0xff]
  %v170 = vld [vmem:[%s0 + $0x60] sm:$0xff]
  %v171 = vld [vmem:[%s0 + $0x68] sm:$0xff]
  %v172 = vld [vmem:[%s0 + $0x70] sm:$0xff]
  %v173 = vld [vmem:[%s0 + $0x78] sm:$0xff]
  %v174 = vld [vmem:[%s0 + $0x80] sm:$0xff]
  %v175 = vld [vmem:[%s0 + $0x88] sm:$0xff]
  %v176 = vld [vmem:[%s0 + $0x90] sm:$0xff]
  %v177 = vld [vmem:[%s0 + $0x98] sm:$0xff]
  %v178 = vld [vmem:[%s0 + $0xa0] sm:$0xff]
  %v179 = vld [vmem:[%s0 + $0xa8] sm:$0xff]
  %v180 = vld [vmem:[%s0 + $0xb0] sm:$0xff]
  %v181 = vld [vmem:[%s0 + $0xb8] sm:$0xff]
  %v182 = vld [vmem:[%s0 + $0xc0] sm:$0xff]
  %v183 = vld [vmem:[%s0 + $0xc8] sm:$0xff]
  %v184 = vld [vmem:[%s0 + $0xd0] sm:$0xff]
  %v185 = vld [vmem:[%s0 + $0xd8] sm:$0xff]
  %v186 = vld [vmem:[%s0 + $0xe0] sm:$0xff]
  %v187 = vld [vmem:[%s0 + $0xe8] sm:$0xff]
  %v188 = vld [vmem:[%s0 + $0xf0] sm:$0xff]
  %v189 = vld [vmem:[%s0 + $0xf8] sm:$0xff]
  %v190 = vld [vmem:[%s0 + $0x100] sm:$0xff]
  %v191 = vld [vmem:[%s0 + $0x108] sm:$0xff]
  %v192 = vld [vmem:[%s0 + $0x110] sm:$0xff]
  %v193 = vld [vmem:[%s0 + $0x118] sm:$0xff]
  %v194 = vld [vmem:[%s0 + $0x120] sm:$0xff]
  %v195 = vld [vmem:[%s0 + $0x128] sm:$0xff]
  %v196 = vld [vmem:[%s0 + $0x130] sm:$0xff]
  %v197 = vld [vmem:[%s0 + $0x138] sm:$0xff]
  %v198 = vld [vmem:[%s0 + $0x140] sm:$0xff]
  %v199 = vld [vmem:[%s0 + $0x148] sm:$0xff]
  %v200 = vld [vmem:[%s0 + $0x150] sm:$0xff]
  %v201 = vld [vmem:[%s0 + $0x158] sm:$0xff]
  %v202 = vld [vmem:[%s0 + $0x160] sm:$0xff]
  %v203 = vld [vmem:[%s0 + $0x168] sm:$0xff]
  %v204 = vld [vmem:[%s0 + $0x170] sm:$0xff]
  %v205 = vld [vmem:[%s0 + $0x178] sm:$0xff]
  %v206 = vld [vmem:[%s0 + $0x180] sm:$0xff]
  %v207 = vld [vmem:[%s0 + $0x188] sm:$0xff]
  %v208 = vld [vmem:[%s0 + $0x190] sm:$0xff]
  %v209 = vld [vmem:[%s0 + $0x198] sm:$0xff]
  %v210 = vld [vmem:[%s0 + $0x1a0] sm:$0xff]
  %v211 = vld [vmem:[%s0 + $0x1a8] sm:$0xff]
  %v212 = vld [vmem:[%s0 + $0x1b0] sm:$0xff]
  %v213 = vld [vmem:[%s0 + $0x1b8] sm:$0xff]
  %v214 = vld [vmem:[%s0 + $0x1c0] sm:$0xff]
  %v215 = vld [vmem:[%s0 + $0x1c8] sm:$0xff]
  %v216 = vld [vmem:[%s0 + $0x1d0] sm:$0xff]
  %v217 = vld [vmem:[%s0 + $0x1d8] sm:$0xff]
  %v218 = vld [vmem:[%s0 + $0x1e0] sm:$0xff]
  %v219 = vld [vmem:[%s0 + $0x1e8] sm:$0xff]
  %v220 = vld [vmem:[%s0 + $0x1f0] sm:$0xff]
  %v221 = vld [vmem:[%s0 + $0x1f8] sm:$0xff]
  %s222 = scalar_lea.vmem [#allocation2], 32
  %223 = vst [vmem:[%s222 + $0x8] sm:$0xff] %v158
  %224 = vst [vmem:[%s222 + $0x10] sm:$0xff] %v159
  %225 = vst [vmem:[%s222 + $0x28] sm:$0xff] %v160
  %226 = vst [vmem:[%s222 + $0x30] sm:$0xff] %v161
  %227 = vst [vmem:[%s222 + $0x48] sm:$0xff] %v162
  %228 = vst [vmem:[%s222 + $0x50] sm:$0xff] %v163
  %229 = vst [vmem:[%s222 + $0x68] sm:$0xff] %v164
  %230 = vst [vmem:[%s222 + $0x70] sm:$0xff] %v165
  %231 = vst [vmem:[%s222 + $0x88] sm:$0xff] %v166
  %232 = vst [vmem:[%s222 + $0x90] sm:$0xff] %v167
  %233 = vst [vmem:[%s222 + $0xa8] sm:$0xff] %v168
  %234 = vst [vmem:[%s222 + $0xb0] sm:$0xff] %v169
  %235 = vst [vmem:[%s222 + $0xc8] sm:$0xff] %v170
  %236 = vst [vmem:[%s222 + $0xd0] sm:$0xff] %v171
  %237 = vst [vmem:[%s222 + $0xe8] sm:$0xff] %v172
  %238 = vst [vmem:[%s222 + $0xf0] sm:$0xff] %v173
  %239 = vst [vmem:[%s222 + $0x108] sm:$0xff] %v174
  %240 = vst [vmem:[%s222 + $0x110] sm:$0xff] %v175
  %241 = vst [vmem:[%s222 + $0x128] sm:$0xff] %v176
  %242 = vst [vmem:[%s222 + $0x130] sm:$0xff] %v177
  %243 = vst [vmem:[%s222 + $0x148] sm:$0xff] %v178
  %244 = vst [vmem:[%s222 + $0x150] sm:$0xff] %v179
  %245 = vst [vmem:[%s222 + $0x168] sm:$0xff] %v180
  %246 = vst [vmem:[%s222 + $0x170] sm:$0xff] %v181
  %247 = vst [vmem:[%s222 + $0x188] sm:$0xff] %v182
  %248 = vst [vmem:[%s222 + $0x190] sm:$0xff] %v183
  %249 = vst [vmem:[%s222 + $0x1a8] sm:$0xff] %v184
  %250 = vst [vmem:[%s222 + $0x1b0] sm:$0xff] %v185
  %251 = vst [vmem:[%s222 + $0x1c8] sm:$0xff] %v186
  %252 = vst [vmem:[%s222 + $0x1d0] sm:$0xff] %v187
  %253 = vst [vmem:[%s222 + $0x1e8] sm:$0xff] %v188
  %254 = vst [vmem:[%s222 + $0x1f0] sm:$0xff] %v189
  %s255 = scalar_lea.vmem [#allocation2], 608
  %256 = vst [vmem:[%s255 + $0x8] sm:$0xff] %v190
  %257 = vst [vmem:[%s255 + $0x10] sm:$0xff] %v191
  %258 = vst [vmem:[%s255 + $0x28] sm:$0xff] %v192
  %259 = vst [vmem:[%s255 + $0x30] sm:$0xff] %v193
  %260 = vst [vmem:[%s255 + $0x48] sm:$0xff] %v194
  %261 = vst [vmem:[%s255 + $0x50] sm:$0xff] %v195
  %262 = vst [vmem:[%s255 + $0x68] sm:$0xff] %v196
  %263 = vst [vmem:[%s255 + $0x70] sm:$0xff] %v197
  %264 = vst [vmem:[%s255 + $0x88] sm:$0xff] %v198
  %265 = vst [vmem:[%s255 + $0x90] sm:$0xff] %v199
  %266 = vst [vmem:[%s255 + $0xa8] sm:$0xff] %v200
  %267 = vst [vmem:[%s255 + $0xb0] sm:$0xff] %v201
  %268 = vst [vmem:[%s255 + $0xc8] sm:$0xff] %v202
  %269 = vst [vmem:[%s255 + $0xd0] sm:$0xff] %v203
  %270 = vst [vmem:[%s255 + $0xe8] sm:$0xff] %v204
  %271 = vst [vmem:[%s255 + $0xf0] sm:$0xff] %v205
  %272 = vst [vmem:[%s255 + $0x108] sm:$0xff] %v206
  %273 = vst [vmem:[%s255 + $0x110] sm:$0xff] %v207
  %274 = vst [vmem:[%s255 + $0x128] sm:$0xff] %v208
  %275 = vst [vmem:[%s255 + $0x130] sm:$0xff] %v209
  %276 = vst [vmem:[%s255 + $0x148] sm:$0xff] %v210
  %277 = vst [vmem:[%s255 + $0x150] sm:$0xff] %v211
  %278 = vst [vmem:[%s255 + $0x168] sm:$0xff] %v212
  %279 = vst [vmem:[%s255 + $0x170] sm:$0xff] %v213
  %280 = vst [vmem:[%s255 + $0x188] sm:$0xff] %v214
  %281 = vst [vmem:[%s255 + $0x190] sm:$0xff] %v215
  %282 = vst [vmem:[%s255 + $0x1a8] sm:$0xff] %v216
  %283 = vst [vmem:[%s255 + $0x1b0] sm:$0xff] %v217
  %284 = vst [vmem:[%s255 + $0x1c8] sm:$0xff] %v218
  %285 = vst [vmem:[%s255 + $0x1d0] sm:$0xff] %v219
  %286 = vst [vmem:[%s255 + $0x1e8] sm:$0xff] %v220
  %287 = vst [vmem:[%s255 + $0x1f0] sm:$0xff] %v221
  %v288 = vld [vmem:[#allocation2 + $0x7] sm:$0xff]
  %v289 = vld [vmem:[#allocation2 + $0xf] sm:$0xff]
  %v290 = vld [vmem:[#allocation2 + $0x27] sm:$0xff]
  %v291 = vld [vmem:[#allocation2 + $0x2f] sm:$0xff]
  %v292 = vld [vmem:[#allocation2 + $0x47] sm:$0xff]
  %v293 = vld [vmem:[#allocation2 + $0x4f] sm:$0xff]
  %v294 = vld [vmem:[#allocation2 + $0x67] sm:$0xff]
  %v295 = vld [vmem:[#allocation2 + $0x6f] sm:$0xff]
  %v296 = vld [vmem:[#allocation2 + $0x87] sm:$0xff]
  %v297 = vld [vmem:[#allocation2 + $0x8f] sm:$0xff]
  %v298 = vld [vmem:[#allocation2 + $0xa7] sm:$0xff]
  %v299 = vld [vmem:[#allocation2 + $0xaf] sm:$0xff]
  %v300 = vld [vmem:[#allocation2 + $0xc7] sm:$0xff]
  %v301 = vld [vmem:[#allocation2 + $0xcf] sm:$0xff]
  %v302 = vld [vmem:[#allocation2 + $0xe7] sm:$0xff]
  %v303 = vld [vmem:[#allocation2 + $0xef] sm:$0xff]
  %v304 = vld [vmem:[#allocation2 + $0x107] sm:$0xff]
  %v305 = vld [vmem:[#allocation2 + $0x10f] sm:$0xff]
  %v306 = vld [vmem:[#allocation2 + $0x127] sm:$0xff]
  %v307 = vld [vmem:[#allocation2 + $0x12f] sm:$0xff]
  %v308 = vld [vmem:[#allocation2 + $0x147] sm:$0xff]
  %v309 = vld [vmem:[#allocation2 + $0x14f] sm:$0xff]
  %v310 = vld [vmem:[#allocation2 + $0x167] sm:$0xff]
  %v311 = vld [vmem:[#allocation2 + $0x16f] sm:$0xff]
  %v312 = vld [vmem:[#allocation2 + $0x187] sm:$0xff]
  %v313 = vld [vmem:[#allocation2 + $0x18f] sm:$0xff]
  %v314 = vld [vmem:[#allocation2 + $0x1a7] sm:$0xff]
  %v315 = vld [vmem:[#allocation2 + $0x1af] sm:$0xff]
  %v316 = vld [vmem:[#allocation2 + $0x1c7] sm:$0xff]
  %v317 = vld [vmem:[#allocation2 + $0x1cf] sm:$0xff]
  %v318 = vld [vmem:[#allocation2 + $0x1e7] sm:$0xff]
  %v319 = vld [vmem:[#allocation2 + $0x1ef] sm:$0xff]
  %v320 = vld [vmem:[#allocation2 + $0x8] sm:$0xff]
  %v321 = vld [vmem:[#allocation2 + $0x10] sm:$0xff]
  %v322 = vld [vmem:[#allocation2 + $0x28] sm:$0xff]
  %v323 = vld [vmem:[#allocation2 + $0x30] sm:$0xff]
  %v324 = vld [vmem:[#allocation2 + $0x48] sm:$0xff]
  %v325 = vld [vmem:[#allocation2 + $0x50] sm:$0xff]
  %v326 = vld [vmem:[#allocation2 + $0x68] sm:$0xff]
  %v327 = vld [vmem:[#allocation2 + $0x70] sm:$0xff]
  %v328 = vld [vmem:[#allocation2 + $0x88] sm:$0xff]
  %v329 = vld [vmem:[#allocation2 + $0x90] sm:$0xff]
  %v330 = vld [vmem:[#allocation2 + $0xa8] sm:$0xff]
  %v331 = vld [vmem:[#allocation2 + $0xb0] sm:$0xff]
  %v332 = vld [vmem:[#allocation2 + $0xc8] sm:$0xff]
  %v333 = vld [vmem:[#allocation2 + $0xd0] sm:$0xff]
  %v334 = vld [vmem:[#allocation2 + $0xe8] sm:$0xff]
  %v335 = vld [vmem:[#allocation2 + $0xf0] sm:$0xff]
  %v336 = vld [vmem:[#allocation2 + $0x108] sm:$0xff]
  %v337 = vld [vmem:[#allocation2 + $0x110] sm:$0xff]
  %v338 = vld [vmem:[#allocation2 + $0x128] sm:$0xff]
  %v339 = vld [vmem:[#allocation2 + $0x130] sm:$0xff]
  %v340 = vld [vmem:[#allocation2 + $0x148] sm:$0xff]
  %v341 = vld [vmem:[#allocation2 + $0x150] sm:$0xff]
  %v342 = vld [vmem:[#allocation2 + $0x168] sm:$0xff]
  %v343 = vld [vmem:[#allocation2 + $0x170] sm:$0xff]
  %v344 = vld [vmem:[#allocation2 + $0x188] sm:$0xff]
  %v345 = vld [vmem:[#allocation2 + $0x190] sm:$0xff]
  %v346 = vld [vmem:[#allocation2 + $0x1a8] sm:$0xff]
  %v347 = vld [vmem:[#allocation2 + $0x1b0] sm:$0xff]
  %v348 = vld [vmem:[#allocation2 + $0x1c8] sm:$0xff]
  %v349 = vld [vmem:[#allocation2 + $0x1d0] sm:$0xff]
  %v350 = vld [vmem:[#allocation2 + $0x1e8] sm:$0xff]
  %v351 = vld [vmem:[#allocation2 + $0x1f0] sm:$0xff]
  %v352 = vld [vmem:[#allocation2 + $0x9] sm:$0xff]
  %v353 = vld [vmem:[#allocation2 + $0x11] sm:$0xff]
  %v354 = vld [vmem:[#allocation2 + $0x29] sm:$0xff]
  %v355 = vld [vmem:[#allocation2 + $0x31] sm:$0xff]
  %v356 = vld [vmem:[#allocation2 + $0x49] sm:$0xff]
  %v357 = vld [vmem:[#allocation2 + $0x51] sm:$0xff]
  %v358 = vld [vmem:[#allocation2 + $0x69] sm:$0xff]
  %v359 = vld [vmem:[#allocation2 + $0x71] sm:$0xff]
  %v360 = vld [vmem:[#allocation2 + $0x89] sm:$0xff]
  %v361 = vld [vmem:[#allocation2 + $0x91] sm:$0xff]
  %v362 = vld [vmem:[#allocation2 + $0xa9] sm:$0xff]
  %v363 = vld [vmem:[#allocation2 + $0xb1] sm:$0xff]
  %v364 = vld [vmem:[#allocation2 + $0xc9] sm:$0xff]
  %v365 = vld [vmem:[#allocation2 + $0xd1] sm:$0xff]
  %v366 = vld [vmem:[#allocation2 + $0xe9] sm:$0xff]
  %v367 = vld [vmem:[#allocation2 + $0xf1] sm:$0xff]
  %v368 = vld [vmem:[#allocation2 + $0x109] sm:$0xff]
  %v369 = vld [vmem:[#allocation2 + $0x111] sm:$0xff]
  %v370 = vld [vmem:[#allocation2 + $0x129] sm:$0xff]
  %v371 = vld [vmem:[#allocation2 + $0x131] sm:$0xff]
  %v372 = vld [vmem:[#allocation2 + $0x149] sm:$0xff]
  %v373 = vld [vmem:[#allocation2 + $0x151] sm:$0xff]
  %v374 = vld [vmem:[#allocation2 + $0x169] sm:$0xff]
  %v375 = vld [vmem:[#allocation2 + $0x171] sm:$0xff]
  %v376 = vld [vmem:[#allocation2 + $0x189] sm:$0xff]
  %v377 = vld [vmem:[#allocation2 + $0x191] sm:$0xff]
  %v378 = vld [vmem:[#allocation2 + $0x1a9] sm:$0xff]
  %v379 = vld [vmem:[#allocation2 + $0x1b1] sm:$0xff]
  %v380 = vld [vmem:[#allocation2 + $0x1c9] sm:$0xff]
  %v381 = vld [vmem:[#allocation2 + $0x1d1] sm:$0xff]
  %v382 = vld [vmem:[#allocation2 + $0x1e9] sm:$0xff]
  %v383 = vld [vmem:[#allocation2 + $0x1f1] sm:$0xff]
  %s384 = scalar_lea.vmem [#allocation2], 576
  %v385 = vld [vmem:[%s384 + $0x7] sm:$0xff]
  %v386 = vld [vmem:[%s384 + $0xf] sm:$0xff]
  %v387 = vld [vmem:[%s384 + $0x27] sm:$0xff]
  %v388 = vld [vmem:[%s384 + $0x2f] sm:$0xff]
  %v389 = vld [vmem:[%s384 + $0x47] sm:$0xff]
  %v390 = vld [vmem:[%s384 + $0x4f] sm:$0xff]
  %v391 = vld [vmem:[%s384 + $0x67] sm:$0xff]
  %v392 = vld [vmem:[%s384 + $0x6f] sm:$0xff]
  %v393 = vld [vmem:[%s384 + $0x87] sm:$0xff]
  %v394 = vld [vmem:[%s384 + $0x8f] sm:$0xff]
  %v395 = vld [vmem:[%s384 + $0xa7] sm:$0xff]
  %v396 = vld [vmem:[%s384 + $0xaf] sm:$0xff]
  %v397 = vld [vmem:[%s384 + $0xc7] sm:$0xff]
  %v398 = vld [vmem:[%s384 + $0xcf] sm:$0xff]
  %v399 = vld [vmem:[%s384 + $0xe7] sm:$0xff]
  %v400 = vld [vmem:[%s384 + $0xef] sm:$0xff]
  %v401 = vld [vmem:[%s384 + $0x107] sm:$0xff]
  %v402 = vld [vmem:[%s384 + $0x10f] sm:$0xff]
  %v403 = vld [vmem:[%s384 + $0x127] sm:$0xff]
  %v404 = vld [vmem:[%s384 + $0x12f] sm:$0xff]
  %v405 = vld [vmem:[%s384 + $0x147] sm:$0xff]
  %v406 = vld [vmem:[%s384 + $0x14f] sm:$0xff]
  %v407 = vld [vmem:[%s384 + $0x167] sm:$0xff]
  %v408 = vld [vmem:[%s384 + $0x16f] sm:$0xff]
  %v409 = vld [vmem:[%s384 + $0x187] sm:$0xff]
  %v410 = vld [vmem:[%s384 + $0x18f] sm:$0xff]
  %v411 = vld [vmem:[%s384 + $0x1a7] sm:$0xff]
  %v412 = vld [vmem:[%s384 + $0x1af] sm:$0xff]
  %v413 = vld [vmem:[%s384 + $0x1c7] sm:$0xff]
  %v414 = vld [vmem:[%s384 + $0x1cf] sm:$0xff]
  %v415 = vld [vmem:[%s384 + $0x1e7] sm:$0xff]
  %v416 = vld [vmem:[%s384 + $0x1ef] sm:$0xff]
  %v417 = vld [vmem:[%s384 + $0x8] sm:$0xff]
  %v418 = vld [vmem:[%s384 + $0x10] sm:$0xff]
  %v419 = vld [vmem:[%s384 + $0x28] sm:$0xff]
  %v420 = vld [vmem:[%s384 + $0x30] sm:$0xff]
  %v421 = vld [vmem:[%s384 + $0x48] sm:$0xff]
  %v422 = vld [vmem:[%s384 + $0x50] sm:$0xff]
  %v423 = vld [vmem:[%s384 + $0x68] sm:$0xff]
  %v424 = vld [vmem:[%s384 + $0x70] sm:$0xff]
  %v425 = vld [vmem:[%s384 + $0x88] sm:$0xff]
  %v426 = vld [vmem:[%s384 + $0x90] sm:$0xff]
  %v427 = vld [vmem:[%s384 + $0xa8] sm:$0xff]
  %v428 = vld [vmem:[%s384 + $0xb0] sm:$0xff]
  %v429 = vld [vmem:[%s384 + $0xc8] sm:$0xff]
  %v430 = vld [vmem:[%s384 + $0xd0] sm:$0xff]
  %v431 = vld [vmem:[%s384 + $0xe8] sm:$0xff]
  %v432 = vld [vmem:[%s384 + $0xf0] sm:$0xff]
  %v433 = vld [vmem:[%s384 + $0x108] sm:$0xff]
  %v434 = vld [vmem:[%s384 + $0x110] sm:$0xff]
  %v435 = vld [vmem:[%s384 + $0x128] sm:$0xff]
  %v436 = vld [vmem:[%s384 + $0x130] sm:$0xff]
  %v437 = vld [vmem:[%s384 + $0x148] sm:$0xff]
  %v438 = vld [vmem:[%s384 + $0x150] sm:$0xff]
  %v439 = vld [vmem:[%s384 + $0x168] sm:$0xff]
  %v440 = vld [vmem:[%s384 + $0x170] sm:$0xff]
  %v441 = vld [vmem:[%s384 + $0x188] sm:$0xff]
  %v442 = vld [vmem:[%s384 + $0x190] sm:$0xff]
  %v443 = vld [vmem:[%s384 + $0x1a8] sm:$0xff]
  %v444 = vld [vmem:[%s384 + $0x1b0] sm:$0xff]
  %v445 = vld [vmem:[%s384 + $0x1c8] sm:$0xff]
  %v446 = vld [vmem:[%s384 + $0x1d0] sm:$0xff]
  %v447 = vld [vmem:[%s384 + $0x1e8] sm:$0xff]
  %v448 = vld [vmem:[%s384 + $0x1f0] sm:$0xff]
  %v449 = vld [vmem:[%s384 + $0x9] sm:$0xff]
  %v450 = vld [vmem:[%s384 + $0x11] sm:$0xff]
  %v451 = vld [vmem:[%s384 + $0x29] sm:$0xff]
  %v452 = vld [vmem:[%s384 + $0x31] sm:$0xff]
  %v453 = vld [vmem:[%s384 + $0x49] sm:$0xff]
  %v454 = vld [vmem:[%s384 + $0x51] sm:$0xff]
  %v455 = vld [vmem:[%s384 + $0x69] sm:$0xff]
  %v456 = vld [vmem:[%s384 + $0x71] sm:$0xff]
  %v457 = vld [vmem:[%s384 + $0x89] sm:$0xff]
  %v458 = vld [vmem:[%s384 + $0x91] sm:$0xff]
  %v459 = vld [vmem:[%s384 + $0xa9] sm:$0xff]
  %v460 = vld [vmem:[%s384 + $0xb1] sm:$0xff]
  %v461 = vld [vmem:[%s384 + $0xc9] sm:$0xff]
  %v462 = vld [vmem:[%s384 + $0xd1] sm:$0xff]
  %v463 = vld [vmem:[%s384 + $0xe9] sm:$0xff]
  %v464 = vld [vmem:[%s384 + $0xf1] sm:$0xff]
  %v465 = vld [vmem:[%s384 + $0x109] sm:$0xff]
  %v466 = vld [vmem:[%s384 + $0x111] sm:$0xff]
  %v467 = vld [vmem:[%s384 + $0x129] sm:$0xff]
  %v468 = vld [vmem:[%s384 + $0x131] sm:$0xff]
  %v469 = vld [vmem:[%s384 + $0x149] sm:$0xff]
  %v470 = vld [vmem:[%s384 + $0x151] sm:$0xff]
  %v471 = vld [vmem:[%s384 + $0x169] sm:$0xff]
  %v472 = vld [vmem:[%s384 + $0x171] sm:$0xff]
  %v473 = vld [vmem:[%s384 + $0x189] sm:$0xff]
  %v474 = vld [vmem:[%s384 + $0x191] sm:$0xff]
  %v475 = vld [vmem:[%s384 + $0x1a9] sm:$0xff]
  %v476 = vld [vmem:[%s384 + $0x1b1] sm:$0xff]
  %v477 = vld [vmem:[%s384 + $0x1c9] sm:$0xff]
  %v478 = vld [vmem:[%s384 + $0x1d1] sm:$0xff]
  %v479 = vld [vmem:[%s384 + $0x1e9] sm:$0xff]
  %v480 = vld [vmem:[%s384 + $0x1f1] sm:$0xff]
  %v481 = vld [vmem:[%s1] sm:$0xff]
  %v482 = vld [vmem:[%s1 + $0x8] sm:$0xff]
  %v483 = vld [vmem:[%s1 + $0x10] sm:$0xff]
  %v484 = vld [vmem:[%s1 + $0x18] sm:$0xff]
  %v485 = vld [vmem:[%s1 + $0x20] sm:$0xff]
  %v486 = vld [vmem:[%s1 + $0x28] sm:$0xff]
  %v487 = vld [vmem:[%s1 + $0x30] sm:$0xff]
  %v488 = vld [vmem:[%s1 + $0x38] sm:$0xff]
  %v489 = vld [vmem:[%s1 + $0x40] sm:$0xff]
  %v490 = vld [vmem:[%s1 + $0x48] sm:$0xff]
  %v491 = vld [vmem:[%s1 + $0x50] sm:$0xff]
  %v492 = vld [vmem:[%s1 + $0x58] sm:$0xff]
  %v493 = vld [vmem:[%s1 + $0x60] sm:$0xff]
  %v494 = vld [vmem:[%s1 + $0x68] sm:$0xff]
  %v495 = vld [vmem:[%s1 + $0x70] sm:$0xff]
  %v496 = vld [vmem:[%s1 + $0x78] sm:$0xff]
  %v497 = vld [vmem:[%s1 + $0x80] sm:$0xff]
  %v498 = vld [vmem:[%s1 + $0x88] sm:$0xff]
  %v499 = vld [vmem:[%s1 + $0x90] sm:$0xff]
  %v500 = vld [vmem:[%s1 + $0x98] sm:$0xff]
  %v501 = vld [vmem:[%s1 + $0xa0] sm:$0xff]
  %v502 = vld [vmem:[%s1 + $0xa8] sm:$0xff]
  %v503 = vld [vmem:[%s1 + $0xb0] sm:$0xff]
  %v504 = vld [vmem:[%s1 + $0xb8] sm:$0xff]
  %v505 = vld [vmem:[%s1 + $0xc0] sm:$0xff]
  %v506 = vld [vmem:[%s1 + $0xc8] sm:$0xff]
  %v507 = vld [vmem:[%s1 + $0xd0] sm:$0xff]
  %v508 = vld [vmem:[%s1 + $0xd8] sm:$0xff]
  %v509 = vld [vmem:[%s1 + $0xe0] sm:$0xff]
  %v510 = vld [vmem:[%s1 + $0xe8] sm:$0xff]
  %v511 = vld [vmem:[%s1 + $0xf0] sm:$0xff]
  %v512 = vld [vmem:[%s1 + $0xf8] sm:$0xff]
  %v513 = vld [vmem:[%s1 + $0x100] sm:$0xff]
  %v514 = vld [vmem:[%s1 + $0x108] sm:$0xff]
  %v515 = vld [vmem:[%s1 + $0x110] sm:$0xff]
  %v516 = vld [vmem:[%s1 + $0x118] sm:$0xff]
  %v517 = vld [vmem:[%s1 + $0x120] sm:$0xff]
  %v518 = vld [vmem:[%s1 + $0x128] sm:$0xff]
  %v519 = vld [vmem:[%s1 + $0x130] sm:$0xff]
  %v520 = vld [vmem:[%s1 + $0x138] sm:$0xff]
  %v521 = vld [vmem:[%s1 + $0x140] sm:$0xff]
  %v522 = vld [vmem:[%s1 + $0x148] sm:$0xff]
  %v523 = vld [vmem:[%s1 + $0x150] sm:$0xff]
  %v524 = vld [vmem:[%s1 + $0x158] sm:$0xff]
  %v525 = vld [vmem:[%s1 + $0x160] sm:$0xff]
  %v526 = vld [vmem:[%s1 + $0x168] sm:$0xff]
  %v527 = vld [vmem:[%s1 + $0x170] sm:$0xff]
  %v528 = vld [vmem:[%s1 + $0x178] sm:$0xff]
  %v529 = vld [vmem:[%s222 + $0x7] sm:$0xff]
  %v530 = vld [vmem:[%s222 + $0xf] sm:$0xff]
  %v531 = vld [vmem:[%s222 + $0x27] sm:$0xff]
  %v532 = vld [vmem:[%s222 + $0x2f] sm:$0xff]
  %v533 = vld [vmem:[%s222 + $0x47] sm:$0xff]
  %v534 = vld [vmem:[%s222 + $0x4f] sm:$0xff]
  %v535 = vld [vmem:[%s222 + $0x67] sm:$0xff]
  %v536 = vld [vmem:[%s222 + $0x6f] sm:$0xff]
  %v537 = vld [vmem:[%s222 + $0x87] sm:$0xff]
  %v538 = vld [vmem:[%s222 + $0x8f] sm:$0xff]
  %v539 = vld [vmem:[%s222 + $0xa7] sm:$0xff]
  %v540 = vld [vmem:[%s222 + $0xaf] sm:$0xff]
  %v541 = vld [vmem:[%s222 + $0xc7] sm:$0xff]
  %v542 = vld [vmem:[%s222 + $0xcf] sm:$0xff]
  %v543 = vld [vmem:[%s222 + $0xe7] sm:$0xff]
  %v544 = vld [vmem:[%s222 + $0xef] sm:$0xff]
  %v545 = vld [vmem:[%s222 + $0x107] sm:$0xff]
  %v546 = vld [vmem:[%s222 + $0x10f] sm:$0xff]
  %v547 = vld [vmem:[%s222 + $0x127] sm:$0xff]
  %v548 = vld [vmem:[%s222 + $0x12f] sm:$0xff]
  %v549 = vld [vmem:[%s222 + $0x147] sm:$0xff]
  %v550 = vld [vmem:[%s222 + $0x14f] sm:$0xff]
  %v551 = vld [vmem:[%s222 + $0x167] sm:$0xff]
  %v552 = vld [vmem:[%s222 + $0x16f] sm:$0xff]
  %v553 = vld [vmem:[%s222 + $0x187] sm:$0xff]
  %v554 = vld [vmem:[%s222 + $0x18f] sm:$0xff]
  %v555 = vld [vmem:[%s222 + $0x1a7] sm:$0xff]
  %v556 = vld [vmem:[%s222 + $0x1af] sm:$0xff]
  %v557 = vld [vmem:[%s222 + $0x1c7] sm:$0xff]
  %v558 = vld [vmem:[%s222 + $0x1cf] sm:$0xff]
  %v559 = vld [vmem:[%s222 + $0x1e7] sm:$0xff]
  %v560 = vld [vmem:[%s222 + $0x1ef] sm:$0xff]
  %v561 = vld [vmem:[%s222 + $0x8] sm:$0xff]
  %v562 = vld [vmem:[%s222 + $0x10] sm:$0xff]
  %v563 = vld [vmem:[%s222 + $0x28] sm:$0xff]
  %v564 = vld [vmem:[%s222 + $0x30] sm:$0xff]
  %v565 = vld [vmem:[%s222 + $0x48] sm:$0xff]
  %v566 = vld [vmem:[%s222 + $0x50] sm:$0xff]
  %v567 = vld [vmem:[%s222 + $0x68] sm:$0xff]
  %v568 = vld [vmem:[%s222 + $0x70] sm:$0xff]
  %v569 = vld [vmem:[%s222 + $0x88] sm:$0xff]
  %v570 = vld [vmem:[%s222 + $0x90] sm:$0xff]
  %v571 = vld [vmem:[%s222 + $0xa8] sm:$0xff]
  %v572 = vld [vmem:[%s222 + $0xb0] sm:$0xff]
  %v573 = vld [vmem:[%s222 + $0xc8] sm:$0xff]
  %v574 = vld [vmem:[%s222 + $0xd0] sm:$0xff]
  %v575 = vld [vmem:[%s222 + $0xe8] sm:$0xff]
  %v576 = vld [vmem:[%s222 + $0xf0] sm:$0xff]
  %v577 = vld [vmem:[%s222 + $0x108] sm:$0xff]
  %v578 = vld [vmem:[%s222 + $0x110] sm:$0xff]
  %v579 = vld [vmem:[%s222 + $0x128] sm:$0xff]
  %v580 = vld [vmem:[%s222 + $0x130] sm:$0xff]
  %v581 = vld [vmem:[%s222 + $0x148] sm:$0xff]
  %v582 = vld [vmem:[%s222 + $0x150] sm:$0xff]
  %v583 = vld [vmem:[%s222 + $0x168] sm:$0xff]
  %v584 = vld [vmem:[%s222 + $0x170] sm:$0xff]
  %v585 = vld [vmem:[%s222 + $0x188] sm:$0xff]
  %v586 = vld [vmem:[%s222 + $0x190] sm:$0xff]
  %v587 = vld [vmem:[%s222 + $0x1a8] sm:$0xff]
  %v588 = vld [vmem:[%s222 + $0x1b0] sm:$0xff]
  %v589 = vld [vmem:[%s222 + $0x1c8] sm:$0xff]
  %v590 = vld [vmem:[%s222 + $0x1d0] sm:$0xff]
  %v591 = vld [vmem:[%s222 + $0x1e8] sm:$0xff]
  %v592 = vld [vmem:[%s222 + $0x1f0] sm:$0xff]
  %v593 = vld [vmem:[%s222 + $0x9] sm:$0xff]
  %v594 = vld [vmem:[%s222 + $0x11] sm:$0xff]
  %v595 = vld [vmem:[%s222 + $0x29] sm:$0xff]
  %v596 = vld [vmem:[%s222 + $0x31] sm:$0xff]
  %v597 = vld [vmem:[%s222 + $0x49] sm:$0xff]
  %v598 = vld [vmem:[%s222 + $0x51] sm:$0xff]
  %v599 = vld [vmem:[%s222 + $0x69] sm:$0xff]
  %v600 = vld [vmem:[%s222 + $0x71] sm:$0xff]
  %v601 = vld [vmem:[%s222 + $0x89] sm:$0xff]
  %v602 = vld [vmem:[%s222 + $0x91] sm:$0xff]
  %v603 = vld [vmem:[%s222 + $0xa9] sm:$0xff]
  %v604 = vld [vmem:[%s222 + $0xb1] sm:$0xff]
  %v605 = vld [vmem:[%s222 + $0xc9] sm:$0xff]
  %v606 = vld [vmem:[%s222 + $0xd1] sm:$0xff]
  %v607 = vld [vmem:[%s222 + $0xe9] sm:$0xff]
  %v608 = vld [vmem:[%s222 + $0xf1] sm:$0xff]
  %v609 = vld [vmem:[%s222 + $0x109] sm:$0xff]
  %v610 = vld [vmem:[%s222 + $0x111] sm:$0xff]
  %v611 = vld [vmem:[%s222 + $0x129] sm:$0xff]
  %v612 = vld [vmem:[%s222 + $0x131] sm:$0xff]
  %v613 = vld [vmem:[%s222 + $0x149] sm:$0xff]
  %v614 = vld [vmem:[%s222 + $0x151] sm:$0xff]
  %v615 = vld [vmem:[%s222 + $0x169] sm:$0xff]
  %v616 = vld [vmem:[%s222 + $0x171] sm:$0xff]
  %v617 = vld [vmem:[%s222 + $0x189] sm:$0xff]
  %v618 = vld [vmem:[%s222 + $0x191] sm:$0xff]
  %v619 = vld [vmem:[%s222 + $0x1a9] sm:$0xff]
  %v620 = vld [vmem:[%s222 + $0x1b1] sm:$0xff]
  %v621 = vld [vmem:[%s222 + $0x1c9] sm:$0xff]
  %v622 = vld [vmem:[%s222 + $0x1d1] sm:$0xff]
  %v623 = vld [vmem:[%s222 + $0x1e9] sm:$0xff]
  %v624 = vld [vmem:[%s222 + $0x1f1] sm:$0xff]
  %v625 = vld [vmem:[%s255 + $0x7] sm:$0xff]
  %v626 = vld [vmem:[%s255 + $0xf] sm:$0xff]
  %v627 = vld [vmem:[%s255 + $0x27] sm:$0xff]
  %v628 = vld [vmem:[%s255 + $0x2f] sm:$0xff]
  %v629 = vld [vmem:[%s255 + $0x47] sm:$0xff]
  %v630 = vld [vmem:[%s255 + $0x4f] sm:$0xff]
  %v631 = vld [vmem:[%s255 + $0x67] sm:$0xff]
  %v632 = vld [vmem:[%s255 + $0x6f] sm:$0xff]
  %v633 = vld [vmem:[%s255 + $0x87] sm:$0xff]
  %v634 = vld [vmem:[%s255 + $0x8f] sm:$0xff]
  %v635 = vld [vmem:[%s255 + $0xa7] sm:$0xff]
  %v636 = vld [vmem:[%s255 + $0xaf] sm:$0xff]
  %v637 = vld [vmem:[%s255 + $0xc7] sm:$0xff]
  %v638 = vld [vmem:[%s255 + $0xcf] sm:$0xff]
  %v639 = vld [vmem:[%s255 + $0xe7] sm:$0xff]
  %v640 = vld [vmem:[%s255 + $0xef] sm:$0xff]
  %v641 = vld [vmem:[%s255 + $0x107] sm:$0xff]
  %v642 = vld [vmem:[%s255 + $0x10f] sm:$0xff]
  %v643 = vld [vmem:[%s255 + $0x127] sm:$0xff]
  %v644 = vld [vmem:[%s255 + $0x12f] sm:$0xff]
  %v645 = vld [vmem:[%s255 + $0x147] sm:$0xff]
  %v646 = vld [vmem:[%s255 + $0x14f] sm:$0xff]
  %v647 = vld [vmem:[%s255 + $0x167] sm:$0xff]
  %v648 = vld [vmem:[%s255 + $0x16f] sm:$0xff]
  %v649 = vld [vmem:[%s255 + $0x187] sm:$0xff]
  %v650 = vld [vmem:[%s255 + $0x18f] sm:$0xff]
  %v651 = vld [vmem:[%s255 + $0x1a7] sm:$0xff]
  %v652 = vld [vmem:[%s255 + $0x1af] sm:$0xff]
  %v653 = vld [vmem:[%s255 + $0x1c7] sm:$0xff]
  %v654 = vld [vmem:[%s255 + $0x1cf] sm:$0xff]
  %v655 = vld [vmem:[%s255 + $0x1e7] sm:$0xff]
  %v656 = vld [vmem:[%s255 + $0x1ef] sm:$0xff]
  %v657 = vld [vmem:[%s255 + $0x8] sm:$0xff]
  %v658 = vld [vmem:[%s255 + $0x10] sm:$0xff]
  %v659 = vld [vmem:[%s255 + $0x28] sm:$0xff]
  %v660 = vld [vmem:[%s255 + $0x30] sm:$0xff]
  %v661 = vld [vmem:[%s255 + $0x48] sm:$0xff]
  %v662 = vld [vmem:[%s255 + $0x50] sm:$0xff]
  %v663 = vld [vmem:[%s255 + $0x68] sm:$0xff]
  %v664 = vld [vmem:[%s255 + $0x70] sm:$0xff]
  %v665 = vld [vmem:[%s255 + $0x88] sm:$0xff]
  %v666 = vld [vmem:[%s255 + $0x90] sm:$0xff]
  %v667 = vld [vmem:[%s255 + $0xa8] sm:$0xff]
  %v668 = vld [vmem:[%s255 + $0xb0] sm:$0xff]
  %v669 = vld [vmem:[%s255 + $0xc8] sm:$0xff]
  %v670 = vld [vmem:[%s255 + $0xd0] sm:$0xff]
  %v671 = vld [vmem:[%s255 + $0xe8] sm:$0xff]
  %v672 = vld [vmem:[%s255 + $0xf0] sm:$0xff]
  %v673 = vld [vmem:[%s255 + $0x108] sm:$0xff]
  %v674 = vld [vmem:[%s255 + $0x110] sm:$0xff]
  %v675 = vld [vmem:[%s255 + $0x128] sm:$0xff]
  %v676 = vld [vmem:[%s255 + $0x130] sm:$0xff]
  %v677 = vld [vmem:[%s255 + $0x148] sm:$0xff]
  %v678 = vld [vmem:[%s255 + $0x150] sm:$0xff]
  %v679 = vld [vmem:[%s255 + $0x168] sm:$0xff]
  %v680 = vld [vmem:[%s255 + $0x170] sm:$0xff]
  %v681 = vld [vmem:[%s255 + $0x188] sm:$0xff]
  %v682 = vld [vmem:[%s255 + $0x190] sm:$0xff]
  %v683 = vld [vmem:[%s255 + $0x1a8] sm:$0xff]
  %v684 = vld [vmem:[%s255 + $0x1b0] sm:$0xff]
  %v685 = vld [vmem:[%s255 + $0x1c8] sm:$0xff]
  %v686 = vld [vmem:[%s255 + $0x1d0] sm:$0xff]
  %v687 = vld [vmem:[%s255 + $0x1e8] sm:$0xff]
  %v688 = vld [vmem:[%s255 + $0x1f0] sm:$0xff]
  %v689 = vld [vmem:[%s255 + $0x9] sm:$0xff]
  %v690 = vld [vmem:[%s255 + $0x11] sm:$0xff]
  %v691 = vld [vmem:[%s255 + $0x29] sm:$0xff]
  %v692 = vld [vmem:[%s255 + $0x31] sm:$0xff]
  %v693 = vld [vmem:[%s255 + $0x49] sm:$0xff]
  %v694 = vld [vmem:[%s255 + $0x51] sm:$0xff]
  %v695 = vld [vmem:[%s255 + $0x69] sm:$0xff]
  %v696 = vld [vmem:[%s255 + $0x71] sm:$0xff]
  %v697 = vld [vmem:[%s255 + $0x89] sm:$0xff]
  %v698 = vld [vmem:[%s255 + $0x91] sm:$0xff]
  %v699 = vld [vmem:[%s255 + $0xa9] sm:$0xff]
  %v700 = vld [vmem:[%s255 + $0xb1] sm:$0xff]
  %v701 = vld [vmem:[%s255 + $0xc9] sm:$0xff]
  %v702 = vld [vmem:[%s255 + $0xd1] sm:$0xff]
  %v703 = vld [vmem:[%s255 + $0xe9] sm:$0xff]
  %v704 = vld [vmem:[%s255 + $0xf1] sm:$0xff]
  %v705 = vld [vmem:[%s255 + $0x109] sm:$0xff]
  %v706 = vld [vmem:[%s255 + $0x111] sm:$0xff]
  %v707 = vld [vmem:[%s255 + $0x129] sm:$0xff]
  %v708 = vld [vmem:[%s255 + $0x131] sm:$0xff]
  %v709 = vld [vmem:[%s255 + $0x149] sm:$0xff]
  %v710 = vld [vmem:[%s255 + $0x151] sm:$0xff]
  %v711 = vld [vmem:[%s255 + $0x169] sm:$0xff]
  %v712 = vld [vmem:[%s255 + $0x171] sm:$0xff]
  %v713 = vld [vmem:[%s255 + $0x189] sm:$0xff]
  %v714 = vld [vmem:[%s255 + $0x191] sm:$0xff]
  %v715 = vld [vmem:[%s255 + $0x1a9] sm:$0xff]
  %v716 = vld [vmem:[%s255 + $0x1b1] sm:$0xff]
  %v717 = vld [vmem:[%s255 + $0x1c9] sm:$0xff]
  %v718 = vld [vmem:[%s255 + $0x1d1] sm:$0xff]
  %v719 = vld [vmem:[%s255 + $0x1e9] sm:$0xff]
  %v720 = vld [vmem:[%s255 + $0x1f1] sm:$0xff]
  %s721 = scalar_lea.vmem %s1, 384
  %v722 = vld [vmem:[%s721] sm:$0xff]
  %v723 = vld [vmem:[%s721 + $0x8] sm:$0xff]
  %v724 = vld [vmem:[%s721 + $0x10] sm:$0xff]
  %v725 = vld [vmem:[%s721 + $0x18] sm:$0xff]
  %v726 = vld [vmem:[%s721 + $0x20] sm:$0xff]
  %v727 = vld [vmem:[%s721 + $0x28] sm:$0xff]
  %v728 = vld [vmem:[%s721 + $0x30] sm:$0xff]
  %v729 = vld [vmem:[%s721 + $0x38] sm:$0xff]
  %v730 = vld [vmem:[%s721 + $0x40] sm:$0xff]
  %v731 = vld [vmem:[%s721 + $0x48] sm:$0xff]
  %v732 = vld [vmem:[%s721 + $0x50] sm:$0xff]
  %v733 = vld [vmem:[%s721 + $0x58] sm:$0xff]
  %v734 = vld [vmem:[%s721 + $0x60] sm:$0xff]
  %v735 = vld [vmem:[%s721 + $0x68] sm:$0xff]
  %v736 = vld [vmem:[%s721 + $0x70] sm:$0xff]
  %v737 = vld [vmem:[%s721 + $0x78] sm:$0xff]
  %v738 = vld [vmem:[%s721 + $0x80] sm:$0xff]
  %v739 = vld [vmem:[%s721 + $0x88] sm:$0xff]
  %v740 = vld [vmem:[%s721 + $0x90] sm:$0xff]
  %v741 = vld [vmem:[%s721 + $0x98] sm:$0xff]
  %v742 = vld [vmem:[%s721 + $0xa0] sm:$0xff]
  %v743 = vld [vmem:[%s721 + $0xa8] sm:$0xff]
  %v744 = vld [vmem:[%s721 + $0xb0] sm:$0xff]
  %v745 = vld [vmem:[%s721 + $0xb8] sm:$0xff]
  %v746 = vld [vmem:[%s721 + $0xc0] sm:$0xff]
  %v747 = vld [vmem:[%s721 + $0xc8] sm:$0xff]
  %v748 = vld [vmem:[%s721 + $0xd0] sm:$0xff]
  %v749 = vld [vmem:[%s721 + $0xd8] sm:$0xff]
  %v750 = vld [vmem:[%s721 + $0xe0] sm:$0xff]
  %v751 = vld [vmem:[%s721 + $0xe8] sm:$0xff]
  %v752 = vld [vmem:[%s721 + $0xf0] sm:$0xff]
  %v753 = vld [vmem:[%s721 + $0xf8] sm:$0xff]
  %v754 = vld [vmem:[%s721 + $0x100] sm:$0xff]
  %v755 = vld [vmem:[%s721 + $0x108] sm:$0xff]
  %v756 = vld [vmem:[%s721 + $0x110] sm:$0xff]
  %v757 = vld [vmem:[%s721 + $0x118] sm:$0xff]
  %v758 = vld [vmem:[%s721 + $0x120] sm:$0xff]
  %v759 = vld [vmem:[%s721 + $0x128] sm:$0xff]
  %v760 = vld [vmem:[%s721 + $0x130] sm:$0xff]
  %v761 = vld [vmem:[%s721 + $0x138] sm:$0xff]
  %v762 = vld [vmem:[%s721 + $0x140] sm:$0xff]
  %v763 = vld [vmem:[%s721 + $0x148] sm:$0xff]
  %v764 = vld [vmem:[%s721 + $0x150] sm:$0xff]
  %v765 = vld [vmem:[%s721 + $0x158] sm:$0xff]
  %v766 = vld [vmem:[%s721 + $0x160] sm:$0xff]
  %v767 = vld [vmem:[%s721 + $0x168] sm:$0xff]
  %v768 = vld [vmem:[%s721 + $0x170] sm:$0xff]
  %v769 = vld [vmem:[%s721 + $0x178] sm:$0xff]
  %770 = vmatprep.subr.mxu0 0.0
  %771 = vmatpush1.msra.mxu0 %v722
  %772 = vmatprep.subr.mxu0 0.0
  %773 = vmatpush1.msra.mxu0 %v723
  %774 = vmatprep.subr.mxu0 0.0
  %775 = vmatpush1.msra.mxu0 %v724
  %776 = vmatprep.subr.mxu0 0.0
  %777 = vmatpush1.msra.mxu0 %v725
  %778 = vmatprep.subr.mxu0 0.0
  %779 = vmatpush1.msra.mxu0 %v726
  %780 = vmatprep.subr.mxu0 0.0
  %781 = vmatpush1.msra.mxu0 %v727
  %782 = vmatprep.subr.mxu0 0.0
  %783 = vmatpush1.msra.mxu0 %v728
  %784 = vmatprep.subr.mxu0 0.0
  %785 = vmatpush1.msra.mxu0 %v729
  %786 = vmatprep.subr.mxu0 0.0
  %787 = vmatpush1.msra.mxu0 %v730
  %788 = vmatprep.subr.mxu0 0.0
  %789 = vmatpush1.msra.mxu0 %v731
  %790 = vmatprep.subr.mxu0 0.0
  %791 = vmatpush1.msra.mxu0 %v732
  %792 = vmatprep.subr.mxu0 0.0
  %793 = vmatpush1.msra.mxu0 %v733
  %794 = vmatprep.subr.mxu0 0.0
  %795 = vmatpush1.msra.mxu0 %v734
  %796 = vmatprep.subr.mxu0 0.0
  %797 = vmatpush1.msra.mxu0 %v735
  %798 = vmatprep.subr.mxu0 0.0
  %799 = vmatpush1.msra.mxu0 %v736
  %800 = vmatprep.subr.mxu0 0.0
  %801 = vmatpush1.msra.mxu0 %v737
  %802 = vmatprep.subr.mxu0 0.0
  %803 = vmatpush1.msra.mxu0 %v738
  %804 = vmatprep.subr.mxu0 0.0
  %805 = vmatpush1.msra.mxu0 %v739
  %806 = vmatprep.subr.mxu0 0.0
  %807 = vmatpush1.msra.mxu0 %v740
  %808 = vmatprep.subr.mxu0 0.0
  %809 = vmatpush1.msra.mxu0 %v741
  %810 = vmatprep.subr.mxu0 0.0
  %811 = vmatpush1.msra.mxu0 %v742
  %812 = vmatprep.subr.mxu0 0.0
  %813 = vmatpush1.msra.mxu0 %v743
  %814 = vmatprep.subr.mxu0 0.0
  %815 = vmatpush1.msra.mxu0 %v744
  %816 = vmatprep.subr.mxu0 0.0
  %817 = vmatpush1.msra.mxu0 %v745
  %818 = vmatprep.subr.mxu0 0.0
  %819 = vmatpush1.msra.mxu0 %v746
  %820 = vmatprep.subr.mxu0 0.0
  %821 = vmatpush1.msra.mxu0 %v747
  %822 = vmatprep.subr.mxu0 0.0
  %823 = vmatpush1.msra.mxu0 %v748
  %824 = vmatprep.subr.mxu0 0.0
  %825 = vmatpush1.msra.mxu0 %v749
  %826 = vmatprep.subr.mxu0 0.0
  %827 = vmatpush1.msra.mxu0 %v750
  %828 = vmatprep.subr.mxu0 0.0
  %829 = vmatpush1.msra.mxu0 %v751
  %830 = vmatprep.subr.mxu0 0.0
  %831 = vmatpush1.msra.mxu0 %v752
  %832 = vmatprep.subr.mxu0 0.0
  %833 = vmatpush1.msra.mxu0 %v753
  %834 = vmatprep.mubr.f32.mxu0 %v561
  %835 = vmatmul.mubr.f32.gmra.mrb[0].mxu0 %v529
  %v836 = vpop.f32.mrb[0].mxu0
  %v837 = vadd.f32 0.0, %v836
  %v838 = vpop.f32.mrb[0].mxu0
  %839 = vmatprep.mubr.f32.mxu0 %v562
  %840 = vmatmul.mubr.f32.gmra.mrb[0].mxu0 %v530
  %v841 = vpop.f32.mrb[0].mxu0
  %v842 = vadd.f32 0.0, %v841
  %v843 = vpop.f32.mrb[0].mxu0
  %844 = vmatprep.mubr.f32.mxu0 %v563
  %845 = vmatmul.mubr.f32.gmra.mrb[0].mxu0 %v531
  %v846 = vpop.f32.mrb[0].mxu0
  %v847 = vadd.f32 0.0, %v846
  %v848 = vpop.f32.mrb[0].mxu0
  %849 = vmatprep.mubr.f32.mxu0 %v564
  %850 = vmatmul.mubr.f32.gmra.mrb[0].mxu0 %v532
  %v851 = vpop.f32.mrb[0].mxu0
  %v852 = vadd.f32 0.0, %v851
  %v853 = vpop.f32.mrb[0].mxu0
  %854 = vmatprep.mubr.f32.mxu0 %v565
  %855 = vmatmul.mubr.f32.gmra.mrb[0].mxu0 %v533
  %v856 = vpop.f32.mrb[0].mxu0
  %v857 = vadd.f32 0.0, %v856
  %v858 = vpop.f32.mrb[0].mxu0
  %859 = vmatprep.mubr.f32.mxu0 %v566
  %860 = vmatmul.mubr.f32.gmra.mrb[0].mxu0 %v534
  %v861 = vpop.f32.mrb[0].mxu0
  %v862 = vadd.f32 0.0, %v861
  %v863 = vpop.f32.mrb[0].mxu0
  %864 = vmatprep.mubr.f32.mxu0 %v567
  %865 = vmatmul.mubr.f32.gmra.mrb[0].mxu0 %v535
  %v866 = vpop.f32.mrb[0].mxu0
  %v867 = vadd.f32 0.0, %v866
  %v868 = vpop.f32.mrb[0].mxu0
  %869 = vmatprep.mubr.f32.mxu0 %v568
  %870 = vmatmul.mubr.f32.gmra.mrb[0].mxu0 %v536
  %v871 = vpop.f32.mrb[0].mxu0
  %v872 = vadd.f32 0.0, %v871
  %v873 = vpop.f32.mrb[0].mxu0
  %874 = vmatprep.mubr.f32.mxu0 %v569
  %875 = vmatmul.mubr.f32.gmra.mrb[0].mxu0 %v537
  %v876 = vpop.f32.mrb[0].mxu0
  %v877 = vadd.f32 0.0, %v876
  %v878 = vpop.f32.mrb[0].mxu0
  %879 = vmatprep.mubr.f32.mxu0 %v570
  %880 = vmatmul.mubr.f32.gmra.mrb[0].mxu0 %v538
  %v881 = vpop.f32.mrb[0].mxu0
  %v882 = vadd.f32 0.0, %v881
  %v883 = vpop.f32.mrb[0].mxu0
  %884 = vmatprep.mubr.f32.mxu0 %v571
  %885 = vmatmul.mubr.f32.gmra.mrb[0].mxu0 %v539
  %v886 = vpop.f32.mrb[0].mxu0
  %v887 = vadd.f32 0.0, %v886
  %v888 = vpop.f32.mrb[0].mxu0
  %889 = vmatprep.mubr.f32.mxu0 %v572
  %890 = vmatmul.mubr.f32.gmra.mrb[0].mxu0 %v540
  %v891 = vpop.f32.mrb[0].mxu0
  %v892 = vadd.f32 0.0, %v891
  %v893 = vpop.f32.mrb[0].mxu0
  %894 = vmatprep.mubr.f32.mxu0 %v573
  %895 = vmatmul.mubr.f32.gmra.mrb[0].mxu0 %v541
  %v896 = vpop.f32.mrb[0].mxu0
  %v897 = vadd.f32 0.0, %v896
  %v898 = vpop.f32.mrb[0].mxu0
  %899 = vmatprep.mubr.f32.mxu0 %v574
  %900 = vmatmul.mubr.f32.gmra.mrb[0].mxu0 %v542
  %v901 = vpop.f32.mrb[0].mxu0
  %v902 = vadd.f32 0.0, %v901
  %v903 = vpop.f32.mrb[0].mxu0
  %904 = vmatprep.mubr.f32.mxu0 %v575
  %905 = vmatmul.mubr.f32.gmra.mrb[0].mxu0 %v543
  %v906 = vpop.f32.mrb[0].mxu0
  %v907 = vadd.f32 0.0, %v906
  %v908 = vpop.f32.mrb[0].mxu0
  %909 = vmatprep.mubr.f32.mxu0 %v576
  %910 = vmatmul.mubr.f32.gmra.mrb[0].mxu0 %v544
  %v911 = vpop.f32.mrb[0].mxu0
  %v912 = vadd.f32 0.0, %v911
  %v913 = vpop.f32.mrb[0].mxu0
  %914 = vmatprep.mubr.f32.mxu0 %v577
  %915 = vmatmul.mubr.f32.gmra.mrb[0].mxu0 %v545
  %v916 = vpop.f32.mrb[0].mxu0
  %v917 = vadd.f32 0.0, %v916
  %v918 = vpop.f32.mrb[0].mxu0
  %919 = vmatprep.mubr.f32.mxu0 %v578
  %920 = vmatmul.mubr.f32.gmra.mrb[0].mxu0 %v546
  %v921 = vpop.f32.mrb[0].mxu0
  %v922 = vadd.f32 0.0, %v921
  %v923 = vpop.f32.mrb[0].mxu0
  %924 = vmatprep.mubr.f32.mxu0 %v579
  %925 = vmatmul.mubr.f32.gmra.mrb[0].mxu0 %v547
  %v926 = vpop.f32.mrb[0].mxu0
  %v927 = vadd.f32 0.0, %v926
  %v928 = vpop.f32.mrb[0].mxu0
  %929 = vmatprep.mubr.f32.mxu0 %v580
  %930 = vmatmul.mubr.f32.gmra.mrb[0].mxu0 %v548
  %v931 = vpop.f32.mrb[0].mxu0
  %v932 = vadd.f32 0.0, %v931
  %v933 = vpop.f32.mrb[0].mxu0
  %934 = vmatprep.mubr.f32.mxu0 %v581
  %935 = vmatmul.mubr.f32.gmra.mrb[0].mxu0 %v549
  %v936 = vpop.f32.mrb[0].mxu0
  %v937 = vadd.f32 0.0, %v936
  %v938 = vpop.f32.mrb[0].mxu0
  %939 = vmatprep.mubr.f32.mxu0 %v582
  %940 = vmatmul.mubr.f32.gmra.mrb[0].mxu0 %v550
  %v941 = vpop.f32.mrb[0].mxu0
  %v942 = vadd.f32 0.0, %v941
  %v943 = vpop.f32.mrb[0].mxu0
  %944 = vmatprep.mubr.f32.mxu0 %v583
  %945 = vmatmul.mubr.f32.gmra.mrb[0].mxu0 %v551
  %v946 = vpop.f32.mrb[0].mxu0
  %v947 = vadd.f32 0.0, %v946
  %v948 = vpop.f32.mrb[0].mxu0
  %949 = vmatprep.mubr.f32.mxu0 %v584
  %950 = vmatmul.mubr.f32.gmra.mrb[0].mxu0 %v552
  %v951 = vpop.f32.mrb[0].mxu0
  %v952 = vadd.f32 0.0, %v951
  %v953 = vpop.f32.mrb[0].mxu0
  %954 = vmatprep.mubr.f32.mxu0 %v585
  %955 = vmatmul.mubr.f32.gmra.mrb[0].mxu0 %v553
  %v956 = vpop.f32.mrb[0].mxu0
  %v957 = vadd.f32 0.0, %v956
  %v958 = vpop.f32.mrb[0].mxu0
  %959 = vmatprep.mubr.f32.mxu0 %v586
  %960 = vmatmul.mubr.f32.gmra.mrb[0].mxu0 %v554
  %v961 = vpop.f32.mrb[0].mxu0
  %v962 = vadd.f32 0.0, %v961
  %v963 = vpop.f32.mrb[0].mxu0
  %964 = vmatprep.mubr.f32.mxu0 %v587
  %965 = vmatmul.mubr.f32.gmra.mrb[0].mxu0 %v555
  %v966 = vpop.f32.mrb[0].mxu0
  %v967 = vadd.f32 0.0, %v966
  %v968 = vpop.f32.mrb[0].mxu0
  %969 = vmatprep.mubr.f32.mxu0 %v588
  %970 = vmatmul.mubr.f32.gmra.mrb[0].mxu0 %v556
  %v971 = vpop.f32.mrb[0].mxu0
  %v972 = vadd.f32 0.0, %v971
  %v973 = vpop.f32.mrb[0].mxu0
  %974 = vmatprep.mubr.f32.mxu0 %v589
  %975 = vmatmul.mubr.f32.gmra.mrb[0].mxu0 %v557
  %v976 = vpop.f32.mrb[0].mxu0
  %v977 = vadd.f32 0.0, %v976
  %v978 = vpop.f32.mrb[0].mxu0
  %979 = vmatprep.mubr.f32.mxu0 %v590
  %980 = vmatmul.mubr.f32.gmra.mrb[0].mxu0 %v558
  %v981 = vpop.f32.mrb[0].mxu0
  %v982 = vadd.f32 0.0, %v981
  %v983 = vpop.f32.mrb[0].mxu0
  %984 = vmatprep.mubr.f32.mxu0 %v591
  %985 = vmatmul.mubr.f32.gmra.mrb[0].mxu0 %v559
  %v986 = vpop.f32.mrb[0].mxu0
  %v987 = vadd.f32 0.0, %v986
  %v988 = vpop.f32.mrb[0].mxu0
  %989 = vmatprep.mubr.f32.mxu0 %v592
  %990 = vmatmul.mubr.f32.gmra.mrb[0].mxu0 %v560
  %v991 = vpop.f32.mrb[0].mxu0
  %v992 = vadd.f32 0.0, %v991
  %v993 = vpop.f32.mrb[0].mxu0
  %994 = vmatprep.mubr.f32.mxu0 %v657
  %995 = vmatmul.mubr.f32.gmra.mrb[0].mxu0 %v625
  %v996 = vpop.f32.mrb[0].mxu0
  %v997 = vadd.f32 0.0, %v996
  %v998 = vpop.f32.mrb[0].mxu0
  %999 = vmatprep.mubr.f32.mxu0 %v658
  %1000 = vmatmul.mubr.f32.gmra.mrb[0].mxu0 %v626
  %v1001 = vpop.f32.mrb[0].mxu0
  %v1002 = vadd.f32 0.0, %v1001
  %v1003 = vpop.f32.mrb[0].mxu0
  %1004 = vmatprep.mubr.f32.mxu0 %v659
  %1005 = vmatmul.mubr.f32.gmra.mrb[0].mxu0 %v627
  %v1006 = vpop.f32.mrb[0].mxu0
  %v1007 = vadd.f32 0.0, %v1006
  %v1008 = vpop.f32.mrb[0].mxu0
  %1009 = vmatprep.mubr.f32.mxu0 %v660
  %1010 = vmatmul.mubr.f32.gmra.mrb[0].mxu0 %v628
  %v1011 = vpop.f32.mrb[0].mxu0
  %v1012 = vadd.f32 0.0, %v1011
  %v1013 = vpop.f32.mrb[0].mxu0
  %1014 = vmatprep.mubr.f32.mxu0 %v661
  %1015 = vmatmul.mubr.f32.gmra.mrb[0].mxu0 %v629
  %v1016 = vpop.f32.mrb[0].mxu0
  %v1017 = vadd.f32 0.0, %v1016
  %v1018 = vpop.f32.mrb[0].mxu0
  %1019 = vmatprep.mubr.f32.mxu0 %v662
  %1020 = vmatmul.mubr.f32.gmra.mrb[0].mxu0 %v630
  %v1021 = vpop.f32.mrb[0].mxu0
  %v1022 = vadd.f32 0.0, %v1021
  %v1023 = vpop.f32.mrb[0].mxu0
  %1024 = vmatprep.mubr.f32.mxu0 %v663
  %1025 = vmatmul.mubr.f32.gmra.mrb[0].mxu0 %v631
  %v1026 = vpop.f32.mrb[0].mxu0
  %v1027 = vadd.f32 0.0, %v1026
  %v1028 = vpop.f32.mrb[0].mxu0
  %1029 = vmatprep.mubr.f32.mxu0 %v664
  %1030 = vmatmul.mubr.f32.gmra.mrb[0].mxu0 %v632
  %v1031 = vpop.f32.mrb[0].mxu0
  %v1032 = vadd.f32 0.0, %v1031
  %v1033 = vpop.f32.mrb[0].mxu0
  %1034 = vmatprep.mubr.f32.mxu0 %v665
  %1035 = vmatmul.mubr.f32.gmra.mrb[0].mxu0 %v633
  %v1036 = vpop.f32.mrb[0].mxu0
  %v1037 = vadd.f32 0.0, %v1036
  %v1038 = vpop.f32.mrb[0].mxu0
  %1039 = vmatprep.mubr.f32.mxu0 %v666
  %1040 = vmatmul.mubr.f32.gmra.mrb[0].mxu0 %v634
  %v1041 = vpop.f32.mrb[0].mxu0
  %v1042 = vadd.f32 0.0, %v1041
  %v1043 = vpop.f32.mrb[0].mxu0
  %1044 = vmatprep.mubr.f32.mxu0 %v667
  %1045 = vmatmul.mubr.f32.gmra.mrb[0].mxu0 %v635
  %v1046 = vpop.f32.mrb[0].mxu0
  %v1047 = vadd.f32 0.0, %v1046
  %v1048 = vpop.f32.mrb[0].mxu0
  %1049 = vmatprep.mubr.f32.mxu0 %v668
  %1050 = vmatmul.mubr.f32.gmra.mrb[0].mxu0 %v636
  %v1051 = vpop.f32.mrb[0].mxu0
  %v1052 = vadd.f32 0.0, %v1051
  %v1053 = vpop.f32.mrb[0].mxu0
  %1054 = vmatprep.mubr.f32.mxu0 %v669
  %1055 = vmatmul.mubr.f32.gmra.mrb[0].mxu0 %v637
  %v1056 = vpop.f32.mrb[0].mxu0
  %v1057 = vadd.f32 0.0, %v1056
  %v1058 = vpop.f32.mrb[0].mxu0
  %1059 = vmatprep.mubr.f32.mxu0 %v670
  %1060 = vmatmul.mubr.f32.gmra.mrb[0].mxu0 %v638
  %v1061 = vpop.f32.mrb[0].mxu0
  %v1062 = vadd.f32 0.0, %v1061
  %v1063 = vpop.f32.mrb[0].mxu0
  %1064 = vmatprep.mubr.f32.mxu0 %v671
  %1065 = vmatmul.mubr.f32.gmra.mrb[0].mxu0 %v639
  %v1066 = vpop.f32.mrb[0].mxu0
  %v1067 = vadd.f32 0.0, %v1066
  %v1068 = vpop.f32.mrb[0].mxu0
  %1069 = vmatprep.mubr.f32.mxu0 %v672
  %1070 = vmatmul.mubr.f32.gmra.mrb[0].mxu0 %v640
  %v1071 = vpop.f32.mrb[0].mxu0
  %v1072 = vadd.f32 0.0, %v1071
  %v1073 = vpop.f32.mrb[0].mxu0
  %1074 = vmatprep.mubr.f32.mxu0 %v673
  %1075 = vmatmul.mubr.f32.gmra.mrb[0].mxu0 %v641
  %v1076 = vpop.f32.mrb[0].mxu0
  %v1077 = vadd.f32 0.0, %v1076
  %v1078 = vpop.f32.mrb[0].mxu0
  %1079 = vmatprep.mubr.f32.mxu0 %v674
  %1080 = vmatmul.mubr.f32.gmra.mrb[0].mxu0 %v642
  %v1081 = vpop.f32.mrb[0].mxu0
  %v1082 = vadd.f32 0.0, %v1081
  %v1083 = vpop.f32.mrb[0].mxu0
  %1084 = vmatprep.mubr.f32.mxu0 %v675
  %1085 = vmatmul.mubr.f32.gmra.mrb[0].mxu0 %v643
  %v1086 = vpop.f32.mrb[0].mxu0
  %v1087 = vadd.f32 0.0, %v1086
  %v1088 = vpop.f32.mrb[0].mxu0
  %1089 = vmatprep.mubr.f32.mxu0 %v676
  %1090 = vmatmul.mubr.f32.gmra.mrb[0].mxu0 %v644
  %v1091 = vpop.f32.mrb[0].mxu0
  %v1092 = vadd.f32 0.0, %v1091
  %v1093 = vpop.f32.mrb[0].mxu0
  %1094 = vmatprep.mubr.f32.mxu0 %v677
  %1095 = vmatmul.mubr.f32.gmra.mrb[0].mxu0 %v645
  %v1096 = vpop.f32.mrb[0].mxu0
  %v1097 = vadd.f32 0.0, %v1096
  %v1098 = vpop.f32.mrb[0].mxu0
  %1099 = vmatprep.mubr.f32.mxu0 %v678
  %1100 = vmatmul.mubr.f32.gmra.mrb[0].mxu0 %v646
  %v1101 = vpop.f32.mrb[0].mxu0
  %v1102 = vadd.f32 0.0, %v1101
  %v1103 = vpop.f32.mrb[0].mxu0
  %1104 = vmatprep.mubr.f32.mxu0 %v679
  %1105 = vmatmul.mubr.f32.gmra.mrb[0].mxu0 %v647
  %v1106 = vpop.f32.mrb[0].mxu0
  %v1107 = vadd.f32 0.0, %v1106
  %v1108 = vpop.f32.mrb[0].mxu0
  %1109 = vmatprep.mubr.f32.mxu0 %v680
  %1110 = vmatmul.mubr.f32.gmra.mrb[0].mxu0 %v648
  %v1111 = vpop.f32.mrb[0].mxu0
  %v1112 = vadd.f32 0.0, %v1111
  %v1113 = vpop.f32.mrb[0].mxu0
  %1114 = vmatprep.mubr.f32.mxu0 %v681
  %1115 = vmatmul.mubr.f32.gmra.mrb[0].mxu0 %v649
  %v1116 = vpop.f32.mrb[0].mxu0
  %v1117 = vadd.f32 0.0, %v1116
  %v1118 = vpop.f32.mrb[0].mxu0
  %1119 = vmatprep.mubr.f32.mxu0 %v682
  %1120 = vmatmul.mubr.f32.gmra.mrb[0].mxu0 %v650
  %v1121 = vpop.f32.mrb[0].mxu0
  %v1122 = vadd.f32 0.0, %v1121
  %v1123 = vpop.f32.mrb[0].mxu0
  %1124 = vmatprep.mubr.f32.mxu0 %v683
  %1125 = vmatmul.mubr.f32.gmra.mrb[0].mxu0 %v651
  %v1126 = vpop.f32.mrb[0].mxu0
  %v1127 = vadd.f32 0.0, %v1126
  %v1128 = vpop.f32.mrb[0].mxu0
  %1129 = vmatprep.mubr.f32.mxu0 %v684
  %1130 = vmatmul.mubr.f32.gmra.mrb[0].mxu0 %v652
  %v1131 = vpop.f32.mrb[0].mxu0
  %v1132 = vadd.f32 0.0, %v1131
  %v1133 = vpop.f32.mrb[0].mxu0
  %1134 = vmatprep.mubr.f32.mxu0 %v685
  %1135 = vmatmul.mubr.f32.gmra.mrb[0].mxu0 %v653
  %v1136 = vpop.f32.mrb[0].mxu0
  %v1137 = vadd.f32 0.0, %v1136
  %v1138 = vpop.f32.mrb[0].mxu0
  %1139 = vmatprep.mubr.f32.mxu0 %v686
  %1140 = vmatmul.mubr.f32.gmra.mrb[0].mxu0 %v654
  %v1141 = vpop.f32.mrb[0].mxu0
  %v1142 = vadd.f32 0.0, %v1141
  %v1143 = vpop.f32.mrb[0].mxu0
  %1144 = vmatprep.mubr.f32.mxu0 %v687
  %1145 = vmatmul.mubr.f32.gmra.mrb[0].mxu0 %v655
  %v1146 = vpop.f32.mrb[0].mxu0
  %v1147 = vadd.f32 0.0, %v1146
  %v1148 = vpop.f32.mrb[0].mxu0
  %1149 = vmatprep.mubr.f32.mxu0 %v688
  %1150 = vmatmul.mubr.f32.gmra.mrb[0].mxu0 %v656
  %v1151 = vpop.f32.mrb[0].mxu0
  %v1152 = vadd.f32 0.0, %v1151
  %v1153 = vpop.f32.mrb[0].mxu0
  %1154 = vdwg.mxu0
  %1155 = vmatprep.subr.mxu0 0.0
  %1156 = vmatpush1.msra.mxu0 %v754
  %1157 = vmatprep.subr.mxu0 0.0
  %1158 = vmatpush1.msra.mxu0 %v755
  %1159 = vmatprep.subr.mxu0 0.0
  %1160 = vmatpush1.msra.mxu0 %v756
  %1161 = vmatprep.subr.mxu0 0.0
  %1162 = vmatpush1.msra.mxu0 %v757
  %1163 = vmatprep.subr.mxu0 0.0
  %1164 = vmatpush1.msra.mxu0 %v758
  %1165 = vmatprep.subr.mxu0 0.0
  %1166 = vmatpush1.msra.mxu0 %v759
  %1167 = vmatprep.subr.mxu0 0.0
  %1168 = vmatpush1.msra.mxu0 %v760
  %1169 = vmatprep.subr.mxu0 0.0
  %1170 = vmatpush1.msra.mxu0 %v761
  %1171 = vmatprep.subr.mxu0 0.0
  %1172 = vmatpush1.msra.mxu0 %v762
  %1173 = vmatprep.subr.mxu0 0.0
  %1174 = vmatpush1.msra.mxu0 %v763
  %1175 = vmatprep.subr.mxu0 0.0
  %1176 = vmatpush1.msra.mxu0 %v764
  %1177 = vmatprep.subr.mxu0 0.0
  %1178 = vmatpush1.msra.mxu0 %v765
  %1179 = vmatprep.subr.mxu0 0.0
  %1180 = vmatpush1.msra.mxu0 %v766
  %1181 = vmatprep.subr.mxu0 0.0
  %1182 = vmatpush1.msra.mxu0 %v767
  %1183 = vmatprep.subr.mxu0 0.0
  %1184 = vmatpush1.msra.mxu0 %v768
  %1185 = vmatprep.subr.mxu0 0.0
  %1186 = vmatpush1.msra.mxu0 %v769
  %1187 = vmatprep.subr.mxu0 0.0
  %1188 = vmatpush1.msra.mxu0 0.0
  %1189 = vmatprep.subr.mxu0 0.0
  %1190 = vmatpush1.msra.mxu0 0.0
  %1191 = vmatprep.subr.mxu0 0.0
  %1192 = vmatpush1.msra.mxu0 0.0
  %1193 = vmatprep.subr.mxu0 0.0
  %1194 = vmatpush1.msra.mxu0 0.0
  %1195 = vmatprep.subr.mxu0 0.0
  %1196 = vmatpush1.msra.mxu0 0.0
  %1197 = vmatprep.subr.mxu0 0.0
  %1198 = vmatpush1.msra.mxu0 0.0
  %1199 = vmatprep.subr.mxu0 0.0
  %1200 = vmatpush1.msra.mxu0 0.0
  %1201 = vmatprep.subr.mxu0 0.0
  %1202 = vmatpush1.msra.mxu0 0.0
  %1203 = vmatprep.subr.mxu0 0.0
  %1204 = vmatpush1.msra.mxu0 0.0
  %1205 = vmatprep.subr.mxu0 0.0
  %1206 = vmatpush1.msra.mxu0 0.0
  %1207 = vmatprep.subr.mxu0 0.0
  %1208 = vmatpush1.msra.mxu0 0.0
  %1209 = vmatprep.subr.mxu0 0.0
  %1210 = vmatpush1.msra.mxu0 0.0
  %1211 = vmatprep.subr.mxu0 0.0
  %1212 = vmatpush1.msra.mxu0 0.0
  %1213 = vmatprep.subr.mxu0 0.0
  %1214 = vmatpush1.msra.mxu0 0.0
  %1215 = vmatprep.subr.mxu0 0.0
  %1216 = vmatpush1.msra.mxu0 0.0
  %1217 = vmatprep.subr.mxu0 0.0
  %1218 = vmatpush1.msra.mxu0 0.0
  %1219 = vmatprep.mubr.f32.mxu0 0.0
  %1220 = vmatmul.mubr.f32.gmra.mrb[0].mxu0 %v593
  %v1221 = vpop.f32.mrb[0].mxu0
  %v1222 = vadd.f32 %v837, %v1221
  %v1223 = vpop.f32.mrb[0].mxu0
  %1224 = vmatprep.mubr.f32.mxu0 0.0
  %1225 = vmatmul.mubr.f32.gmra.mrb[0].mxu0 %v594
  %v1226 = vpop.f32.mrb[0].mxu0
  %v1227 = vadd.f32 %v842, %v1226
  %v1228 = vpop.f32.mrb[0].mxu0
  %1229 = vmatprep.mubr.f32.mxu0 0.0
  %1230 = vmatmul.mubr.f32.gmra.mrb[0].mxu0 %v595
  %v1231 = vpop.f32.mrb[0].mxu0
  %v1232 = vadd.f32 %v847, %v1231
  %v1233 = vpop.f32.mrb[0].mxu0
  %1234 = vmatprep.mubr.f32.mxu0 0.0
  %1235 = vmatmul.mubr.f32.gmra.mrb[0].mxu0 %v596
  %v1236 = vpop.f32.mrb[0].mxu0
  %v1237 = vadd.f32 %v852, %v1236
  %v1238 = vpop.f32.mrb[0].mxu0
  %1239 = vmatprep.mubr.f32.mxu0 0.0
  %1240 = vmatmul.mubr.f32.gmra.mrb[0].mxu0 %v597
  %v1241 = vpop.f32.mrb[0].mxu0
  %v1242 = vadd.f32 %v857, %v1241
  %v1243 = vpop.f32.mrb[0].mxu0
  %1244 = vmatprep.mubr.f32.mxu0 0.0
  %1245 = vmatmul.mubr.f32.gmra.mrb[0].mxu0 %v598
  %v1246 = vpop.f32.mrb[0].mxu0
  %v1247 = vadd.f32 %v862, %v1246
  %v1248 = vpop.f32.mrb[0].mxu0
  %1249 = vmatprep.mubr.f32.mxu0 0.0
  %1250 = vmatmul.mubr.f32.gmra.mrb[0].mxu0 %v599
  %v1251 = vpop.f32.mrb[0].mxu0
  %v1252 = vadd.f32 %v867, %v1251
  %v1253 = vpop.f32.mrb[0].mxu0
  %1254 = vmatprep.mubr.f32.mxu0 0.0
  %1255 = vmatmul.mubr.f32.gmra.mrb[0].mxu0 %v600
  %v1256 = vpop.f32.mrb[0].mxu0
  %v1257 = vadd.f32 %v872, %v1256
  %v1258 = vpop.f32.mrb[0].mxu0
  %1259 = vmatprep.mubr.f32.mxu0 0.0
  %1260 = vmatmul.mubr.f32.gmra.mrb[0].mxu0 %v601
  %v1261 = vpop.f32.mrb[0].mxu0
  %v1262 = vadd.f32 %v877, %v1261
  %v1263 = vpop.f32.mrb[0].mxu0
  %1264 = vmatprep.mubr.f32.mxu0 0.0
  %1265 = vmatmul.mubr.f32.gmra.mrb[0].mxu0 %v602
  %v1266 = vpop.f32.mrb[0].mxu0
  %v1267 = vadd.f32 %v882, %v1266
  %v1268 = vpop.f32.mrb[0].mxu0
  %1269 = vmatprep.mubr.f32.mxu0 0.0
  %1270 = vmatmul.mubr.f32.gmra.mrb[0].mxu0 %v603
  %v1271 = vpop.f32.mrb[0].mxu0
  %v1272 = vadd.f32 %v887, %v1271
  %v1273 = vpop.f32.mrb[0].mxu0
  %1274 = vmatprep.mubr.f32.mxu0 0.0
  %1275 = vmatmul.mubr.f32.gmra.mrb[0].mxu0 %v604
  %v1276 = vpop.f32.mrb[0].mxu0
  %v1277 = vadd.f32 %v892, %v1276
  %v1278 = vpop.f32.mrb[0].mxu0
  %1279 = vmatprep.mubr.f32.mxu0 0.0
  %1280 = vmatmul.mubr.f32.gmra.mrb[0].mxu0 %v605
  %v1281 = vpop.f32.mrb[0].mxu0
  %v1282 = vadd.f32 %v897, %v1281
  %v1283 = vpop.f32.mrb[0].mxu0
  %1284 = vmatprep.mubr.f32.mxu0 0.0
  %1285 = vmatmul.mubr.f32.gmra.mrb[0].mxu0 %v606
  %v1286 = vpop.f32.mrb[0].mxu0
  %v1287 = vadd.f32 %v902, %v1286
  %v1288 = vpop.f32.mrb[0].mxu0
  %1289 = vmatprep.mubr.f32.mxu0 0.0
  %1290 = vmatmul.mubr.f32.gmra.mrb[0].mxu0 %v607
  %v1291 = vpop.f32.mrb[0].mxu0
  %v1292 = vadd.f32 %v907, %v1291
  %v1293 = vpop.f32.mrb[0].mxu0
  %1294 = vmatprep.mubr.f32.mxu0 0.0
  %1295 = vmatmul.mubr.f32.gmra.mrb[0].mxu0 %v608
  %v1296 = vpop.f32.mrb[0].mxu0
  %v1297 = vadd.f32 %v912, %v1296
  %v1298 = vpop.f32.mrb[0].mxu0
  %1299 = vmatprep.mubr.f32.mxu0 0.0
  %1300 = vmatmul.mubr.f32.gmra.mrb[0].mxu0 %v609
  %v1301 = vpop.f32.mrb[0].mxu0
  %v1302 = vadd.f32 %v917, %v1301
  %v1303 = vpop.f32.mrb[0].mxu0
  %1304 = vmatprep.mubr.f32.mxu0 0.0
  %1305 = vmatmul.mubr.f32.gmra.mrb[0].mxu0 %v610
  %v1306 = vpop.f32.mrb[0].mxu0
  %v1307 = vadd.f32 %v922, %v1306
  %v1308 = vpop.f32.mrb[0].mxu0
  %1309 = vmatprep.mubr.f32.mxu0 0.0
  %1310 = vmatmul.mubr.f32.gmra.mrb[0].mxu0 %v611
  %v1311 = vpop.f32.mrb[0].mxu0
  %v1312 = vadd.f32 %v927, %v1311
  %v1313 = vpop.f32.mrb[0].mxu0
  %1314 = vmatprep.mubr.f32.mxu0 0.0
  %1315 = vmatmul.mubr.f32.gmra.mrb[0].mxu0 %v612
  %v1316 = vpop.f32.mrb[0].mxu0
  %v1317 = vadd.f32 %v932, %v1316
  %v1318 = vpop.f32.mrb[0].mxu0
  %1319 = vmatprep.mubr.f32.mxu0 0.0
  %1320 = vmatmul.mubr.f32.gmra.mrb[0].mxu0 %v613
  %v1321 = vpop.f32.mrb[0].mxu0
  %v1322 = vadd.f32 %v937, %v1321
  %v1323 = vpop.f32.mrb[0].mxu0
  %1324 = vmatprep.mubr.f32.mxu0 0.0
  %1325 = vmatmul.mubr.f32.gmra.mrb[0].mxu0 %v614
  %v1326 = vpop.f32.mrb[0].mxu0
  %v1327 = vadd.f32 %v942, %v1326
  %v1328 = vpop.f32.mrb[0].mxu0
  %1329 = vmatprep.mubr.f32.mxu0 0.0
  %1330 = vmatmul.mubr.f32.gmra.mrb[0].mxu0 %v615
  %v1331 = vpop.f32.mrb[0].mxu0
  %v1332 = vadd.f32 %v947, %v1331
  %v1333 = vpop.f32.mrb[0].mxu0
  %1334 = vmatprep.mubr.f32.mxu0 0.0
  %1335 = vmatmul.mubr.f32.gmra.mrb[0].mxu0 %v616
  %v1336 = vpop.f32.mrb[0].mxu0
  %v1337 = vadd.f32 %v952, %v1336
  %v1338 = vpop.f32.mrb[0].mxu0
  %1339 = vmatprep.mubr.f32.mxu0 0.0
  %1340 = vmatmul.mubr.f32.gmra.mrb[0].mxu0 %v617
  %v1341 = vpop.f32.mrb[0].mxu0
  %v1342 = vadd.f32 %v957, %v1341
  %v1343 = vpop.f32.mrb[0].mxu0
  %1344 = vmatprep.mubr.f32.mxu0 0.0
  %1345 = vmatmul.mubr.f32.gmra.mrb[0].mxu0 %v618
  %v1346 = vpop.f32.mrb[0].mxu0
  %v1347 = vadd.f32 %v962, %v1346
  %v1348 = vpop.f32.mrb[0].mxu0
  %1349 = vmatprep.mubr.f32.mxu0 0.0
  %1350 = vmatmul.mubr.f32.gmra.mrb[0].mxu0 %v619
  %v1351 = vpop.f32.mrb[0].mxu0
  %v1352 = vadd.f32 %v967, %v1351
  %v1353 = vpop.f32.mrb[0].mxu0
  %1354 = vmatprep.mubr.f32.mxu0 0.0
  %1355 = vmatmul.mubr.f32.gmra.mrb[0].mxu0 %v620
  %v1356 = vpop.f32.mrb[0].mxu0
  %v1357 = vadd.f32 %v972, %v1356
  %v1358 = vpop.f32.mrb[0].mxu0
  %1359 = vmatprep.mubr.f32.mxu0 0.0
  %1360 = vmatmul.mubr.f32.gmra.mrb[0].mxu0 %v621
  %v1361 = vpop.f32.mrb[0].mxu0
  %v1362 = vadd.f32 %v977, %v1361
  %v1363 = vpop.f32.mrb[0].mxu0
  %1364 = vmatprep.mubr.f32.mxu0 0.0
  %1365 = vmatmul.mubr.f32.gmra.mrb[0].mxu0 %v622
  %v1366 = vpop.f32.mrb[0].mxu0
  %v1367 = vadd.f32 %v982, %v1366
  %v1368 = vpop.f32.mrb[0].mxu0
  %1369 = vmatprep.mubr.f32.mxu0 0.0
  %1370 = vmatmul.mubr.f32.gmra.mrb[0].mxu0 %v623
  %v1371 = vpop.f32.mrb[0].mxu0
  %v1372 = vadd.f32 %v987, %v1371
  %v1373 = vpop.f32.mrb[0].mxu0
  %1374 = vmatprep.mubr.f32.mxu0 0.0
  %1375 = vmatmul.mubr.f32.gmra.mrb[0].mxu0 %v624
  %v1376 = vpop.f32.mrb[0].mxu0
  %v1377 = vadd.f32 %v992, %v1376
  %v1378 = vpop.f32.mrb[0].mxu0
  %1379 = vmatprep.mubr.f32.mxu0 0.0
  %1380 = vmatmul.mubr.f32.gmra.mrb[0].mxu0 %v689
  %v1381 = vpop.f32.mrb[0].mxu0
  %v1382 = vadd.f32 %v997, %v1381
  %v1383 = vpop.f32.mrb[0].mxu0
  %1384 = vmatprep.mubr.f32.mxu0 0.0
  %1385 = vmatmul.mubr.f32.gmra.mrb[0].mxu0 %v690
  %v1386 = vpop.f32.mrb[0].mxu0
  %v1387 = vadd.f32 %v1002, %v1386
  %v1388 = vpop.f32.mrb[0].mxu0
  %1389 = vmatprep.mubr.f32.mxu0 0.0
  %1390 = vmatmul.mubr.f32.gmra.mrb[0].mxu0 %v691
  %v1391 = vpop.f32.mrb[0].mxu0
  %v1392 = vadd.f32 %v1007, %v1391
  %v1393 = vpop.f32.mrb[0].mxu0
  %1394 = vmatprep.mubr.f32.mxu0 0.0
  %1395 = vmatmul.mubr.f32.gmra.mrb[0].mxu0 %v692
  %v1396 = vpop.f32.mrb[0].mxu0
  %v1397 = vadd.f32 %v1012, %v1396
  %v1398 = vpop.f32.mrb[0].mxu0
  %1399 = vmatprep.mubr.f32.mxu0 0.0
  %1400 = vmatmul.mubr.f32.gmra.mrb[0].mxu0 %v693
  %v1401 = vpop.f32.mrb[0].mxu0
  %v1402 = vadd.f32 %v1017, %v1401
  %v1403 = vpop.f32.mrb[0].mxu0
  %1404 = vmatprep.mubr.f32.mxu0 0.0
  %1405 = vmatmul.mubr.f32.gmra.mrb[0].mxu0 %v694
  %v1406 = vpop.f32.mrb[0].mxu0
  %v1407 = vadd.f32 %v1022, %v1406
  %v1408 = vpop.f32.mrb[0].mxu0
  %1409 = vmatprep.mubr.f32.mxu0 0.0
  %1410 = vmatmul.mubr.f32.gmra.mrb[0].mxu0 %v695
  %v1411 = vpop.f32.mrb[0].mxu0
  %v1412 = vadd.f32 %v1027, %v1411
  %v1413 = vpop.f32.mrb[0].mxu0
  %1414 = vmatprep.mubr.f32.mxu0 0.0
  %1415 = vmatmul.mubr.f32.gmra.mrb[0].mxu0 %v696
  %v1416 = vpop.f32.mrb[0].mxu0
  %v1417 = vadd.f32 %v1032, %v1416
  %v1418 = vpop.f32.mrb[0].mxu0
  %1419 = vmatprep.mubr.f32.mxu0 0.0
  %1420 = vmatmul.mubr.f32.gmra.mrb[0].mxu0 %v697
  %v1421 = vpop.f32.mrb[0].mxu0
  %v1422 = vadd.f32 %v1037, %v1421
  %v1423 = vpop.f32.mrb[0].mxu0
  %1424 = vmatprep.mubr.f32.mxu0 0.0
  %1425 = vmatmul.mubr.f32.gmra.mrb[0].mxu0 %v698
  %v1426 = vpop.f32.mrb[0].mxu0
  %v1427 = vadd.f32 %v1042, %v1426
  %v1428 = vpop.f32.mrb[0].mxu0
  %1429 = vmatprep.mubr.f32.mxu0 0.0
  %1430 = vmatmul.mubr.f32.gmra.mrb[0].mxu0 %v699
  %v1431 = vpop.f32.mrb[0].mxu0
  %v1432 = vadd.f32 %v1047, %v1431
  %v1433 = vpop.f32.mrb[0].mxu0
  %1434 = vmatprep.mubr.f32.mxu0 0.0
  %1435 = vmatmul.mubr.f32.gmra.mrb[0].mxu0 %v700
  %v1436 = vpop.f32.mrb[0].mxu0
  %v1437 = vadd.f32 %v1052, %v1436
  %v1438 = vpop.f32.mrb[0].mxu0
  %1439 = vmatprep.mubr.f32.mxu0 0.0
  %1440 = vmatmul.mubr.f32.gmra.mrb[0].mxu0 %v701
  %v1441 = vpop.f32.mrb[0].mxu0
  %v1442 = vadd.f32 %v1057, %v1441
  %v1443 = vpop.f32.mrb[0].mxu0
  %1444 = vmatprep.mubr.f32.mxu0 0.0
  %1445 = vmatmul.mubr.f32.gmra.mrb[0].mxu0 %v702
  %v1446 = vpop.f32.mrb[0].mxu0
  %v1447 = vadd.f32 %v1062, %v1446
  %v1448 = vpop.f32.mrb[0].mxu0
  %1449 = vmatprep.mubr.f32.mxu0 0.0
  %1450 = vmatmul.mubr.f32.gmra.mrb[0].mxu0 %v703
  %v1451 = vpop.f32.mrb[0].mxu0
  %v1452 = vadd.f32 %v1067, %v1451
  %v1453 = vpop.f32.mrb[0].mxu0
  %1454 = vmatprep.mubr.f32.mxu0 0.0
  %1455 = vmatmul.mubr.f32.gmra.mrb[0].mxu0 %v704
  %v1456 = vpop.f32.mrb[0].mxu0
  %v1457 = vadd.f32 %v1072, %v1456
  %v1458 = vpop.f32.mrb[0].mxu0
  %1459 = vmatprep.mubr.f32.mxu0 0.0
  %1460 = vmatmul.mubr.f32.gmra.mrb[0].mxu0 %v705
  %v1461 = vpop.f32.mrb[0].mxu0
  %v1462 = vadd.f32 %v1077, %v1461
  %v1463 = vpop.f32.mrb[0].mxu0
  %1464 = vmatprep.mubr.f32.mxu0 0.0
  %1465 = vmatmul.mubr.f32.gmra.mrb[0].mxu0 %v706
  %v1466 = vpop.f32.mrb[0].mxu0
  %v1467 = vadd.f32 %v1082, %v1466
  %v1468 = vpop.f32.mrb[0].mxu0
  %1469 = vmatprep.mubr.f32.mxu0 0.0
  %1470 = vmatmul.mubr.f32.gmra.mrb[0].mxu0 %v707
  %v1471 = vpop.f32.mrb[0].mxu0
  %v1472 = vadd.f32 %v1087, %v1471
  %v1473 = vpop.f32.mrb[0].mxu0
  %1474 = vmatprep.mubr.f32.mxu0 0.0
  %1475 = vmatmul.mubr.f32.gmra.mrb[0].mxu0 %v708
  %v1476 = vpop.f32.mrb[0].mxu0
  %v1477 = vadd.f32 %v1092, %v1476
  %v1478 = vpop.f32.mrb[0].mxu0
  %1479 = vmatprep.mubr.f32.mxu0 0.0
  %1480 = vmatmul.mubr.f32.gmra.mrb[0].mxu0 %v709
  %v1481 = vpop.f32.mrb[0].mxu0
  %v1482 = vadd.f32 %v1097, %v1481
  %v1483 = vpop.f32.mrb[0].mxu0
  %1484 = vmatprep.mubr.f32.mxu0 0.0
  %1485 = vmatmul.mubr.f32.gmra.mrb[0].mxu0 %v710
  %v1486 = vpop.f32.mrb[0].mxu0
  %v1487 = vadd.f32 %v1102, %v1486
  %v1488 = vpop.f32.mrb[0].mxu0
  %1489 = vmatprep.mubr.f32.mxu0 0.0
  %1490 = vmatmul.mubr.f32.gmra.mrb[0].mxu0 %v711
  %v1491 = vpop.f32.mrb[0].mxu0
  %v1492 = vadd.f32 %v1107, %v1491
  %v1493 = vpop.f32.mrb[0].mxu0
  %1494 = vmatprep.mubr.f32.mxu0 0.0
  %1495 = vmatmul.mubr.f32.gmra.mrb[0].mxu0 %v712
  %v1496 = vpop.f32.mrb[0].mxu0
  %v1497 = vadd.f32 %v1112, %v1496
  %v1498 = vpop.f32.mrb[0].mxu0
  %1499 = vmatprep.mubr.f32.mxu0 0.0
  %1500 = vmatmul.mubr.f32.gmra.mrb[0].mxu0 %v713
  %v1501 = vpop.f32.mrb[0].mxu0
  %v1502 = vadd.f32 %v1117, %v1501
  %v1503 = vpop.f32.mrb[0].mxu0
  %1504 = vmatprep.mubr.f32.mxu0 0.0
  %1505 = vmatmul.mubr.f32.gmra.mrb[0].mxu0 %v714
  %v1506 = vpop.f32.mrb[0].mxu0
  %v1507 = vadd.f32 %v1122, %v1506
  %v1508 = vpop.f32.mrb[0].mxu0
  %1509 = vmatprep.mubr.f32.mxu0 0.0
  %1510 = vmatmul.mubr.f32.gmra.mrb[0].mxu0 %v715
  %v1511 = vpop.f32.mrb[0].mxu0
  %v1512 = vadd.f32 %v1127, %v1511
  %v1513 = vpop.f32.mrb[0].mxu0
  %1514 = vmatprep.mubr.f32.mxu0 0.0
  %1515 = vmatmul.mubr.f32.gmra.mrb[0].mxu0 %v716
  %v1516 = vpop.f32.mrb[0].mxu0
  %v1517 = vadd.f32 %v1132, %v1516
  %v1518 = vpop.f32.mrb[0].mxu0
  %1519 = vmatprep.mubr.f32.mxu0 0.0
  %1520 = vmatmul.mubr.f32.gmra.mrb[0].mxu0 %v717
  %v1521 = vpop.f32.mrb[0].mxu0
  %v1522 = vadd.f32 %v1137, %v1521
  %v1523 = vpop.f32.mrb[0].mxu0
  %1524 = vmatprep.mubr.f32.mxu0 0.0
  %1525 = vmatmul.mubr.f32.gmra.mrb[0].mxu0 %v718
  %v1526 = vpop.f32.mrb[0].mxu0
  %v1527 = vadd.f32 %v1142, %v1526
  %v1528 = vpop.f32.mrb[0].mxu0
  %1529 = vmatprep.mubr.f32.mxu0 0.0
  %1530 = vmatmul.mubr.f32.gmra.mrb[0].mxu0 %v719
  %v1531 = vpop.f32.mrb[0].mxu0
  %v1532 = vadd.f32 %v1147, %v1531
  %v1533 = vpop.f32.mrb[0].mxu0
  %1534 = vmatprep.mubr.f32.mxu0 0.0
  %1535 = vmatmul.mubr.f32.gmra.mrb[0].mxu0 %v720
  %v1536 = vpop.f32.mrb[0].mxu0
  %v1537 = vadd.f32 %v1152, %v1536
  %v1538 = vpop.f32.mrb[0].mxu0
  %1539 = vdwg.mxu0
  %1540 = vmatprep.subr.mxu0 0.0
  %1541 = vmatpush1.msra.mxu0 %v481
  %1542 = vmatprep.subr.mxu0 0.0
  %1543 = vmatpush1.msra.mxu0 %v482
  %1544 = vmatprep.subr.mxu0 0.0
  %1545 = vmatpush1.msra.mxu0 %v483
  %1546 = vmatprep.subr.mxu0 0.0
  %1547 = vmatpush1.msra.mxu0 %v484
  %1548 = vmatprep.subr.mxu0 0.0
  %1549 = vmatpush1.msra.mxu0 %v485
  %1550 = vmatprep.subr.mxu0 0.0
  %1551 = vmatpush1.msra.mxu0 %v486
  %1552 = vmatprep.subr.mxu0 0.0
  %1553 = vmatpush1.msra.mxu0 %v487
  %1554 = vmatprep.subr.mxu0 0.0
  %1555 = vmatpush1.msra.mxu0 %v488
  %1556 = vmatprep.subr.mxu0 0.0
  %1557 = vmatpush1.msra.mxu0 %v489
  %1558 = vmatprep.subr.mxu0 0.0
  %1559 = vmatpush1.msra.mxu0 %v490
  %1560 = vmatprep.subr.mxu0 0.0
  %1561 = vmatpush1.msra.mxu0 %v491
  %1562 = vmatprep.subr.mxu0 0.0
  %1563 = vmatpush1.msra.mxu0 %v492
  %1564 = vmatprep.subr.mxu0 0.0
  %1565 = vmatpush1.msra.mxu0 %v493
  %1566 = vmatprep.subr.mxu0 0.0
  %1567 = vmatpush1.msra.mxu0 %v494
  %1568 = vmatprep.subr.mxu0 0.0
  %1569 = vmatpush1.msra.mxu0 %v495
  %1570 = vmatprep.subr.mxu0 0.0
  %1571 = vmatpush1.msra.mxu0 %v496
  %1572 = vmatprep.subr.mxu0 0.0
  %1573 = vmatpush1.msra.mxu0 %v497
  %1574 = vmatprep.subr.mxu0 0.0
  %1575 = vmatpush1.msra.mxu0 %v498
  %1576 = vmatprep.subr.mxu0 0.0
  %1577 = vmatpush1.msra.mxu0 %v499
  %1578 = vmatprep.subr.mxu0 0.0
  %1579 = vmatpush1.msra.mxu0 %v500
  %1580 = vmatprep.subr.mxu0 0.0
  %1581 = vmatpush1.msra.mxu0 %v501
  %1582 = vmatprep.subr.mxu0 0.0
  %1583 = vmatpush1.msra.mxu0 %v502
  %1584 = vmatprep.subr.mxu0 0.0
  %1585 = vmatpush1.msra.mxu0 %v503
  %1586 = vmatprep.subr.mxu0 0.0
  %1587 = vmatpush1.msra.mxu0 %v504
  %1588 = vmatprep.subr.mxu0 0.0
  %1589 = vmatpush1.msra.mxu0 %v505
  %1590 = vmatprep.subr.mxu0 0.0
  %1591 = vmatpush1.msra.mxu0 %v506
  %1592 = vmatprep.subr.mxu0 0.0
  %1593 = vmatpush1.msra.mxu0 %v507
  %1594 = vmatprep.subr.mxu0 0.0
  %1595 = vmatpush1.msra.mxu0 %v508
  %1596 = vmatprep.subr.mxu0 0.0
  %1597 = vmatpush1.msra.mxu0 %v509
  %1598 = vmatprep.subr.mxu0 0.0
  %1599 = vmatpush1.msra.mxu0 %v510
  %1600 = vmatprep.subr.mxu0 0.0
  %1601 = vmatpush1.msra.mxu0 %v511
  %1602 = vmatprep.subr.mxu0 0.0
  %1603 = vmatpush1.msra.mxu0 %v512
  %1604 = vmatprep.mubr.f32.mxu0 %v320
  %1605 = vmatmul.mubr.f32.gmra.mrb[0].mxu0 %v288
  %v1606 = vpop.f32.mrb[0].mxu0
  %v1607 = vadd.f32 %v1222, %v1606
  %v1608 = vpop.f32.mrb[0].mxu0
  %1609 = vmatprep.mubr.f32.mxu0 %v321
  %1610 = vmatmul.mubr.f32.gmra.mrb[0].mxu0 %v289
  %v1611 = vpop.f32.mrb[0].mxu0
  %v1612 = vadd.f32 %v1227, %v1611
  %v1613 = vpop.f32.mrb[0].mxu0
  %1614 = vmatprep.mubr.f32.mxu0 %v322
  %1615 = vmatmul.mubr.f32.gmra.mrb[0].mxu0 %v290
  %v1616 = vpop.f32.mrb[0].mxu0
  %v1617 = vadd.f32 %v1232, %v1616
  %v1618 = vpop.f32.mrb[0].mxu0
  %1619 = vmatprep.mubr.f32.mxu0 %v323
  %1620 = vmatmul.mubr.f32.gmra.mrb[0].mxu0 %v291
  %v1621 = vpop.f32.mrb[0].mxu0
  %v1622 = vadd.f32 %v1237, %v1621
  %v1623 = vpop.f32.mrb[0].mxu0
  %1624 = vmatprep.mubr.f32.mxu0 %v324
  %1625 = vmatmul.mubr.f32.gmra.mrb[0].mxu0 %v292
  %v1626 = vpop.f32.mrb[0].mxu0
  %v1627 = vadd.f32 %v1242, %v1626
  %v1628 = vpop.f32.mrb[0].mxu0
  %1629 = vmatprep.mubr.f32.mxu0 %v325
  %1630 = vmatmul.mubr.f32.gmra.mrb[0].mxu0 %v293
  %v1631 = vpop.f32.mrb[0].mxu0
  %v1632 = vadd.f32 %v1247, %v1631
  %v1633 = vpop.f32.mrb[0].mxu0
  %1634 = vmatprep.mubr.f32.mxu0 %v326
  %1635 = vmatmul.mubr.f32.gmra.mrb[0].mxu0 %v294
  %v1636 = vpop.f32.mrb[0].mxu0
  %v1637 = vadd.f32 %v1252, %v1636
  %v1638 = vpop.f32.mrb[0].mxu0
  %1639 = vmatprep.mubr.f32.mxu0 %v327
  %1640 = vmatmul.mubr.f32.gmra.mrb[0].mxu0 %v295
  %v1641 = vpop.f32.mrb[0].mxu0
  %v1642 = vadd.f32 %v1257, %v1641
  %v1643 = vpop.f32.mrb[0].mxu0
  %1644 = vmatprep.mubr.f32.mxu0 %v328
  %1645 = vmatmul.mubr.f32.gmra.mrb[0].mxu0 %v296
  %v1646 = vpop.f32.mrb[0].mxu0
  %v1647 = vadd.f32 %v1262, %v1646
  %v1648 = vpop.f32.mrb[0].mxu0
  %1649 = vmatprep.mubr.f32.mxu0 %v329
  %1650 = vmatmul.mubr.f32.gmra.mrb[0].mxu0 %v297
  %v1651 = vpop.f32.mrb[0].mxu0
  %v1652 = vadd.f32 %v1267, %v1651
  %v1653 = vpop.f32.mrb[0].mxu0
  %1654 = vmatprep.mubr.f32.mxu0 %v330
  %1655 = vmatmul.mubr.f32.gmra.mrb[0].mxu0 %v298
  %v1656 = vpop.f32.mrb[0].mxu0
  %v1657 = vadd.f32 %v1272, %v1656
  %v1658 = vpop.f32.mrb[0].mxu0
  %1659 = vmatprep.mubr.f32.mxu0 %v331
  %1660 = vmatmul.mubr.f32.gmra.mrb[0].mxu0 %v299
  %v1661 = vpop.f32.mrb[0].mxu0
  %v1662 = vadd.f32 %v1277, %v1661
  %v1663 = vpop.f32.mrb[0].mxu0
  %1664 = vmatprep.mubr.f32.mxu0 %v332
  %1665 = vmatmul.mubr.f32.gmra.mrb[0].mxu0 %v300
  %v1666 = vpop.f32.mrb[0].mxu0
  %v1667 = vadd.f32 %v1282, %v1666
  %v1668 = vpop.f32.mrb[0].mxu0
  %1669 = vmatprep.mubr.f32.mxu0 %v333
  %1670 = vmatmul.mubr.f32.gmra.mrb[0].mxu0 %v301
  %v1671 = vpop.f32.mrb[0].mxu0
  %v1672 = vadd.f32 %v1287, %v1671
  %v1673 = vpop.f32.mrb[0].mxu0
  %1674 = vmatprep.mubr.f32.mxu0 %v334
  %1675 = vmatmul.mubr.f32.gmra.mrb[0].mxu0 %v302
  %v1676 = vpop.f32.mrb[0].mxu0
  %v1677 = vadd.f32 %v1292, %v1676
  %v1678 = vpop.f32.mrb[0].mxu0
  %1679 = vmatprep.mubr.f32.mxu0 %v335
  %1680 = vmatmul.mubr.f32.gmra.mrb[0].mxu0 %v303
  %v1681 = vpop.f32.mrb[0].mxu0
  %v1682 = vadd.f32 %v1297, %v1681
  %v1683 = vpop.f32.mrb[0].mxu0
  %1684 = vmatprep.mubr.f32.mxu0 %v336
  %1685 = vmatmul.mubr.f32.gmra.mrb[0].mxu0 %v304
  %v1686 = vpop.f32.mrb[0].mxu0
  %v1687 = vadd.f32 %v1302, %v1686
  %v1688 = vpop.f32.mrb[0].mxu0
  %1689 = vmatprep.mubr.f32.mxu0 %v337
  %1690 = vmatmul.mubr.f32.gmra.mrb[0].mxu0 %v305
  %v1691 = vpop.f32.mrb[0].mxu0
  %v1692 = vadd.f32 %v1307, %v1691
  %v1693 = vpop.f32.mrb[0].mxu0
  %1694 = vmatprep.mubr.f32.mxu0 %v338
  %1695 = vmatmul.mubr.f32.gmra.mrb[0].mxu0 %v306
  %v1696 = vpop.f32.mrb[0].mxu0
  %v1697 = vadd.f32 %v1312, %v1696
  %v1698 = vpop.f32.mrb[0].mxu0
  %1699 = vmatprep.mubr.f32.mxu0 %v339
  %1700 = vmatmul.mubr.f32.gmra.mrb[0].mxu0 %v307
  %v1701 = vpop.f32.mrb[0].mxu0
  %v1702 = vadd.f32 %v1317, %v1701
  %v1703 = vpop.f32.mrb[0].mxu0
  %1704 = vmatprep.mubr.f32.mxu0 %v340
  %1705 = vmatmul.mubr.f32.gmra.mrb[0].mxu0 %v308
  %v1706 = vpop.f32.mrb[0].mxu0
  %v1707 = vadd.f32 %v1322, %v1706
  %v1708 = vpop.f32.mrb[0].mxu0
  %1709 = vmatprep.mubr.f32.mxu0 %v341
  %1710 = vmatmul.mubr.f32.gmra.mrb[0].mxu0 %v309
  %v1711 = vpop.f32.mrb[0].mxu0
  %v1712 = vadd.f32 %v1327, %v1711
  %v1713 = vpop.f32.mrb[0].mxu0
  %1714 = vmatprep.mubr.f32.mxu0 %v342
  %1715 = vmatmul.mubr.f32.gmra.mrb[0].mxu0 %v310
  %v1716 = vpop.f32.mrb[0].mxu0
  %v1717 = vadd.f32 %v1332, %v1716
  %v1718 = vpop.f32.mrb[0].mxu0
  %1719 = vmatprep.mubr.f32.mxu0 %v343
  %1720 = vmatmul.mubr.f32.gmra.mrb[0].mxu0 %v311
  %v1721 = vpop.f32.mrb[0].mxu0
  %v1722 = vadd.f32 %v1337, %v1721
  %v1723 = vpop.f32.mrb[0].mxu0
  %1724 = vmatprep.mubr.f32.mxu0 %v344
  %1725 = vmatmul.mubr.f32.gmra.mrb[0].mxu0 %v312
  %v1726 = vpop.f32.mrb[0].mxu0
  %v1727 = vadd.f32 %v1342, %v1726
  %v1728 = vpop.f32.mrb[0].mxu0
  %1729 = vmatprep.mubr.f32.mxu0 %v345
  %1730 = vmatmul.mubr.f32.gmra.mrb[0].mxu0 %v313
  %v1731 = vpop.f32.mrb[0].mxu0
  %v1732 = vadd.f32 %v1347, %v1731
  %v1733 = vpop.f32.mrb[0].mxu0
  %1734 = vmatprep.mubr.f32.mxu0 %v346
  %1735 = vmatmul.mubr.f32.gmra.mrb[0].mxu0 %v314
  %v1736 = vpop.f32.mrb[0].mxu0
  %v1737 = vadd.f32 %v1352, %v1736
  %v1738 = vpop.f32.mrb[0].mxu0
  %1739 = vmatprep.mubr.f32.mxu0 %v347
  %1740 = vmatmul.mubr.f32.gmra.mrb[0].mxu0 %v315
  %v1741 = vpop.f32.mrb[0].mxu0
  %v1742 = vadd.f32 %v1357, %v1741
  %v1743 = vpop.f32.mrb[0].mxu0
  %1744 = vmatprep.mubr.f32.mxu0 %v348
  %1745 = vmatmul.mubr.f32.gmra.mrb[0].mxu0 %v316
  %v1746 = vpop.f32.mrb[0].mxu0
  %v1747 = vadd.f32 %v1362, %v1746
  %v1748 = vpop.f32.mrb[0].mxu0
  %1749 = vmatprep.mubr.f32.mxu0 %v349
  %1750 = vmatmul.mubr.f32.gmra.mrb[0].mxu0 %v317
  %v1751 = vpop.f32.mrb[0].mxu0
  %v1752 = vadd.f32 %v1367, %v1751
  %v1753 = vpop.f32.mrb[0].mxu0
  %1754 = vmatprep.mubr.f32.mxu0 %v350
  %1755 = vmatmul.mubr.f32.gmra.mrb[0].mxu0 %v318
  %v1756 = vpop.f32.mrb[0].mxu0
  %v1757 = vadd.f32 %v1372, %v1756
  %v1758 = vpop.f32.mrb[0].mxu0
  %1759 = vmatprep.mubr.f32.mxu0 %v351
  %1760 = vmatmul.mubr.f32.gmra.mrb[0].mxu0 %v319
  %v1761 = vpop.f32.mrb[0].mxu0
  %v1762 = vadd.f32 %v1377, %v1761
  %v1763 = vpop.f32.mrb[0].mxu0
  %1764 = vmatprep.mubr.f32.mxu0 %v417
  %1765 = vmatmul.mubr.f32.gmra.mrb[0].mxu0 %v385
  %v1766 = vpop.f32.mrb[0].mxu0
  %v1767 = vadd.f32 %v1382, %v1766
  %v1768 = vpop.f32.mrb[0].mxu0
  %1769 = vmatprep.mubr.f32.mxu0 %v418
  %1770 = vmatmul.mubr.f32.gmra.mrb[0].mxu0 %v386
  %v1771 = vpop.f32.mrb[0].mxu0
  %v1772 = vadd.f32 %v1387, %v1771
  %v1773 = vpop.f32.mrb[0].mxu0
  %1774 = vmatprep.mubr.f32.mxu0 %v419
  %1775 = vmatmul.mubr.f32.gmra.mrb[0].mxu0 %v387
  %v1776 = vpop.f32.mrb[0].mxu0
  %v1777 = vadd.f32 %v1392, %v1776
  %v1778 = vpop.f32.mrb[0].mxu0
  %1779 = vmatprep.mubr.f32.mxu0 %v420
  %1780 = vmatmul.mubr.f32.gmra.mrb[0].mxu0 %v388
  %v1781 = vpop.f32.mrb[0].mxu0
  %v1782 = vadd.f32 %v1397, %v1781
  %v1783 = vpop.f32.mrb[0].mxu0
  %1784 = vmatprep.mubr.f32.mxu0 %v421
  %1785 = vmatmul.mubr.f32.gmra.mrb[0].mxu0 %v389
  %v1786 = vpop.f32.mrb[0].mxu0
  %v1787 = vadd.f32 %v1402, %v1786
  %v1788 = vpop.f32.mrb[0].mxu0
  %1789 = vmatprep.mubr.f32.mxu0 %v422
  %1790 = vmatmul.mubr.f32.gmra.mrb[0].mxu0 %v390
  %v1791 = vpop.f32.mrb[0].mxu0
  %v1792 = vadd.f32 %v1407, %v1791
  %v1793 = vpop.f32.mrb[0].mxu0
  %1794 = vmatprep.mubr.f32.mxu0 %v423
  %1795 = vmatmul.mubr.f32.gmra.mrb[0].mxu0 %v391
  %v1796 = vpop.f32.mrb[0].mxu0
  %v1797 = vadd.f32 %v1412, %v1796
  %v1798 = vpop.f32.mrb[0].mxu0
  %1799 = vmatprep.mubr.f32.mxu0 %v424
  %1800 = vmatmul.mubr.f32.gmra.mrb[0].mxu0 %v392
  %v1801 = vpop.f32.mrb[0].mxu0
  %v1802 = vadd.f32 %v1417, %v1801
  %v1803 = vpop.f32.mrb[0].mxu0
  %1804 = vmatprep.mubr.f32.mxu0 %v425
  %1805 = vmatmul.mubr.f32.gmra.mrb[0].mxu0 %v393
  %v1806 = vpop.f32.mrb[0].mxu0
  %v1807 = vadd.f32 %v1422, %v1806
  %v1808 = vpop.f32.mrb[0].mxu0
  %1809 = vmatprep.mubr.f32.mxu0 %v426
  %1810 = vmatmul.mubr.f32.gmra.mrb[0].mxu0 %v394
  %v1811 = vpop.f32.mrb[0].mxu0
  %v1812 = vadd.f32 %v1427, %v1811
  %v1813 = vpop.f32.mrb[0].mxu0
  %1814 = vmatprep.mubr.f32.mxu0 %v427
  %1815 = vmatmul.mubr.f32.gmra.mrb[0].mxu0 %v395
  %v1816 = vpop.f32.mrb[0].mxu0
  %v1817 = vadd.f32 %v1432, %v1816
  %v1818 = vpop.f32.mrb[0].mxu0
  %1819 = vmatprep.mubr.f32.mxu0 %v428
  %1820 = vmatmul.mubr.f32.gmra.mrb[0].mxu0 %v396
  %v1821 = vpop.f32.mrb[0].mxu0
  %v1822 = vadd.f32 %v1437, %v1821
  %v1823 = vpop.f32.mrb[0].mxu0
  %1824 = vmatprep.mubr.f32.mxu0 %v429
  %1825 = vmatmul.mubr.f32.gmra.mrb[0].mxu0 %v397
  %v1826 = vpop.f32.mrb[0].mxu0
  %v1827 = vadd.f32 %v1442, %v1826
  %v1828 = vpop.f32.mrb[0].mxu0
  %1829 = vmatprep.mubr.f32.mxu0 %v430
  %1830 = vmatmul.mubr.f32.gmra.mrb[0].mxu0 %v398
  %v1831 = vpop.f32.mrb[0].mxu0
  %v1832 = vadd.f32 %v1447, %v1831
  %v1833 = vpop.f32.mrb[0].mxu0
  %1834 = vmatprep.mubr.f32.mxu0 %v431
  %1835 = vmatmul.mubr.f32.gmra.mrb[0].mxu0 %v399
  %v1836 = vpop.f32.mrb[0].mxu0
  %v1837 = vadd.f32 %v1452, %v1836
  %v1838 = vpop.f32.mrb[0].mxu0
  %1839 = vmatprep.mubr.f32.mxu0 %v432
  %1840 = vmatmul.mubr.f32.gmra.mrb[0].mxu0 %v400
  %v1841 = vpop.f32.mrb[0].mxu0
  %v1842 = vadd.f32 %v1457, %v1841
  %v1843 = vpop.f32.mrb[0].mxu0
  %1844 = vmatprep.mubr.f32.mxu0 %v433
  %1845 = vmatmul.mubr.f32.gmra.mrb[0].mxu0 %v401
  %v1846 = vpop.f32.mrb[0].mxu0
  %v1847 = vadd.f32 %v1462, %v1846
  %v1848 = vpop.f32.mrb[0].mxu0
  %1849 = vmatprep.mubr.f32.mxu0 %v434
  %1850 = vmatmul.mubr.f32.gmra.mrb[0].mxu0 %v402
  %v1851 = vpop.f32.mrb[0].mxu0
  %v1852 = vadd.f32 %v1467, %v1851
  %v1853 = vpop.f32.mrb[0].mxu0
  %1854 = vmatprep.mubr.f32.mxu0 %v435
  %1855 = vmatmul.mubr.f32.gmra.mrb[0].mxu0 %v403
  %v1856 = vpop.f32.mrb[0].mxu0
  %v1857 = vadd.f32 %v1472, %v1856
  %v1858 = vpop.f32.mrb[0].mxu0
  %1859 = vmatprep.mubr.f32.mxu0 %v436
  %1860 = vmatmul.mubr.f32.gmra.mrb[0].mxu0 %v404
  %v1861 = vpop.f32.mrb[0].mxu0
  %v1862 = vadd.f32 %v1477, %v1861
  %v1863 = vpop.f32.mrb[0].mxu0
  %1864 = vmatprep.mubr.f32.mxu0 %v437
  %1865 = vmatmul.mubr.f32.gmra.mrb[0].mxu0 %v405
  %v1866 = vpop.f32.mrb[0].mxu0
  %v1867 = vadd.f32 %v1482, %v1866
  %v1868 = vpop.f32.mrb[0].mxu0
  %1869 = vmatprep.mubr.f32.mxu0 %v438
  %1870 = vmatmul.mubr.f32.gmra.mrb[0].mxu0 %v406
  %v1871 = vpop.f32.mrb[0].mxu0
  %v1872 = vadd.f32 %v1487, %v1871
  %v1873 = vpop.f32.mrb[0].mxu0
  %1874 = vmatprep.mubr.f32.mxu0 %v439
  %1875 = vmatmul.mubr.f32.gmra.mrb[0].mxu0 %v407
  %v1876 = vpop.f32.mrb[0].mxu0
  %v1877 = vadd.f32 %v1492, %v1876
  %v1878 = vpop.f32.mrb[0].mxu0
  %1879 = vmatprep.mubr.f32.mxu0 %v440
  %1880 = vmatmul.mubr.f32.gmra.mrb[0].mxu0 %v408
  %v1881 = vpop.f32.mrb[0].mxu0
  %v1882 = vadd.f32 %v1497, %v1881
  %v1883 = vpop.f32.mrb[0].mxu0
  %1884 = vmatprep.mubr.f32.mxu0 %v441
  %1885 = vmatmul.mubr.f32.gmra.mrb[0].mxu0 %v409
  %v1886 = vpop.f32.mrb[0].mxu0
  %v1887 = vadd.f32 %v1502, %v1886
  %v1888 = vpop.f32.mrb[0].mxu0
  %1889 = vmatprep.mubr.f32.mxu0 %v442
  %1890 = vmatmul.mubr.f32.gmra.mrb[0].mxu0 %v410
  %v1891 = vpop.f32.mrb[0].mxu0
  %v1892 = vadd.f32 %v1507, %v1891
  %v1893 = vpop.f32.mrb[0].mxu0
  %1894 = vmatprep.mubr.f32.mxu0 %v443
  %1895 = vmatmul.mubr.f32.gmra.mrb[0].mxu0 %v411
  %v1896 = vpop.f32.mrb[0].mxu0
  %v1897 = vadd.f32 %v1512, %v1896
  %v1898 = vpop.f32.mrb[0].mxu0
  %1899 = vmatprep.mubr.f32.mxu0 %v444
  %1900 = vmatmul.mubr.f32.gmra.mrb[0].mxu0 %v412
  %v1901 = vpop.f32.mrb[0].mxu0
  %v1902 = vadd.f32 %v1517, %v1901
  %v1903 = vpop.f32.mrb[0].mxu0
  %1904 = vmatprep.mubr.f32.mxu0 %v445
  %1905 = vmatmul.mubr.f32.gmra.mrb[0].mxu0 %v413
  %v1906 = vpop.f32.mrb[0].mxu0
  %v1907 = vadd.f32 %v1522, %v1906
  %v1908 = vpop.f32.mrb[0].mxu0
  %1909 = vmatprep.mubr.f32.mxu0 %v446
  %1910 = vmatmul.mubr.f32.gmra.mrb[0].mxu0 %v414
  %v1911 = vpop.f32.mrb[0].mxu0
  %v1912 = vadd.f32 %v1527, %v1911
  %v1913 = vpop.f32.mrb[0].mxu0
  %1914 = vmatprep.mubr.f32.mxu0 %v447
  %1915 = vmatmul.mubr.f32.gmra.mrb[0].mxu0 %v415
  %v1916 = vpop.f32.mrb[0].mxu0
  %v1917 = vadd.f32 %v1532, %v1916
  %v1918 = vpop.f32.mrb[0].mxu0
  %1919 = vmatprep.mubr.f32.mxu0 %v448
  %1920 = vmatmul.mubr.f32.gmra.mrb[0].mxu0 %v416
  %v1921 = vpop.f32.mrb[0].mxu0
  %v1922 = vadd.f32 %v1537, %v1921
  %v1923 = vpop.f32.mrb[0].mxu0
  %1924 = vdwg.mxu0
  %1925 = vmatprep.subr.mxu0 0.0
  %1926 = vmatpush1.msra.mxu0 %v513
  %1927 = vmatprep.subr.mxu0 0.0
  %1928 = vmatpush1.msra.mxu0 %v514
  %1929 = vmatprep.subr.mxu0 0.0
  %1930 = vmatpush1.msra.mxu0 %v515
  %1931 = vmatprep.subr.mxu0 0.0
  %1932 = vmatpush1.msra.mxu0 %v516
  %1933 = vmatprep.subr.mxu0 0.0
  %1934 = vmatpush1.msra.mxu0 %v517
  %1935 = vmatprep.subr.mxu0 0.0
  %1936 = vmatpush1.msra.mxu0 %v518
  %1937 = vmatprep.subr.mxu0 0.0
  %1938 = vmatpush1.msra.mxu0 %v519
  %1939 = vmatprep.subr.mxu0 0.0
  %1940 = vmatpush1.msra.mxu0 %v520
  %1941 = vmatprep.subr.mxu0 0.0
  %1942 = vmatpush1.msra.mxu0 %v521
  %1943 = vmatprep.subr.mxu0 0.0
  %1944 = vmatpush1.msra.mxu0 %v522
  %1945 = vmatprep.subr.mxu0 0.0
  %1946 = vmatpush1.msra.mxu0 %v523
  %1947 = vmatprep.subr.mxu0 0.0
  %1948 = vmatpush1.msra.mxu0 %v524
  %1949 = vmatprep.subr.mxu0 0.0
  %1950 = vmatpush1.msra.mxu0 %v525
  %1951 = vmatprep.subr.mxu0 0.0
  %1952 = vmatpush1.msra.mxu0 %v526
  %1953 = vmatprep.subr.mxu0 0.0
  %1954 = vmatpush1.msra.mxu0 %v527
  %1955 = vmatprep.subr.mxu0 0.0
  %1956 = vmatpush1.msra.mxu0 %v528
  %1957 = vmatprep.subr.mxu0 0.0
  %1958 = vmatpush1.msra.mxu0 0.0
  %1959 = vmatprep.subr.mxu0 0.0
  %1960 = vmatpush1.msra.mxu0 0.0
  %1961 = vmatprep.subr.mxu0 0.0
  %1962 = vmatpush1.msra.mxu0 0.0
  %1963 = vmatprep.subr.mxu0 0.0
  %1964 = vmatpush1.msra.mxu0 0.0
  %1965 = vmatprep.subr.mxu0 0.0
  %1966 = vmatpush1.msra.mxu0 0.0
  %1967 = vmatprep.subr.mxu0 0.0
  %1968 = vmatpush1.msra.mxu0 0.0
  %1969 = vmatprep.subr.mxu0 0.0
  %1970 = vmatpush1.msra.mxu0 0.0
  %1971 = vmatprep.subr.mxu0 0.0
  %1972 = vmatpush1.msra.mxu0 0.0
  %1973 = vmatprep.subr.mxu0 0.0
  %1974 = vmatpush1.msra.mxu0 0.0
  %1975 = vmatprep.subr.mxu0 0.0
  %1976 = vmatpush1.msra.mxu0 0.0
  %1977 = vmatprep.subr.mxu0 0.0
  %1978 = vmatpush1.msra.mxu0 0.0
  %1979 = vmatprep.subr.mxu0 0.0
  %1980 = vmatpush1.msra.mxu0 0.0
  %1981 = vmatprep.subr.mxu0 0.0
  %1982 = vmatpush1.msra.mxu0 0.0
  %1983 = vmatprep.subr.mxu0 0.0
  %1984 = vmatpush1.msra.mxu0 0.0
  %1985 = vmatprep.subr.mxu0 0.0
  %1986 = vmatpush1.msra.mxu0 0.0
  %1987 = vmatprep.subr.mxu0 0.0
  %1988 = vmatpush1.msra.mxu0 0.0
  %1989 = vmatprep.mubr.f32.mxu0 0.0
  %1990 = vmatmul.mubr.f32.gmra.mrb[0].mxu0 %v352
  %v1991 = vpop.f32.mrb[0].mxu0
  %v1992 = vadd.f32 %v1607, %v1991
  %v1993 = vpop.f32.mrb[0].mxu0
  %1994 = vmatprep.mubr.f32.mxu0 0.0
  %1995 = vmatmul.mubr.f32.gmra.mrb[0].mxu0 %v353
  %v1996 = vpop.f32.mrb[0].mxu0
  %v1997 = vadd.f32 %v1612, %v1996
  %v1998 = vpop.f32.mrb[0].mxu0
  %1999 = vmatprep.mubr.f32.mxu0 0.0
  %2000 = vmatmul.mubr.f32.gmra.mrb[0].mxu0 %v354
  %v2001 = vpop.f32.mrb[0].mxu0
  %v2002 = vadd.f32 %v1617, %v2001
  %v2003 = vpop.f32.mrb[0].mxu0
  %2004 = vmatprep.mubr.f32.mxu0 0.0
  %2005 = vmatmul.mubr.f32.gmra.mrb[0].mxu0 %v355
  %v2006 = vpop.f32.mrb[0].mxu0
  %v2007 = vadd.f32 %v1622, %v2006
  %v2008 = vpop.f32.mrb[0].mxu0
  %2009 = vmatprep.mubr.f32.mxu0 0.0
  %2010 = vmatmul.mubr.f32.gmra.mrb[0].mxu0 %v356
  %v2011 = vpop.f32.mrb[0].mxu0
  %v2012 = vadd.f32 %v1627, %v2011
  %v2013 = vpop.f32.mrb[0].mxu0
  %2014 = vmatprep.mubr.f32.mxu0 0.0
  %2015 = vmatmul.mubr.f32.gmra.mrb[0].mxu0 %v357
  %v2016 = vpop.f32.mrb[0].mxu0
  %v2017 = vadd.f32 %v1632, %v2016
  %v2018 = vpop.f32.mrb[0].mxu0
  %2019 = vmatprep.mubr.f32.mxu0 0.0
  %2020 = vmatmul.mubr.f32.gmra.mrb[0].mxu0 %v358
  %v2021 = vpop.f32.mrb[0].mxu0
  %v2022 = vadd.f32 %v1637, %v2021
  %v2023 = vpop.f32.mrb[0].mxu0
  %2024 = vmatprep.mubr.f32.mxu0 0.0
  %2025 = vmatmul.mubr.f32.gmra.mrb[0].mxu0 %v359
  %v2026 = vpop.f32.mrb[0].mxu0
  %v2027 = vadd.f32 %v1642, %v2026
  %v2028 = vpop.f32.mrb[0].mxu0
  %2029 = vmatprep.mubr.f32.mxu0 0.0
  %2030 = vmatmul.mubr.f32.gmra.mrb[0].mxu0 %v360
  %v2031 = vpop.f32.mrb[0].mxu0
  %v2032 = vadd.f32 %v1647, %v2031
  %v2033 = vpop.f32.mrb[0].mxu0
  %2034 = vmatprep.mubr.f32.mxu0 0.0
  %2035 = vmatmul.mubr.f32.gmra.mrb[0].mxu0 %v361
  %v2036 = vpop.f32.mrb[0].mxu0
  %v2037 = vadd.f32 %v1652, %v2036
  %v2038 = vpop.f32.mrb[0].mxu0
  %2039 = vmatprep.mubr.f32.mxu0 0.0
  %2040 = vmatmul.mubr.f32.gmra.mrb[0].mxu0 %v362
  %v2041 = vpop.f32.mrb[0].mxu0
  %v2042 = vadd.f32 %v1657, %v2041
  %v2043 = vpop.f32.mrb[0].mxu0
  %2044 = vmatprep.mubr.f32.mxu0 0.0
  %2045 = vmatmul.mubr.f32.gmra.mrb[0].mxu0 %v363
  %v2046 = vpop.f32.mrb[0].mxu0
  %v2047 = vadd.f32 %v1662, %v2046
  %v2048 = vpop.f32.mrb[0].mxu0
  %2049 = vmatprep.mubr.f32.mxu0 0.0
  %2050 = vmatmul.mubr.f32.gmra.mrb[0].mxu0 %v364
  %v2051 = vpop.f32.mrb[0].mxu0
  %v2052 = vadd.f32 %v1667, %v2051
  %v2053 = vpop.f32.mrb[0].mxu0
  %2054 = vmatprep.mubr.f32.mxu0 0.0
  %2055 = vmatmul.mubr.f32.gmra.mrb[0].mxu0 %v365
  %v2056 = vpop.f32.mrb[0].mxu0
  %v2057 = vadd.f32 %v1672, %v2056
  %v2058 = vpop.f32.mrb[0].mxu0
  %2059 = vmatprep.mubr.f32.mxu0 0.0
  %2060 = vmatmul.mubr.f32.gmra.mrb[0].mxu0 %v366
  %v2061 = vpop.f32.mrb[0].mxu0
  %v2062 = vadd.f32 %v1677, %v2061
  %v2063 = vpop.f32.mrb[0].mxu0
  %2064 = vmatprep.mubr.f32.mxu0 0.0
  %2065 = vmatmul.mubr.f32.gmra.mrb[0].mxu0 %v367
  %v2066 = vpop.f32.mrb[0].mxu0
  %v2067 = vadd.f32 %v1682, %v2066
  %v2068 = vpop.f32.mrb[0].mxu0
  %2069 = vmatprep.mubr.f32.mxu0 0.0
  %2070 = vmatmul.mubr.f32.gmra.mrb[0].mxu0 %v368
  %v2071 = vpop.f32.mrb[0].mxu0
  %v2072 = vadd.f32 %v1687, %v2071
  %v2073 = vpop.f32.mrb[0].mxu0
  %2074 = vmatprep.mubr.f32.mxu0 0.0
  %2075 = vmatmul.mubr.f32.gmra.mrb[0].mxu0 %v369
  %v2076 = vpop.f32.mrb[0].mxu0
  %v2077 = vadd.f32 %v1692, %v2076
  %v2078 = vpop.f32.mrb[0].mxu0
  %2079 = vmatprep.mubr.f32.mxu0 0.0
  %2080 = vmatmul.mubr.f32.gmra.mrb[0].mxu0 %v370
  %v2081 = vpop.f32.mrb[0].mxu0
  %v2082 = vadd.f32 %v1697, %v2081
  %v2083 = vpop.f32.mrb[0].mxu0
  %2084 = vmatprep.mubr.f32.mxu0 0.0
  %2085 = vmatmul.mubr.f32.gmra.mrb[0].mxu0 %v371
  %v2086 = vpop.f32.mrb[0].mxu0
  %v2087 = vadd.f32 %v1702, %v2086
  %v2088 = vpop.f32.mrb[0].mxu0
  %2089 = vmatprep.mubr.f32.mxu0 0.0
  %2090 = vmatmul.mubr.f32.gmra.mrb[0].mxu0 %v372
  %v2091 = vpop.f32.mrb[0].mxu0
  %v2092 = vadd.f32 %v1707, %v2091
  %v2093 = vpop.f32.mrb[0].mxu0
  %2094 = vmatprep.mubr.f32.mxu0 0.0
  %2095 = vmatmul.mubr.f32.gmra.mrb[0].mxu0 %v373
  %v2096 = vpop.f32.mrb[0].mxu0
  %v2097 = vadd.f32 %v1712, %v2096
  %v2098 = vpop.f32.mrb[0].mxu0
  %2099 = vmatprep.mubr.f32.mxu0 0.0
  %2100 = vmatmul.mubr.f32.gmra.mrb[0].mxu0 %v374
  %v2101 = vpop.f32.mrb[0].mxu0
  %v2102 = vadd.f32 %v1717, %v2101
  %v2103 = vpop.f32.mrb[0].mxu0
  %2104 = vmatprep.mubr.f32.mxu0 0.0
  %2105 = vmatmul.mubr.f32.gmra.mrb[0].mxu0 %v375
  %v2106 = vpop.f32.mrb[0].mxu0
  %v2107 = vadd.f32 %v1722, %v2106
  %v2108 = vpop.f32.mrb[0].mxu0
  %2109 = vmatprep.mubr.f32.mxu0 0.0
  %2110 = vmatmul.mubr.f32.gmra.mrb[0].mxu0 %v376
  %v2111 = vpop.f32.mrb[0].mxu0
  %v2112 = vadd.f32 %v1727, %v2111
  %v2113 = vpop.f32.mrb[0].mxu0
  %2114 = vmatprep.mubr.f32.mxu0 0.0
  %2115 = vmatmul.mubr.f32.gmra.mrb[0].mxu0 %v377
  %v2116 = vpop.f32.mrb[0].mxu0
  %v2117 = vadd.f32 %v1732, %v2116
  %v2118 = vpop.f32.mrb[0].mxu0
  %2119 = vmatprep.mubr.f32.mxu0 0.0
  %2120 = vmatmul.mubr.f32.gmra.mrb[0].mxu0 %v378
  %v2121 = vpop.f32.mrb[0].mxu0
  %v2122 = vadd.f32 %v1737, %v2121
  %v2123 = vpop.f32.mrb[0].mxu0
  %2124 = vmatprep.mubr.f32.mxu0 0.0
  %2125 = vmatmul.mubr.f32.gmra.mrb[0].mxu0 %v379
  %v2126 = vpop.f32.mrb[0].mxu0
  %v2127 = vadd.f32 %v1742, %v2126
  %v2128 = vpop.f32.mrb[0].mxu0
  %2129 = vmatprep.mubr.f32.mxu0 0.0
  %2130 = vmatmul.mubr.f32.gmra.mrb[0].mxu0 %v380
  %v2131 = vpop.f32.mrb[0].mxu0
  %v2132 = vadd.f32 %v1747, %v2131
  %v2133 = vpop.f32.mrb[0].mxu0
  %2134 = vmatprep.mubr.f32.mxu0 0.0
  %2135 = vmatmul.mubr.f32.gmra.mrb[0].mxu0 %v381
  %v2136 = vpop.f32.mrb[0].mxu0
  %v2137 = vadd.f32 %v1752, %v2136
  %v2138 = vpop.f32.mrb[0].mxu0
  %2139 = vmatprep.mubr.f32.mxu0 0.0
  %2140 = vmatmul.mubr.f32.gmra.mrb[0].mxu0 %v382
  %v2141 = vpop.f32.mrb[0].mxu0
  %v2142 = vadd.f32 %v1757, %v2141
  %v2143 = vpop.f32.mrb[0].mxu0
  %2144 = vmatprep.mubr.f32.mxu0 0.0
  %2145 = vmatmul.mubr.f32.gmra.mrb[0].mxu0 %v383
  %v2146 = vpop.f32.mrb[0].mxu0
  %v2147 = vadd.f32 %v1762, %v2146
  %v2148 = vpop.f32.mrb[0].mxu0
  %2149 = vmatprep.mubr.f32.mxu0 0.0
  %2150 = vmatmul.mubr.f32.gmra.mrb[0].mxu0 %v449
  %v2151 = vpop.f32.mrb[0].mxu0
  %v2152 = vadd.f32 %v1767, %v2151
  %v2153 = vpop.f32.mrb[0].mxu0
  %2154 = vmatprep.mubr.f32.mxu0 0.0
  %2155 = vmatmul.mubr.f32.gmra.mrb[0].mxu0 %v450
  %v2156 = vpop.f32.mrb[0].mxu0
  %v2157 = vadd.f32 %v1772, %v2156
  %v2158 = vpop.f32.mrb[0].mxu0
  %2159 = vmatprep.mubr.f32.mxu0 0.0
  %2160 = vmatmul.mubr.f32.gmra.mrb[0].mxu0 %v451
  %v2161 = vpop.f32.mrb[0].mxu0
  %v2162 = vadd.f32 %v1777, %v2161
  %v2163 = vpop.f32.mrb[0].mxu0
  %2164 = vmatprep.mubr.f32.mxu0 0.0
  %2165 = vmatmul.mubr.f32.gmra.mrb[0].mxu0 %v452
  %v2166 = vpop.f32.mrb[0].mxu0
  %v2167 = vadd.f32 %v1782, %v2166
  %v2168 = vpop.f32.mrb[0].mxu0
  %2169 = vmatprep.mubr.f32.mxu0 0.0
  %2170 = vmatmul.mubr.f32.gmra.mrb[0].mxu0 %v453
  %v2171 = vpop.f32.mrb[0].mxu0
  %v2172 = vadd.f32 %v1787, %v2171
  %v2173 = vpop.f32.mrb[0].mxu0
  %2174 = vmatprep.mubr.f32.mxu0 0.0
  %2175 = vmatmul.mubr.f32.gmra.mrb[0].mxu0 %v454
  %v2176 = vpop.f32.mrb[0].mxu0
  %v2177 = vadd.f32 %v1792, %v2176
  %v2178 = vpop.f32.mrb[0].mxu0
  %2179 = vmatprep.mubr.f32.mxu0 0.0
  %2180 = vmatmul.mubr.f32.gmra.mrb[0].mxu0 %v455
  %v2181 = vpop.f32.mrb[0].mxu0
  %v2182 = vadd.f32 %v1797, %v2181
  %v2183 = vpop.f32.mrb[0].mxu0
  %2184 = vmatprep.mubr.f32.mxu0 0.0
  %2185 = vmatmul.mubr.f32.gmra.mrb[0].mxu0 %v456
  %v2186 = vpop.f32.mrb[0].mxu0
  %v2187 = vadd.f32 %v1802, %v2186
  %v2188 = vpop.f32.mrb[0].mxu0
  %2189 = vmatprep.mubr.f32.mxu0 0.0
  %2190 = vmatmul.mubr.f32.gmra.mrb[0].mxu0 %v457
  %v2191 = vpop.f32.mrb[0].mxu0
  %v2192 = vadd.f32 %v1807, %v2191
  %v2193 = vpop.f32.mrb[0].mxu0
  %2194 = vmatprep.mubr.f32.mxu0 0.0
  %2195 = vmatmul.mubr.f32.gmra.mrb[0].mxu0 %v458
  %v2196 = vpop.f32.mrb[0].mxu0
  %v2197 = vadd.f32 %v1812, %v2196
  %v2198 = vpop.f32.mrb[0].mxu0
  %2199 = vmatprep.mubr.f32.mxu0 0.0
  %2200 = vmatmul.mubr.f32.gmra.mrb[0].mxu0 %v459
  %v2201 = vpop.f32.mrb[0].mxu0
  %v2202 = vadd.f32 %v1817, %v2201
  %v2203 = vpop.f32.mrb[0].mxu0
  %2204 = vmatprep.mubr.f32.mxu0 0.0
  %2205 = vmatmul.mubr.f32.gmra.mrb[0].mxu0 %v460
  %v2206 = vpop.f32.mrb[0].mxu0
  %v2207 = vadd.f32 %v1822, %v2206
  %v2208 = vpop.f32.mrb[0].mxu0
  %2209 = vmatprep.mubr.f32.mxu0 0.0
  %2210 = vmatmul.mubr.f32.gmra.mrb[0].mxu0 %v461
  %v2211 = vpop.f32.mrb[0].mxu0
  %v2212 = vadd.f32 %v1827, %v2211
  %v2213 = vpop.f32.mrb[0].mxu0
  %2214 = vmatprep.mubr.f32.mxu0 0.0
  %2215 = vmatmul.mubr.f32.gmra.mrb[0].mxu0 %v462
  %v2216 = vpop.f32.mrb[0].mxu0
  %v2217 = vadd.f32 %v1832, %v2216
  %v2218 = vpop.f32.mrb[0].mxu0
  %2219 = vmatprep.mubr.f32.mxu0 0.0
  %2220 = vmatmul.mubr.f32.gmra.mrb[0].mxu0 %v463
  %v2221 = vpop.f32.mrb[0].mxu0
  %v2222 = vadd.f32 %v1837, %v2221
  %v2223 = vpop.f32.mrb[0].mxu0
  %2224 = vmatprep.mubr.f32.mxu0 0.0
  %2225 = vmatmul.mubr.f32.gmra.mrb[0].mxu0 %v464
  %v2226 = vpop.f32.mrb[0].mxu0
  %v2227 = vadd.f32 %v1842, %v2226
  %v2228 = vpop.f32.mrb[0].mxu0
  %2229 = vmatprep.mubr.f32.mxu0 0.0
  %2230 = vmatmul.mubr.f32.gmra.mrb[0].mxu0 %v465
  %v2231 = vpop.f32.mrb[0].mxu0
  %v2232 = vadd.f32 %v1847, %v2231
  %v2233 = vpop.f32.mrb[0].mxu0
  %2234 = vmatprep.mubr.f32.mxu0 0.0
  %2235 = vmatmul.mubr.f32.gmra.mrb[0].mxu0 %v466
  %v2236 = vpop.f32.mrb[0].mxu0
  %v2237 = vadd.f32 %v1852, %v2236
  %v2238 = vpop.f32.mrb[0].mxu0
  %2239 = vmatprep.mubr.f32.mxu0 0.0
  %2240 = vmatmul.mubr.f32.gmra.mrb[0].mxu0 %v467
  %v2241 = vpop.f32.mrb[0].mxu0
  %v2242 = vadd.f32 %v1857, %v2241
  %v2243 = vpop.f32.mrb[0].mxu0
  %2244 = vmatprep.mubr.f32.mxu0 0.0
  %2245 = vmatmul.mubr.f32.gmra.mrb[0].mxu0 %v468
  %v2246 = vpop.f32.mrb[0].mxu0
  %v2247 = vadd.f32 %v1862, %v2246
  %v2248 = vpop.f32.mrb[0].mxu0
  %2249 = vmatprep.mubr.f32.mxu0 0.0
  %2250 = vmatmul.mubr.f32.gmra.mrb[0].mxu0 %v469
  %v2251 = vpop.f32.mrb[0].mxu0
  %v2252 = vadd.f32 %v1867, %v2251
  %v2253 = vpop.f32.mrb[0].mxu0
  %2254 = vmatprep.mubr.f32.mxu0 0.0
  %2255 = vmatmul.mubr.f32.gmra.mrb[0].mxu0 %v470
  %v2256 = vpop.f32.mrb[0].mxu0
  %v2257 = vadd.f32 %v1872, %v2256
  %v2258 = vpop.f32.mrb[0].mxu0
  %2259 = vmatprep.mubr.f32.mxu0 0.0
  %2260 = vmatmul.mubr.f32.gmra.mrb[0].mxu0 %v471
  %v2261 = vpop.f32.mrb[0].mxu0
  %v2262 = vadd.f32 %v1877, %v2261
  %v2263 = vpop.f32.mrb[0].mxu0
  %2264 = vmatprep.mubr.f32.mxu0 0.0
  %2265 = vmatmul.mubr.f32.gmra.mrb[0].mxu0 %v472
  %v2266 = vpop.f32.mrb[0].mxu0
  %v2267 = vadd.f32 %v1882, %v2266
  %v2268 = vpop.f32.mrb[0].mxu0
  %2269 = vmatprep.mubr.f32.mxu0 0.0
  %2270 = vmatmul.mubr.f32.gmra.mrb[0].mxu0 %v473
  %v2271 = vpop.f32.mrb[0].mxu0
  %v2272 = vadd.f32 %v1887, %v2271
  %v2273 = vpop.f32.mrb[0].mxu0
  %2274 = vmatprep.mubr.f32.mxu0 0.0
  %2275 = vmatmul.mubr.f32.gmra.mrb[0].mxu0 %v474
  %v2276 = vpop.f32.mrb[0].mxu0
  %v2277 = vadd.f32 %v1892, %v2276
  %v2278 = vpop.f32.mrb[0].mxu0
  %2279 = vmatprep.mubr.f32.mxu0 0.0
  %2280 = vmatmul.mubr.f32.gmra.mrb[0].mxu0 %v475
  %v2281 = vpop.f32.mrb[0].mxu0
  %v2282 = vadd.f32 %v1897, %v2281
  %v2283 = vpop.f32.mrb[0].mxu0
  %2284 = vmatprep.mubr.f32.mxu0 0.0
  %2285 = vmatmul.mubr.f32.gmra.mrb[0].mxu0 %v476
  %v2286 = vpop.f32.mrb[0].mxu0
  %v2287 = vadd.f32 %v1902, %v2286
  %v2288 = vpop.f32.mrb[0].mxu0
  %2289 = vmatprep.mubr.f32.mxu0 0.0
  %2290 = vmatmul.mubr.f32.gmra.mrb[0].mxu0 %v477
  %v2291 = vpop.f32.mrb[0].mxu0
  %v2292 = vadd.f32 %v1907, %v2291
  %v2293 = vpop.f32.mrb[0].mxu0
  %2294 = vmatprep.mubr.f32.mxu0 0.0
  %2295 = vmatmul.mubr.f32.gmra.mrb[0].mxu0 %v478
  %v2296 = vpop.f32.mrb[0].mxu0
  %v2297 = vadd.f32 %v1912, %v2296
  %v2298 = vpop.f32.mrb[0].mxu0
  %2299 = vmatprep.mubr.f32.mxu0 0.0
  %2300 = vmatmul.mubr.f32.gmra.mrb[0].mxu0 %v479
  %v2301 = vpop.f32.mrb[0].mxu0
  %v2302 = vadd.f32 %v1917, %v2301
  %v2303 = vpop.f32.mrb[0].mxu0
  %2304 = vmatprep.mubr.f32.mxu0 0.0
  %2305 = vmatmul.mubr.f32.gmra.mrb[0].mxu0 %v480
  %v2306 = vpop.f32.mrb[0].mxu0
  %v2307 = vadd.f32 %v1922, %v2306
  %v2308 = vpop.f32.mrb[0].mxu0
  %2309 = vdwg.mxu0
  %s2310 = scalar_lea.vmem [#allocation2], 64
  %v2311 = vld [vmem:[%s2310 + $0x7] sm:$0xff]
  %v2312 = vld [vmem:[%s2310 + $0xf] sm:$0xff]
  %v2313 = vld [vmem:[%s2310 + $0x27] sm:$0xff]
  %v2314 = vld [vmem:[%s2310 + $0x2f] sm:$0xff]
  %v2315 = vld [vmem:[%s2310 + $0x47] sm:$0xff]
  %v2316 = vld [vmem:[%s2310 + $0x4f] sm:$0xff]
  %v2317 = vld [vmem:[%s2310 + $0x67] sm:$0xff]
  %v2318 = vld [vmem:[%s2310 + $0x6f] sm:$0xff]
  %v2319 = vld [vmem:[%s2310 + $0x87] sm:$0xff]
  %v2320 = vld [vmem:[%s2310 + $0x8f] sm:$0xff]
  %v2321 = vld [vmem:[%s2310 + $0xa7] sm:$0xff]
  %v2322 = vld [vmem:[%s2310 + $0xaf] sm:$0xff]
  %v2323 = vld [vmem:[%s2310 + $0xc7] sm:$0xff]
  %v2324 = vld [vmem:[%s2310 + $0xcf] sm:$0xff]
  %v2325 = vld [vmem:[%s2310 + $0xe7] sm:$0xff]
  %v2326 = vld [vmem:[%s2310 + $0xef] sm:$0xff]
  %v2327 = vld [vmem:[%s2310 + $0x107] sm:$0xff]
  %v2328 = vld [vmem:[%s2310 + $0x10f] sm:$0xff]
  %v2329 = vld [vmem:[%s2310 + $0x127] sm:$0xff]
  %v2330 = vld [vmem:[%s2310 + $0x12f] sm:$0xff]
  %v2331 = vld [vmem:[%s2310 + $0x147] sm:$0xff]
  %v2332 = vld [vmem:[%s2310 + $0x14f] sm:$0xff]
  %v2333 = vld [vmem:[%s2310 + $0x167] sm:$0xff]
  %v2334 = vld [vmem:[%s2310 + $0x16f] sm:$0xff]
  %v2335 = vld [vmem:[%s2310 + $0x187] sm:$0xff]
  %v2336 = vld [vmem:[%s2310 + $0x18f] sm:$0xff]
  %v2337 = vld [vmem:[%s2310 + $0x1a7] sm:$0xff]
  %v2338 = vld [vmem:[%s2310 + $0x1af] sm:$0xff]
  %v2339 = vld [vmem:[%s2310 + $0x1c7] sm:$0xff]
  %v2340 = vld [vmem:[%s2310 + $0x1cf] sm:$0xff]
  %v2341 = vld [vmem:[%s2310 + $0x1e7] sm:$0xff]
  %v2342 = vld [vmem:[%s2310 + $0x1ef] sm:$0xff]
  %v2343 = vld [vmem:[%s2310 + $0x8] sm:$0xff]
  %v2344 = vld [vmem:[%s2310 + $0x10] sm:$0xff]
  %v2345 = vld [vmem:[%s2310 + $0x28] sm:$0xff]
  %v2346 = vld [vmem:[%s2310 + $0x30] sm:$0xff]
  %v2347 = vld [vmem:[%s2310 + $0x48] sm:$0xff]
  %v2348 = vld [vmem:[%s2310 + $0x50] sm:$0xff]
  %v2349 = vld [vmem:[%s2310 + $0x68] sm:$0xff]
  %v2350 = vld [vmem:[%s2310 + $0x70] sm:$0xff]
  %v2351 = vld [vmem:[%s2310 + $0x88] sm:$0xff]
  %v2352 = vld [vmem:[%s2310 + $0x90] sm:$0xff]
  %v2353 = vld [vmem:[%s2310 + $0xa8] sm:$0xff]
  %v2354 = vld [vmem:[%s2310 + $0xb0] sm:$0xff]
  %v2355 = vld [vmem:[%s2310 + $0xc8] sm:$0xff]
  %v2356 = vld [vmem:[%s2310 + $0xd0] sm:$0xff]
  %v2357 = vld [vmem:[%s2310 + $0xe8] sm:$0xff]
  %v2358 = vld [vmem:[%s2310 + $0xf0] sm:$0xff]
  %v2359 = vld [vmem:[%s2310 + $0x108] sm:$0xff]
  %v2360 = vld [vmem:[%s2310 + $0x110] sm:$0xff]
  %v2361 = vld [vmem:[%s2310 + $0x128] sm:$0xff]
  %v2362 = vld [vmem:[%s2310 + $0x130] sm:$0xff]
  %v2363 = vld [vmem:[%s2310 + $0x148] sm:$0xff]
  %v2364 = vld [vmem:[%s2310 + $0x150] sm:$0xff]
  %v2365 = vld [vmem:[%s2310 + $0x168] sm:$0xff]
  %v2366 = vld [vmem:[%s2310 + $0x170] sm:$0xff]
  %v2367 = vld [vmem:[%s2310 + $0x188] sm:$0xff]
  %v2368 = vld [vmem:[%s2310 + $0x190] sm:$0xff]
  %v2369 = vld [vmem:[%s2310 + $0x1a8] sm:$0xff]
  %v2370 = vld [vmem:[%s2310 + $0x1b0] sm:$0xff]
  %v2371 = vld [vmem:[%s2310 + $0x1c8] sm:$0xff]
  %v2372 = vld [vmem:[%s2310 + $0x1d0] sm:$0xff]
  %v2373 = vld [vmem:[%s2310 + $0x1e8] sm:$0xff]
  %v2374 = vld [vmem:[%s2310 + $0x1f0] sm:$0xff]
  %v2375 = vld [vmem:[%s2310 + $0x9] sm:$0xff]
  %v2376 = vld [vmem:[%s2310 + $0x11] sm:$0xff]
  %v2377 = vld [vmem:[%s2310 + $0x29] sm:$0xff]
  %v2378 = vld [vmem:[%s2310 + $0x31] sm:$0xff]
  %v2379 = vld [vmem:[%s2310 + $0x49] sm:$0xff]
  %v2380 = vld [vmem:[%s2310 + $0x51] sm:$0xff]
  %v2381 = vld [vmem:[%s2310 + $0x69] sm:$0xff]
  %v2382 = vld [vmem:[%s2310 + $0x71] sm:$0xff]
  %v2383 = vld [vmem:[%s2310 + $0x89] sm:$0xff]
  %v2384 = vld [vmem:[%s2310 + $0x91] sm:$0xff]
  %v2385 = vld [vmem:[%s2310 + $0xa9] sm:$0xff]
  %v2386 = vld [vmem:[%s2310 + $0xb1] sm:$0xff]
  %v2387 = vld [vmem:[%s2310 + $0xc9] sm:$0xff]
  %v2388 = vld [vmem:[%s2310 + $0xd1] sm:$0xff]
  %v2389 = vld [vmem:[%s2310 + $0xe9] sm:$0xff]
  %v2390 = vld [vmem:[%s2310 + $0xf1] sm:$0xff]
  %v2391 = vld [vmem:[%s2310 + $0x109] sm:$0xff]
  %v2392 = vld [vmem:[%s2310 + $0x111] sm:$0xff]
  %v2393 = vld [vmem:[%s2310 + $0x129] sm:$0xff]
  %v2394 = vld [vmem:[%s2310 + $0x131] sm:$0xff]
  %v2395 = vld [vmem:[%s2310 + $0x149] sm:$0xff]
  %v2396 = vld [vmem:[%s2310 + $0x151] sm:$0xff]
  %v2397 = vld [vmem:[%s2310 + $0x169] sm:$0xff]
  %v2398 = vld [vmem:[%s2310 + $0x171] sm:$0xff]
  %v2399 = vld [vmem:[%s2310 + $0x189] sm:$0xff]
  %v2400 = vld [vmem:[%s2310 + $0x191] sm:$0xff]
  %v2401 = vld [vmem:[%s2310 + $0x1a9] sm:$0xff]
  %v2402 = vld [vmem:[%s2310 + $0x1b1] sm:$0xff]
  %v2403 = vld [vmem:[%s2310 + $0x1c9] sm:$0xff]
  %v2404 = vld [vmem:[%s2310 + $0x1d1] sm:$0xff]
  %v2405 = vld [vmem:[%s2310 + $0x1e9] sm:$0xff]
  %v2406 = vld [vmem:[%s2310 + $0x1f1] sm:$0xff]
  %s2407 = scalar_lea.vmem [#allocation2], 640
  %v2408 = vld [vmem:[%s2407 + $0x7] sm:$0xff]
  %v2409 = vld [vmem:[%s2407 + $0xf] sm:$0xff]
  %v2410 = vld [vmem:[%s2407 + $0x27] sm:$0xff]
  %v2411 = vld [vmem:[%s2407 + $0x2f] sm:$0xff]
  %v2412 = vld [vmem:[%s2407 + $0x47] sm:$0xff]
  %v2413 = vld [vmem:[%s2407 + $0x4f] sm:$0xff]
  %v2414 = vld [vmem:[%s2407 + $0x67] sm:$0xff]
  %v2415 = vld [vmem:[%s2407 + $0x6f] sm:$0xff]
  %v2416 = vld [vmem:[%s2407 + $0x87] sm:$0xff]
  %v2417 = vld [vmem:[%s2407 + $0x8f] sm:$0xff]
  %v2418 = vld [vmem:[%s2407 + $0xa7] sm:$0xff]
  %v2419 = vld [vmem:[%s2407 + $0xaf] sm:$0xff]
  %v2420 = vld [vmem:[%s2407 + $0xc7] sm:$0xff]
  %v2421 = vld [vmem:[%s2407 + $0xcf] sm:$0xff]
  %v2422 = vld [vmem:[%s2407 + $0xe7] sm:$0xff]
  %v2423 = vld [vmem:[%s2407 + $0xef] sm:$0xff]
  %v2424 = vld [vmem:[%s2407 + $0x107] sm:$0xff]
  %v2425 = vld [vmem:[%s2407 + $0x10f] sm:$0xff]
  %v2426 = vld [vmem:[%s2407 + $0x127] sm:$0xff]
  %v2427 = vld [vmem:[%s2407 + $0x12f] sm:$0xff]
  %v2428 = vld [vmem:[%s2407 + $0x147] sm:$0xff]
  %v2429 = vld [vmem:[%s2407 + $0x14f] sm:$0xff]
  %v2430 = vld [vmem:[%s2407 + $0x167] sm:$0xff]
  %v2431 = vld [vmem:[%s2407 + $0x16f] sm:$0xff]
  %v2432 = vld [vmem:[%s2407 + $0x187] sm:$0xff]
  %v2433 = vld [vmem:[%s2407 + $0x18f] sm:$0xff]
  %v2434 = vld [vmem:[%s2407 + $0x1a7] sm:$0xff]
  %v2435 = vld [vmem:[%s2407 + $0x1af] sm:$0xff]
  %v2436 = vld [vmem:[%s2407 + $0x1c7] sm:$0xff]
  %v2437 = vld [vmem:[%s2407 + $0x1cf] sm:$0xff]
  %v2438 = vld [vmem:[%s2407 + $0x1e7] sm:$0xff]
  %v2439 = vld [vmem:[%s2407 + $0x1ef] sm:$0xff]
  %v2440 = vld [vmem:[%s2407 + $0x8] sm:$0xff]
  %v2441 = vld [vmem:[%s2407 + $0x10] sm:$0xff]
  %v2442 = vld [vmem:[%s2407 + $0x28] sm:$0xff]
  %v2443 = vld [vmem:[%s2407 + $0x30] sm:$0xff]
  %v2444 = vld [vmem:[%s2407 + $0x48] sm:$0xff]
  %v2445 = vld [vmem:[%s2407 + $0x50] sm:$0xff]
  %v2446 = vld [vmem:[%s2407 + $0x68] sm:$0xff]
  %v2447 = vld [vmem:[%s2407 + $0x70] sm:$0xff]
  %v2448 = vld [vmem:[%s2407 + $0x88] sm:$0xff]
  %v2449 = vld [vmem:[%s2407 + $0x90] sm:$0xff]
  %v2450 = vld [vmem:[%s2407 + $0xa8] sm:$0xff]
  %v2451 = vld [vmem:[%s2407 + $0xb0] sm:$0xff]
  %v2452 = vld [vmem:[%s2407 + $0xc8] sm:$0xff]
  %v2453 = vld [vmem:[%s2407 + $0xd0] sm:$0xff]
  %v2454 = vld [vmem:[%s2407 + $0xe8] sm:$0xff]
  %v2455 = vld [vmem:[%s2407 + $0xf0] sm:$0xff]
  %v2456 = vld [vmem:[%s2407 + $0x108] sm:$0xff]
  %v2457 = vld [vmem:[%s2407 + $0x110] sm:$0xff]
  %v2458 = vld [vmem:[%s2407 + $0x128] sm:$0xff]
  %v2459 = vld [vmem:[%s2407 + $0x130] sm:$0xff]
  %v2460 = vld [vmem:[%s2407 + $0x148] sm:$0xff]
  %v2461 = vld [vmem:[%s2407 + $0x150] sm:$0xff]
  %v2462 = vld [vmem:[%s2407 + $0x168] sm:$0xff]
  %v2463 = vld [vmem:[%s2407 + $0x170] sm:$0xff]
  %v2464 = vld [vmem:[%s2407 + $0x188] sm:$0xff]
  %v2465 = vld [vmem:[%s2407 + $0x190] sm:$0xff]
  %v2466 = vld [vmem:[%s2407 + $0x1a8] sm:$0xff]
  %v2467 = vld [vmem:[%s2407 + $0x1b0] sm:$0xff]
  %v2468 = vld [vmem:[%s2407 + $0x1c8] sm:$0xff]
  %v2469 = vld [vmem:[%s2407 + $0x1d0] sm:$0xff]
  %v2470 = vld [vmem:[%s2407 + $0x1e8] sm:$0xff]
  %v2471 = vld [vmem:[%s2407 + $0x1f0] sm:$0xff]
  %v2472 = vld [vmem:[%s2407 + $0x9] sm:$0xff]
  %v2473 = vld [vmem:[%s2407 + $0x11] sm:$0xff]
  %v2474 = vld [vmem:[%s2407 + $0x29] sm:$0xff]
  %v2475 = vld [vmem:[%s2407 + $0x31] sm:$0xff]
  %v2476 = vld [vmem:[%s2407 + $0x49] sm:$0xff]
  %v2477 = vld [vmem:[%s2407 + $0x51] sm:$0xff]
  %v2478 = vld [vmem:[%s2407 + $0x69] sm:$0xff]
  %v2479 = vld [vmem:[%s2407 + $0x71] sm:$0xff]
  %v2480 = vld [vmem:[%s2407 + $0x89] sm:$0xff]
  %v2481 = vld [vmem:[%s2407 + $0x91] sm:$0xff]
  %v2482 = vld [vmem:[%s2407 + $0xa9] sm:$0xff]
  %v2483 = vld [vmem:[%s2407 + $0xb1] sm:$0xff]
  %v2484 = vld [vmem:[%s2407 + $0xc9] sm:$0xff]
  %v2485 = vld [vmem:[%s2407 + $0xd1] sm:$0xff]
  %v2486 = vld [vmem:[%s2407 + $0xe9] sm:$0xff]
  %v2487 = vld [vmem:[%s2407 + $0xf1] sm:$0xff]
  %v2488 = vld [vmem:[%s2407 + $0x109] sm:$0xff]
  %v2489 = vld [vmem:[%s2407 + $0x111] sm:$0xff]
  %v2490 = vld [vmem:[%s2407 + $0x129] sm:$0xff]
  %v2491 = vld [vmem:[%s2407 + $0x131] sm:$0xff]
  %v2492 = vld [vmem:[%s2407 + $0x149] sm:$0xff]
  %v2493 = vld [vmem:[%s2407 + $0x151] sm:$0xff]
  %v2494 = vld [vmem:[%s2407 + $0x169] sm:$0xff]
  %v2495 = vld [vmem:[%s2407 + $0x171] sm:$0xff]
  %v2496 = vld [vmem:[%s2407 + $0x189] sm:$0xff]
  %v2497 = vld [vmem:[%s2407 + $0x191] sm:$0xff]
  %v2498 = vld [vmem:[%s2407 + $0x1a9] sm:$0xff]
  %v2499 = vld [vmem:[%s2407 + $0x1b1] sm:$0xff]
  %v2500 = vld [vmem:[%s2407 + $0x1c9] sm:$0xff]
  %v2501 = vld [vmem:[%s2407 + $0x1d1] sm:$0xff]
  %v2502 = vld [vmem:[%s2407 + $0x1e9] sm:$0xff]
  %v2503 = vld [vmem:[%s2407 + $0x1f1] sm:$0xff]
  %s2504 = scalar_lea.vmem %s1, 768
  %v2505 = vld [vmem:[%s2504] sm:$0xff]
  %v2506 = vld [vmem:[%s2504 + $0x8] sm:$0xff]
  %v2507 = vld [vmem:[%s2504 + $0x10] sm:$0xff]
  %v2508 = vld [vmem:[%s2504 + $0x18] sm:$0xff]
  %v2509 = vld [vmem:[%s2504 + $0x20] sm:$0xff]
  %v2510 = vld [vmem:[%s2504 + $0x28] sm:$0xff]
  %v2511 = vld [vmem:[%s2504 + $0x30] sm:$0xff]
  %v2512 = vld [vmem:[%s2504 + $0x38] sm:$0xff]
  %v2513 = vld [vmem:[%s2504 + $0x40] sm:$0xff]
  %v2514 = vld [vmem:[%s2504 + $0x48] sm:$0xff]
  %v2515 = vld [vmem:[%s2504 + $0x50] sm:$0xff]
  %v2516 = vld [vmem:[%s2504 + $0x58] sm:$0xff]
  %v2517 = vld [vmem:[%s2504 + $0x60] sm:$0xff]
  %v2518 = vld [vmem:[%s2504 + $0x68] sm:$0xff]
  %v2519 = vld [vmem:[%s2504 + $0x70] sm:$0xff]
  %v2520 = vld [vmem:[%s2504 + $0x78] sm:$0xff]
  %v2521 = vld [vmem:[%s2504 + $0x80] sm:$0xff]
  %v2522 = vld [vmem:[%s2504 + $0x88] sm:$0xff]
  %v2523 = vld [vmem:[%s2504 + $0x90] sm:$0xff]
  %v2524 = vld [vmem:[%s2504 + $0x98] sm:$0xff]
  %v2525 = vld [vmem:[%s2504 + $0xa0] sm:$0xff]
  %v2526 = vld [vmem:[%s2504 + $0xa8] sm:$0xff]
  %v2527 = vld [vmem:[%s2504 + $0xb0] sm:$0xff]
  %v2528 = vld [vmem:[%s2504 + $0xb8] sm:$0xff]
  %v2529 = vld [vmem:[%s2504 + $0xc0] sm:$0xff]
  %v2530 = vld [vmem:[%s2504 + $0xc8] sm:$0xff]
  %v2531 = vld [vmem:[%s2504 + $0xd0] sm:$0xff]
  %v2532 = vld [vmem:[%s2504 + $0xd8] sm:$0xff]
  %v2533 = vld [vmem:[%s2504 + $0xe0] sm:$0xff]
  %v2534 = vld [vmem:[%s2504 + $0xe8] sm:$0xff]
  %v2535 = vld [vmem:[%s2504 + $0xf0] sm:$0xff]
  %v2536 = vld [vmem:[%s2504 + $0xf8] sm:$0xff]
  %v2537 = vld [vmem:[%s2504 + $0x100] sm:$0xff]
  %v2538 = vld [vmem:[%s2504 + $0x108] sm:$0xff]
  %v2539 = vld [vmem:[%s2504 + $0x110] sm:$0xff]
  %v2540 = vld [vmem:[%s2504 + $0x118] sm:$0xff]
  %v2541 = vld [vmem:[%s2504 + $0x120] sm:$0xff]
  %v2542 = vld [vmem:[%s2504 + $0x128] sm:$0xff]
  %v2543 = vld [vmem:[%s2504 + $0x130] sm:$0xff]
  %v2544 = vld [vmem:[%s2504 + $0x138] sm:$0xff]
  %v2545 = vld [vmem:[%s2504 + $0x140] sm:$0xff]
  %v2546 = vld [vmem:[%s2504 + $0x148] sm:$0xff]
  %v2547 = vld [vmem:[%s2504 + $0x150] sm:$0xff]
  %v2548 = vld [vmem:[%s2504 + $0x158] sm:$0xff]
  %v2549 = vld [vmem:[%s2504 + $0x160] sm:$0xff]
  %v2550 = vld [vmem:[%s2504 + $0x168] sm:$0xff]
  %v2551 = vld [vmem:[%s2504 + $0x170] sm:$0xff]
  %v2552 = vld [vmem:[%s2504 + $0x178] sm:$0xff]
  %2553 = vmatprep.subr.mxu0 0.0
  %2554 = vmatpush1.msra.mxu0 %v2505
  %2555 = vmatprep.subr.mxu0 0.0
  %2556 = vmatpush1.msra.mxu0 %v2506
  %2557 = vmatprep.subr.mxu0 0.0
  %2558 = vmatpush1.msra.mxu0 %v2507
  %2559 = vmatprep.subr.mxu0 0.0
  %2560 = vmatpush1.msra.mxu0 %v2508
  %2561 = vmatprep.subr.mxu0 0.0
  %2562 = vmatpush1.msra.mxu0 %v2509
  %2563 = vmatprep.subr.mxu0 0.0
  %2564 = vmatpush1.msra.mxu0 %v2510
  %2565 = vmatprep.subr.mxu0 0.0
  %2566 = vmatpush1.msra.mxu0 %v2511
  %2567 = vmatprep.subr.mxu0 0.0
  %2568 = vmatpush1.msra.mxu0 %v2512
  %2569 = vmatprep.subr.mxu0 0.0
  %2570 = vmatpush1.msra.mxu0 %v2513
  %2571 = vmatprep.subr.mxu0 0.0
  %2572 = vmatpush1.msra.mxu0 %v2514
  %2573 = vmatprep.subr.mxu0 0.0
  %2574 = vmatpush1.msra.mxu0 %v2515
  %2575 = vmatprep.subr.mxu0 0.0
  %2576 = vmatpush1.msra.mxu0 %v2516
  %2577 = vmatprep.subr.mxu0 0.0
  %2578 = vmatpush1.msra.mxu0 %v2517
  %2579 = vmatprep.subr.mxu0 0.0
  %2580 = vmatpush1.msra.mxu0 %v2518
  %2581 = vmatprep.subr.mxu0 0.0
  %2582 = vmatpush1.msra.mxu0 %v2519
  %2583 = vmatprep.subr.mxu0 0.0
  %2584 = vmatpush1.msra.mxu0 %v2520
  %2585 = vmatprep.subr.mxu0 0.0
  %2586 = vmatpush1.msra.mxu0 %v2521
  %2587 = vmatprep.subr.mxu0 0.0
  %2588 = vmatpush1.msra.mxu0 %v2522
  %2589 = vmatprep.subr.mxu0 0.0
  %2590 = vmatpush1.msra.mxu0 %v2523
  %2591 = vmatprep.subr.mxu0 0.0
  %2592 = vmatpush1.msra.mxu0 %v2524
  %2593 = vmatprep.subr.mxu0 0.0
  %2594 = vmatpush1.msra.mxu0 %v2525
  %2595 = vmatprep.subr.mxu0 0.0
  %2596 = vmatpush1.msra.mxu0 %v2526
  %2597 = vmatprep.subr.mxu0 0.0
  %2598 = vmatpush1.msra.mxu0 %v2527
  %2599 = vmatprep.subr.mxu0 0.0
  %2600 = vmatpush1.msra.mxu0 %v2528
  %2601 = vmatprep.subr.mxu0 0.0
  %2602 = vmatpush1.msra.mxu0 %v2529
  %2603 = vmatprep.subr.mxu0 0.0
  %2604 = vmatpush1.msra.mxu0 %v2530
  %2605 = vmatprep.subr.mxu0 0.0
  %2606 = vmatpush1.msra.mxu0 %v2531
  %2607 = vmatprep.subr.mxu0 0.0
  %2608 = vmatpush1.msra.mxu0 %v2532
  %2609 = vmatprep.subr.mxu0 0.0
  %2610 = vmatpush1.msra.mxu0 %v2533
  %2611 = vmatprep.subr.mxu0 0.0
  %2612 = vmatpush1.msra.mxu0 %v2534
  %2613 = vmatprep.subr.mxu0 0.0
  %2614 = vmatpush1.msra.mxu0 %v2535
  %2615 = vmatprep.subr.mxu0 0.0
  %2616 = vmatpush1.msra.mxu0 %v2536
  %2617 = vmatprep.mubr.f32.mxu0 %v2343
  %2618 = vmatmul.mubr.f32.gmra.mrb[0].mxu0 %v2311
  %v2619 = vpop.f32.mrb[0].mxu0
  %v2620 = vadd.f32 0.0, %v2619
  %v2621 = vpop.f32.mrb[0].mxu0
  %2622 = vmatprep.mubr.f32.mxu0 %v2344
  %2623 = vmatmul.mubr.f32.gmra.mrb[0].mxu0 %v2312
  %v2624 = vpop.f32.mrb[0].mxu0
  %v2625 = vadd.f32 0.0, %v2624
  %v2626 = vpop.f32.mrb[0].mxu0
  %2627 = vmatprep.mubr.f32.mxu0 %v2345
  %2628 = vmatmul.mubr.f32.gmra.mrb[0].mxu0 %v2313
  %v2629 = vpop.f32.mrb[0].mxu0
  %v2630 = vadd.f32 0.0, %v2629
  %v2631 = vpop.f32.mrb[0].mxu0
  %2632 = vmatprep.mubr.f32.mxu0 %v2346
  %2633 = vmatmul.mubr.f32.gmra.mrb[0].mxu0 %v2314
  %v2634 = vpop.f32.mrb[0].mxu0
  %v2635 = vadd.f32 0.0, %v2634
  %v2636 = vpop.f32.mrb[0].mxu0
  %2637 = vmatprep.mubr.f32.mxu0 %v2347
  %2638 = vmatmul.mubr.f32.gmra.mrb[0].mxu0 %v2315
  %v2639 = vpop.f32.mrb[0].mxu0
  %v2640 = vadd.f32 0.0, %v2639
  %v2641 = vpop.f32.mrb[0].mxu0
  %2642 = vmatprep.mubr.f32.mxu0 %v2348
  %2643 = vmatmul.mubr.f32.gmra.mrb[0].mxu0 %v2316
  %v2644 = vpop.f32.mrb[0].mxu0
  %v2645 = vadd.f32 0.0, %v2644
  %v2646 = vpop.f32.mrb[0].mxu0
  %2647 = vmatprep.mubr.f32.mxu0 %v2349
  %2648 = vmatmul.mubr.f32.gmra.mrb[0].mxu0 %v2317
  %v2649 = vpop.f32.mrb[0].mxu0
  %v2650 = vadd.f32 0.0, %v2649
  %v2651 = vpop.f32.mrb[0].mxu0
  %2652 = vmatprep.mubr.f32.mxu0 %v2350
  %2653 = vmatmul.mubr.f32.gmra.mrb[0].mxu0 %v2318
  %v2654 = vpop.f32.mrb[0].mxu0
  %v2655 = vadd.f32 0.0, %v2654
  %v2656 = vpop.f32.mrb[0].mxu0
  %2657 = vmatprep.mubr.f32.mxu0 %v2351
  %2658 = vmatmul.mubr.f32.gmra.mrb[0].mxu0 %v2319
  %v2659 = vpop.f32.mrb[0].mxu0
  %v2660 = vadd.f32 0.0, %v2659
  %v2661 = vpop.f32.mrb[0].mxu0
  %2662 = vmatprep.mubr.f32.mxu0 %v2352
  %2663 = vmatmul.mubr.f32.gmra.mrb[0].mxu0 %v2320
  %v2664 = vpop.f32.mrb[0].mxu0
  %v2665 = vadd.f32 0.0, %v2664
  %v2666 = vpop.f32.mrb[0].mxu0
  %2667 = vmatprep.mubr.f32.mxu0 %v2353
  %2668 = vmatmul.mubr.f32.gmra.mrb[0].mxu0 %v2321
  %v2669 = vpop.f32.mrb[0].mxu0
  %v2670 = vadd.f32 0.0, %v2669
  %v2671 = vpop.f32.mrb[0].mxu0
  %2672 = vmatprep.mubr.f32.mxu0 %v2354
  %2673 = vmatmul.mubr.f32.gmra.mrb[0].mxu0 %v2322
  %v2674 = vpop.f32.mrb[0].mxu0
  %v2675 = vadd.f32 0.0, %v2674
  %v2676 = vpop.f32.mrb[0].mxu0
  %2677 = vmatprep.mubr.f32.mxu0 %v2355
  %2678 = vmatmul.mubr.f32.gmra.mrb[0].mxu0 %v2323
  %v2679 = vpop.f32.mrb[0].mxu0
  %v2680 = vadd.f32 0.0, %v2679
  %v2681 = vpop.f32.mrb[0].mxu0
  %2682 = vmatprep.mubr.f32.mxu0 %v2356
  %2683 = vmatmul.mubr.f32.gmra.mrb[0].mxu0 %v2324
  %v2684 = vpop.f32.mrb[0].mxu0
  %v2685 = vadd.f32 0.0, %v2684
  %v2686 = vpop.f32.mrb[0].mxu0
  %2687 = vmatprep.mubr.f32.mxu0 %v2357
  %2688 = vmatmul.mubr.f32.gmra.mrb[0].mxu0 %v2325
  %v2689 = vpop.f32.mrb[0].mxu0
  %v2690 = vadd.f32 0.0, %v2689
  %v2691 = vpop.f32.mrb[0].mxu0
  %2692 = vmatprep.mubr.f32.mxu0 %v2358
  %2693 = vmatmul.mubr.f32.gmra.mrb[0].mxu0 %v2326
  %v2694 = vpop.f32.mrb[0].mxu0
  %v2695 = vadd.f32 0.0, %v2694
  %v2696 = vpop.f32.mrb[0].mxu0
  %2697 = vmatprep.mubr.f32.mxu0 %v2359
  %2698 = vmatmul.mubr.f32.gmra.mrb[0].mxu0 %v2327
  %v2699 = vpop.f32.mrb[0].mxu0
  %v2700 = vadd.f32 0.0, %v2699
  %v2701 = vpop.f32.mrb[0].mxu0
  %2702 = vmatprep.mubr.f32.mxu0 %v2360
  %2703 = vmatmul.mubr.f32.gmra.mrb[0].mxu0 %v2328
  %v2704 = vpop.f32.mrb[0].mxu0
  %v2705 = vadd.f32 0.0, %v2704
  %v2706 = vpop.f32.mrb[0].mxu0
  %2707 = vmatprep.mubr.f32.mxu0 %v2361
  %2708 = vmatmul.mubr.f32.gmra.mrb[0].mxu0 %v2329
  %v2709 = vpop.f32.mrb[0].mxu0
  %v2710 = vadd.f32 0.0, %v2709
  %v2711 = vpop.f32.mrb[0].mxu0
  %2712 = vmatprep.mubr.f32.mxu0 %v2362
  %2713 = vmatmul.mubr.f32.gmra.mrb[0].mxu0 %v2330
  %v2714 = vpop.f32.mrb[0].mxu0
  %v2715 = vadd.f32 0.0, %v2714
  %v2716 = vpop.f32.mrb[0].mxu0
  %2717 = vmatprep.mubr.f32.mxu0 %v2363
  %2718 = vmatmul.mubr.f32.gmra.mrb[0].mxu0 %v2331
  %v2719 = vpop.f32.mrb[0].mxu0
  %v2720 = vadd.f32 0.0, %v2719
  %v2721 = vpop.f32.mrb[0].mxu0
  %2722 = vmatprep.mubr.f32.mxu0 %v2364
  %2723 = vmatmul.mubr.f32.gmra.mrb[0].mxu0 %v2332
  %v2724 = vpop.f32.mrb[0].mxu0
  %v2725 = vadd.f32 0.0, %v2724
  %v2726 = vpop.f32.mrb[0].mxu0
  %2727 = vmatprep.mubr.f32.mxu0 %v2365
  %2728 = vmatmul.mubr.f32.gmra.mrb[0].mxu0 %v2333
  %v2729 = vpop.f32.mrb[0].mxu0
  %v2730 = vadd.f32 0.0, %v2729
  %v2731 = vpop.f32.mrb[0].mxu0
  %2732 = vmatprep.mubr.f32.mxu0 %v2366
  %2733 = vmatmul.mubr.f32.gmra.mrb[0].mxu0 %v2334
  %v2734 = vpop.f32.mrb[0].mxu0
  %v2735 = vadd.f32 0.0, %v2734
  %v2736 = vpop.f32.mrb[0].mxu0
  %2737 = vmatprep.mubr.f32.mxu0 %v2367
  %2738 = vmatmul.mubr.f32.gmra.mrb[0].mxu0 %v2335
  %v2739 = vpop.f32.mrb[0].mxu0
  %v2740 = vadd.f32 0.0, %v2739
  %v2741 = vpop.f32.mrb[0].mxu0
  %2742 = vmatprep.mubr.f32.mxu0 %v2368
  %2743 = vmatmul.mubr.f32.gmra.mrb[0].mxu0 %v2336
  %v2744 = vpop.f32.mrb[0].mxu0
  %v2745 = vadd.f32 0.0, %v2744
  %v2746 = vpop.f32.mrb[0].mxu0
  %2747 = vmatprep.mubr.f32.mxu0 %v2369
  %2748 = vmatmul.mubr.f32.gmra.mrb[0].mxu0 %v2337
  %v2749 = vpop.f32.mrb[0].mxu0
  %v2750 = vadd.f32 0.0, %v2749
  %v2751 = vpop.f32.mrb[0].mxu0
  %2752 = vmatprep.mubr.f32.mxu0 %v2370
  %2753 = vmatmul.mubr.f32.gmra.mrb[0].mxu0 %v2338
  %v2754 = vpop.f32.mrb[0].mxu0
  %v2755 = vadd.f32 0.0, %v2754
  %v2756 = vpop.f32.mrb[0].mxu0
  %2757 = vmatprep.mubr.f32.mxu0 %v2371
  %2758 = vmatmul.mubr.f32.gmra.mrb[0].mxu0 %v2339
  %v2759 = vpop.f32.mrb[0].mxu0
  %v2760 = vadd.f32 0.0, %v2759
  %v2761 = vpop.f32.mrb[0].mxu0
  %2762 = vmatprep.mubr.f32.mxu0 %v2372
  %2763 = vmatmul.mubr.f32.gmra.mrb[0].mxu0 %v2340
  %v2764 = vpop.f32.mrb[0].mxu0
  %v2765 = vadd.f32 0.0, %v2764
  %v2766 = vpop.f32.mrb[0].mxu0
  %2767 = vmatprep.mubr.f32.mxu0 %v2373
  %2768 = vmatmul.mubr.f32.gmra.mrb[0].mxu0 %v2341
  %v2769 = vpop.f32.mrb[0].mxu0
  %v2770 = vadd.f32 0.0, %v2769
  %v2771 = vpop.f32.mrb[0].mxu0
  %2772 = vmatprep.mubr.f32.mxu0 %v2374
  %2773 = vmatmul.mubr.f32.gmra.mrb[0].mxu0 %v2342
  %v2774 = vpop.f32.mrb[0].mxu0
  %v2775 = vadd.f32 0.0, %v2774
  %v2776 = vpop.f32.mrb[0].mxu0
  %2777 = vmatprep.mubr.f32.mxu0 %v2440
  %2778 = vmatmul.mubr.f32.gmra.mrb[0].mxu0 %v2408
  %v2779 = vpop.f32.mrb[0].mxu0
  %v2780 = vadd.f32 0.0, %v2779
  %v2781 = vpop.f32.mrb[0].mxu0
  %2782 = vmatprep.mubr.f32.mxu0 %v2441
  %2783 = vmatmul.mubr.f32.gmra.mrb[0].mxu0 %v2409
  %v2784 = vpop.f32.mrb[0].mxu0
  %v2785 = vadd.f32 0.0, %v2784
  %v2786 = vpop.f32.mrb[0].mxu0
  %2787 = vmatprep.mubr.f32.mxu0 %v2442
  %2788 = vmatmul.mubr.f32.gmra.mrb[0].mxu0 %v2410
  %v2789 = vpop.f32.mrb[0].mxu0
  %v2790 = vadd.f32 0.0, %v2789
  %v2791 = vpop.f32.mrb[0].mxu0
  %2792 = vmatprep.mubr.f32.mxu0 %v2443
  %2793 = vmatmul.mubr.f32.gmra.mrb[0].mxu0 %v2411
  %v2794 = vpop.f32.mrb[0].mxu0
  %v2795 = vadd.f32 0.0, %v2794
  %v2796 = vpop.f32.mrb[0].mxu0
  %2797 = vmatprep.mubr.f32.mxu0 %v2444
  %2798 = vmatmul.mubr.f32.gmra.mrb[0].mxu0 %v2412
  %v2799 = vpop.f32.mrb[0].mxu0
  %v2800 = vadd.f32 0.0, %v2799
  %v2801 = vpop.f32.mrb[0].mxu0
  %2802 = vmatprep.mubr.f32.mxu0 %v2445
  %2803 = vmatmul.mubr.f32.gmra.mrb[0].mxu0 %v2413
  %v2804 = vpop.f32.mrb[0].mxu0
  %v2805 = vadd.f32 0.0, %v2804
  %v2806 = vpop.f32.mrb[0].mxu0
  %2807 = vmatprep.mubr.f32.mxu0 %v2446
  %2808 = vmatmul.mubr.f32.gmra.mrb[0].mxu0 %v2414
  %v2809 = vpop.f32.mrb[0].mxu0
  %v2810 = vadd.f32 0.0, %v2809
  %v2811 = vpop.f32.mrb[0].mxu0
  %2812 = vmatprep.mubr.f32.mxu0 %v2447
  %2813 = vmatmul.mubr.f32.gmra.mrb[0].mxu0 %v2415
  %v2814 = vpop.f32.mrb[0].mxu0
  %v2815 = vadd.f32 0.0, %v2814
  %v2816 = vpop.f32.mrb[0].mxu0
  %2817 = vmatprep.mubr.f32.mxu0 %v2448
  %2818 = vmatmul.mubr.f32.gmra.mrb[0].mxu0 %v2416
  %v2819 = vpop.f32.mrb[0].mxu0
  %v2820 = vadd.f32 0.0, %v2819
  %v2821 = vpop.f32.mrb[0].mxu0
  %2822 = vmatprep.mubr.f32.mxu0 %v2449
  %2823 = vmatmul.mubr.f32.gmra.mrb[0].mxu0 %v2417
  %v2824 = vpop.f32.mrb[0].mxu0
  %v2825 = vadd.f32 0.0, %v2824
  %v2826 = vpop.f32.mrb[0].mxu0
  %2827 = vmatprep.mubr.f32.mxu0 %v2450
  %2828 = vmatmul.mubr.f32.gmra.mrb[0].mxu0 %v2418
  %v2829 = vpop.f32.mrb[0].mxu0
  %v2830 = vadd.f32 0.0, %v2829
  %v2831 = vpop.f32.mrb[0].mxu0
  %2832 = vmatprep.mubr.f32.mxu0 %v2451
  %2833 = vmatmul.mubr.f32.gmra.mrb[0].mxu0 %v2419
  %v2834 = vpop.f32.mrb[0].mxu0
  %v2835 = vadd.f32 0.0, %v2834
  %v2836 = vpop.f32.mrb[0].mxu0
  %2837 = vmatprep.mubr.f32.mxu0 %v2452
  %2838 = vmatmul.mubr.f32.gmra.mrb[0].mxu0 %v2420
  %v2839 = vpop.f32.mrb[0].mxu0
  %v2840 = vadd.f32 0.0, %v2839
  %v2841 = vpop.f32.mrb[0].mxu0
  %2842 = vmatprep.mubr.f32.mxu0 %v2453
  %2843 = vmatmul.mubr.f32.gmra.mrb[0].mxu0 %v2421
  %v2844 = vpop.f32.mrb[0].mxu0
  %v2845 = vadd.f32 0.0, %v2844
  %v2846 = vpop.f32.mrb[0].mxu0
  %2847 = vmatprep.mubr.f32.mxu0 %v2454
  %2848 = vmatmul.mubr.f32.gmra.mrb[0].mxu0 %v2422
  %v2849 = vpop.f32.mrb[0].mxu0
  %v2850 = vadd.f32 0.0, %v2849
  %v2851 = vpop.f32.mrb[0].mxu0
  %2852 = vmatprep.mubr.f32.mxu0 %v2455
  %2853 = vmatmul.mubr.f32.gmra.mrb[0].mxu0 %v2423
  %v2854 = vpop.f32.mrb[0].mxu0
  %v2855 = vadd.f32 0.0, %v2854
  %v2856 = vpop.f32.mrb[0].mxu0
  %2857 = vmatprep.mubr.f32.mxu0 %v2456
  %2858 = vmatmul.mubr.f32.gmra.mrb[0].mxu0 %v2424
  %v2859 = vpop.f32.mrb[0].mxu0
  %v2860 = vadd.f32 0.0, %v2859
  %v2861 = vpop.f32.mrb[0].mxu0
  %2862 = vmatprep.mubr.f32.mxu0 %v2457
  %2863 = vmatmul.mubr.f32.gmra.mrb[0].mxu0 %v2425
  %v2864 = vpop.f32.mrb[0].mxu0
  %v2865 = vadd.f32 0.0, %v2864
  %v2866 = vpop.f32.mrb[0].mxu0
  %2867 = vmatprep.mubr.f32.mxu0 %v2458
  %2868 = vmatmul.mubr.f32.gmra.mrb[0].mxu0 %v2426
  %v2869 = vpop.f32.mrb[0].mxu0
  %v2870 = vadd.f32 0.0, %v2869
  %v2871 = vpop.f32.mrb[0].mxu0
  %2872 = vmatprep.mubr.f32.mxu0 %v2459
  %2873 = vmatmul.mubr.f32.gmra.mrb[0].mxu0 %v2427
  %v2874 = vpop.f32.mrb[0].mxu0
  %v2875 = vadd.f32 0.0, %v2874
  %v2876 = vpop.f32.mrb[0].mxu0
  %2877 = vmatprep.mubr.f32.mxu0 %v2460
  %2878 = vmatmul.mubr.f32.gmra.mrb[0].mxu0 %v2428
  %v2879 = vpop.f32.mrb[0].mxu0
  %v2880 = vadd.f32 0.0, %v2879
  %v2881 = vpop.f32.mrb[0].mxu0
  %2882 = vmatprep.mubr.f32.mxu0 %v2461
  %2883 = vmatmul.mubr.f32.gmra.mrb[0].mxu0 %v2429
  %v2884 = vpop.f32.mrb[0].mxu0
  %v2885 = vadd.f32 0.0, %v2884
  %v2886 = vpop.f32.mrb[0].mxu0
  %2887 = vmatprep.mubr.f32.mxu0 %v2462
  %2888 = vmatmul.mubr.f32.gmra.mrb[0].mxu0 %v2430
  %v2889 = vpop.f32.mrb[0].mxu0
  %v2890 = vadd.f32 0.0, %v2889
  %v2891 = vpop.f32.mrb[0].mxu0
  %2892 = vmatprep.mubr.f32.mxu0 %v2463
  %2893 = vmatmul.mubr.f32.gmra.mrb[0].mxu0 %v2431
  %v2894 = vpop.f32.mrb[0].mxu0
  %v2895 = vadd.f32 0.0, %v2894
  %v2896 = vpop.f32.mrb[0].mxu0
  %2897 = vmatprep.mubr.f32.mxu0 %v2464
  %2898 = vmatmul.mubr.f32.gmra.mrb[0].mxu0 %v2432
  %v2899 = vpop.f32.mrb[0].mxu0
  %v2900 = vadd.f32 0.0, %v2899
  %v2901 = vpop.f32.mrb[0].mxu0
  %2902 = vmatprep.mubr.f32.mxu0 %v2465
  %2903 = vmatmul.mubr.f32.gmra.mrb[0].mxu0 %v2433
  %v2904 = vpop.f32.mrb[0].mxu0
  %v2905 = vadd.f32 0.0, %v2904
  %v2906 = vpop.f32.mrb[0].mxu0
  %2907 = vmatprep.mubr.f32.mxu0 %v2466
  %2908 = vmatmul.mubr.f32.gmra.mrb[0].mxu0 %v2434
  %v2909 = vpop.f32.mrb[0].mxu0
  %v2910 = vadd.f32 0.0, %v2909
  %v2911 = vpop.f32.mrb[0].mxu0
  %2912 = vmatprep.mubr.f32.mxu0 %v2467
  %2913 = vmatmul.mubr.f32.gmra.mrb[0].mxu0 %v2435
  %v2914 = vpop.f32.mrb[0].mxu0
  %v2915 = vadd.f32 0.0, %v2914
  %v2916 = vpop.f32.mrb[0].mxu0
  %2917 = vmatprep.mubr.f32.mxu0 %v2468
  %2918 = vmatmul.mubr.f32.gmra.mrb[0].mxu0 %v2436
  %v2919 = vpop.f32.mrb[0].mxu0
  %v2920 = vadd.f32 0.0, %v2919
  %v2921 = vpop.f32.mrb[0].mxu0
  %2922 = vmatprep.mubr.f32.mxu0 %v2469
  %2923 = vmatmul.mubr.f32.gmra.mrb[0].mxu0 %v2437
  %v2924 = vpop.f32.mrb[0].mxu0
  %v2925 = vadd.f32 0.0, %v2924
  %v2926 = vpop.f32.mrb[0].mxu0
  %2927 = vmatprep.mubr.f32.mxu0 %v2470
  %2928 = vmatmul.mubr.f32.gmra.mrb[0].mxu0 %v2438
  %v2929 = vpop.f32.mrb[0].mxu0
  %v2930 = vadd.f32 0.0, %v2929
  %v2931 = vpop.f32.mrb[0].mxu0
  %2932 = vmatprep.mubr.f32.mxu0 %v2471
  %2933 = vmatmul.mubr.f32.gmra.mrb[0].mxu0 %v2439
  %v2934 = vpop.f32.mrb[0].mxu0
  %v2935 = vadd.f32 0.0, %v2934
  %v2936 = vpop.f32.mrb[0].mxu0
  %2937 = vdwg.mxu0
  %2938 = vmatprep.subr.mxu0 0.0
  %2939 = vmatpush1.msra.mxu0 %v2537
  %2940 = vmatprep.subr.mxu0 0.0
  %2941 = vmatpush1.msra.mxu0 %v2538
  %2942 = vmatprep.subr.mxu0 0.0
  %2943 = vmatpush1.msra.mxu0 %v2539
  %2944 = vmatprep.subr.mxu0 0.0
  %2945 = vmatpush1.msra.mxu0 %v2540
  %2946 = vmatprep.subr.mxu0 0.0
  %2947 = vmatpush1.msra.mxu0 %v2541
  %2948 = vmatprep.subr.mxu0 0.0
  %2949 = vmatpush1.msra.mxu0 %v2542
  %2950 = vmatprep.subr.mxu0 0.0
  %2951 = vmatpush1.msra.mxu0 %v2543
  %2952 = vmatprep.subr.mxu0 0.0
  %2953 = vmatpush1.msra.mxu0 %v2544
  %2954 = vmatprep.subr.mxu0 0.0
  %2955 = vmatpush1.msra.mxu0 %v2545
  %2956 = vmatprep.subr.mxu0 0.0
  %2957 = vmatpush1.msra.mxu0 %v2546
  %2958 = vmatprep.subr.mxu0 0.0
  %2959 = vmatpush1.msra.mxu0 %v2547
  %2960 = vmatprep.subr.mxu0 0.0
  %2961 = vmatpush1.msra.mxu0 %v2548
  %2962 = vmatprep.subr.mxu0 0.0
  %2963 = vmatpush1.msra.mxu0 %v2549
  %2964 = vmatprep.subr.mxu0 0.0
  %2965 = vmatpush1.msra.mxu0 %v2550
  %2966 = vmatprep.subr.mxu0 0.0
  %2967 = vmatpush1.msra.mxu0 %v2551
  %2968 = vmatprep.subr.mxu0 0.0
  %2969 = vmatpush1.msra.mxu0 %v2552
  %2970 = vmatprep.subr.mxu0 0.0
  %2971 = vmatpush1.msra.mxu0 0.0
  %2972 = vmatprep.subr.mxu0 0.0
  %2973 = vmatpush1.msra.mxu0 0.0
  %2974 = vmatprep.subr.mxu0 0.0
  %2975 = vmatpush1.msra.mxu0 0.0
  %2976 = vmatprep.subr.mxu0 0.0
  %2977 = vmatpush1.msra.mxu0 0.0
  %2978 = vmatprep.subr.mxu0 0.0
  %2979 = vmatpush1.msra.mxu0 0.0
  %2980 = vmatprep.subr.mxu0 0.0
  %2981 = vmatpush1.msra.mxu0 0.0
  %2982 = vmatprep.subr.mxu0 0.0
  %2983 = vmatpush1.msra.mxu0 0.0
  %2984 = vmatprep.subr.mxu0 0.0
  %2985 = vmatpush1.msra.mxu0 0.0
  %2986 = vmatprep.subr.mxu0 0.0
  %2987 = vmatpush1.msra.mxu0 0.0
  %2988 = vmatprep.subr.mxu0 0.0
  %2989 = vmatpush1.msra.mxu0 0.0
  %2990 = vmatprep.subr.mxu0 0.0
  %2991 = vmatpush1.msra.mxu0 0.0
  %2992 = vmatprep.subr.mxu0 0.0
  %2993 = vmatpush1.msra.mxu0 0.0
  %2994 = vmatprep.subr.mxu0 0.0
  %2995 = vmatpush1.msra.mxu0 0.0
  %2996 = vmatprep.subr.mxu0 0.0
  %2997 = vmatpush1.msra.mxu0 0.0
  %2998 = vmatprep.subr.mxu0 0.0
  %2999 = vmatpush1.msra.mxu0 0.0
  %3000 = vmatprep.subr.mxu0 0.0
  %3001 = vmatpush1.msra.mxu0 0.0
  %3002 = vmatprep.mubr.f32.mxu0 0.0
  %3003 = vmatmul.mubr.f32.gmra.mrb[0].mxu0 %v2375
  %v3004 = vpop.f32.mrb[0].mxu0
  %v3005 = vadd.f32 %v2620, %v3004
  %v3006 = vpop.f32.mrb[0].mxu0
  %3007 = vmatprep.mubr.f32.mxu0 0.0
  %3008 = vmatmul.mubr.f32.gmra.mrb[0].mxu0 %v2376
  %v3009 = vpop.f32.mrb[0].mxu0
  %v3010 = vadd.f32 %v2625, %v3009
  %v3011 = vpop.f32.mrb[0].mxu0
  %3012 = vmatprep.mubr.f32.mxu0 0.0
  %3013 = vmatmul.mubr.f32.gmra.mrb[0].mxu0 %v2377
  %v3014 = vpop.f32.mrb[0].mxu0
  %v3015 = vadd.f32 %v2630, %v3014
  %v3016 = vpop.f32.mrb[0].mxu0
  %3017 = vmatprep.mubr.f32.mxu0 0.0
  %3018 = vmatmul.mubr.f32.gmra.mrb[0].mxu0 %v2378
  %v3019 = vpop.f32.mrb[0].mxu0
  %v3020 = vadd.f32 %v2635, %v3019
  %v3021 = vpop.f32.mrb[0].mxu0
  %3022 = vmatprep.mubr.f32.mxu0 0.0
  %3023 = vmatmul.mubr.f32.gmra.mrb[0].mxu0 %v2379
  %v3024 = vpop.f32.mrb[0].mxu0
  %v3025 = vadd.f32 %v2640, %v3024
  %v3026 = vpop.f32.mrb[0].mxu0
  %3027 = vmatprep.mubr.f32.mxu0 0.0
  %3028 = vmatmul.mubr.f32.gmra.mrb[0].mxu0 %v2380
  %v3029 = vpop.f32.mrb[0].mxu0
  %v3030 = vadd.f32 %v2645, %v3029
  %v3031 = vpop.f32.mrb[0].mxu0
  %3032 = vmatprep.mubr.f32.mxu0 0.0
  %3033 = vmatmul.mubr.f32.gmra.mrb[0].mxu0 %v2381
  %v3034 = vpop.f32.mrb[0].mxu0
  %v3035 = vadd.f32 %v2650, %v3034
  %v3036 = vpop.f32.mrb[0].mxu0
  %3037 = vmatprep.mubr.f32.mxu0 0.0
  %3038 = vmatmul.mubr.f32.gmra.mrb[0].mxu0 %v2382
  %v3039 = vpop.f32.mrb[0].mxu0
  %v3040 = vadd.f32 %v2655, %v3039
  %v3041 = vpop.f32.mrb[0].mxu0
  %3042 = vmatprep.mubr.f32.mxu0 0.0
  %3043 = vmatmul.mubr.f32.gmra.mrb[0].mxu0 %v2383
  %v3044 = vpop.f32.mrb[0].mxu0
  %v3045 = vadd.f32 %v2660, %v3044
  %v3046 = vpop.f32.mrb[0].mxu0
  %3047 = vmatprep.mubr.f32.mxu0 0.0
  %3048 = vmatmul.mubr.f32.gmra.mrb[0].mxu0 %v2384
  %v3049 = vpop.f32.mrb[0].mxu0
  %v3050 = vadd.f32 %v2665, %v3049
  %v3051 = vpop.f32.mrb[0].mxu0
  %3052 = vmatprep.mubr.f32.mxu0 0.0
  %3053 = vmatmul.mubr.f32.gmra.mrb[0].mxu0 %v2385
  %v3054 = vpop.f32.mrb[0].mxu0
  %v3055 = vadd.f32 %v2670, %v3054
  %v3056 = vpop.f32.mrb[0].mxu0
  %3057 = vmatprep.mubr.f32.mxu0 0.0
  %3058 = vmatmul.mubr.f32.gmra.mrb[0].mxu0 %v2386
  %v3059 = vpop.f32.mrb[0].mxu0
  %v3060 = vadd.f32 %v2675, %v3059
  %v3061 = vpop.f32.mrb[0].mxu0
  %3062 = vmatprep.mubr.f32.mxu0 0.0
  %3063 = vmatmul.mubr.f32.gmra.mrb[0].mxu0 %v2387
  %v3064 = vpop.f32.mrb[0].mxu0
  %v3065 = vadd.f32 %v2680, %v3064
  %v3066 = vpop.f32.mrb[0].mxu0
  %3067 = vmatprep.mubr.f32.mxu0 0.0
  %3068 = vmatmul.mubr.f32.gmra.mrb[0].mxu0 %v2388
  %v3069 = vpop.f32.mrb[0].mxu0
  %v3070 = vadd.f32 %v2685, %v3069
  %v3071 = vpop.f32.mrb[0].mxu0
  %3072 = vmatprep.mubr.f32.mxu0 0.0
  %3073 = vmatmul.mubr.f32.gmra.mrb[0].mxu0 %v2389
  %v3074 = vpop.f32.mrb[0].mxu0
  %v3075 = vadd.f32 %v2690, %v3074
  %v3076 = vpop.f32.mrb[0].mxu0
  %3077 = vmatprep.mubr.f32.mxu0 0.0
  %3078 = vmatmul.mubr.f32.gmra.mrb[0].mxu0 %v2390
  %v3079 = vpop.f32.mrb[0].mxu0
  %v3080 = vadd.f32 %v2695, %v3079
  %v3081 = vpop.f32.mrb[0].mxu0
  %3082 = vmatprep.mubr.f32.mxu0 0.0
  %3083 = vmatmul.mubr.f32.gmra.mrb[0].mxu0 %v2391
  %v3084 = vpop.f32.mrb[0].mxu0
  %v3085 = vadd.f32 %v2700, %v3084
  %v3086 = vpop.f32.mrb[0].mxu0
  %3087 = vmatprep.mubr.f32.mxu0 0.0
  %3088 = vmatmul.mubr.f32.gmra.mrb[0].mxu0 %v2392
  %v3089 = vpop.f32.mrb[0].mxu0
  %v3090 = vadd.f32 %v2705, %v3089
  %v3091 = vpop.f32.mrb[0].mxu0
  %3092 = vmatprep.mubr.f32.mxu0 0.0
  %3093 = vmatmul.mubr.f32.gmra.mrb[0].mxu0 %v2393
  %v3094 = vpop.f32.mrb[0].mxu0
  %v3095 = vadd.f32 %v2710, %v3094
  %v3096 = vpop.f32.mrb[0].mxu0
  %3097 = vmatprep.mubr.f32.mxu0 0.0
  %3098 = vmatmul.mubr.f32.gmra.mrb[0].mxu0 %v2394
  %v3099 = vpop.f32.mrb[0].mxu0
  %v3100 = vadd.f32 %v2715, %v3099
  %v3101 = vpop.f32.mrb[0].mxu0
  %3102 = vmatprep.mubr.f32.mxu0 0.0
  %3103 = vmatmul.mubr.f32.gmra.mrb[0].mxu0 %v2395
  %v3104 = vpop.f32.mrb[0].mxu0
  %v3105 = vadd.f32 %v2720, %v3104
  %v3106 = vpop.f32.mrb[0].mxu0
  %3107 = vmatprep.mubr.f32.mxu0 0.0
  %3108 = vmatmul.mubr.f32.gmra.mrb[0].mxu0 %v2396
  %v3109 = vpop.f32.mrb[0].mxu0
  %v3110 = vadd.f32 %v2725, %v3109
  %v3111 = vpop.f32.mrb[0].mxu0
  %3112 = vmatprep.mubr.f32.mxu0 0.0
  %3113 = vmatmul.mubr.f32.gmra.mrb[0].mxu0 %v2397
  %v3114 = vpop.f32.mrb[0].mxu0
  %v3115 = vadd.f32 %v2730, %v3114
  %v3116 = vpop.f32.mrb[0].mxu0
  %3117 = vmatprep.mubr.f32.mxu0 0.0
  %3118 = vmatmul.mubr.f32.gmra.mrb[0].mxu0 %v2398
  %v3119 = vpop.f32.mrb[0].mxu0
  %v3120 = vadd.f32 %v2735, %v3119
  %v3121 = vpop.f32.mrb[0].mxu0
  %3122 = vmatprep.mubr.f32.mxu0 0.0
  %3123 = vmatmul.mubr.f32.gmra.mrb[0].mxu0 %v2399
  %v3124 = vpop.f32.mrb[0].mxu0
  %v3125 = vadd.f32 %v2740, %v3124
  %v3126 = vpop.f32.mrb[0].mxu0
  %3127 = vmatprep.mubr.f32.mxu0 0.0
  %3128 = vmatmul.mubr.f32.gmra.mrb[0].mxu0 %v2400
  %v3129 = vpop.f32.mrb[0].mxu0
  %v3130 = vadd.f32 %v2745, %v3129
  %v3131 = vpop.f32.mrb[0].mxu0
  %3132 = vmatprep.mubr.f32.mxu0 0.0
  %3133 = vmatmul.mubr.f32.gmra.mrb[0].mxu0 %v2401
  %v3134 = vpop.f32.mrb[0].mxu0
  %v3135 = vadd.f32 %v2750, %v3134
  %v3136 = vpop.f32.mrb[0].mxu0
  %3137 = vmatprep.mubr.f32.mxu0 0.0
  %3138 = vmatmul.mubr.f32.gmra.mrb[0].mxu0 %v2402
  %v3139 = vpop.f32.mrb[0].mxu0
  %v3140 = vadd.f32 %v2755, %v3139
  %v3141 = vpop.f32.mrb[0].mxu0
  %3142 = vmatprep.mubr.f32.mxu0 0.0
  %3143 = vmatmul.mubr.f32.gmra.mrb[0].mxu0 %v2403
  %v3144 = vpop.f32.mrb[0].mxu0
  %v3145 = vadd.f32 %v2760, %v3144
  %v3146 = vpop.f32.mrb[0].mxu0
  %3147 = vmatprep.mubr.f32.mxu0 0.0
  %3148 = vmatmul.mubr.f32.gmra.mrb[0].mxu0 %v2404
  %v3149 = vpop.f32.mrb[0].mxu0
  %v3150 = vadd.f32 %v2765, %v3149
  %v3151 = vpop.f32.mrb[0].mxu0
  %3152 = vmatprep.mubr.f32.mxu0 0.0
  %3153 = vmatmul.mubr.f32.gmra.mrb[0].mxu0 %v2405
  %v3154 = vpop.f32.mrb[0].mxu0
  %v3155 = vadd.f32 %v2770, %v3154
  %v3156 = vpop.f32.mrb[0].mxu0
  %3157 = vmatprep.mubr.f32.mxu0 0.0
  %3158 = vmatmul.mubr.f32.gmra.mrb[0].mxu0 %v2406
  %v3159 = vpop.f32.mrb[0].mxu0
  %v3160 = vadd.f32 %v2775, %v3159
  %v3161 = vpop.f32.mrb[0].mxu0
  %3162 = vmatprep.mubr.f32.mxu0 0.0
  %3163 = vmatmul.mubr.f32.gmra.mrb[0].mxu0 %v2472
  %v3164 = vpop.f32.mrb[0].mxu0
  %v3165 = vadd.f32 %v2780, %v3164
  %v3166 = vpop.f32.mrb[0].mxu0
  %3167 = vmatprep.mubr.f32.mxu0 0.0
  %3168 = vmatmul.mubr.f32.gmra.mrb[0].mxu0 %v2473
  %v3169 = vpop.f32.mrb[0].mxu0
  %v3170 = vadd.f32 %v2785, %v3169
  %v3171 = vpop.f32.mrb[0].mxu0
  %3172 = vmatprep.mubr.f32.mxu0 0.0
  %3173 = vmatmul.mubr.f32.gmra.mrb[0].mxu0 %v2474
  %v3174 = vpop.f32.mrb[0].mxu0
  %v3175 = vadd.f32 %v2790, %v3174
  %v3176 = vpop.f32.mrb[0].mxu0
  %3177 = vmatprep.mubr.f32.mxu0 0.0
  %3178 = vmatmul.mubr.f32.gmra.mrb[0].mxu0 %v2475
  %v3179 = vpop.f32.mrb[0].mxu0
  %v3180 = vadd.f32 %v2795, %v3179
  %v3181 = vpop.f32.mrb[0].mxu0
  %3182 = vmatprep.mubr.f32.mxu0 0.0
  %3183 = vmatmul.mubr.f32.gmra.mrb[0].mxu0 %v2476
  %v3184 = vpop.f32.mrb[0].mxu0
  %v3185 = vadd.f32 %v2800, %v3184
  %v3186 = vpop.f32.mrb[0].mxu0
  %3187 = vmatprep.mubr.f32.mxu0 0.0
  %3188 = vmatmul.mubr.f32.gmra.mrb[0].mxu0 %v2477
  %v3189 = vpop.f32.mrb[0].mxu0
  %v3190 = vadd.f32 %v2805, %v3189
  %v3191 = vpop.f32.mrb[0].mxu0
  %3192 = vmatprep.mubr.f32.mxu0 0.0
  %3193 = vmatmul.mubr.f32.gmra.mrb[0].mxu0 %v2478
  %v3194 = vpop.f32.mrb[0].mxu0
  %v3195 = vadd.f32 %v2810, %v3194
  %v3196 = vpop.f32.mrb[0].mxu0
  %3197 = vmatprep.mubr.f32.mxu0 0.0
  %3198 = vmatmul.mubr.f32.gmra.mrb[0].mxu0 %v2479
  %v3199 = vpop.f32.mrb[0].mxu0
  %v3200 = vadd.f32 %v2815, %v3199
  %v3201 = vpop.f32.mrb[0].mxu0
  %3202 = vmatprep.mubr.f32.mxu0 0.0
  %3203 = vmatmul.mubr.f32.gmra.mrb[0].mxu0 %v2480
  %v3204 = vpop.f32.mrb[0].mxu0
  %v3205 = vadd.f32 %v2820, %v3204
  %v3206 = vpop.f32.mrb[0].mxu0
  %3207 = vmatprep.mubr.f32.mxu0 0.0
  %3208 = vmatmul.mubr.f32.gmra.mrb[0].mxu0 %v2481
  %v3209 = vpop.f32.mrb[0].mxu0
  %v3210 = vadd.f32 %v2825, %v3209
  %v3211 = vpop.f32.mrb[0].mxu0
  %3212 = vmatprep.mubr.f32.mxu0 0.0
  %3213 = vmatmul.mubr.f32.gmra.mrb[0].mxu0 %v2482
  %v3214 = vpop.f32.mrb[0].mxu0
  %v3215 = vadd.f32 %v2830, %v3214
  %v3216 = vpop.f32.mrb[0].mxu0
  %3217 = vmatprep.mubr.f32.mxu0 0.0
  %3218 = vmatmul.mubr.f32.gmra.mrb[0].mxu0 %v2483
  %v3219 = vpop.f32.mrb[0].mxu0
  %v3220 = vadd.f32 %v2835, %v3219
  %v3221 = vpop.f32.mrb[0].mxu0
  %3222 = vmatprep.mubr.f32.mxu0 0.0
  %3223 = vmatmul.mubr.f32.gmra.mrb[0].mxu0 %v2484
  %v3224 = vpop.f32.mrb[0].mxu0
  %v3225 = vadd.f32 %v2840, %v3224
  %v3226 = vpop.f32.mrb[0].mxu0
  %3227 = vmatprep.mubr.f32.mxu0 0.0
  %3228 = vmatmul.mubr.f32.gmra.mrb[0].mxu0 %v2485
  %v3229 = vpop.f32.mrb[0].mxu0
  %v3230 = vadd.f32 %v2845, %v3229
  %v3231 = vpop.f32.mrb[0].mxu0
  %3232 = vmatprep.mubr.f32.mxu0 0.0
  %3233 = vmatmul.mubr.f32.gmra.mrb[0].mxu0 %v2486
  %v3234 = vpop.f32.mrb[0].mxu0
  %v3235 = vadd.f32 %v2850, %v3234
  %v3236 = vpop.f32.mrb[0].mxu0
  %3237 = vmatprep.mubr.f32.mxu0 0.0
  %3238 = vmatmul.mubr.f32.gmra.mrb[0].mxu0 %v2487
  %v3239 = vpop.f32.mrb[0].mxu0
  %v3240 = vadd.f32 %v2855, %v3239
  %v3241 = vpop.f32.mrb[0].mxu0
  %3242 = vmatprep.mubr.f32.mxu0 0.0
  %3243 = vmatmul.mubr.f32.gmra.mrb[0].mxu0 %v2488
  %v3244 = vpop.f32.mrb[0].mxu0
  %v3245 = vadd.f32 %v2860, %v3244
  %v3246 = vpop.f32.mrb[0].mxu0
  %3247 = vmatprep.mubr.f32.mxu0 0.0
  %3248 = vmatmul.mubr.f32.gmra.mrb[0].mxu0 %v2489
  %v3249 = vpop.f32.mrb[0].mxu0
  %v3250 = vadd.f32 %v2865, %v3249
  %v3251 = vpop.f32.mrb[0].mxu0
  %3252 = vmatprep.mubr.f32.mxu0 0.0
  %3253 = vmatmul.mubr.f32.gmra.mrb[0].mxu0 %v2490
  %v3254 = vpop.f32.mrb[0].mxu0
  %v3255 = vadd.f32 %v2870, %v3254
  %v3256 = vpop.f32.mrb[0].mxu0
  %3257 = vmatprep.mubr.f32.mxu0 0.0
  %3258 = vmatmul.mubr.f32.gmra.mrb[0].mxu0 %v2491
  %v3259 = vpop.f32.mrb[0].mxu0
  %v3260 = vadd.f32 %v2875, %v3259
  %v3261 = vpop.f32.mrb[0].mxu0
  %3262 = vmatprep.mubr.f32.mxu0 0.0
  %3263 = vmatmul.mubr.f32.gmra.mrb[0].mxu0 %v2492
  %v3264 = vpop.f32.mrb[0].mxu0
  %v3265 = vadd.f32 %v2880, %v3264
  %v3266 = vpop.f32.mrb[0].mxu0
  %3267 = vmatprep.mubr.f32.mxu0 0.0
  %3268 = vmatmul.mubr.f32.gmra.mrb[0].mxu0 %v2493
  %v3269 = vpop.f32.mrb[0].mxu0
  %v3270 = vadd.f32 %v2885, %v3269
  %v3271 = vpop.f32.mrb[0].mxu0
  %3272 = vmatprep.mubr.f32.mxu0 0.0
  %3273 = vmatmul.mubr.f32.gmra.mrb[0].mxu0 %v2494
  %v3274 = vpop.f32.mrb[0].mxu0
  %v3275 = vadd.f32 %v2890, %v3274
  %v3276 = vpop.f32.mrb[0].mxu0
  %3277 = vmatprep.mubr.f32.mxu0 0.0
  %3278 = vmatmul.mubr.f32.gmra.mrb[0].mxu0 %v2495
  %v3279 = vpop.f32.mrb[0].mxu0
  %v3280 = vadd.f32 %v2895, %v3279
  %v3281 = vpop.f32.mrb[0].mxu0
  %3282 = vmatprep.mubr.f32.mxu0 0.0
  %3283 = vmatmul.mubr.f32.gmra.mrb[0].mxu0 %v2496
  %v3284 = vpop.f32.mrb[0].mxu0
  %v3285 = vadd.f32 %v2900, %v3284
  %v3286 = vpop.f32.mrb[0].mxu0
  %3287 = vmatprep.mubr.f32.mxu0 0.0
  %3288 = vmatmul.mubr.f32.gmra.mrb[0].mxu0 %v2497
  %v3289 = vpop.f32.mrb[0].mxu0
  %v3290 = vadd.f32 %v2905, %v3289
  %v3291 = vpop.f32.mrb[0].mxu0
  %3292 = vmatprep.mubr.f32.mxu0 0.0
  %3293 = vmatmul.mubr.f32.gmra.mrb[0].mxu0 %v2498
  %v3294 = vpop.f32.mrb[0].mxu0
  %v3295 = vadd.f32 %v2910, %v3294
  %v3296 = vpop.f32.mrb[0].mxu0
  %3297 = vmatprep.mubr.f32.mxu0 0.0
  %3298 = vmatmul.mubr.f32.gmra.mrb[0].mxu0 %v2499
  %v3299 = vpop.f32.mrb[0].mxu0
  %v3300 = vadd.f32 %v2915, %v3299
  %v3301 = vpop.f32.mrb[0].mxu0
  %3302 = vmatprep.mubr.f32.mxu0 0.0
  %3303 = vmatmul.mubr.f32.gmra.mrb[0].mxu0 %v2500
  %v3304 = vpop.f32.mrb[0].mxu0
  %v3305 = vadd.f32 %v2920, %v3304
  %v3306 = vpop.f32.mrb[0].mxu0
  %3307 = vmatprep.mubr.f32.mxu0 0.0
  %3308 = vmatmul.mubr.f32.gmra.mrb[0].mxu0 %v2501
  %v3309 = vpop.f32.mrb[0].mxu0
  %v3310 = vadd.f32 %v2925, %v3309
  %v3311 = vpop.f32.mrb[0].mxu0
  %3312 = vmatprep.mubr.f32.mxu0 0.0
  %3313 = vmatmul.mubr.f32.gmra.mrb[0].mxu0 %v2502
  %v3314 = vpop.f32.mrb[0].mxu0
  %v3315 = vadd.f32 %v2930, %v3314
  %v3316 = vpop.f32.mrb[0].mxu0
  %3317 = vmatprep.mubr.f32.mxu0 0.0
  %3318 = vmatmul.mubr.f32.gmra.mrb[0].mxu0 %v2503
  %v3319 = vpop.f32.mrb[0].mxu0
  %v3320 = vadd.f32 %v2935, %v3319
  %v3321 = vpop.f32.mrb[0].mxu0
  %3322 = vdwg.mxu0
  %v3323 = vadd.f32 %v1992, %v3005
  %v3324 = vadd.f32 %v1997, %v3010
  %v3325 = vadd.f32 %v2002, %v3015
  %v3326 = vadd.f32 %v2007, %v3020
  %v3327 = vadd.f32 %v2012, %v3025
  %v3328 = vadd.f32 %v2017, %v3030
  %v3329 = vadd.f32 %v2022, %v3035
  %v3330 = vadd.f32 %v2027, %v3040
  %v3331 = vadd.f32 %v2032, %v3045
  %v3332 = vadd.f32 %v2037, %v3050
  %v3333 = vadd.f32 %v2042, %v3055
  %v3334 = vadd.f32 %v2047, %v3060
  %v3335 = vadd.f32 %v2052, %v3065
  %v3336 = vadd.f32 %v2057, %v3070
  %v3337 = vadd.f32 %v2062, %v3075
  %v3338 = vadd.f32 %v2067, %v3080
  %v3339 = vadd.f32 %v2072, %v3085
  %v3340 = vadd.f32 %v2077, %v3090
  %v3341 = vadd.f32 %v2082, %v3095
  %v3342 = vadd.f32 %v2087, %v3100
  %v3343 = vadd.f32 %v2092, %v3105
  %v3344 = vadd.f32 %v2097, %v3110
  %v3345 = vadd.f32 %v2102, %v3115
  %v3346 = vadd.f32 %v2107, %v3120
  %v3347 = vadd.f32 %v2112, %v3125
  %v3348 = vadd.f32 %v2117, %v3130
  %v3349 = vadd.f32 %v2122, %v3135
  %v3350 = vadd.f32 %v2127, %v3140
  %v3351 = vadd.f32 %v2132, %v3145
  %v3352 = vadd.f32 %v2137, %v3150
  %v3353 = vadd.f32 %v2142, %v3155
  %v3354 = vadd.f32 %v2147, %v3160
  %v3355 = vadd.f32 %v2152, %v3165
  %v3356 = vadd.f32 %v2157, %v3170
  %v3357 = vadd.f32 %v2162, %v3175
  %v3358 = vadd.f32 %v2167, %v3180
  %v3359 = vadd.f32 %v2172, %v3185
  %v3360 = vadd.f32 %v2177, %v3190
  %v3361 = vadd.f32 %v2182, %v3195
  %v3362 = vadd.f32 %v2187, %v3200
  %v3363 = vadd.f32 %v2192, %v3205
  %v3364 = vadd.f32 %v2197, %v3210
  %v3365 = vadd.f32 %v2202, %v3215
  %v3366 = vadd.f32 %v2207, %v3220
  %v3367 = vadd.f32 %v2212, %v3225
  %v3368 = vadd.f32 %v2217, %v3230
  %v3369 = vadd.f32 %v2222, %v3235
  %v3370 = vadd.f32 %v2227, %v3240
  %v3371 = vadd.f32 %v2232, %v3245
  %v3372 = vadd.f32 %v2237, %v3250
  %v3373 = vadd.f32 %v2242, %v3255
  %v3374 = vadd.f32 %v2247, %v3260
  %v3375 = vadd.f32 %v2252, %v3265
  %v3376 = vadd.f32 %v2257, %v3270
  %v3377 = vadd.f32 %v2262, %v3275
  %v3378 = vadd.f32 %v2267, %v3280
  %v3379 = vadd.f32 %v2272, %v3285
  %v3380 = vadd.f32 %v2277, %v3290
  %v3381 = vadd.f32 %v2282, %v3295
  %v3382 = vadd.f32 %v2287, %v3300
  %v3383 = vadd.f32 %v2292, %v3305
  %v3384 = vadd.f32 %v2297, %v3310
  %v3385 = vadd.f32 %v2302, %v3315
  %v3386 = vadd.f32 %v2307, %v3320
  %v3387 = vld [vmem:[%s2] sm:$0x1]
  %v3389 = vlaneseq
  %v3390 = vshrl.u32 %v3389, 7
  %v3391 = vsub.s32 0, %v3390
  %v3392 = vrot.slane %v3387, %v3391
  %v3394 = vadd.f32 %v3323, %v3392
  %v3395 = vadd.f32 %v3324, %v3392
  %v3396 = vadd.f32 %v3325, %v3392
  %v3397 = vadd.f32 %v3326, %v3392
  %v3398 = vadd.f32 %v3327, %v3392
  %v3399 = vadd.f32 %v3328, %v3392
  %v3400 = vadd.f32 %v3329, %v3392
  %v3401 = vadd.f32 %v3330, %v3392
  %v3402 = vadd.f32 %v3331, %v3392
  %v3403 = vadd.f32 %v3332, %v3392
  %v3404 = vadd.f32 %v3333, %v3392
  %v3405 = vadd.f32 %v3334, %v3392
  %v3406 = vadd.f32 %v3335, %v3392
  %v3407 = vadd.f32 %v3336, %v3392
  %v3408 = vadd.f32 %v3337, %v3392
  %v3409 = vadd.f32 %v3338, %v3392
  %v3410 = vadd.f32 %v3339, %v3392
  %v3411 = vadd.f32 %v3340, %v3392
  %v3412 = vadd.f32 %v3341, %v3392
  %v3413 = vadd.f32 %v3342, %v3392
  %v3414 = vadd.f32 %v3343, %v3392
  %v3415 = vadd.f32 %v3344, %v3392
  %v3416 = vadd.f32 %v3345, %v3392
  %v3417 = vadd.f32 %v3346, %v3392
  %v3418 = vadd.f32 %v3347, %v3392
  %v3419 = vadd.f32 %v3348, %v3392
  %v3420 = vadd.f32 %v3349, %v3392
  %v3421 = vadd.f32 %v3350, %v3392
  %v3422 = vadd.f32 %v3351, %v3392
  %v3423 = vadd.f32 %v3352, %v3392
  %v3424 = vadd.f32 %v3353, %v3392
  %v3425 = vadd.f32 %v3354, %v3392
  %v3426 = vadd.f32 %v3355, %v3392
  %v3427 = vadd.f32 %v3356, %v3392
  %v3428 = vadd.f32 %v3357, %v3392
  %v3429 = vadd.f32 %v3358, %v3392
  %v3430 = vadd.f32 %v3359, %v3392
  %v3431 = vadd.f32 %v3360, %v3392
  %v3432 = vadd.f32 %v3361, %v3392
  %v3433 = vadd.f32 %v3362, %v3392
  %v3434 = vadd.f32 %v3363, %v3392
  %v3435 = vadd.f32 %v3364, %v3392
  %v3436 = vadd.f32 %v3365, %v3392
  %v3437 = vadd.f32 %v3366, %v3392
  %v3438 = vadd.f32 %v3367, %v3392
  %v3439 = vadd.f32 %v3368, %v3392
  %v3440 = vadd.f32 %v3369, %v3392
  %v3441 = vadd.f32 %v3370, %v3392
  %v3442 = vadd.f32 %v3371, %v3392
  %v3443 = vadd.f32 %v3372, %v3392
  %v3444 = vadd.f32 %v3373, %v3392
  %v3445 = vadd.f32 %v3374, %v3392
  %v3446 = vadd.f32 %v3375, %v3392
  %v3447 = vadd.f32 %v3376, %v3392
  %v3448 = vadd.f32 %v3377, %v3392
  %v3449 = vadd.f32 %v3378, %v3392
  %v3450 = vadd.f32 %v3379, %v3392
  %v3451 = vadd.f32 %v3380, %v3392
  %v3452 = vadd.f32 %v3381, %v3392
  %v3453 = vadd.f32 %v3382, %v3392
  %v3454 = vadd.f32 %v3383, %v3392
  %v3455 = vadd.f32 %v3384, %v3392
  %v3456 = vadd.f32 %v3385, %v3392
  %v3457 = vadd.f32 %v3386, %v3392
  %v3458 = vtanh.pop %v3394
  %v3459 = vtanh.pop %v3395
  %v3460 = vtanh.pop %v3396
  %v3461 = vtanh.pop %v3397
  %v3462 = vtanh.pop %v3398
  %v3463 = vtanh.pop %v3399
  %v3464 = vtanh.pop %v3400
  %v3465 = vtanh.pop %v3401
  %v3466 = vtanh.pop %v3402
  %v3467 = vtanh.pop %v3403
  %v3468 = vtanh.pop %v3404
  %v3469 = vtanh.pop %v3405
  %v3470 = vtanh.pop %v3406
  %v3471 = vtanh.pop %v3407
  %v3472 = vtanh.pop %v3408
  %v3473 = vtanh.pop %v3409
  %v3474 = vtanh.pop %v3410
  %v3475 = vtanh.pop %v3411
  %v3476 = vtanh.pop %v3412
  %v3477 = vtanh.pop %v3413
  %v3478 = vtanh.pop %v3414
  %v3479 = vtanh.pop %v3415
  %v3480 = vtanh.pop %v3416
  %v3481 = vtanh.pop %v3417
  %v3482 = vtanh.pop %v3418
  %v3483 = vtanh.pop %v3419
  %v3484 = vtanh.pop %v3420
  %v3485 = vtanh.pop %v3421
  %v3486 = vtanh.pop %v3422
  %v3487 = vtanh.pop %v3423
  %v3488 = vtanh.pop %v3424
  %v3489 = vtanh.pop %v3425
  %v3490 = vtanh.pop %v3426
  %v3491 = vtanh.pop %v3427
  %v3492 = vtanh.pop %v3428
  %v3493 = vtanh.pop %v3429
  %v3494 = vtanh.pop %v3430
  %v3495 = vtanh.pop %v3431
  %v3496 = vtanh.pop %v3432
  %v3497 = vtanh.pop %v3433
  %v3498 = vtanh.pop %v3434
  %v3499 = vtanh.pop %v3435
  %v3500 = vtanh.pop %v3436
  %v3501 = vtanh.pop %v3437
  %v3502 = vtanh.pop %v3438
  %v3503 = vtanh.pop %v3439
  %v3504 = vtanh.pop %v3440
  %v3505 = vtanh.pop %v3441
  %v3506 = vtanh.pop %v3442
  %v3507 = vtanh.pop %v3443
  %v3508 = vtanh.pop %v3444
  %v3509 = vtanh.pop %v3445
  %v3510 = vtanh.pop %v3446
  %v3511 = vtanh.pop %v3447
  %v3512 = vtanh.pop %v3448
  %v3513 = vtanh.pop %v3449
  %v3514 = vtanh.pop %v3450
  %v3515 = vtanh.pop %v3451
  %v3516 = vtanh.pop %v3452
  %v3517 = vtanh.pop %v3453
  %v3518 = vtanh.pop %v3454
  %v3519 = vtanh.pop %v3455
  %v3520 = vtanh.pop %v3456
  %v3521 = vtanh.pop %v3457
  %3522 = vst [vmem:[%s3] sm:$0xff] %v3458
  %3523 = vst [vmem:[%s3 + $0x8] sm:$0xff] %v3459
  %3524 = vst [vmem:[%s3 + $0x10] sm:$0xff] %v3460
  %3525 = vst [vmem:[%s3 + $0x18] sm:$0xff] %v3461
  %3526 = vst [vmem:[%s3 + $0x20] sm:$0xff] %v3462
  %3527 = vst [vmem:[%s3 + $0x28] sm:$0xff] %v3463
  %3528 = vst [vmem:[%s3 + $0x30] sm:$0xff] %v3464
  %3529 = vst [vmem:[%s3 + $0x38] sm:$0xff] %v3465
  %3530 = vst [vmem:[%s3 + $0x40] sm:$0xff] %v3466
  %3531 = vst [vmem:[%s3 + $0x48] sm:$0xff] %v3467
  %3532 = vst [vmem:[%s3 + $0x50] sm:$0xff] %v3468
  %3533 = vst [vmem:[%s3 + $0x58] sm:$0xff] %v3469
  %3534 = vst [vmem:[%s3 + $0x60] sm:$0xff] %v3470
  %3535 = vst [vmem:[%s3 + $0x68] sm:$0xff] %v3471
  %3536 = vst [vmem:[%s3 + $0x70] sm:$0xff] %v3472
  %3537 = vst [vmem:[%s3 + $0x78] sm:$0xff] %v3473
  %3538 = vst [vmem:[%s3 + $0x80] sm:$0xff] %v3474
  %3539 = vst [vmem:[%s3 + $0x88] sm:$0xff] %v3475
  %3540 = vst [vmem:[%s3 + $0x90] sm:$0xff] %v3476
  %3541 = vst [vmem:[%s3 + $0x98] sm:$0xff] %v3477
  %3542 = vst [vmem:[%s3 + $0xa0] sm:$0xff] %v3478
  %3543 = vst [vmem:[%s3 + $0xa8] sm:$0xff] %v3479
  %3544 = vst [vmem:[%s3 + $0xb0] sm:$0xff] %v3480
  %3545 = vst [vmem:[%s3 + $0xb8] sm:$0xff] %v3481
  %3546 = vst [vmem:[%s3 + $0xc0] sm:$0xff] %v3482
  %3547 = vst [vmem:[%s3 + $0xc8] sm:$0xff] %v3483
  %3548 = vst [vmem:[%s3 + $0xd0] sm:$0xff] %v3484
  %3549 = vst [vmem:[%s3 + $0xd8] sm:$0xff] %v3485
  %3550 = vst [vmem:[%s3 + $0xe0] sm:$0xff] %v3486
  %3551 = vst [vmem:[%s3 + $0xe8] sm:$0xff] %v3487
  %3552 = vst [vmem:[%s3 + $0xf0] sm:$0xff] %v3488
  %3553 = vst [vmem:[%s3 + $0xf8] sm:$0xff] %v3489
  %3554 = vst [vmem:[%s3 + $0x100] sm:$0xff] %v3490
  %3555 = vst [vmem:[%s3 + $0x108] sm:$0xff] %v3491
  %3556 = vst [vmem:[%s3 + $0x110] sm:$0xff] %v3492
  %3557 = vst [vmem:[%s3 + $0x118] sm:$0xff] %v3493
  %3558 = vst [vmem:[%s3 + $0x120] sm:$0xff] %v3494
  %3559 = vst [vmem:[%s3 + $0x128] sm:$0xff] %v3495
  %3560 = vst [vmem:[%s3 + $0x130] sm:$0xff] %v3496
  %3561 = vst [vmem:[%s3 + $0x138] sm:$0xff] %v3497
  %3562 = vst [vmem:[%s3 + $0x140] sm:$0xff] %v3498
  %3563 = vst [vmem:[%s3 + $0x148] sm:$0xff] %v3499
  %3564 = vst [vmem:[%s3 + $0x150] sm:$0xff] %v3500
  %3565 = vst [vmem:[%s3 + $0x158] sm:$0xff] %v3501
  %3566 = vst [vmem:[%s3 + $0x160] sm:$0xff] %v3502
  %3567 = vst [vmem:[%s3 + $0x168] sm:$0xff] %v3503
  %3568 = vst [vmem:[%s3 + $0x170] sm:$0xff] %v3504
  %3569 = vst [vmem:[%s3 + $0x178] sm:$0xff] %v3505
  %3570 = vst [vmem:[%s3 + $0x180] sm:$0xff] %v3506
  %3571 = vst [vmem:[%s3 + $0x188] sm:$0xff] %v3507
  %3572 = vst [vmem:[%s3 + $0x190] sm:$0xff] %v3508
  %3573 = vst [vmem:[%s3 + $0x198] sm:$0xff] %v3509
  %3574 = vst [vmem:[%s3 + $0x1a0] sm:$0xff] %v3510
  %3575 = vst [vmem:[%s3 + $0x1a8] sm:$0xff] %v3511
  %3576 = vst [vmem:[%s3 + $0x1b0] sm:$0xff] %v3512
  %3577 = vst [vmem:[%s3 + $0x1b8] sm:$0xff] %v3513
  %3578 = vst [vmem:[%s3 + $0x1c0] sm:$0xff] %v3514
  %3579 = vst [vmem:[%s3 + $0x1c8] sm:$0xff] %v3515
  %3580 = vst [vmem:[%s3 + $0x1d0] sm:$0xff] %v3516
  %3581 = vst [vmem:[%s3 + $0x1d8] sm:$0xff] %v3517
  %3582 = vst [vmem:[%s3 + $0x1e0] sm:$0xff] %v3518
  %3583 = vst [vmem:[%s3 + $0x1e8] sm:$0xff] %v3519
  %3584 = vst [vmem:[%s3 + $0x1f0] sm:$0xff] %v3520
  %3585 = vst [vmem:[%s3 + $0x1f8] sm:$0xff] %v3521
  // Predicated region
  $region14: #{generator_forward.5} parent=0 // pred_check
    _
  $region15: #{generator_forward.5} parent=0 // pred_check_branch
    %3587 = sbr.rel (0) target = $region17
  $region16: #{generator_forward.5} parent=0 // pred_region
    _
  $region17: #{generator_forward.5} parent=0 // pred_fallthru
    _
  // Predicated region
  $region18: #{generator_forward.5} parent=0 // pred_check
    _
  $region19: #{generator_forward.5} parent=0 // pred_check_branch
    %3589 = sbr.rel (0) target = $region21
  $region20: #{generator_forward.5} parent=0 // pred_region
    _
  $region21: #{generator_forward.5} parent=0 // pred_fallthru
    _

// kernel: generator_forward.4
$region0: #{generator_forward.4}
  #allocation0 [shape = 'u32[]', space=smem, size = 0x4, offset = 0x4, fixed_abs, tag = 'smem constant byte address 0x4 - core index']
  #allocation1 [shape = 'u32[144,128]{1,0:T(1,128)}', space=vmem, size = 0x12000, scoped, tag = 'internal scratch']
  #allocation2 [shape = 'f32[2,18,32,128]{3,2,1,0:T(8,128)}', space=vmem, size = 0x90000, scoped, tag = 'scratch operand']
  %s0 = inlined_call_operand.vmem [shape: f32[128,128], index: 0, kind: input, shape index: {}]
  %s1 = inlined_call_operand.vmem [shape: f32[256,64], index: 1, kind: input, shape index: {}]
  %s2 = inlined_call_operand.vmem [shape: f32[3,384,128], index: 2, kind: input, shape index: {}]
  %s3 = inlined_call_operand.vmem [shape: f32[1,128], index: 3, kind: input, shape index: {}]
  %s4 = inlined_call_operand.vmem [shape: f32[1,128], index: 4, kind: input, shape index: {}]
  %s5 = inlined_call_operand.vmem [shape: f32[1,128], index: 5, kind: input, shape index: {}]
  %s6 = inlined_call_operand.vmem [shape: f32[1,128], index: 6, kind: input, shape index: {}]
  %s7 = inlined_call_operand.vmem [shape: f32[1,128], index: 7, kind: input, shape index: {}]
  %s8 = inlined_call_operand.vmem [shape: f32[512,128], index: 8, kind: output, shape index: {}]
  %s9 = sld [smem:[#allocation0]]
  $region42: #{generator_forward.4} parent=0
    _
  %s11 = ssub.s32 1, %s9
  %s12 = scalar_select 0, %s11, %s9
  // Predicated region
  $region2: #{generator_forward.4} parent=0 // pred_check
    _
  $region3: #{generator_forward.4} parent=0 // pred_check_branch
    %14 = sbr.rel (0) target = $region5
  $region4: #{generator_forward.4} parent=0 // pred_region
    _
  $region5: #{generator_forward.4} parent=0 // pred_fallthru
    _
  // Predicated region
  $region6: #{generator_forward.4} parent=0 // pred_check
    _
  $region7: #{generator_forward.4} parent=0 // pred_check_branch
    %16 = sbr.rel (0) target = $region9
  $region8: #{generator_forward.4} parent=0 // pred_region
    _
  $region9: #{generator_forward.4} parent=0 // pred_fallthru
    _
  // Predicated region
  $region10: #{generator_forward.4} parent=0 // pred_check
    _
  $region11: #{generator_forward.4} parent=0 // pred_check_branch
    %18 = sbr.rel (0) target = $region13
  $region12: #{generator_forward.4} parent=0 // pred_region
    _
  $region13: #{generator_forward.4} parent=0 // pred_fallthru
    _
  // Predicated region
  $region14: #{generator_forward.4} parent=0 // pred_check
    _
  $region15: #{generator_forward.4} parent=0 // pred_check_branch
    %20 = sbr.rel (0) target = $region17
  $region16: #{generator_forward.4} parent=0 // pred_region
    _
  $region17: #{generator_forward.4} parent=0 // pred_fallthru
    _
  // Predicated region
  $region18: #{generator_forward.4} parent=0 // pred_check
    _
  $region19: #{generator_forward.4} parent=0 // pred_check_branch
    %22 = sbr.rel (0) target = $region21
  $region20: #{generator_forward.4} parent=0 // pred_region
    _
  $region21: #{generator_forward.4} parent=0 // pred_fallthru
    _
  // Predicated region
  $region22: #{generator_forward.4} parent=0 // pred_check
    _
  $region23: #{generator_forward.4} parent=0 // pred_check_branch
    %24 = sbr.rel (0) target = $region25
  $region24: #{generator_forward.4} parent=0 // pred_region
    _
  $region25: #{generator_forward.4} parent=0 // pred_fallthru
    _
  // Predicated region
  $region26: #{generator_forward.4} parent=0 // pred_check
    _
  $region27: #{generator_forward.4} parent=0 // pred_check_branch
    %26 = sbr.rel (0) target = $region29
  $region28: #{generator_forward.4} parent=0 // pred_region
    _
  $region29: #{generator_forward.4} parent=0 // pred_fallthru
    _
  // Predicated region
  $region30: #{generator_forward.4} parent=0 // pred_check
    _
  $region31: #{generator_forward.4} parent=0 // pred_check_branch
    %28 = sbr.rel (0) target = $region33
  $region32: #{generator_forward.4} parent=0 // pred_region
    _
  $region33: #{generator_forward.4} parent=0 // pred_fallthru
    _
  %v29 = vld [vmem:[%s0] sm:$0xff]
  %v30 = vld [vmem:[%s0 + $0x8] sm:$0xff]
  %v31 = vld [vmem:[%s0 + $0x10] sm:$0xff]
  %v32 = vld [vmem:[%s0 + $0x18] sm:$0xff]
  %v33 = vld [vmem:[%s0 + $0x20] sm:$0xff]
  %v34 = vld [vmem:[%s0 + $0x28] sm:$0xff]
  %v35 = vld [vmem:[%s0 + $0x30] sm:$0xff]
  %v36 = vld [vmem:[%s0 + $0x38] sm:$0xff]
  %v37 = vld [vmem:[%s0 + $0x40] sm:$0xff]
  %v38 = vld [vmem:[%s0 + $0x48] sm:$0xff]
  %v39 = vld [vmem:[%s0 + $0x50] sm:$0xff]
  %v40 = vld [vmem:[%s0 + $0x58] sm:$0xff]
  %v41 = vld [vmem:[%s0 + $0x60] sm:$0xff]
  %v42 = vld [vmem:[%s0 + $0x68] sm:$0xff]
  %v43 = vld [vmem:[%s0 + $0x70] sm:$0xff]
  %v44 = vld [vmem:[%s0 + $0x78] sm:$0xff]
  %45 = vst [vmem:[#allocation2] sm:$0xff] 0.0
  %46 = vst [vmem:[#allocation2 + $0x8] sm:$0xff] 0.0
  %47 = vst [vmem:[#allocation2 + $0x10] sm:$0xff] 0.0
  %48 = vst [vmem:[#allocation2 + $0x18] sm:$0xff] 0.0
  %49 = vst [vmem:[#allocation2 + $0x20] sm:$0xff] 0.0
  %50 = vst [vmem:[#allocation2 + $0x28] sm:$0xff] 0.0
  %51 = vst [vmem:[#allocation2 + $0x30] sm:$0xff] 0.0
  %52 = vst [vmem:[#allocation2 + $0x38] sm:$0xff] 0.0
  %53 = vst [vmem:[#allocation2 + $0x40] sm:$0xff] 0.0
  %54 = vst [vmem:[#allocation2 + $0x48] sm:$0xff] 0.0
  %55 = vst [vmem:[#allocation2 + $0x50] sm:$0xff] 0.0
  %56 = vst [vmem:[#allocation2 + $0x58] sm:$0xff] 0.0
  %57 = vst [vmem:[#allocation2 + $0x60] sm:$0xff] 0.0
  %58 = vst [vmem:[#allocation2 + $0x68] sm:$0xff] 0.0
  %59 = vst [vmem:[#allocation2 + $0x70] sm:$0xff] 0.0
  %60 = vst [vmem:[#allocation2 + $0x78] sm:$0xff] 0.0
  %61 = vst [vmem:[#allocation2 + $0x80] sm:$0xff] 0.0
  %62 = vst [vmem:[#allocation2 + $0x88] sm:$0xff] 0.0
  %63 = vst [vmem:[#allocation2 + $0x90] sm:$0xff] 0.0
  %64 = vst [vmem:[#allocation2 + $0x98] sm:$0xff] 0.0
  %65 = vst [vmem:[#allocation2 + $0xa0] sm:$0xff] 0.0
  %66 = vst [vmem:[#allocation2 + $0xa8] sm:$0xff] 0.0
  %67 = vst [vmem:[#allocation2 + $0xb0] sm:$0xff] 0.0
  %68 = vst [vmem:[#allocation2 + $0xb8] sm:$0xff] 0.0
  %69 = vst [vmem:[#allocation2 + $0xc0] sm:$0xff] 0.0
  %70 = vst [vmem:[#allocation2 + $0xc8] sm:$0xff] 0.0
  %71 = vst [vmem:[#allocation2 + $0xd0] sm:$0xff] 0.0
  %72 = vst [vmem:[#allocation2 + $0xd8] sm:$0xff] 0.0
  %73 = vst [vmem:[#allocation2 + $0xe0] sm:$0xff] 0.0
  %74 = vst [vmem:[#allocation2 + $0xe8] sm:$0xff] 0.0
  %75 = vst [vmem:[#allocation2 + $0xf0] sm:$0xff] 0.0
  %76 = vst [vmem:[#allocation2 + $0xf8] sm:$0xff] 0.0
  %77 = vst [vmem:[#allocation2 + $0x100] sm:$0xff] 0.0
  %78 = vst [vmem:[#allocation2 + $0x108] sm:$0xff] 0.0
  %79 = vst [vmem:[#allocation2 + $0x110] sm:$0xff] 0.0
  %80 = vst [vmem:[#allocation2 + $0x118] sm:$0xff] 0.0
  %81 = vst [vmem:[#allocation2 + $0x120] sm:$0xff] 0.0
  %82 = vst [vmem:[#allocation2 + $0x128] sm:$0xff] 0.0
  %83 = vst [vmem:[#allocation2 + $0x130] sm:$0xff] 0.0
  %84 = vst [vmem:[#allocation2 + $0x138] sm:$0xff] 0.0
  %85 = vst [vmem:[#allocation2 + $0x140] sm:$0xff] 0.0
  %86 = vst [vmem:[#allocation2 + $0x148] sm:$0xff] 0.0
  %87 = vst [vmem:[#allocation2 + $0x150] sm:$0xff] 0.0
  %88 = vst [vmem:[#allocation2 + $0x158] sm:$0xff] 0.0
  %89 = vst [vmem:[#allocation2 + $0x160] sm:$0xff] 0.0
  %90 = vst [vmem:[#allocation2 + $0x168] sm:$0xff] 0.0
  %91 = vst [vmem:[#allocation2 + $0x170] sm:$0xff] 0.0
  %92 = vst [vmem:[#allocation2 + $0x178] sm:$0xff] 0.0
  %93 = vst [vmem:[#allocation2 + $0x180] sm:$0xff] 0.0
  %94 = vst [vmem:[#allocation2 + $0x188] sm:$0xff] 0.0
  %95 = vst [vmem:[#allocation2 + $0x190] sm:$0xff] 0.0
  %96 = vst [vmem:[#allocation2 + $0x198] sm:$0xff] 0.0
  %97 = vst [vmem:[#allocation2 + $0x1a0] sm:$0xff] 0.0
  %98 = vst [vmem:[#allocation2 + $0x1a8] sm:$0xff] 0.0
  %99 = vst [vmem:[#allocation2 + $0x1b0] sm:$0xff] 0.0
  %100 = vst [vmem:[#allocation2 + $0x1b8] sm:$0xff] 0.0
  %101 = vst [vmem:[#allocation2 + $0x1c0] sm:$0xff] 0.0
  %102 = vst [vmem:[#allocation2 + $0x1c8] sm:$0xff] 0.0
  %103 = vst [vmem:[#allocation2 + $0x1d0] sm:$0xff] 0.0
  %104 = vst [vmem:[#allocation2 + $0x1d8] sm:$0xff] 0.0
  %105 = vst [vmem:[#allocation2 + $0x1e0] sm:$0xff] 0.0
  %106 = vst [vmem:[#allocation2 + $0x1e8] sm:$0xff] 0.0
  %107 = vst [vmem:[#allocation2 + $0x1f0] sm:$0xff] 0.0
  %108 = vst [vmem:[#allocation2 + $0x1f8] sm:$0xff] 0.0
  %109 = vst [vmem:[#allocation2 + $0x200] sm:$0xff] 0.0
  %110 = vst [vmem:[#allocation2 + $0x208] sm:$0xff] 0.0
  %111 = vst [vmem:[#allocation2 + $0x210] sm:$0xff] 0.0
  %112 = vst [vmem:[#allocation2 + $0x218] sm:$0xff] 0.0
  %113 = vst [vmem:[#allocation2 + $0x220] sm:$0xff] 0.0
  %114 = vst [vmem:[#allocation2 + $0x228] sm:$0xff] 0.0
  %115 = vst [vmem:[#allocation2 + $0x230] sm:$0xff] 0.0
  %116 = vst [vmem:[#allocation2 + $0x238] sm:$0xff] 0.0
  %117 = vst [vmem:[#allocation2 + $0x240] sm:$0xff] 0.0
  %118 = vst [vmem:[#allocation2 + $0x248] sm:$0xff] 0.0
  %119 = vst [vmem:[#allocation2 + $0x250] sm:$0xff] 0.0
  %120 = vst [vmem:[#allocation2 + $0x258] sm:$0xff] 0.0
  %121 = vst [vmem:[#allocation2 + $0x260] sm:$0xff] 0.0
  %122 = vst [vmem:[#allocation2 + $0x268] sm:$0xff] 0.0
  %123 = vst [vmem:[#allocation2 + $0x270] sm:$0xff] 0.0
  %124 = vst [vmem:[#allocation2 + $0x278] sm:$0xff] 0.0
  %125 = vst [vmem:[#allocation2 + $0x280] sm:$0xff] 0.0
  %126 = vst [vmem:[#allocation2 + $0x288] sm:$0xff] 0.0
  %127 = vst [vmem:[#allocation2 + $0x290] sm:$0xff] 0.0
  %128 = vst [vmem:[#allocation2 + $0x298] sm:$0xff] 0.0
  %129 = vst [vmem:[#allocation2 + $0x2a0] sm:$0xff] 0.0
  %130 = vst [vmem:[#allocation2 + $0x2a8] sm:$0xff] 0.0
  %131 = vst [vmem:[#allocation2 + $0x2b0] sm:$0xff] 0.0
  %132 = vst [vmem:[#allocation2 + $0x2b8] sm:$0xff] 0.0
  %133 = vst [vmem:[#allocation2 + $0x2c0] sm:$0xff] 0.0
  %134 = vst [vmem:[#allocation2 + $0x2c8] sm:$0xff] 0.0
  %135 = vst [vmem:[#allocation2 + $0x2d0] sm:$0xff] 0.0
  %136 = vst [vmem:[#allocation2 + $0x2d8] sm:$0xff] 0.0
  %137 = vst [vmem:[#allocation2 + $0x2e0] sm:$0xff] 0.0
  %138 = vst [vmem:[#allocation2 + $0x2e8] sm:$0xff] 0.0
  %139 = vst [vmem:[#allocation2 + $0x2f0] sm:$0xff] 0.0
  %140 = vst [vmem:[#allocation2 + $0x2f8] sm:$0xff] 0.0
  %141 = vst [vmem:[#allocation2 + $0x300] sm:$0xff] 0.0
  %142 = vst [vmem:[#allocation2 + $0x308] sm:$0xff] 0.0
  %143 = vst [vmem:[#allocation2 + $0x310] sm:$0xff] 0.0
  %144 = vst [vmem:[#allocation2 + $0x318] sm:$0xff] 0.0
  %145 = vst [vmem:[#allocation2 + $0x320] sm:$0xff] 0.0
  %146 = vst [vmem:[#allocation2 + $0x328] sm:$0xff] 0.0
  %147 = vst [vmem:[#allocation2 + $0x330] sm:$0xff] 0.0
  %148 = vst [vmem:[#allocation2 + $0x338] sm:$0xff] 0.0
  %149 = vst [vmem:[#allocation2 + $0x340] sm:$0xff] 0.0
  %150 = vst [vmem:[#allocation2 + $0x348] sm:$0xff] 0.0
  %151 = vst [vmem:[#allocation2 + $0x350] sm:$0xff] 0.0
  %152 = vst [vmem:[#allocation2 + $0x358] sm:$0xff] 0.0
  %153 = vst [vmem:[#allocation2 + $0x360] sm:$0xff] 0.0
  %154 = vst [vmem:[#allocation2 + $0x368] sm:$0xff] 0.0
  %155 = vst [vmem:[#allocation2 + $0x370] sm:$0xff] 0.0
  %156 = vst [vmem:[#allocation2 + $0x378] sm:$0xff] 0.0
  %157 = vst [vmem:[#allocation2 + $0x380] sm:$0xff] 0.0
  %158 = vst [vmem:[#allocation2 + $0x388] sm:$0xff] 0.0
  %159 = vst [vmem:[#allocation2 + $0x390] sm:$0xff] 0.0
  %160 = vst [vmem:[#allocation2 + $0x398] sm:$0xff] 0.0
  %161 = vst [vmem:[#allocation2 + $0x3a0] sm:$0xff] 0.0
  %162 = vst [vmem:[#allocation2 + $0x3a8] sm:$0xff] 0.0
  %163 = vst [vmem:[#allocation2 + $0x3b0] sm:$0xff] 0.0
  %164 = vst [vmem:[#allocation2 + $0x3b8] sm:$0xff] 0.0
  %165 = vst [vmem:[#allocation2 + $0x3c0] sm:$0xff] 0.0
  %166 = vst [vmem:[#allocation2 + $0x3c8] sm:$0xff] 0.0
  %167 = vst [vmem:[#allocation2 + $0x3d0] sm:$0xff] 0.0
  %168 = vst [vmem:[#allocation2 + $0x3d8] sm:$0xff] 0.0
  %169 = vst [vmem:[#allocation2 + $0x3e0] sm:$0xff] 0.0
  %170 = vst [vmem:[#allocation2 + $0x3e8] sm:$0xff] 0.0
  %171 = vst [vmem:[#allocation2 + $0x3f0] sm:$0xff] 0.0
  %172 = vst [vmem:[#allocation2 + $0x3f8] sm:$0xff] 0.0
  %173 = vst [vmem:[#allocation2 + $0x400] sm:$0xff] 0.0
  %174 = vst [vmem:[#allocation2 + $0x408] sm:$0xff] 0.0
  %175 = vst [vmem:[#allocation2 + $0x410] sm:$0xff] 0.0
  %176 = vst [vmem:[#allocation2 + $0x418] sm:$0xff] 0.0
  %177 = vst [vmem:[#allocation2 + $0x420] sm:$0xff] 0.0
  %178 = vst [vmem:[#allocation2 + $0x428] sm:$0xff] 0.0
  %179 = vst [vmem:[#allocation2 + $0x430] sm:$0xff] 0.0
  %180 = vst [vmem:[#allocation2 + $0x438] sm:$0xff] 0.0
  %181 = vst [vmem:[#allocation2 + $0x440] sm:$0xff] 0.0
  %182 = vst [vmem:[#allocation2 + $0x448] sm:$0xff] 0.0
  %183 = vst [vmem:[#allocation2 + $0x450] sm:$0xff] 0.0
  %184 = vst [vmem:[#allocation2 + $0x458] sm:$0xff] 0.0
  %185 = vst [vmem:[#allocation2 + $0x460] sm:$0xff] 0.0
  %186 = vst [vmem:[#allocation2 + $0x468] sm:$0xff] 0.0
  %187 = vst [vmem:[#allocation2 + $0x470] sm:$0xff] 0.0
  %188 = vst [vmem:[#allocation2 + $0x478] sm:$0xff] 0.0
  %v189 = vld [vmem:[%s1] sm:$0xff]
  %v190 = vld [vmem:[%s1 + $0x8] sm:$0xff]
  %v191 = vld [vmem:[%s1 + $0x10] sm:$0xff]
  %v192 = vld [vmem:[%s1 + $0x18] sm:$0xff]
  %v193 = vld [vmem:[%s1 + $0x20] sm:$0xff]
  %v194 = vld [vmem:[%s1 + $0x28] sm:$0xff]
  %v195 = vld [vmem:[%s1 + $0x30] sm:$0xff]
  %v196 = vld [vmem:[%s1 + $0x38] sm:$0xff]
  %v197 = vld [vmem:[%s1 + $0x40] sm:$0xff]
  %v198 = vld [vmem:[%s1 + $0x48] sm:$0xff]
  %v199 = vld [vmem:[%s1 + $0x50] sm:$0xff]
  %v200 = vld [vmem:[%s1 + $0x58] sm:$0xff]
  %v201 = vld [vmem:[%s1 + $0x60] sm:$0xff]
  %v202 = vld [vmem:[%s1 + $0x68] sm:$0xff]
  %v203 = vld [vmem:[%s1 + $0x70] sm:$0xff]
  %v204 = vld [vmem:[%s1 + $0x78] sm:$0xff]
  %v205 = vld [vmem:[%s1 + $0x80] sm:$0xff]
  %v206 = vld [vmem:[%s1 + $0x88] sm:$0xff]
  %v207 = vld [vmem:[%s1 + $0x90] sm:$0xff]
  %v208 = vld [vmem:[%s1 + $0x98] sm:$0xff]
  %v209 = vld [vmem:[%s1 + $0xa0] sm:$0xff]
  %v210 = vld [vmem:[%s1 + $0xa8] sm:$0xff]
  %v211 = vld [vmem:[%s1 + $0xb0] sm:$0xff]
  %v212 = vld [vmem:[%s1 + $0xb8] sm:$0xff]
  %v213 = vld [vmem:[%s1 + $0xc0] sm:$0xff]
  %v214 = vld [vmem:[%s1 + $0xc8] sm:$0xff]
  %v215 = vld [vmem:[%s1 + $0xd0] sm:$0xff]
  %v216 = vld [vmem:[%s1 + $0xd8] sm:$0xff]
  %v217 = vld [vmem:[%s1 + $0xe0] sm:$0xff]
  %v218 = vld [vmem:[%s1 + $0xe8] sm:$0xff]
  %v219 = vld [vmem:[%s1 + $0xf0] sm:$0xff]
  %v220 = vld [vmem:[%s1 + $0xf8] sm:$0xff]
  %vm221 = vcmask 523264
  %v223 = vsel %vm221, %v189, 0
  %v226 = vsel %vm221, %v190, 0
  %v229 = vsel %vm221, %v191, 0
  %v232 = vsel %vm221, %v192, 0
  %v235 = vsel %vm221, %v193, 0
  %v238 = vsel %vm221, %v194, 0
  %v241 = vsel %vm221, %v195, 0
  %v244 = vsel %vm221, %v196, 0
  %v247 = vsel %vm221, %v197, 0
  %v250 = vsel %vm221, %v198, 0
  %v253 = vsel %vm221, %v199, 0
  %v256 = vsel %vm221, %v200, 0
  %v259 = vsel %vm221, %v201, 0
  %v262 = vsel %vm221, %v202, 0
  %v265 = vsel %vm221, %v203, 0
  %v268 = vsel %vm221, %v204, 0
  %v271 = vsel %vm221, %v205, 0
  %v274 = vsel %vm221, %v206, 0
  %v277 = vsel %vm221, %v207, 0
  %v280 = vsel %vm221, %v208, 0
  %v283 = vsel %vm221, %v209, 0
  %v286 = vsel %vm221, %v210, 0
  %v289 = vsel %vm221, %v211, 0
  %v292 = vsel %vm221, %v212, 0
  %v295 = vsel %vm221, %v213, 0
  %v298 = vsel %vm221, %v214, 0
  %v301 = vsel %vm221, %v215, 0
  %v304 = vsel %vm221, %v216, 0
  %v307 = vsel %vm221, %v217, 0
  %v310 = vsel %vm221, %v218, 0
  %v313 = vsel %vm221, %v219, 0
  %v316 = vsel %vm221, %v220, 0
  %318 = vmatprep.subr.mxu0 0.0
  %319 = vmatpush1.msra.mxu0 %v29
  %320 = vmatprep.subr.mxu0 0.0
  %321 = vmatpush1.msra.mxu0 %v30
  %322 = vmatprep.subr.mxu0 0.0
  %323 = vmatpush1.msra.mxu0 %v31
  %324 = vmatprep.subr.mxu0 0.0
  %325 = vmatpush1.msra.mxu0 %v32
  %326 = vmatprep.subr.mxu0 0.0
  %327 = vmatpush1.msra.mxu0 %v33
  %328 = vmatprep.subr.mxu0 0.0
  %329 = vmatpush1.msra.mxu0 %v34
  %330 = vmatprep.subr.mxu0 0.0
  %331 = vmatpush1.msra.mxu0 %v35
  %332 = vmatprep.subr.mxu0 0.0
  %333 = vmatpush1.msra.mxu0 %v36
  %334 = vmatprep.subr.mxu0 0.0
  %335 = vmatpush1.msra.mxu0 0.0
  %336 = vmatprep.subr.mxu0 0.0
  %337 = vmatpush1.msra.mxu0 0.0
  %338 = vmatprep.subr.mxu0 0.0
  %339 = vmatpush1.msra.mxu0 0.0
  %340 = vmatprep.subr.mxu0 0.0
  %341 = vmatpush1.msra.mxu0 0.0
  %342 = vmatprep.subr.mxu0 0.0
  %343 = vmatpush1.msra.mxu0 0.0
  %344 = vmatprep.subr.mxu0 0.0
  %345 = vmatpush1.msra.mxu0 0.0
  %346 = vmatprep.subr.mxu0 0.0
  %347 = vmatpush1.msra.mxu0 0.0
  %348 = vmatprep.subr.mxu0 0.0
  %349 = vmatpush1.msra.mxu0 0.0
  %350 = vmatprep.subr.mxu0 0.0
  %351 = vmatpush1.msra.mxu0 0.0
  %352 = vmatprep.subr.mxu0 0.0
  %353 = vmatpush1.msra.mxu0 0.0
  %354 = vmatprep.subr.mxu0 0.0
  %355 = vmatpush1.msra.mxu0 0.0
  %356 = vmatprep.subr.mxu0 0.0
  %357 = vmatpush1.msra.mxu0 0.0
  %358 = vmatprep.subr.mxu0 0.0
  %359 = vmatpush1.msra.mxu0 0.0
  %360 = vmatprep.subr.mxu0 0.0
  %361 = vmatpush1.msra.mxu0 0.0
  %362 = vmatprep.subr.mxu0 0.0
  %363 = vmatpush1.msra.mxu0 0.0
  %364 = vmatprep.subr.mxu0 0.0
  %365 = vmatpush1.msra.mxu0 0.0
  %366 = vmatprep.subr.mxu0 0.0
  %367 = vmatpush1.msra.mxu0 0.0
  %368 = vmatprep.subr.mxu0 0.0
  %369 = vmatpush1.msra.mxu0 0.0
  %370 = vmatprep.subr.mxu0 0.0
  %371 = vmatpush1.msra.mxu0 0.0
  %372 = vmatprep.subr.mxu0 0.0
  %373 = vmatpush1.msra.mxu0 0.0
  %374 = vmatprep.subr.mxu0 0.0
  %375 = vmatpush1.msra.mxu0 0.0
  %376 = vmatprep.subr.mxu0 0.0
  %377 = vmatpush1.msra.mxu0 0.0
  %378 = vmatprep.subr.mxu0 0.0
  %379 = vmatpush1.msra.mxu0 0.0
  %380 = vmatprep.subr.mxu0 0.0
  %381 = vmatpush1.msra.mxu0 0.0
  %382 = vmatprep.mubr.f32.mxu0 0.0
  %383 = vmatmul.mubr.f32.gmra.mrb[0].mxu0 %v223
  %v384 = vpop.f32.mrb[0].mxu0
  %v385 = vadd.f32 0.0, %v384
  %v386 = vpop.f32.mrb[0].mxu0
  %387 = vmatprep.mubr.f32.mxu0 0.0
  %388 = vmatmul.mubr.f32.gmra.mrb[0].mxu0 %v226
  %v389 = vpop.f32.mrb[0].mxu0
  %v390 = vadd.f32 0.0, %v389
  %v391 = vpop.f32.mrb[0].mxu0
  %392 = vmatprep.mubr.f32.mxu0 0.0
  %393 = vmatmul.mubr.f32.gmra.mrb[0].mxu0 %v229
  %v394 = vpop.f32.mrb[0].mxu0
  %v395 = vadd.f32 0.0, %v394
  %v396 = vpop.f32.mrb[0].mxu0
  %397 = vmatprep.mubr.f32.mxu0 0.0
  %398 = vmatmul.mubr.f32.gmra.mrb[0].mxu0 %v232
  %v399 = vpop.f32.mrb[0].mxu0
  %v400 = vadd.f32 0.0, %v399
  %v401 = vpop.f32.mrb[0].mxu0
  %402 = vmatprep.mubr.f32.mxu0 0.0
  %403 = vmatmul.mubr.f32.gmra.mrb[0].mxu0 %v235
  %v404 = vpop.f32.mrb[0].mxu0
  %v405 = vadd.f32 0.0, %v404
  %v406 = vpop.f32.mrb[0].mxu0
  %407 = vmatprep.mubr.f32.mxu0 0.0
  %408 = vmatmul.mubr.f32.gmra.mrb[0].mxu0 %v238
  %v409 = vpop.f32.mrb[0].mxu0
  %v410 = vadd.f32 0.0, %v409
  %v411 = vpop.f32.mrb[0].mxu0
  %412 = vmatprep.mubr.f32.mxu0 0.0
  %413 = vmatmul.mubr.f32.gmra.mrb[0].mxu0 %v241
  %v414 = vpop.f32.mrb[0].mxu0
  %v415 = vadd.f32 0.0, %v414
  %v416 = vpop.f32.mrb[0].mxu0
  %417 = vmatprep.mubr.f32.mxu0 0.0
  %418 = vmatmul.mubr.f32.gmra.mrb[0].mxu0 %v244
  %v419 = vpop.f32.mrb[0].mxu0
  %v420 = vadd.f32 0.0, %v419
  %v421 = vpop.f32.mrb[0].mxu0
  %422 = vmatprep.mubr.f32.mxu0 0.0
  %423 = vmatmul.mubr.f32.gmra.mrb[0].mxu0 %v247
  %v424 = vpop.f32.mrb[0].mxu0
  %v425 = vadd.f32 0.0, %v424
  %v426 = vpop.f32.mrb[0].mxu0
  %427 = vmatprep.mubr.f32.mxu0 0.0
  %428 = vmatmul.mubr.f32.gmra.mrb[0].mxu0 %v250
  %v429 = vpop.f32.mrb[0].mxu0
  %v430 = vadd.f32 0.0, %v429
  %v431 = vpop.f32.mrb[0].mxu0
  %432 = vmatprep.mubr.f32.mxu0 0.0
  %433 = vmatmul.mubr.f32.gmra.mrb[0].mxu0 %v253
  %v434 = vpop.f32.mrb[0].mxu0
  %v435 = vadd.f32 0.0, %v434
  %v436 = vpop.f32.mrb[0].mxu0
  %437 = vmatprep.mubr.f32.mxu0 0.0
  %438 = vmatmul.mubr.f32.gmra.mrb[0].mxu0 %v256
  %v439 = vpop.f32.mrb[0].mxu0
  %v440 = vadd.f32 0.0, %v439
  %v441 = vpop.f32.mrb[0].mxu0
  %442 = vmatprep.mubr.f32.mxu0 0.0
  %443 = vmatmul.mubr.f32.gmra.mrb[0].mxu0 %v259
  %v444 = vpop.f32.mrb[0].mxu0
  %v445 = vadd.f32 0.0, %v444
  %v446 = vpop.f32.mrb[0].mxu0
  %447 = vmatprep.mubr.f32.mxu0 0.0
  %448 = vmatmul.mubr.f32.gmra.mrb[0].mxu0 %v262
  %v449 = vpop.f32.mrb[0].mxu0
  %v450 = vadd.f32 0.0, %v449
  %v451 = vpop.f32.mrb[0].mxu0
  %452 = vmatprep.mubr.f32.mxu0 0.0
  %453 = vmatmul.mubr.f32.gmra.mrb[0].mxu0 %v265
  %v454 = vpop.f32.mrb[0].mxu0
  %v455 = vadd.f32 0.0, %v454
  %v456 = vpop.f32.mrb[0].mxu0
  %457 = vmatprep.mubr.f32.mxu0 0.0
  %458 = vmatmul.mubr.f32.gmra.mrb[0].mxu0 %v268
  %v459 = vpop.f32.mrb[0].mxu0
  %v460 = vadd.f32 0.0, %v459
  %v461 = vpop.f32.mrb[0].mxu0
  %462 = vmatprep.mubr.f32.mxu0 0.0
  %463 = vmatmul.mubr.f32.gmra.mrb[0].mxu0 %v271
  %v464 = vpop.f32.mrb[0].mxu0
  %v465 = vadd.f32 0.0, %v464
  %v466 = vpop.f32.mrb[0].mxu0
  %467 = vmatprep.mubr.f32.mxu0 0.0
  %468 = vmatmul.mubr.f32.gmra.mrb[0].mxu0 %v274
  %v469 = vpop.f32.mrb[0].mxu0
  %v470 = vadd.f32 0.0, %v469
  %v471 = vpop.f32.mrb[0].mxu0
  %472 = vmatprep.mubr.f32.mxu0 0.0
  %473 = vmatmul.mubr.f32.gmra.mrb[0].mxu0 %v277
  %v474 = vpop.f32.mrb[0].mxu0
  %v475 = vadd.f32 0.0, %v474
  %v476 = vpop.f32.mrb[0].mxu0
  %477 = vmatprep.mubr.f32.mxu0 0.0
  %478 = vmatmul.mubr.f32.gmra.mrb[0].mxu0 %v280
  %v479 = vpop.f32.mrb[0].mxu0
  %v480 = vadd.f32 0.0, %v479
  %v481 = vpop.f32.mrb[0].mxu0
  %482 = vmatprep.mubr.f32.mxu0 0.0
  %483 = vmatmul.mubr.f32.gmra.mrb[0].mxu0 %v283
  %v484 = vpop.f32.mrb[0].mxu0
  %v485 = vadd.f32 0.0, %v484
  %v486 = vpop.f32.mrb[0].mxu0
  %487 = vmatprep.mubr.f32.mxu0 0.0
  %488 = vmatmul.mubr.f32.gmra.mrb[0].mxu0 %v286
  %v489 = vpop.f32.mrb[0].mxu0
  %v490 = vadd.f32 0.0, %v489
  %v491 = vpop.f32.mrb[0].mxu0
  %492 = vmatprep.mubr.f32.mxu0 0.0
  %493 = vmatmul.mubr.f32.gmra.mrb[0].mxu0 %v289
  %v494 = vpop.f32.mrb[0].mxu0
  %v495 = vadd.f32 0.0, %v494
  %v496 = vpop.f32.mrb[0].mxu0
  %497 = vmatprep.mubr.f32.mxu0 0.0
  %498 = vmatmul.mubr.f32.gmra.mrb[0].mxu0 %v292
  %v499 = vpop.f32.mrb[0].mxu0
  %v500 = vadd.f32 0.0, %v499
  %v501 = vpop.f32.mrb[0].mxu0
  %502 = vmatprep.mubr.f32.mxu0 0.0
  %503 = vmatmul.mubr.f32.gmra.mrb[0].mxu0 %v295
  %v504 = vpop.f32.mrb[0].mxu0
  %v505 = vadd.f32 0.0, %v504
  %v506 = vpop.f32.mrb[0].mxu0
  %507 = vmatprep.mubr.f32.mxu0 0.0
  %508 = vmatmul.mubr.f32.gmra.mrb[0].mxu0 %v298
  %v509 = vpop.f32.mrb[0].mxu0
  %v510 = vadd.f32 0.0, %v509
  %v511 = vpop.f32.mrb[0].mxu0
  %512 = vmatprep.mubr.f32.mxu0 0.0
  %513 = vmatmul.mubr.f32.gmra.mrb[0].mxu0 %v301
  %v514 = vpop.f32.mrb[0].mxu0
  %v515 = vadd.f32 0.0, %v514
  %v516 = vpop.f32.mrb[0].mxu0
  %517 = vmatprep.mubr.f32.mxu0 0.0
  %518 = vmatmul.mubr.f32.gmra.mrb[0].mxu0 %v304
  %v519 = vpop.f32.mrb[0].mxu0
  %v520 = vadd.f32 0.0, %v519
  %v521 = vpop.f32.mrb[0].mxu0
  %522 = vmatprep.mubr.f32.mxu0 0.0
  %523 = vmatmul.mubr.f32.gmra.mrb[0].mxu0 %v307
  %v524 = vpop.f32.mrb[0].mxu0
  %v525 = vadd.f32 0.0, %v524
  %v526 = vpop.f32.mrb[0].mxu0
  %527 = vmatprep.mubr.f32.mxu0 0.0
  %528 = vmatmul.mubr.f32.gmra.mrb[0].mxu0 %v310
  %v529 = vpop.f32.mrb[0].mxu0
  %v530 = vadd.f32 0.0, %v529
  %v531 = vpop.f32.mrb[0].mxu0
  %532 = vmatprep.mubr.f32.mxu0 0.0
  %533 = vmatmul.mubr.f32.gmra.mrb[0].mxu0 %v313
  %v534 = vpop.f32.mrb[0].mxu0
  %v535 = vadd.f32 0.0, %v534
  %v536 = vpop.f32.mrb[0].mxu0
  %537 = vmatprep.mubr.f32.mxu0 0.0
  %538 = vmatmul.mubr.f32.gmra.mrb[0].mxu0 %v316
  %v539 = vpop.f32.mrb[0].mxu0
  %v540 = vadd.f32 0.0, %v539
  %v541 = vpop.f32.mrb[0].mxu0
  %542 = vdwg.mxu0
  %s543 = scalar_lea.vmem [#allocation2], 32
  %544 = vst [vmem:[%s543 + $0x8] sm:$0xff] %v385
  %545 = vst [vmem:[%s543 + $0x10] sm:$0xff] %v390
  %546 = vst [vmem:[%s543 + $0x28] sm:$0xff] %v395
  %547 = vst [vmem:[%s543 + $0x30] sm:$0xff] %v400
  %548 = vst [vmem:[%s543 + $0x48] sm:$0xff] %v405
  %549 = vst [vmem:[%s543 + $0x50] sm:$0xff] %v410
  %550 = vst [vmem:[%s543 + $0x68] sm:$0xff] %v415
  %551 = vst [vmem:[%s543 + $0x70] sm:$0xff] %v420
  %552 = vst [vmem:[%s543 + $0x88] sm:$0xff] %v425
  %553 = vst [vmem:[%s543 + $0x90] sm:$0xff] %v430
  %554 = vst [vmem:[%s543 + $0xa8] sm:$0xff] %v435
  %555 = vst [vmem:[%s543 + $0xb0] sm:$0xff] %v440
  %556 = vst [vmem:[%s543 + $0xc8] sm:$0xff] %v445
  %557 = vst [vmem:[%s543 + $0xd0] sm:$0xff] %v450
  %558 = vst [vmem:[%s543 + $0xe8] sm:$0xff] %v455
  %559 = vst [vmem:[%s543 + $0xf0] sm:$0xff] %v460
  %560 = vst [vmem:[%s543 + $0x108] sm:$0xff] %v465
  %561 = vst [vmem:[%s543 + $0x110] sm:$0xff] %v470
  %562 = vst [vmem:[%s543 + $0x128] sm:$0xff] %v475
  %563 = vst [vmem:[%s543 + $0x130] sm:$0xff] %v480
  %564 = vst [vmem:[%s543 + $0x148] sm:$0xff] %v485
  %565 = vst [vmem:[%s543 + $0x150] sm:$0xff] %v490
  %566 = vst [vmem:[%s543 + $0x168] sm:$0xff] %v495
  %567 = vst [vmem:[%s543 + $0x170] sm:$0xff] %v500
  %568 = vst [vmem:[%s543 + $0x188] sm:$0xff] %v505
  %569 = vst [vmem:[%s543 + $0x190] sm:$0xff] %v510
  %570 = vst [vmem:[%s543 + $0x1a8] sm:$0xff] %v515
  %571 = vst [vmem:[%s543 + $0x1b0] sm:$0xff] %v520
  %572 = vst [vmem:[%s543 + $0x1c8] sm:$0xff] %v525
  %573 = vst [vmem:[%s543 + $0x1d0] sm:$0xff] %v530
  %574 = vst [vmem:[%s543 + $0x1e8] sm:$0xff] %v535
  %575 = vst [vmem:[%s543 + $0x1f0] sm:$0xff] %v540
  %576 = vmatprep.subr.mxu0 0.0
  %577 = vmatpush1.msra.mxu0 %v37
  %578 = vmatprep.subr.mxu0 0.0
  %579 = vmatpush1.msra.mxu0 %v38
  %580 = vmatprep.subr.mxu0 0.0
  %581 = vmatpush1.msra.mxu0 %v39
  %582 = vmatprep.subr.mxu0 0.0
  %583 = vmatpush1.msra.mxu0 %v40
  %584 = vmatprep.subr.mxu0 0.0
  %585 = vmatpush1.msra.mxu0 %v41
  %586 = vmatprep.subr.mxu0 0.0
  %587 = vmatpush1.msra.mxu0 %v42
  %588 = vmatprep.subr.mxu0 0.0
  %589 = vmatpush1.msra.mxu0 %v43
  %590 = vmatprep.subr.mxu0 0.0
  %591 = vmatpush1.msra.mxu0 %v44
  %592 = vmatprep.subr.mxu0 0.0
  %593 = vmatpush1.msra.mxu0 0.0
  %594 = vmatprep.subr.mxu0 0.0
  %595 = vmatpush1.msra.mxu0 0.0
  %596 = vmatprep.subr.mxu0 0.0
  %597 = vmatpush1.msra.mxu0 0.0
  %598 = vmatprep.subr.mxu0 0.0
  %599 = vmatpush1.msra.mxu0 0.0
  %600 = vmatprep.subr.mxu0 0.0
  %601 = vmatpush1.msra.mxu0 0.0
  %602 = vmatprep.subr.mxu0 0.0
  %603 = vmatpush1.msra.mxu0 0.0
  %604 = vmatprep.subr.mxu0 0.0
  %605 = vmatpush1.msra.mxu0 0.0
  %606 = vmatprep.subr.mxu0 0.0
  %607 = vmatpush1.msra.mxu0 0.0
  %608 = vmatprep.subr.mxu0 0.0
  %609 = vmatpush1.msra.mxu0 0.0
  %610 = vmatprep.subr.mxu0 0.0
  %611 = vmatpush1.msra.mxu0 0.0
  %612 = vmatprep.subr.mxu0 0.0
  %613 = vmatpush1.msra.mxu0 0.0
  %614 = vmatprep.subr.mxu0 0.0
  %615 = vmatpush1.msra.mxu0 0.0
  %616 = vmatprep.subr.mxu0 0.0
  %617 = vmatpush1.msra.mxu0 0.0
  %618 = vmatprep.subr.mxu0 0.0
  %619 = vmatpush1.msra.mxu0 0.0
  %620 = vmatprep.subr.mxu0 0.0
  %621 = vmatpush1.msra.mxu0 0.0
  %622 = vmatprep.subr.mxu0 0.0
  %623 = vmatpush1.msra.mxu0 0.0
  %624 = vmatprep.subr.mxu0 0.0
  %625 = vmatpush1.msra.mxu0 0.0
  %626 = vmatprep.subr.mxu0 0.0
  %627 = vmatpush1.msra.mxu0 0.0
  %628 = vmatprep.subr.mxu0 0.0
  %629 = vmatpush1.msra.mxu0 0.0
  %630 = vmatprep.subr.mxu0 0.0
  %631 = vmatpush1.msra.mxu0 0.0
  %632 = vmatprep.subr.mxu0 0.0
  %633 = vmatpush1.msra.mxu0 0.0
  %634 = vmatprep.subr.mxu0 0.0
  %635 = vmatpush1.msra.mxu0 0.0
  %636 = vmatprep.subr.mxu0 0.0
  %637 = vmatpush1.msra.mxu0 0.0
  %638 = vmatprep.subr.mxu0 0.0
  %639 = vmatpush1.msra.mxu0 0.0
  %640 = vmatprep.mubr.f32.mxu0 0.0
  %641 = vmatmul.mubr.f32.gmra.mrb[0].mxu0 %v223
  %v642 = vpop.f32.mrb[0].mxu0
  %v643 = vadd.f32 0.0, %v642
  %v644 = vpop.f32.mrb[0].mxu0
  %645 = vmatprep.mubr.f32.mxu0 0.0
  %646 = vmatmul.mubr.f32.gmra.mrb[0].mxu0 %v226
  %v647 = vpop.f32.mrb[0].mxu0
  %v648 = vadd.f32 0.0, %v647
  %v649 = vpop.f32.mrb[0].mxu0
  %650 = vmatprep.mubr.f32.mxu0 0.0
  %651 = vmatmul.mubr.f32.gmra.mrb[0].mxu0 %v229
  %v652 = vpop.f32.mrb[0].mxu0
  %v653 = vadd.f32 0.0, %v652
  %v654 = vpop.f32.mrb[0].mxu0
  %655 = vmatprep.mubr.f32.mxu0 0.0
  %656 = vmatmul.mubr.f32.gmra.mrb[0].mxu0 %v232
  %v657 = vpop.f32.mrb[0].mxu0
  %v658 = vadd.f32 0.0, %v657
  %v659 = vpop.f32.mrb[0].mxu0
  %660 = vmatprep.mubr.f32.mxu0 0.0
  %661 = vmatmul.mubr.f32.gmra.mrb[0].mxu0 %v235
  %v662 = vpop.f32.mrb[0].mxu0
  %v663 = vadd.f32 0.0, %v662
  %v664 = vpop.f32.mrb[0].mxu0
  %665 = vmatprep.mubr.f32.mxu0 0.0
  %666 = vmatmul.mubr.f32.gmra.mrb[0].mxu0 %v238
  %v667 = vpop.f32.mrb[0].mxu0
  %v668 = vadd.f32 0.0, %v667
  %v669 = vpop.f32.mrb[0].mxu0
  %670 = vmatprep.mubr.f32.mxu0 0.0
  %671 = vmatmul.mubr.f32.gmra.mrb[0].mxu0 %v241
  %v672 = vpop.f32.mrb[0].mxu0
  %v673 = vadd.f32 0.0, %v672
  %v674 = vpop.f32.mrb[0].mxu0
  %675 = vmatprep.mubr.f32.mxu0 0.0
  %676 = vmatmul.mubr.f32.gmra.mrb[0].mxu0 %v244
  %v677 = vpop.f32.mrb[0].mxu0
  %v678 = vadd.f32 0.0, %v677
  %v679 = vpop.f32.mrb[0].mxu0
  %680 = vmatprep.mubr.f32.mxu0 0.0
  %681 = vmatmul.mubr.f32.gmra.mrb[0].mxu0 %v247
  %v682 = vpop.f32.mrb[0].mxu0
  %v683 = vadd.f32 0.0, %v682
  %v684 = vpop.f32.mrb[0].mxu0
  %685 = vmatprep.mubr.f32.mxu0 0.0
  %686 = vmatmul.mubr.f32.gmra.mrb[0].mxu0 %v250
  %v687 = vpop.f32.mrb[0].mxu0
  %v688 = vadd.f32 0.0, %v687
  %v689 = vpop.f32.mrb[0].mxu0
  %690 = vmatprep.mubr.f32.mxu0 0.0
  %691 = vmatmul.mubr.f32.gmra.mrb[0].mxu0 %v253
  %v692 = vpop.f32.mrb[0].mxu0
  %v693 = vadd.f32 0.0, %v692
  %v694 = vpop.f32.mrb[0].mxu0
  %695 = vmatprep.mubr.f32.mxu0 0.0
  %696 = vmatmul.mubr.f32.gmra.mrb[0].mxu0 %v256
  %v697 = vpop.f32.mrb[0].mxu0
  %v698 = vadd.f32 0.0, %v697
  %v699 = vpop.f32.mrb[0].mxu0
  %700 = vmatprep.mubr.f32.mxu0 0.0
  %701 = vmatmul.mubr.f32.gmra.mrb[0].mxu0 %v259
  %v702 = vpop.f32.mrb[0].mxu0
  %v703 = vadd.f32 0.0, %v702
  %v704 = vpop.f32.mrb[0].mxu0
  %705 = vmatprep.mubr.f32.mxu0 0.0
  %706 = vmatmul.mubr.f32.gmra.mrb[0].mxu0 %v262
  %v707 = vpop.f32.mrb[0].mxu0
  %v708 = vadd.f32 0.0, %v707
  %v709 = vpop.f32.mrb[0].mxu0
  %710 = vmatprep.mubr.f32.mxu0 0.0
  %711 = vmatmul.mubr.f32.gmra.mrb[0].mxu0 %v265
  %v712 = vpop.f32.mrb[0].mxu0
  %v713 = vadd.f32 0.0, %v712
  %v714 = vpop.f32.mrb[0].mxu0
  %715 = vmatprep.mubr.f32.mxu0 0.0
  %716 = vmatmul.mubr.f32.gmra.mrb[0].mxu0 %v268
  %v717 = vpop.f32.mrb[0].mxu0
  %v718 = vadd.f32 0.0, %v717
  %v719 = vpop.f32.mrb[0].mxu0
  %720 = vmatprep.mubr.f32.mxu0 0.0
  %721 = vmatmul.mubr.f32.gmra.mrb[0].mxu0 %v271
  %v722 = vpop.f32.mrb[0].mxu0
  %v723 = vadd.f32 0.0, %v722
  %v724 = vpop.f32.mrb[0].mxu0
  %725 = vmatprep.mubr.f32.mxu0 0.0
  %726 = vmatmul.mubr.f32.gmra.mrb[0].mxu0 %v274
  %v727 = vpop.f32.mrb[0].mxu0
  %v728 = vadd.f32 0.0, %v727
  %v729 = vpop.f32.mrb[0].mxu0
  %730 = vmatprep.mubr.f32.mxu0 0.0
  %731 = vmatmul.mubr.f32.gmra.mrb[0].mxu0 %v277
  %v732 = vpop.f32.mrb[0].mxu0
  %v733 = vadd.f32 0.0, %v732
  %v734 = vpop.f32.mrb[0].mxu0
  %735 = vmatprep.mubr.f32.mxu0 0.0
  %736 = vmatmul.mubr.f32.gmra.mrb[0].mxu0 %v280
  %v737 = vpop.f32.mrb[0].mxu0
  %v738 = vadd.f32 0.0, %v737
  %v739 = vpop.f32.mrb[0].mxu0
  %740 = vmatprep.mubr.f32.mxu0 0.0
  %741 = vmatmul.mubr.f32.gmra.mrb[0].mxu0 %v283
  %v742 = vpop.f32.mrb[0].mxu0
  %v743 = vadd.f32 0.0, %v742
  %v744 = vpop.f32.mrb[0].mxu0
  %745 = vmatprep.mubr.f32.mxu0 0.0
  %746 = vmatmul.mubr.f32.gmra.mrb[0].mxu0 %v286
  %v747 = vpop.f32.mrb[0].mxu0
  %v748 = vadd.f32 0.0, %v747
  %v749 = vpop.f32.mrb[0].mxu0
  %750 = vmatprep.mubr.f32.mxu0 0.0
  %751 = vmatmul.mubr.f32.gmra.mrb[0].mxu0 %v289
  %v752 = vpop.f32.mrb[0].mxu0
  %v753 = vadd.f32 0.0, %v752
  %v754 = vpop.f32.mrb[0].mxu0
  %755 = vmatprep.mubr.f32.mxu0 0.0
  %756 = vmatmul.mubr.f32.gmra.mrb[0].mxu0 %v292
  %v757 = vpop.f32.mrb[0].mxu0
  %v758 = vadd.f32 0.0, %v757
  %v759 = vpop.f32.mrb[0].mxu0
  %760 = vmatprep.mubr.f32.mxu0 0.0
  %761 = vmatmul.mubr.f32.gmra.mrb[0].mxu0 %v295
  %v762 = vpop.f32.mrb[0].mxu0
  %v763 = vadd.f32 0.0, %v762
  %v764 = vpop.f32.mrb[0].mxu0
  %765 = vmatprep.mubr.f32.mxu0 0.0
  %766 = vmatmul.mubr.f32.gmra.mrb[0].mxu0 %v298
  %v767 = vpop.f32.mrb[0].mxu0
  %v768 = vadd.f32 0.0, %v767
  %v769 = vpop.f32.mrb[0].mxu0
  %770 = vmatprep.mubr.f32.mxu0 0.0
  %771 = vmatmul.mubr.f32.gmra.mrb[0].mxu0 %v301
  %v772 = vpop.f32.mrb[0].mxu0
  %v773 = vadd.f32 0.0, %v772
  %v774 = vpop.f32.mrb[0].mxu0
  %775 = vmatprep.mubr.f32.mxu0 0.0
  %776 = vmatmul.mubr.f32.gmra.mrb[0].mxu0 %v304
  %v777 = vpop.f32.mrb[0].mxu0
  %v778 = vadd.f32 0.0, %v777
  %v779 = vpop.f32.mrb[0].mxu0
  %780 = vmatprep.mubr.f32.mxu0 0.0
  %781 = vmatmul.mubr.f32.gmra.mrb[0].mxu0 %v307
  %v782 = vpop.f32.mrb[0].mxu0
  %v783 = vadd.f32 0.0, %v782
  %v784 = vpop.f32.mrb[0].mxu0
  %785 = vmatprep.mubr.f32.mxu0 0.0
  %786 = vmatmul.mubr.f32.gmra.mrb[0].mxu0 %v310
  %v787 = vpop.f32.mrb[0].mxu0
  %v788 = vadd.f32 0.0, %v787
  %v789 = vpop.f32.mrb[0].mxu0
  %790 = vmatprep.mubr.f32.mxu0 0.0
  %791 = vmatmul.mubr.f32.gmra.mrb[0].mxu0 %v313
  %v792 = vpop.f32.mrb[0].mxu0
  %v793 = vadd.f32 0.0, %v792
  %v794 = vpop.f32.mrb[0].mxu0
  %795 = vmatprep.mubr.f32.mxu0 0.0
  %796 = vmatmul.mubr.f32.gmra.mrb[0].mxu0 %v316
  %v797 = vpop.f32.mrb[0].mxu0
  %v798 = vadd.f32 0.0, %v797
  %v799 = vpop.f32.mrb[0].mxu0
  %800 = vdwg.mxu0
  %s801 = scalar_lea.vmem [#allocation2], 608
  %802 = vst [vmem:[%s801 + $0x8] sm:$0xff] %v643
  %803 = vst [vmem:[%s801 + $0x10] sm:$0xff] %v648
  %804 = vst [vmem:[%s801 + $0x28] sm:$0xff] %v653
  %805 = vst [vmem:[%s801 + $0x30] sm:$0xff] %v658
  %806 = vst [vmem:[%s801 + $0x48] sm:$0xff] %v663
  %807 = vst [vmem:[%s801 + $0x50] sm:$0xff] %v668
  %808 = vst [vmem:[%s801 + $0x68] sm:$0xff] %v673
  %809 = vst [vmem:[%s801 + $0x70] sm:$0xff] %v678
  %810 = vst [vmem:[%s801 + $0x88] sm:$0xff] %v683
  %811 = vst [vmem:[%s801 + $0x90] sm:$0xff] %v688
  %812 = vst [vmem:[%s801 + $0xa8] sm:$0xff] %v693
  %813 = vst [vmem:[%s801 + $0xb0] sm:$0xff] %v698
  %814 = vst [vmem:[%s801 + $0xc8] sm:$0xff] %v703
  %815 = vst [vmem:[%s801 + $0xd0] sm:$0xff] %v708
  %816 = vst [vmem:[%s801 + $0xe8] sm:$0xff] %v713
  %817 = vst [vmem:[%s801 + $0xf0] sm:$0xff] %v718
  %818 = vst [vmem:[%s801 + $0x108] sm:$0xff] %v723
  %819 = vst [vmem:[%s801 + $0x110] sm:$0xff] %v728
  %820 = vst [vmem:[%s801 + $0x128] sm:$0xff] %v733
  %821 = vst [vmem:[%s801 + $0x130] sm:$0xff] %v738
  %822 = vst [vmem:[%s801 + $0x148] sm:$0xff] %v743
  %823 = vst [vmem:[%s801 + $0x150] sm:$0xff] %v748
  %824 = vst [vmem:[%s801 + $0x168] sm:$0xff] %v753
  %825 = vst [vmem:[%s801 + $0x170] sm:$0xff] %v758
  %826 = vst [vmem:[%s801 + $0x188] sm:$0xff] %v763
  %827 = vst [vmem:[%s801 + $0x190] sm:$0xff] %v768
  %828 = vst [vmem:[%s801 + $0x1a8] sm:$0xff] %v773
  %829 = vst [vmem:[%s801 + $0x1b0] sm:$0xff] %v778
  %830 = vst [vmem:[%s801 + $0x1c8] sm:$0xff] %v783
  %831 = vst [vmem:[%s801 + $0x1d0] sm:$0xff] %v788
  %832 = vst [vmem:[%s801 + $0x1e8] sm:$0xff] %v793
  %833 = vst [vmem:[%s801 + $0x1f0] sm:$0xff] %v798
  %v834 = vld [vmem:[#allocation2 + $0x7] sm:$0xff]
  %v835 = vld [vmem:[#allocation2 + $0xf] sm:$0xff]
  %v836 = vld [vmem:[#allocation2 + $0x27] sm:$0xff]
  %v837 = vld [vmem:[#allocation2 + $0x2f] sm:$0xff]
  %v838 = vld [vmem:[#allocation2 + $0x47] sm:$0xff]
  %v839 = vld [vmem:[#allocation2 + $0x4f] sm:$0xff]
  %v840 = vld [vmem:[#allocation2 + $0x67] sm:$0xff]
  %v841 = vld [vmem:[#allocation2 + $0x6f] sm:$0xff]
  %v842 = vld [vmem:[#allocation2 + $0x87] sm:$0xff]
  %v843 = vld [vmem:[#allocation2 + $0x8f] sm:$0xff]
  %v844 = vld [vmem:[#allocation2 + $0xa7] sm:$0xff]
  %v845 = vld [vmem:[#allocation2 + $0xaf] sm:$0xff]
  %v846 = vld [vmem:[#allocation2 + $0xc7] sm:$0xff]
  %v847 = vld [vmem:[#allocation2 + $0xcf] sm:$0xff]
  %v848 = vld [vmem:[#allocation2 + $0xe7] sm:$0xff]
  %v849 = vld [vmem:[#allocation2 + $0xef] sm:$0xff]
  %v850 = vld [vmem:[#allocation2 + $0x107] sm:$0xff]
  %v851 = vld [vmem:[#allocation2 + $0x10f] sm:$0xff]
  %v852 = vld [vmem:[#allocation2 + $0x127] sm:$0xff]
  %v853 = vld [vmem:[#allocation2 + $0x12f] sm:$0xff]
  %v854 = vld [vmem:[#allocation2 + $0x147] sm:$0xff]
  %v855 = vld [vmem:[#allocation2 + $0x14f] sm:$0xff]
  %v856 = vld [vmem:[#allocation2 + $0x167] sm:$0xff]
  %v857 = vld [vmem:[#allocation2 + $0x16f] sm:$0xff]
  %v858 = vld [vmem:[#allocation2 + $0x187] sm:$0xff]
  %v859 = vld [vmem:[#allocation2 + $0x18f] sm:$0xff]
  %v860 = vld [vmem:[#allocation2 + $0x1a7] sm:$0xff]
  %v861 = vld [vmem:[#allocation2 + $0x1af] sm:$0xff]
  %v862 = vld [vmem:[#allocation2 + $0x1c7] sm:$0xff]
  %v863 = vld [vmem:[#allocation2 + $0x1cf] sm:$0xff]
  %v864 = vld [vmem:[#allocation2 + $0x1e7] sm:$0xff]
  %v865 = vld [vmem:[#allocation2 + $0x1ef] sm:$0xff]
  %v866 = vld [vmem:[#allocation2 + $0x8] sm:$0xff]
  %v867 = vld [vmem:[#allocation2 + $0x10] sm:$0xff]
  %v868 = vld [vmem:[#allocation2 + $0x28] sm:$0xff]
  %v869 = vld [vmem:[#allocation2 + $0x30] sm:$0xff]
  %v870 = vld [vmem:[#allocation2 + $0x48] sm:$0xff]
  %v871 = vld [vmem:[#allocation2 + $0x50] sm:$0xff]
  %v872 = vld [vmem:[#allocation2 + $0x68] sm:$0xff]
  %v873 = vld [vmem:[#allocation2 + $0x70] sm:$0xff]
  %v874 = vld [vmem:[#allocation2 + $0x88] sm:$0xff]
  %v875 = vld [vmem:[#allocation2 + $0x90] sm:$0xff]
  %v876 = vld [vmem:[#allocation2 + $0xa8] sm:$0xff]
  %v877 = vld [vmem:[#allocation2 + $0xb0] sm:$0xff]
  %v878 = vld [vmem:[#allocation2 + $0xc8] sm:$0xff]
  %v879 = vld [vmem:[#allocation2 + $0xd0] sm:$0xff]
  %v880 = vld [vmem:[#allocation2 + $0xe8] sm:$0xff]
  %v881 = vld [vmem:[#allocation2 + $0xf0] sm:$0xff]
  %v882 = vld [vmem:[#allocation2 + $0x108] sm:$0xff]
  %v883 = vld [vmem:[#allocation2 + $0x110] sm:$0xff]
  %v884 = vld [vmem:[#allocation2 + $0x128] sm:$0xff]
  %v885 = vld [vmem:[#allocation2 + $0x130] sm:$0xff]
  %v886 = vld [vmem:[#allocation2 + $0x148] sm:$0xff]
  %v887 = vld [vmem:[#allocation2 + $0x150] sm:$0xff]
  %v888 = vld [vmem:[#allocation2 + $0x168] sm:$0xff]
  %v889 = vld [vmem:[#allocation2 + $0x170] sm:$0xff]
  %v890 = vld [vmem:[#allocation2 + $0x188] sm:$0xff]
  %v891 = vld [vmem:[#allocation2 + $0x190] sm:$0xff]
  %v892 = vld [vmem:[#allocation2 + $0x1a8] sm:$0xff]
  %v893 = vld [vmem:[#allocation2 + $0x1b0] sm:$0xff]
  %v894 = vld [vmem:[#allocation2 + $0x1c8] sm:$0xff]
  %v895 = vld [vmem:[#allocation2 + $0x1d0] sm:$0xff]
  %v896 = vld [vmem:[#allocation2 + $0x1e8] sm:$0xff]
  %v897 = vld [vmem:[#allocation2 + $0x1f0] sm:$0xff]
  %v898 = vld [vmem:[#allocation2 + $0x9] sm:$0xff]
  %v899 = vld [vmem:[#allocation2 + $0x11] sm:$0xff]
  %v900 = vld [vmem:[#allocation2 + $0x29] sm:$0xff]
  %v901 = vld [vmem:[#allocation2 + $0x31] sm:$0xff]
  %v902 = vld [vmem:[#allocation2 + $0x49] sm:$0xff]
  %v903 = vld [vmem:[#allocation2 + $0x51] sm:$0xff]
  %v904 = vld [vmem:[#allocation2 + $0x69] sm:$0xff]
  %v905 = vld [vmem:[#allocation2 + $0x71] sm:$0xff]
  %v906 = vld [vmem:[#allocation2 + $0x89] sm:$0xff]
  %v907 = vld [vmem:[#allocation2 + $0x91] sm:$0xff]
  %v908 = vld [vmem:[#allocation2 + $0xa9] sm:$0xff]
  %v909 = vld [vmem:[#allocation2 + $0xb1] sm:$0xff]
  %v910 = vld [vmem:[#allocation2 + $0xc9] sm:$0xff]
  %v911 = vld [vmem:[#allocation2 + $0xd1] sm:$0xff]
  %v912 = vld [vmem:[#allocation2 + $0xe9] sm:$0xff]
  %v913 = vld [vmem:[#allocation2 + $0xf1] sm:$0xff]
  %v914 = vld [vmem:[#allocation2 + $0x109] sm:$0xff]
  %v915 = vld [vmem:[#allocation2 + $0x111] sm:$0xff]
  %v916 = vld [vmem:[#allocation2 + $0x129] sm:$0xff]
  %v917 = vld [vmem:[#allocation2 + $0x131] sm:$0xff]
  %v918 = vld [vmem:[#allocation2 + $0x149] sm:$0xff]
  %v919 = vld [vmem:[#allocation2 + $0x151] sm:$0xff]
  %v920 = vld [vmem:[#allocation2 + $0x169] sm:$0xff]
  %v921 = vld [vmem:[#allocation2 + $0x171] sm:$0xff]
  %v922 = vld [vmem:[#allocation2 + $0x189] sm:$0xff]
  %v923 = vld [vmem:[#allocation2 + $0x191] sm:$0xff]
  %v924 = vld [vmem:[#allocation2 + $0x1a9] sm:$0xff]
  %v925 = vld [vmem:[#allocation2 + $0x1b1] sm:$0xff]
  %v926 = vld [vmem:[#allocation2 + $0x1c9] sm:$0xff]
  %v927 = vld [vmem:[#allocation2 + $0x1d1] sm:$0xff]
  %v928 = vld [vmem:[#allocation2 + $0x1e9] sm:$0xff]
  %v929 = vld [vmem:[#allocation2 + $0x1f1] sm:$0xff]
  %s930 = scalar_lea.vmem [#allocation2], 576
  %v931 = vld [vmem:[%s930 + $0x7] sm:$0xff]
  %v932 = vld [vmem:[%s930 + $0xf] sm:$0xff]
  %v933 = vld [vmem:[%s930 + $0x27] sm:$0xff]
  %v934 = vld [vmem:[%s930 + $0x2f] sm:$0xff]
  %v935 = vld [vmem:[%s930 + $0x47] sm:$0xff]
  %v936 = vld [vmem:[%s930 + $0x4f] sm:$0xff]
  %v937 = vld [vmem:[%s930 + $0x67] sm:$0xff]
  %v938 = vld [vmem:[%s930 + $0x6f] sm:$0xff]
  %v939 = vld [vmem:[%s930 + $0x87] sm:$0xff]
  %v940 = vld [vmem:[%s930 + $0x8f] sm:$0xff]
  %v941 = vld [vmem:[%s930 + $0xa7] sm:$0xff]
  %v942 = vld [vmem:[%s930 + $0xaf] sm:$0xff]
  %v943 = vld [vmem:[%s930 + $0xc7] sm:$0xff]
  %v944 = vld [vmem:[%s930 + $0xcf] sm:$0xff]
  %v945 = vld [vmem:[%s930 + $0xe7] sm:$0xff]
  %v946 = vld [vmem:[%s930 + $0xef] sm:$0xff]
  %v947 = vld [vmem:[%s930 + $0x107] sm:$0xff]
  %v948 = vld [vmem:[%s930 + $0x10f] sm:$0xff]
  %v949 = vld [vmem:[%s930 + $0x127] sm:$0xff]
  %v950 = vld [vmem:[%s930 + $0x12f] sm:$0xff]
  %v951 = vld [vmem:[%s930 + $0x147] sm:$0xff]
  %v952 = vld [vmem:[%s930 + $0x14f] sm:$0xff]
  %v953 = vld [vmem:[%s930 + $0x167] sm:$0xff]
  %v954 = vld [vmem:[%s930 + $0x16f] sm:$0xff]
  %v955 = vld [vmem:[%s930 + $0x187] sm:$0xff]
  %v956 = vld [vmem:[%s930 + $0x18f] sm:$0xff]
  %v957 = vld [vmem:[%s930 + $0x1a7] sm:$0xff]
  %v958 = vld [vmem:[%s930 + $0x1af] sm:$0xff]
  %v959 = vld [vmem:[%s930 + $0x1c7] sm:$0xff]
  %v960 = vld [vmem:[%s930 + $0x1cf] sm:$0xff]
  %v961 = vld [vmem:[%s930 + $0x1e7] sm:$0xff]
  %v962 = vld [vmem:[%s930 + $0x1ef] sm:$0xff]
  %v963 = vld [vmem:[%s930 + $0x8] sm:$0xff]
  %v964 = vld [vmem:[%s930 + $0x10] sm:$0xff]
  %v965 = vld [vmem:[%s930 + $0x28] sm:$0xff]
  %v966 = vld [vmem:[%s930 + $0x30] sm:$0xff]
  %v967 = vld [vmem:[%s930 + $0x48] sm:$0xff]
  %v968 = vld [vmem:[%s930 + $0x50] sm:$0xff]
  %v969 = vld [vmem:[%s930 + $0x68] sm:$0xff]
  %v970 = vld [vmem:[%s930 + $0x70] sm:$0xff]
  %v971 = vld [vmem:[%s930 + $0x88] sm:$0xff]
  %v972 = vld [vmem:[%s930 + $0x90] sm:$0xff]
  %v973 = vld [vmem:[%s930 + $0xa8] sm:$0xff]
  %v974 = vld [vmem:[%s930 + $0xb0] sm:$0xff]
  %v975 = vld [vmem:[%s930 + $0xc8] sm:$0xff]
  %v976 = vld [vmem:[%s930 + $0xd0] sm:$0xff]
  %v977 = vld [vmem:[%s930 + $0xe8] sm:$0xff]
  %v978 = vld [vmem:[%s930 + $0xf0] sm:$0xff]
  %v979 = vld [vmem:[%s930 + $0x108] sm:$0xff]
  %v980 = vld [vmem:[%s930 + $0x110] sm:$0xff]
  %v981 = vld [vmem:[%s930 + $0x128] sm:$0xff]
  %v982 = vld [vmem:[%s930 + $0x130] sm:$0xff]
  %v983 = vld [vmem:[%s930 + $0x148] sm:$0xff]
  %v984 = vld [vmem:[%s930 + $0x150] sm:$0xff]
  %v985 = vld [vmem:[%s930 + $0x168] sm:$0xff]
  %v986 = vld [vmem:[%s930 + $0x170] sm:$0xff]
  %v987 = vld [vmem:[%s930 + $0x188] sm:$0xff]
  %v988 = vld [vmem:[%s930 + $0x190] sm:$0xff]
  %v989 = vld [vmem:[%s930 + $0x1a8] sm:$0xff]
  %v990 = vld [vmem:[%s930 + $0x1b0] sm:$0xff]
  %v991 = vld [vmem:[%s930 + $0x1c8] sm:$0xff]
  %v992 = vld [vmem:[%s930 + $0x1d0] sm:$0xff]
  %v993 = vld [vmem:[%s930 + $0x1e8] sm:$0xff]
  %v994 = vld [vmem:[%s930 + $0x1f0] sm:$0xff]
  %v995 = vld [vmem:[%s930 + $0x9] sm:$0xff]
  %v996 = vld [vmem:[%s930 + $0x11] sm:$0xff]
  %v997 = vld [vmem:[%s930 + $0x29] sm:$0xff]
  %v998 = vld [vmem:[%s930 + $0x31] sm:$0xff]
  %v999 = vld [vmem:[%s930 + $0x49] sm:$0xff]
  %v1000 = vld [vmem:[%s930 + $0x51] sm:$0xff]
  %v1001 = vld [vmem:[%s930 + $0x69] sm:$0xff]
  %v1002 = vld [vmem:[%s930 + $0x71] sm:$0xff]
  %v1003 = vld [vmem:[%s930 + $0x89] sm:$0xff]
  %v1004 = vld [vmem:[%s930 + $0x91] sm:$0xff]
  %v1005 = vld [vmem:[%s930 + $0xa9] sm:$0xff]
  %v1006 = vld [vmem:[%s930 + $0xb1] sm:$0xff]
  %v1007 = vld [vmem:[%s930 + $0xc9] sm:$0xff]
  %v1008 = vld [vmem:[%s930 + $0xd1] sm:$0xff]
  %v1009 = vld [vmem:[%s930 + $0xe9] sm:$0xff]
  %v1010 = vld [vmem:[%s930 + $0xf1] sm:$0xff]
  %v1011 = vld [vmem:[%s930 + $0x109] sm:$0xff]
  %v1012 = vld [vmem:[%s930 + $0x111] sm:$0xff]
  %v1013 = vld [vmem:[%s930 + $0x129] sm:$0xff]
  %v1014 = vld [vmem:[%s930 + $0x131] sm:$0xff]
  %v1015 = vld [vmem:[%s930 + $0x149] sm:$0xff]
  %v1016 = vld [vmem:[%s930 + $0x151] sm:$0xff]
  %v1017 = vld [vmem:[%s930 + $0x169] sm:$0xff]
  %v1018 = vld [vmem:[%s930 + $0x171] sm:$0xff]
  %v1019 = vld [vmem:[%s930 + $0x189] sm:$0xff]
  %v1020 = vld [vmem:[%s930 + $0x191] sm:$0xff]
  %v1021 = vld [vmem:[%s930 + $0x1a9] sm:$0xff]
  %v1022 = vld [vmem:[%s930 + $0x1b1] sm:$0xff]
  %v1023 = vld [vmem:[%s930 + $0x1c9] sm:$0xff]
  %v1024 = vld [vmem:[%s930 + $0x1d1] sm:$0xff]
  %v1025 = vld [vmem:[%s930 + $0x1e9] sm:$0xff]
  %v1026 = vld [vmem:[%s930 + $0x1f1] sm:$0xff]
  %v1027 = vld [vmem:[%s2] sm:$0xff]
  %v1028 = vld [vmem:[%s2 + $0x8] sm:$0xff]
  %v1029 = vld [vmem:[%s2 + $0x10] sm:$0xff]
  %v1030 = vld [vmem:[%s2 + $0x18] sm:$0xff]
  %v1031 = vld [vmem:[%s2 + $0x20] sm:$0xff]
  %v1032 = vld [vmem:[%s2 + $0x28] sm:$0xff]
  %v1033 = vld [vmem:[%s2 + $0x30] sm:$0xff]
  %v1034 = vld [vmem:[%s2 + $0x38] sm:$0xff]
  %v1035 = vld [vmem:[%s2 + $0x40] sm:$0xff]
  %v1036 = vld [vmem:[%s2 + $0x48] sm:$0xff]
  %v1037 = vld [vmem:[%s2 + $0x50] sm:$0xff]
  %v1038 = vld [vmem:[%s2 + $0x58] sm:$0xff]
  %v1039 = vld [vmem:[%s2 + $0x60] sm:$0xff]
  %v1040 = vld [vmem:[%s2 + $0x68] sm:$0xff]
  %v1041 = vld [vmem:[%s2 + $0x70] sm:$0xff]
  %v1042 = vld [vmem:[%s2 + $0x78] sm:$0xff]
  %v1043 = vld [vmem:[%s2 + $0x80] sm:$0xff]
  %v1044 = vld [vmem:[%s2 + $0x88] sm:$0xff]
  %v1045 = vld [vmem:[%s2 + $0x90] sm:$0xff]
  %v1046 = vld [vmem:[%s2 + $0x98] sm:$0xff]
  %v1047 = vld [vmem:[%s2 + $0xa0] sm:$0xff]
  %v1048 = vld [vmem:[%s2 + $0xa8] sm:$0xff]
  %v1049 = vld [vmem:[%s2 + $0xb0] sm:$0xff]
  %v1050 = vld [vmem:[%s2 + $0xb8] sm:$0xff]
  %v1051 = vld [vmem:[%s2 + $0xc0] sm:$0xff]
  %v1052 = vld [vmem:[%s2 + $0xc8] sm:$0xff]
  %v1053 = vld [vmem:[%s2 + $0xd0] sm:$0xff]
  %v1054 = vld [vmem:[%s2 + $0xd8] sm:$0xff]
  %v1055 = vld [vmem:[%s2 + $0xe0] sm:$0xff]
  %v1056 = vld [vmem:[%s2 + $0xe8] sm:$0xff]
  %v1057 = vld [vmem:[%s2 + $0xf0] sm:$0xff]
  %v1058 = vld [vmem:[%s2 + $0xf8] sm:$0xff]
  %v1059 = vld [vmem:[%s2 + $0x100] sm:$0xff]
  %v1060 = vld [vmem:[%s2 + $0x108] sm:$0xff]
  %v1061 = vld [vmem:[%s2 + $0x110] sm:$0xff]
  %v1062 = vld [vmem:[%s2 + $0x118] sm:$0xff]
  %v1063 = vld [vmem:[%s2 + $0x120] sm:$0xff]
  %v1064 = vld [vmem:[%s2 + $0x128] sm:$0xff]
  %v1065 = vld [vmem:[%s2 + $0x130] sm:$0xff]
  %v1066 = vld [vmem:[%s2 + $0x138] sm:$0xff]
  %v1067 = vld [vmem:[%s2 + $0x140] sm:$0xff]
  %v1068 = vld [vmem:[%s2 + $0x148] sm:$0xff]
  %v1069 = vld [vmem:[%s2 + $0x150] sm:$0xff]
  %v1070 = vld [vmem:[%s2 + $0x158] sm:$0xff]
  %v1071 = vld [vmem:[%s2 + $0x160] sm:$0xff]
  %v1072 = vld [vmem:[%s2 + $0x168] sm:$0xff]
  %v1073 = vld [vmem:[%s2 + $0x170] sm:$0xff]
  %v1074 = vld [vmem:[%s2 + $0x178] sm:$0xff]
  %v1075 = vld [vmem:[%s543 + $0x7] sm:$0xff]
  %v1076 = vld [vmem:[%s543 + $0xf] sm:$0xff]
  %v1077 = vld [vmem:[%s543 + $0x27] sm:$0xff]
  %v1078 = vld [vmem:[%s543 + $0x2f] sm:$0xff]
  %v1079 = vld [vmem:[%s543 + $0x47] sm:$0xff]
  %v1080 = vld [vmem:[%s543 + $0x4f] sm:$0xff]
  %v1081 = vld [vmem:[%s543 + $0x67] sm:$0xff]
  %v1082 = vld [vmem:[%s543 + $0x6f] sm:$0xff]
  %v1083 = vld [vmem:[%s543 + $0x87] sm:$0xff]
  %v1084 = vld [vmem:[%s543 + $0x8f] sm:$0xff]
  %v1085 = vld [vmem:[%s543 + $0xa7] sm:$0xff]
  %v1086 = vld [vmem:[%s543 + $0xaf] sm:$0xff]
  %v1087 = vld [vmem:[%s543 + $0xc7] sm:$0xff]
  %v1088 = vld [vmem:[%s543 + $0xcf] sm:$0xff]
  %v1089 = vld [vmem:[%s543 + $0xe7] sm:$0xff]
  %v1090 = vld [vmem:[%s543 + $0xef] sm:$0xff]
  %v1091 = vld [vmem:[%s543 + $0x107] sm:$0xff]
  %v1092 = vld [vmem:[%s543 + $0x10f] sm:$0xff]
  %v1093 = vld [vmem:[%s543 + $0x127] sm:$0xff]
  %v1094 = vld [vmem:[%s543 + $0x12f] sm:$0xff]
  %v1095 = vld [vmem:[%s543 + $0x147] sm:$0xff]
  %v1096 = vld [vmem:[%s543 + $0x14f] sm:$0xff]
  %v1097 = vld [vmem:[%s543 + $0x167] sm:$0xff]
  %v1098 = vld [vmem:[%s543 + $0x16f] sm:$0xff]
  %v1099 = vld [vmem:[%s543 + $0x187] sm:$0xff]
  %v1100 = vld [vmem:[%s543 + $0x18f] sm:$0xff]
  %v1101 = vld [vmem:[%s543 + $0x1a7] sm:$0xff]
  %v1102 = vld [vmem:[%s543 + $0x1af] sm:$0xff]
  %v1103 = vld [vmem:[%s543 + $0x1c7] sm:$0xff]
  %v1104 = vld [vmem:[%s543 + $0x1cf] sm:$0xff]
  %v1105 = vld [vmem:[%s543 + $0x1e7] sm:$0xff]
  %v1106 = vld [vmem:[%s543 + $0x1ef] sm:$0xff]
  %v1107 = vld [vmem:[%s543 + $0x8] sm:$0xff]
  %v1108 = vld [vmem:[%s543 + $0x10] sm:$0xff]
  %v1109 = vld [vmem:[%s543 + $0x28] sm:$0xff]
  %v1110 = vld [vmem:[%s543 + $0x30] sm:$0xff]
  %v1111 = vld [vmem:[%s543 + $0x48] sm:$0xff]
  %v1112 = vld [vmem:[%s543 + $0x50] sm:$0xff]
  %v1113 = vld [vmem:[%s543 + $0x68] sm:$0xff]
  %v1114 = vld [vmem:[%s543 + $0x70] sm:$0xff]
  %v1115 = vld [vmem:[%s543 + $0x88] sm:$0xff]
  %v1116 = vld [vmem:[%s543 + $0x90] sm:$0xff]
  %v1117 = vld [vmem:[%s543 + $0xa8] sm:$0xff]
  %v1118 = vld [vmem:[%s543 + $0xb0] sm:$0xff]
  %v1119 = vld [vmem:[%s543 + $0xc8] sm:$0xff]
  %v1120 = vld [vmem:[%s543 + $0xd0] sm:$0xff]
  %v1121 = vld [vmem:[%s543 + $0xe8] sm:$0xff]
  %v1122 = vld [vmem:[%s543 + $0xf0] sm:$0xff]
  %v1123 = vld [vmem:[%s543 + $0x108] sm:$0xff]
  %v1124 = vld [vmem:[%s543 + $0x110] sm:$0xff]
  %v1125 = vld [vmem:[%s543 + $0x128] sm:$0xff]
  %v1126 = vld [vmem:[%s543 + $0x130] sm:$0xff]
  %v1127 = vld [vmem:[%s543 + $0x148] sm:$0xff]
  %v1128 = vld [vmem:[%s543 + $0x150] sm:$0xff]
  %v1129 = vld [vmem:[%s543 + $0x168] sm:$0xff]
  %v1130 = vld [vmem:[%s543 + $0x170] sm:$0xff]
  %v1131 = vld [vmem:[%s543 + $0x188] sm:$0xff]
  %v1132 = vld [vmem:[%s543 + $0x190] sm:$0xff]
  %v1133 = vld [vmem:[%s543 + $0x1a8] sm:$0xff]
  %v1134 = vld [vmem:[%s543 + $0x1b0] sm:$0xff]
  %v1135 = vld [vmem:[%s543 + $0x1c8] sm:$0xff]
  %v1136 = vld [vmem:[%s543 + $0x1d0] sm:$0xff]
  %v1137 = vld [vmem:[%s543 + $0x1e8] sm:$0xff]
  %v1138 = vld [vmem:[%s543 + $0x1f0] sm:$0xff]
  %v1139 = vld [vmem:[%s543 + $0x9] sm:$0xff]
  %v1140 = vld [vmem:[%s543 + $0x11] sm:$0xff]
  %v1141 = vld [vmem:[%s543 + $0x29] sm:$0xff]
  %v1142 = vld [vmem:[%s543 + $0x31] sm:$0xff]
  %v1143 = vld [vmem:[%s543 + $0x49] sm:$0xff]
  %v1144 = vld [vmem:[%s543 + $0x51] sm:$0xff]
  %v1145 = vld [vmem:[%s543 + $0x69] sm:$0xff]
  %v1146 = vld [vmem:[%s543 + $0x71] sm:$0xff]
  %v1147 = vld [vmem:[%s543 + $0x89] sm:$0xff]
  %v1148 = vld [vmem:[%s543 + $0x91] sm:$0xff]
  %v1149 = vld [vmem:[%s543 + $0xa9] sm:$0xff]
  %v1150 = vld [vmem:[%s543 + $0xb1] sm:$0xff]
  %v1151 = vld [vmem:[%s543 + $0xc9] sm:$0xff]
  %v1152 = vld [vmem:[%s543 + $0xd1] sm:$0xff]
  %v1153 = vld [vmem:[%s543 + $0xe9] sm:$0xff]
  %v1154 = vld [vmem:[%s543 + $0xf1] sm:$0xff]
  %v1155 = vld [vmem:[%s543 + $0x109] sm:$0xff]
  %v1156 = vld [vmem:[%s543 + $0x111] sm:$0xff]
  %v1157 = vld [vmem:[%s543 + $0x129] sm:$0xff]
  %v1158 = vld [vmem:[%s543 + $0x131] sm:$0xff]
  %v1159 = vld [vmem:[%s543 + $0x149] sm:$0xff]
  %v1160 = vld [vmem:[%s543 + $0x151] sm:$0xff]
  %v1161 = vld [vmem:[%s543 + $0x169] sm:$0xff]
  %v1162 = vld [vmem:[%s543 + $0x171] sm:$0xff]
  %v1163 = vld [vmem:[%s543 + $0x189] sm:$0xff]
  %v1164 = vld [vmem:[%s543 + $0x191] sm:$0xff]
  %v1165 = vld [vmem:[%s543 + $0x1a9] sm:$0xff]
  %v1166 = vld [vmem:[%s543 + $0x1b1] sm:$0xff]
  %v1167 = vld [vmem:[%s543 + $0x1c9] sm:$0xff]
  %v1168 = vld [vmem:[%s543 + $0x1d1] sm:$0xff]
  %v1169 = vld [vmem:[%s543 + $0x1e9] sm:$0xff]
  %v1170 = vld [vmem:[%s543 + $0x1f1] sm:$0xff]
  %v1171 = vld [vmem:[%s801 + $0x7] sm:$0xff]
  %v1172 = vld [vmem:[%s801 + $0xf] sm:$0xff]
  %v1173 = vld [vmem:[%s801 + $0x27] sm:$0xff]
  %v1174 = vld [vmem:[%s801 + $0x2f] sm:$0xff]
  %v1175 = vld [vmem:[%s801 + $0x47] sm:$0xff]
  %v1176 = vld [vmem:[%s801 + $0x4f] sm:$0xff]
  %v1177 = vld [vmem:[%s801 + $0x67] sm:$0xff]
  %v1178 = vld [vmem:[%s801 + $0x6f] sm:$0xff]
  %v1179 = vld [vmem:[%s801 + $0x87] sm:$0xff]
  %v1180 = vld [vmem:[%s801 + $0x8f] sm:$0xff]
  %v1181 = vld [vmem:[%s801 + $0xa7] sm:$0xff]
  %v1182 = vld [vmem:[%s801 + $0xaf] sm:$0xff]
  %v1183 = vld [vmem:[%s801 + $0xc7] sm:$0xff]
  %v1184 = vld [vmem:[%s801 + $0xcf] sm:$0xff]
  %v1185 = vld [vmem:[%s801 + $0xe7] sm:$0xff]
  %v1186 = vld [vmem:[%s801 + $0xef] sm:$0xff]
  %v1187 = vld [vmem:[%s801 + $0x107] sm:$0xff]
  %v1188 = vld [vmem:[%s801 + $0x10f] sm:$0xff]
  %v1189 = vld [vmem:[%s801 + $0x127] sm:$0xff]
  %v1190 = vld [vmem:[%s801 + $0x12f] sm:$0xff]
  %v1191 = vld [vmem:[%s801 + $0x147] sm:$0xff]
  %v1192 = vld [vmem:[%s801 + $0x14f] sm:$0xff]
  %v1193 = vld [vmem:[%s801 + $0x167] sm:$0xff]
  %v1194 = vld [vmem:[%s801 + $0x16f] sm:$0xff]
  %v1195 = vld [vmem:[%s801 + $0x187] sm:$0xff]
  %v1196 = vld [vmem:[%s801 + $0x18f] sm:$0xff]
  %v1197 = vld [vmem:[%s801 + $0x1a7] sm:$0xff]
  %v1198 = vld [vmem:[%s801 + $0x1af] sm:$0xff]
  %v1199 = vld [vmem:[%s801 + $0x1c7] sm:$0xff]
  %v1200 = vld [vmem:[%s801 + $0x1cf] sm:$0xff]
  %v1201 = vld [vmem:[%s801 + $0x1e7] sm:$0xff]
  %v1202 = vld [vmem:[%s801 + $0x1ef] sm:$0xff]
  %v1203 = vld [vmem:[%s801 + $0x8] sm:$0xff]
  %v1204 = vld [vmem:[%s801 + $0x10] sm:$0xff]
  %v1205 = vld [vmem:[%s801 + $0x28] sm:$0xff]
  %v1206 = vld [vmem:[%s801 + $0x30] sm:$0xff]
  %v1207 = vld [vmem:[%s801 + $0x48] sm:$0xff]
  %v1208 = vld [vmem:[%s801 + $0x50] sm:$0xff]
  %v1209 = vld [vmem:[%s801 + $0x68] sm:$0xff]
  %v1210 = vld [vmem:[%s801 + $0x70] sm:$0xff]
  %v1211 = vld [vmem:[%s801 + $0x88] sm:$0xff]
  %v1212 = vld [vmem:[%s801 + $0x90] sm:$0xff]
  %v1213 = vld [vmem:[%s801 + $0xa8] sm:$0xff]
  %v1214 = vld [vmem:[%s801 + $0xb0] sm:$0xff]
  %v1215 = vld [vmem:[%s801 + $0xc8] sm:$0xff]
  %v1216 = vld [vmem:[%s801 + $0xd0] sm:$0xff]
  %v1217 = vld [vmem:[%s801 + $0xe8] sm:$0xff]
  %v1218 = vld [vmem:[%s801 + $0xf0] sm:$0xff]
  %v1219 = vld [vmem:[%s801 + $0x108] sm:$0xff]
  %v1220 = vld [vmem:[%s801 + $0x110] sm:$0xff]
  %v1221 = vld [vmem:[%s801 + $0x128] sm:$0xff]
  %v1222 = vld [vmem:[%s801 + $0x130] sm:$0xff]
  %v1223 = vld [vmem:[%s801 + $0x148] sm:$0xff]
  %v1224 = vld [vmem:[%s801 + $0x150] sm:$0xff]
  %v1225 = vld [vmem:[%s801 + $0x168] sm:$0xff]
  %v1226 = vld [vmem:[%s801 + $0x170] sm:$0xff]
  %v1227 = vld [vmem:[%s801 + $0x188] sm:$0xff]
  %v1228 = vld [vmem:[%s801 + $0x190] sm:$0xff]
  %v1229 = vld [vmem:[%s801 + $0x1a8] sm:$0xff]
  %v1230 = vld [vmem:[%s801 + $0x1b0] sm:$0xff]
  %v1231 = vld [vmem:[%s801 + $0x1c8] sm:$0xff]
  %v1232 = vld [vmem:[%s801 + $0x1d0] sm:$0xff]
  %v1233 = vld [vmem:[%s801 + $0x1e8] sm:$0xff]
  %v1234 = vld [vmem:[%s801 + $0x1f0] sm:$0xff]
  %v1235 = vld [vmem:[%s801 + $0x9] sm:$0xff]
  %v1236 = vld [vmem:[%s801 + $0x11] sm:$0xff]
  %v1237 = vld [vmem:[%s801 + $0x29] sm:$0xff]
  %v1238 = vld [vmem:[%s801 + $0x31] sm:$0xff]
  %v1239 = vld [vmem:[%s801 + $0x49] sm:$0xff]
  %v1240 = vld [vmem:[%s801 + $0x51] sm:$0xff]
  %v1241 = vld [vmem:[%s801 + $0x69] sm:$0xff]
  %v1242 = vld [vmem:[%s801 + $0x71] sm:$0xff]
  %v1243 = vld [vmem:[%s801 + $0x89] sm:$0xff]
  %v1244 = vld [vmem:[%s801 + $0x91] sm:$0xff]
  %v1245 = vld [vmem:[%s801 + $0xa9] sm:$0xff]
  %v1246 = vld [vmem:[%s801 + $0xb1] sm:$0xff]
  %v1247 = vld [vmem:[%s801 + $0xc9] sm:$0xff]
  %v1248 = vld [vmem:[%s801 + $0xd1] sm:$0xff]
  %v1249 = vld [vmem:[%s801 + $0xe9] sm:$0xff]
  %v1250 = vld [vmem:[%s801 + $0xf1] sm:$0xff]
  %v1251 = vld [vmem:[%s801 + $0x109] sm:$0xff]
  %v1252 = vld [vmem:[%s801 + $0x111] sm:$0xff]
  %v1253 = vld [vmem:[%s801 + $0x129] sm:$0xff]
  %v1254 = vld [vmem:[%s801 + $0x131] sm:$0xff]
  %v1255 = vld [vmem:[%s801 + $0x149] sm:$0xff]
  %v1256 = vld [vmem:[%s801 + $0x151] sm:$0xff]
  %v1257 = vld [vmem:[%s801 + $0x169] sm:$0xff]
  %v1258 = vld [vmem:[%s801 + $0x171] sm:$0xff]
  %v1259 = vld [vmem:[%s801 + $0x189] sm:$0xff]
  %v1260 = vld [vmem:[%s801 + $0x191] sm:$0xff]
  %v1261 = vld [vmem:[%s801 + $0x1a9] sm:$0xff]
  %v1262 = vld [vmem:[%s801 + $0x1b1] sm:$0xff]
  %v1263 = vld [vmem:[%s801 + $0x1c9] sm:$0xff]
  %v1264 = vld [vmem:[%s801 + $0x1d1] sm:$0xff]
  %v1265 = vld [vmem:[%s801 + $0x1e9] sm:$0xff]
  %v1266 = vld [vmem:[%s801 + $0x1f1] sm:$0xff]
  %s1267 = scalar_lea.vmem %s2, 384
  %v1268 = vld [vmem:[%s1267] sm:$0xff]
  %v1269 = vld [vmem:[%s1267 + $0x8] sm:$0xff]
  %v1270 = vld [vmem:[%s1267 + $0x10] sm:$0xff]
  %v1271 = vld [vmem:[%s1267 + $0x18] sm:$0xff]
  %v1272 = vld [vmem:[%s1267 + $0x20] sm:$0xff]
  %v1273 = vld [vmem:[%s1267 + $0x28] sm:$0xff]
  %v1274 = vld [vmem:[%s1267 + $0x30] sm:$0xff]
  %v1275 = vld [vmem:[%s1267 + $0x38] sm:$0xff]
  %v1276 = vld [vmem:[%s1267 + $0x40] sm:$0xff]
  %v1277 = vld [vmem:[%s1267 + $0x48] sm:$0xff]
  %v1278 = vld [vmem:[%s1267 + $0x50] sm:$0xff]
  %v1279 = vld [vmem:[%s1267 + $0x58] sm:$0xff]
  %v1280 = vld [vmem:[%s1267 + $0x60] sm:$0xff]
  %v1281 = vld [vmem:[%s1267 + $0x68] sm:$0xff]
  %v1282 = vld [vmem:[%s1267 + $0x70] sm:$0xff]
  %v1283 = vld [vmem:[%s1267 + $0x78] sm:$0xff]
  %v1284 = vld [vmem:[%s1267 + $0x80] sm:$0xff]
  %v1285 = vld [vmem:[%s1267 + $0x88] sm:$0xff]
  %v1286 = vld [vmem:[%s1267 + $0x90] sm:$0xff]
  %v1287 = vld [vmem:[%s1267 + $0x98] sm:$0xff]
  %v1288 = vld [vmem:[%s1267 + $0xa0] sm:$0xff]
  %v1289 = vld [vmem:[%s1267 + $0xa8] sm:$0xff]
  %v1290 = vld [vmem:[%s1267 + $0xb0] sm:$0xff]
  %v1291 = vld [vmem:[%s1267 + $0xb8] sm:$0xff]
  %v1292 = vld [vmem:[%s1267 + $0xc0] sm:$0xff]
  %v1293 = vld [vmem:[%s1267 + $0xc8] sm:$0xff]
  %v1294 = vld [vmem:[%s1267 + $0xd0] sm:$0xff]
  %v1295 = vld [vmem:[%s1267 + $0xd8] sm:$0xff]
  %v1296 = vld [vmem:[%s1267 + $0xe0] sm:$0xff]
  %v1297 = vld [vmem:[%s1267 + $0xe8] sm:$0xff]
  %v1298 = vld [vmem:[%s1267 + $0xf0] sm:$0xff]
  %v1299 = vld [vmem:[%s1267 + $0xf8] sm:$0xff]
  %v1300 = vld [vmem:[%s1267 + $0x100] sm:$0xff]
  %v1301 = vld [vmem:[%s1267 + $0x108] sm:$0xff]
  %v1302 = vld [vmem:[%s1267 + $0x110] sm:$0xff]
  %v1303 = vld [vmem:[%s1267 + $0x118] sm:$0xff]
  %v1304 = vld [vmem:[%s1267 + $0x120] sm:$0xff]
  %v1305 = vld [vmem:[%s1267 + $0x128] sm:$0xff]
  %v1306 = vld [vmem:[%s1267 + $0x130] sm:$0xff]
  %v1307 = vld [vmem:[%s1267 + $0x138] sm:$0xff]
  %v1308 = vld [vmem:[%s1267 + $0x140] sm:$0xff]
  %v1309 = vld [vmem:[%s1267 + $0x148] sm:$0xff]
  %v1310 = vld [vmem:[%s1267 + $0x150] sm:$0xff]
  %v1311 = vld [vmem:[%s1267 + $0x158] sm:$0xff]
  %v1312 = vld [vmem:[%s1267 + $0x160] sm:$0xff]
  %v1313 = vld [vmem:[%s1267 + $0x168] sm:$0xff]
  %v1314 = vld [vmem:[%s1267 + $0x170] sm:$0xff]
  %v1315 = vld [vmem:[%s1267 + $0x178] sm:$0xff]
  %1316 = vmatprep.subr.mxu0 0.0
  %1317 = vmatpush1.msra.mxu0 %v1268
  %1318 = vmatprep.subr.mxu0 0.0
  %1319 = vmatpush1.msra.mxu0 %v1269
  %1320 = vmatprep.subr.mxu0 0.0
  %1321 = vmatpush1.msra.mxu0 %v1270
  %1322 = vmatprep.subr.mxu0 0.0
  %1323 = vmatpush1.msra.mxu0 %v1271
  %1324 = vmatprep.subr.mxu0 0.0
  %1325 = vmatpush1.msra.mxu0 %v1272
  %1326 = vmatprep.subr.mxu0 0.0
  %1327 = vmatpush1.msra.mxu0 %v1273
  %1328 = vmatprep.subr.mxu0 0.0
  %1329 = vmatpush1.msra.mxu0 %v1274
  %1330 = vmatprep.subr.mxu0 0.0
  %1331 = vmatpush1.msra.mxu0 %v1275
  %1332 = vmatprep.subr.mxu0 0.0
  %1333 = vmatpush1.msra.mxu0 %v1276
  %1334 = vmatprep.subr.mxu0 0.0
  %1335 = vmatpush1.msra.mxu0 %v1277
  %1336 = vmatprep.subr.mxu0 0.0
  %1337 = vmatpush1.msra.mxu0 %v1278
  %1338 = vmatprep.subr.mxu0 0.0
  %1339 = vmatpush1.msra.mxu0 %v1279
  %1340 = vmatprep.subr.mxu0 0.0
  %1341 = vmatpush1.msra.mxu0 %v1280
  %1342 = vmatprep.subr.mxu0 0.0
  %1343 = vmatpush1.msra.mxu0 %v1281
  %1344 = vmatprep.subr.mxu0 0.0
  %1345 = vmatpush1.msra.mxu0 %v1282
  %1346 = vmatprep.subr.mxu0 0.0
  %1347 = vmatpush1.msra.mxu0 %v1283
  %1348 = vmatprep.subr.mxu0 0.0
  %1349 = vmatpush1.msra.mxu0 %v1284
  %1350 = vmatprep.subr.mxu0 0.0
  %1351 = vmatpush1.msra.mxu0 %v1285
  %1352 = vmatprep.subr.mxu0 0.0
  %1353 = vmatpush1.msra.mxu0 %v1286
  %1354 = vmatprep.subr.mxu0 0.0
  %1355 = vmatpush1.msra.mxu0 %v1287
  %1356 = vmatprep.subr.mxu0 0.0
  %1357 = vmatpush1.msra.mxu0 %v1288
  %1358 = vmatprep.subr.mxu0 0.0
  %1359 = vmatpush1.msra.mxu0 %v1289
  %1360 = vmatprep.subr.mxu0 0.0
  %1361 = vmatpush1.msra.mxu0 %v1290
  %1362 = vmatprep.subr.mxu0 0.0
  %1363 = vmatpush1.msra.mxu0 %v1291
  %1364 = vmatprep.subr.mxu0 0.0
  %1365 = vmatpush1.msra.mxu0 %v1292
  %1366 = vmatprep.subr.mxu0 0.0
  %1367 = vmatpush1.msra.mxu0 %v1293
  %1368 = vmatprep.subr.mxu0 0.0
  %1369 = vmatpush1.msra.mxu0 %v1294
  %1370 = vmatprep.subr.mxu0 0.0
  %1371 = vmatpush1.msra.mxu0 %v1295
  %1372 = vmatprep.subr.mxu0 0.0
  %1373 = vmatpush1.msra.mxu0 %v1296
  %1374 = vmatprep.subr.mxu0 0.0
  %1375 = vmatpush1.msra.mxu0 %v1297
  %1376 = vmatprep.subr.mxu0 0.0
  %1377 = vmatpush1.msra.mxu0 %v1298
  %1378 = vmatprep.subr.mxu0 0.0
  %1379 = vmatpush1.msra.mxu0 %v1299
  %1380 = vmatprep.mubr.f32.mxu0 %v1107
  %1381 = vmatmul.mubr.f32.gmra.mrb[0].mxu0 %v1075
  %v1382 = vpop.f32.mrb[0].mxu0
  %v1383 = vadd.f32 0.0, %v1382
  %v1384 = vpop.f32.mrb[0].mxu0
  %1385 = vmatprep.mubr.f32.mxu0 %v1108
  %1386 = vmatmul.mubr.f32.gmra.mrb[0].mxu0 %v1076
  %v1387 = vpop.f32.mrb[0].mxu0
  %v1388 = vadd.f32 0.0, %v1387
  %v1389 = vpop.f32.mrb[0].mxu0
  %1390 = vmatprep.mubr.f32.mxu0 %v1109
  %1391 = vmatmul.mubr.f32.gmra.mrb[0].mxu0 %v1077
  %v1392 = vpop.f32.mrb[0].mxu0
  %v1393 = vadd.f32 0.0, %v1392
  %v1394 = vpop.f32.mrb[0].mxu0
  %1395 = vmatprep.mubr.f32.mxu0 %v1110
  %1396 = vmatmul.mubr.f32.gmra.mrb[0].mxu0 %v1078
  %v1397 = vpop.f32.mrb[0].mxu0
  %v1398 = vadd.f32 0.0, %v1397
  %v1399 = vpop.f32.mrb[0].mxu0
  %1400 = vmatprep.mubr.f32.mxu0 %v1111
  %1401 = vmatmul.mubr.f32.gmra.mrb[0].mxu0 %v1079
  %v1402 = vpop.f32.mrb[0].mxu0
  %v1403 = vadd.f32 0.0, %v1402
  %v1404 = vpop.f32.mrb[0].mxu0
  %1405 = vmatprep.mubr.f32.mxu0 %v1112
  %1406 = vmatmul.mubr.f32.gmra.mrb[0].mxu0 %v1080
  %v1407 = vpop.f32.mrb[0].mxu0
  %v1408 = vadd.f32 0.0, %v1407
  %v1409 = vpop.f32.mrb[0].mxu0
  %1410 = vmatprep.mubr.f32.mxu0 %v1113
  %1411 = vmatmul.mubr.f32.gmra.mrb[0].mxu0 %v1081
  %v1412 = vpop.f32.mrb[0].mxu0
  %v1413 = vadd.f32 0.0, %v1412
  %v1414 = vpop.f32.mrb[0].mxu0
  %1415 = vmatprep.mubr.f32.mxu0 %v1114
  %1416 = vmatmul.mubr.f32.gmra.mrb[0].mxu0 %v1082
  %v1417 = vpop.f32.mrb[0].mxu0
  %v1418 = vadd.f32 0.0, %v1417
  %v1419 = vpop.f32.mrb[0].mxu0
  %1420 = vmatprep.mubr.f32.mxu0 %v1115
  %1421 = vmatmul.mubr.f32.gmra.mrb[0].mxu0 %v1083
  %v1422 = vpop.f32.mrb[0].mxu0
  %v1423 = vadd.f32 0.0, %v1422
  %v1424 = vpop.f32.mrb[0].mxu0
  %1425 = vmatprep.mubr.f32.mxu0 %v1116
  %1426 = vmatmul.mubr.f32.gmra.mrb[0].mxu0 %v1084
  %v1427 = vpop.f32.mrb[0].mxu0
  %v1428 = vadd.f32 0.0, %v1427
  %v1429 = vpop.f32.mrb[0].mxu0
  %1430 = vmatprep.mubr.f32.mxu0 %v1117
  %1431 = vmatmul.mubr.f32.gmra.mrb[0].mxu0 %v1085
  %v1432 = vpop.f32.mrb[0].mxu0
  %v1433 = vadd.f32 0.0, %v1432
  %v1434 = vpop.f32.mrb[0].mxu0
  %1435 = vmatprep.mubr.f32.mxu0 %v1118
  %1436 = vmatmul.mubr.f32.gmra.mrb[0].mxu0 %v1086
  %v1437 = vpop.f32.mrb[0].mxu0
  %v1438 = vadd.f32 0.0, %v1437
  %v1439 = vpop.f32.mrb[0].mxu0
  %1440 = vmatprep.mubr.f32.mxu0 %v1119
  %1441 = vmatmul.mubr.f32.gmra.mrb[0].mxu0 %v1087
  %v1442 = vpop.f32.mrb[0].mxu0
  %v1443 = vadd.f32 0.0, %v1442
  %v1444 = vpop.f32.mrb[0].mxu0
  %1445 = vmatprep.mubr.f32.mxu0 %v1120
  %1446 = vmatmul.mubr.f32.gmra.mrb[0].mxu0 %v1088
  %v1447 = vpop.f32.mrb[0].mxu0
  %v1448 = vadd.f32 0.0, %v1447
  %v1449 = vpop.f32.mrb[0].mxu0
  %1450 = vmatprep.mubr.f32.mxu0 %v1121
  %1451 = vmatmul.mubr.f32.gmra.mrb[0].mxu0 %v1089
  %v1452 = vpop.f32.mrb[0].mxu0
  %v1453 = vadd.f32 0.0, %v1452
  %v1454 = vpop.f32.mrb[0].mxu0
  %1455 = vmatprep.mubr.f32.mxu0 %v1122
  %1456 = vmatmul.mubr.f32.gmra.mrb[0].mxu0 %v1090
  %v1457 = vpop.f32.mrb[0].mxu0
  %v1458 = vadd.f32 0.0, %v1457
  %v1459 = vpop.f32.mrb[0].mxu0
  %1460 = vmatprep.mubr.f32.mxu0 %v1123
  %1461 = vmatmul.mubr.f32.gmra.mrb[0].mxu0 %v1091
  %v1462 = vpop.f32.mrb[0].mxu0
  %v1463 = vadd.f32 0.0, %v1462
  %v1464 = vpop.f32.mrb[0].mxu0
  %1465 = vmatprep.mubr.f32.mxu0 %v1124
  %1466 = vmatmul.mubr.f32.gmra.mrb[0].mxu0 %v1092
  %v1467 = vpop.f32.mrb[0].mxu0
  %v1468 = vadd.f32 0.0, %v1467
  %v1469 = vpop.f32.mrb[0].mxu0
  %1470 = vmatprep.mubr.f32.mxu0 %v1125
  %1471 = vmatmul.mubr.f32.gmra.mrb[0].mxu0 %v1093
  %v1472 = vpop.f32.mrb[0].mxu0
  %v1473 = vadd.f32 0.0, %v1472
  %v1474 = vpop.f32.mrb[0].mxu0
  %1475 = vmatprep.mubr.f32.mxu0 %v1126
  %1476 = vmatmul.mubr.f32.gmra.mrb[0].mxu0 %v1094
  %v1477 = vpop.f32.mrb[0].mxu0
  %v1478 = vadd.f32 0.0, %v1477
  %v1479 = vpop.f32.mrb[0].mxu0
  %1480 = vmatprep.mubr.f32.mxu0 %v1127
  %1481 = vmatmul.mubr.f32.gmra.mrb[0].mxu0 %v1095
  %v1482 = vpop.f32.mrb[0].mxu0
  %v1483 = vadd.f32 0.0, %v1482
  %v1484 = vpop.f32.mrb[0].mxu0
  %1485 = vmatprep.mubr.f32.mxu0 %v1128
  %1486 = vmatmul.mubr.f32.gmra.mrb[0].mxu0 %v1096
  %v1487 = vpop.f32.mrb[0].mxu0
  %v1488 = vadd.f32 0.0, %v1487
  %v1489 = vpop.f32.mrb[0].mxu0
  %1490 = vmatprep.mubr.f32.mxu0 %v1129
  %1491 = vmatmul.mubr.f32.gmra.mrb[0].mxu0 %v1097
  %v1492 = vpop.f32.mrb[0].mxu0
  %v1493 = vadd.f32 0.0, %v1492
  %v1494 = vpop.f32.mrb[0].mxu0
  %1495 = vmatprep.mubr.f32.mxu0 %v1130
  %1496 = vmatmul.mubr.f32.gmra.mrb[0].mxu0 %v1098
  %v1497 = vpop.f32.mrb[0].mxu0
  %v1498 = vadd.f32 0.0, %v1497
  %v1499 = vpop.f32.mrb[0].mxu0
  %1500 = vmatprep.mubr.f32.mxu0 %v1131
  %1501 = vmatmul.mubr.f32.gmra.mrb[0].mxu0 %v1099
  %v1502 = vpop.f32.mrb[0].mxu0
  %v1503 = vadd.f32 0.0, %v1502
  %v1504 = vpop.f32.mrb[0].mxu0
  %1505 = vmatprep.mubr.f32.mxu0 %v1132
  %1506 = vmatmul.mubr.f32.gmra.mrb[0].mxu0 %v1100
  %v1507 = vpop.f32.mrb[0].mxu0
  %v1508 = vadd.f32 0.0, %v1507
  %v1509 = vpop.f32.mrb[0].mxu0
  %1510 = vmatprep.mubr.f32.mxu0 %v1133
  %1511 = vmatmul.mubr.f32.gmra.mrb[0].mxu0 %v1101
  %v1512 = vpop.f32.mrb[0].mxu0
  %v1513 = vadd.f32 0.0, %v1512
  %v1514 = vpop.f32.mrb[0].mxu0
  %1515 = vmatprep.mubr.f32.mxu0 %v1134
  %1516 = vmatmul.mubr.f32.gmra.mrb[0].mxu0 %v1102
  %v1517 = vpop.f32.mrb[0].mxu0
  %v1518 = vadd.f32 0.0, %v1517
  %v1519 = vpop.f32.mrb[0].mxu0
  %1520 = vmatprep.mubr.f32.mxu0 %v1135
  %1521 = vmatmul.mubr.f32.gmra.mrb[0].mxu0 %v1103
  %v1522 = vpop.f32.mrb[0].mxu0
  %v1523 = vadd.f32 0.0, %v1522
  %v1524 = vpop.f32.mrb[0].mxu0
  %1525 = vmatprep.mubr.f32.mxu0 %v1136
  %1526 = vmatmul.mubr.f32.gmra.mrb[0].mxu0 %v1104
  %v1527 = vpop.f32.mrb[0].mxu0
  %v1528 = vadd.f32 0.0, %v1527
  %v1529 = vpop.f32.mrb[0].mxu0
  %1530 = vmatprep.mubr.f32.mxu0 %v1137
  %1531 = vmatmul.mubr.f32.gmra.mrb[0].mxu0 %v1105
  %v1532 = vpop.f32.mrb[0].mxu0
  %v1533 = vadd.f32 0.0, %v1532
  %v1534 = vpop.f32.mrb[0].mxu0
  %1535 = vmatprep.mubr.f32.mxu0 %v1138
  %1536 = vmatmul.mubr.f32.gmra.mrb[0].mxu0 %v1106
  %v1537 = vpop.f32.mrb[0].mxu0
  %v1538 = vadd.f32 0.0, %v1537
  %v1539 = vpop.f32.mrb[0].mxu0
  %1540 = vmatprep.mubr.f32.mxu0 %v1203
  %1541 = vmatmul.mubr.f32.gmra.mrb[0].mxu0 %v1171
  %v1542 = vpop.f32.mrb[0].mxu0
  %v1543 = vadd.f32 0.0, %v1542
  %v1544 = vpop.f32.mrb[0].mxu0
  %1545 = vmatprep.mubr.f32.mxu0 %v1204
  %1546 = vmatmul.mubr.f32.gmra.mrb[0].mxu0 %v1172
  %v1547 = vpop.f32.mrb[0].mxu0
  %v1548 = vadd.f32 0.0, %v1547
  %v1549 = vpop.f32.mrb[0].mxu0
  %1550 = vmatprep.mubr.f32.mxu0 %v1205
  %1551 = vmatmul.mubr.f32.gmra.mrb[0].mxu0 %v1173
  %v1552 = vpop.f32.mrb[0].mxu0
  %v1553 = vadd.f32 0.0, %v1552
  %v1554 = vpop.f32.mrb[0].mxu0
  %1555 = vmatprep.mubr.f32.mxu0 %v1206
  %1556 = vmatmul.mubr.f32.gmra.mrb[0].mxu0 %v1174
  %v1557 = vpop.f32.mrb[0].mxu0
  %v1558 = vadd.f32 0.0, %v1557
  %v1559 = vpop.f32.mrb[0].mxu0
  %1560 = vmatprep.mubr.f32.mxu0 %v1207
  %1561 = vmatmul.mubr.f32.gmra.mrb[0].mxu0 %v1175
  %v1562 = vpop.f32.mrb[0].mxu0
  %v1563 = vadd.f32 0.0, %v1562
  %v1564 = vpop.f32.mrb[0].mxu0
  %1565 = vmatprep.mubr.f32.mxu0 %v1208
  %1566 = vmatmul.mubr.f32.gmra.mrb[0].mxu0 %v1176
  %v1567 = vpop.f32.mrb[0].mxu0
  %v1568 = vadd.f32 0.0, %v1567
  %v1569 = vpop.f32.mrb[0].mxu0
  %1570 = vmatprep.mubr.f32.mxu0 %v1209
  %1571 = vmatmul.mubr.f32.gmra.mrb[0].mxu0 %v1177
  %v1572 = vpop.f32.mrb[0].mxu0
  %v1573 = vadd.f32 0.0, %v1572
  %v1574 = vpop.f32.mrb[0].mxu0
  %1575 = vmatprep.mubr.f32.mxu0 %v1210
  %1576 = vmatmul.mubr.f32.gmra.mrb[0].mxu0 %v1178
  %v1577 = vpop.f32.mrb[0].mxu0
  %v1578 = vadd.f32 0.0, %v1577
  %v1579 = vpop.f32.mrb[0].mxu0
  %1580 = vmatprep.mubr.f32.mxu0 %v1211
  %1581 = vmatmul.mubr.f32.gmra.mrb[0].mxu0 %v1179
  %v1582 = vpop.f32.mrb[0].mxu0
  %v1583 = vadd.f32 0.0, %v1582
  %v1584 = vpop.f32.mrb[0].mxu0
  %1585 = vmatprep.mubr.f32.mxu0 %v1212
  %1586 = vmatmul.mubr.f32.gmra.mrb[0].mxu0 %v1180
  %v1587 = vpop.f32.mrb[0].mxu0
  %v1588 = vadd.f32 0.0, %v1587
  %v1589 = vpop.f32.mrb[0].mxu0
  %1590 = vmatprep.mubr.f32.mxu0 %v1213
  %1591 = vmatmul.mubr.f32.gmra.mrb[0].mxu0 %v1181
  %v1592 = vpop.f32.mrb[0].mxu0
  %v1593 = vadd.f32 0.0, %v1592
  %v1594 = vpop.f32.mrb[0].mxu0
  %1595 = vmatprep.mubr.f32.mxu0 %v1214
  %1596 = vmatmul.mubr.f32.gmra.mrb[0].mxu0 %v1182
  %v1597 = vpop.f32.mrb[0].mxu0
  %v1598 = vadd.f32 0.0, %v1597
  %v1599 = vpop.f32.mrb[0].mxu0
  %1600 = vmatprep.mubr.f32.mxu0 %v1215
  %1601 = vmatmul.mubr.f32.gmra.mrb[0].mxu0 %v1183
  %v1602 = vpop.f32.mrb[0].mxu0
  %v1603 = vadd.f32 0.0, %v1602
  %v1604 = vpop.f32.mrb[0].mxu0
  %1605 = vmatprep.mubr.f32.mxu0 %v1216
  %1606 = vmatmul.mubr.f32.gmra.mrb[0].mxu0 %v1184
  %v1607 = vpop.f32.mrb[0].mxu0
  %v1608 = vadd.f32 0.0, %v1607
  %v1609 = vpop.f32.mrb[0].mxu0
  %1610 = vmatprep.mubr.f32.mxu0 %v1217
  %1611 = vmatmul.mubr.f32.gmra.mrb[0].mxu0 %v1185
  %v1612 = vpop.f32.mrb[0].mxu0
  %v1613 = vadd.f32 0.0, %v1612
  %v1614 = vpop.f32.mrb[0].mxu0
  %1615 = vmatprep.mubr.f32.mxu0 %v1218
  %1616 = vmatmul.mubr.f32.gmra.mrb[0].mxu0 %v1186
  %v1617 = vpop.f32.mrb[0].mxu0
  %v1618 = vadd.f32 0.0, %v1617
  %v1619 = vpop.f32.mrb[0].mxu0
  %1620 = vmatprep.mubr.f32.mxu0 %v1219
  %1621 = vmatmul.mubr.f32.gmra.mrb[0].mxu0 %v1187
  %v1622 = vpop.f32.mrb[0].mxu0
  %v1623 = vadd.f32 0.0, %v1622
  %v1624 = vpop.f32.mrb[0].mxu0
  %1625 = vmatprep.mubr.f32.mxu0 %v1220
  %1626 = vmatmul.mubr.f32.gmra.mrb[0].mxu0 %v1188
  %v1627 = vpop.f32.mrb[0].mxu0
  %v1628 = vadd.f32 0.0, %v1627
  %v1629 = vpop.f32.mrb[0].mxu0
  %1630 = vmatprep.mubr.f32.mxu0 %v1221
  %1631 = vmatmul.mubr.f32.gmra.mrb[0].mxu0 %v1189
  %v1632 = vpop.f32.mrb[0].mxu0
  %v1633 = vadd.f32 0.0, %v1632
  %v1634 = vpop.f32.mrb[0].mxu0
  %1635 = vmatprep.mubr.f32.mxu0 %v1222
  %1636 = vmatmul.mubr.f32.gmra.mrb[0].mxu0 %v1190
  %v1637 = vpop.f32.mrb[0].mxu0
  %v1638 = vadd.f32 0.0, %v1637
  %v1639 = vpop.f32.mrb[0].mxu0
  %1640 = vmatprep.mubr.f32.mxu0 %v1223
  %1641 = vmatmul.mubr.f32.gmra.mrb[0].mxu0 %v1191
  %v1642 = vpop.f32.mrb[0].mxu0
  %v1643 = vadd.f32 0.0, %v1642
  %v1644 = vpop.f32.mrb[0].mxu0
  %1645 = vmatprep.mubr.f32.mxu0 %v1224
  %1646 = vmatmul.mubr.f32.gmra.mrb[0].mxu0 %v1192
  %v1647 = vpop.f32.mrb[0].mxu0
  %v1648 = vadd.f32 0.0, %v1647
  %v1649 = vpop.f32.mrb[0].mxu0
  %1650 = vmatprep.mubr.f32.mxu0 %v1225
  %1651 = vmatmul.mubr.f32.gmra.mrb[0].mxu0 %v1193
  %v1652 = vpop.f32.mrb[0].mxu0
  %v1653 = vadd.f32 0.0, %v1652
  %v1654 = vpop.f32.mrb[0].mxu0
  %1655 = vmatprep.mubr.f32.mxu0 %v1226
  %1656 = vmatmul.mubr.f32.gmra.mrb[0].mxu0 %v1194
  %v1657 = vpop.f32.mrb[0].mxu0
  %v1658 = vadd.f32 0.0, %v1657
  %v1659 = vpop.f32.mrb[0].mxu0
  %1660 = vmatprep.mubr.f32.mxu0 %v1227
  %1661 = vmatmul.mubr.f32.gmra.mrb[0].mxu0 %v1195
  %v1662 = vpop.f32.mrb[0].mxu0
  %v1663 = vadd.f32 0.0, %v1662
  %v1664 = vpop.f32.mrb[0].mxu0
  %1665 = vmatprep.mubr.f32.mxu0 %v1228
  %1666 = vmatmul.mubr.f32.gmra.mrb[0].mxu0 %v1196
  %v1667 = vpop.f32.mrb[0].mxu0
  %v1668 = vadd.f32 0.0, %v1667
  %v1669 = vpop.f32.mrb[0].mxu0
  %1670 = vmatprep.mubr.f32.mxu0 %v1229
  %1671 = vmatmul.mubr.f32.gmra.mrb[0].mxu0 %v1197
  %v1672 = vpop.f32.mrb[0].mxu0
  %v1673 = vadd.f32 0.0, %v1672
  %v1674 = vpop.f32.mrb[0].mxu0
  %1675 = vmatprep.mubr.f32.mxu0 %v1230
  %1676 = vmatmul.mubr.f32.gmra.mrb[0].mxu0 %v1198
  %v1677 = vpop.f32.mrb[0].mxu0
  %v1678 = vadd.f32 0.0, %v1677
  %v1679 = vpop.f32.mrb[0].mxu0
  %1680 = vmatprep.mubr.f32.mxu0 %v1231
  %1681 = vmatmul.mubr.f32.gmra.mrb[0].mxu0 %v1199
  %v1682 = vpop.f32.mrb[0].mxu0
  %v1683 = vadd.f32 0.0, %v1682
  %v1684 = vpop.f32.mrb[0].mxu0
  %1685 = vmatprep.mubr.f32.mxu0 %v1232
  %1686 = vmatmul.mubr.f32.gmra.mrb[0].mxu0 %v1200
  %v1687 = vpop.f32.mrb[0].mxu0
  %v1688 = vadd.f32 0.0, %v1687
  %v1689 = vpop.f32.mrb[0].mxu0
  %1690 = vmatprep.mubr.f32.mxu0 %v1233
  %1691 = vmatmul.mubr.f32.gmra.mrb[0].mxu0 %v1201
  %v1692 = vpop.f32.mrb[0].mxu0
  %v1693 = vadd.f32 0.0, %v1692
  %v1694 = vpop.f32.mrb[0].mxu0
  %1695 = vmatprep.mubr.f32.mxu0 %v1234
  %1696 = vmatmul.mubr.f32.gmra.mrb[0].mxu0 %v1202
  %v1697 = vpop.f32.mrb[0].mxu0
  %v1698 = vadd.f32 0.0, %v1697
  %v1699 = vpop.f32.mrb[0].mxu0
  %1700 = vdwg.mxu0
  %1701 = vmatprep.subr.mxu0 0.0
  %1702 = vmatpush1.msra.mxu0 %v1300
  %1703 = vmatprep.subr.mxu0 0.0
  %1704 = vmatpush1.msra.mxu0 %v1301
  %1705 = vmatprep.subr.mxu0 0.0
  %1706 = vmatpush1.msra.mxu0 %v1302
  %1707 = vmatprep.subr.mxu0 0.0
  %1708 = vmatpush1.msra.mxu0 %v1303
  %1709 = vmatprep.subr.mxu0 0.0
  %1710 = vmatpush1.msra.mxu0 %v1304
  %1711 = vmatprep.subr.mxu0 0.0
  %1712 = vmatpush1.msra.mxu0 %v1305
  %1713 = vmatprep.subr.mxu0 0.0
  %1714 = vmatpush1.msra.mxu0 %v1306
  %1715 = vmatprep.subr.mxu0 0.0
  %1716 = vmatpush1.msra.mxu0 %v1307
  %1717 = vmatprep.subr.mxu0 0.0
  %1718 = vmatpush1.msra.mxu0 %v1308
  %1719 = vmatprep.subr.mxu0 0.0
  %1720 = vmatpush1.msra.mxu0 %v1309
  %1721 = vmatprep.subr.mxu0 0.0
  %1722 = vmatpush1.msra.mxu0 %v1310
  %1723 = vmatprep.subr.mxu0 0.0
  %1724 = vmatpush1.msra.mxu0 %v1311
  %1725 = vmatprep.subr.mxu0 0.0
  %1726 = vmatpush1.msra.mxu0 %v1312
  %1727 = vmatprep.subr.mxu0 0.0
  %1728 = vmatpush1.msra.mxu0 %v1313
  %1729 = vmatprep.subr.mxu0 0.0
  %1730 = vmatpush1.msra.mxu0 %v1314
  %1731 = vmatprep.subr.mxu0 0.0
  %1732 = vmatpush1.msra.mxu0 %v1315
  %1733 = vmatprep.subr.mxu0 0.0
  %1734 = vmatpush1.msra.mxu0 0.0
  %1735 = vmatprep.subr.mxu0 0.0
  %1736 = vmatpush1.msra.mxu0 0.0
  %1737 = vmatprep.subr.mxu0 0.0
  %1738 = vmatpush1.msra.mxu0 0.0
  %1739 = vmatprep.subr.mxu0 0.0
  %1740 = vmatpush1.msra.mxu0 0.0
  %1741 = vmatprep.subr.mxu0 0.0
  %1742 = vmatpush1.msra.mxu0 0.0
  %1743 = vmatprep.subr.mxu0 0.0
  %1744 = vmatpush1.msra.mxu0 0.0
  %1745 = vmatprep.subr.mxu0 0.0
  %1746 = vmatpush1.msra.mxu0 0.0
  %1747 = vmatprep.subr.mxu0 0.0
  %1748 = vmatpush1.msra.mxu0 0.0
  %1749 = vmatprep.subr.mxu0 0.0
  %1750 = vmatpush1.msra.mxu0 0.0
  %1751 = vmatprep.subr.mxu0 0.0
  %1752 = vmatpush1.msra.mxu0 0.0
  %1753 = vmatprep.subr.mxu0 0.0
  %1754 = vmatpush1.msra.mxu0 0.0
  %1755 = vmatprep.subr.mxu0 0.0
  %1756 = vmatpush1.msra.mxu0 0.0
  %1757 = vmatprep.subr.mxu0 0.0
  %1758 = vmatpush1.msra.mxu0 0.0
  %1759 = vmatprep.subr.mxu0 0.0
  %1760 = vmatpush1.msra.mxu0 0.0
  %1761 = vmatprep.subr.mxu0 0.0
  %1762 = vmatpush1.msra.mxu0 0.0
  %1763 = vmatprep.subr.mxu0 0.0
  %1764 = vmatpush1.msra.mxu0 0.0
  %1765 = vmatprep.mubr.f32.mxu0 0.0
  %1766 = vmatmul.mubr.f32.gmra.mrb[0].mxu0 %v1139
  %v1767 = vpop.f32.mrb[0].mxu0
  %v1768 = vadd.f32 %v1383, %v1767
  %v1769 = vpop.f32.mrb[0].mxu0
  %1770 = vmatprep.mubr.f32.mxu0 0.0
  %1771 = vmatmul.mubr.f32.gmra.mrb[0].mxu0 %v1140
  %v1772 = vpop.f32.mrb[0].mxu0
  %v1773 = vadd.f32 %v1388, %v1772
  %v1774 = vpop.f32.mrb[0].mxu0
  %1775 = vmatprep.mubr.f32.mxu0 0.0
  %1776 = vmatmul.mubr.f32.gmra.mrb[0].mxu0 %v1141
  %v1777 = vpop.f32.mrb[0].mxu0
  %v1778 = vadd.f32 %v1393, %v1777
  %v1779 = vpop.f32.mrb[0].mxu0
  %1780 = vmatprep.mubr.f32.mxu0 0.0
  %1781 = vmatmul.mubr.f32.gmra.mrb[0].mxu0 %v1142
  %v1782 = vpop.f32.mrb[0].mxu0
  %v1783 = vadd.f32 %v1398, %v1782
  %v1784 = vpop.f32.mrb[0].mxu0
  %1785 = vmatprep.mubr.f32.mxu0 0.0
  %1786 = vmatmul.mubr.f32.gmra.mrb[0].mxu0 %v1143
  %v1787 = vpop.f32.mrb[0].mxu0
  %v1788 = vadd.f32 %v1403, %v1787
  %v1789 = vpop.f32.mrb[0].mxu0
  %1790 = vmatprep.mubr.f32.mxu0 0.0
  %1791 = vmatmul.mubr.f32.gmra.mrb[0].mxu0 %v1144
  %v1792 = vpop.f32.mrb[0].mxu0
  %v1793 = vadd.f32 %v1408, %v1792
  %v1794 = vpop.f32.mrb[0].mxu0
  %1795 = vmatprep.mubr.f32.mxu0 0.0
  %1796 = vmatmul.mubr.f32.gmra.mrb[0].mxu0 %v1145
  %v1797 = vpop.f32.mrb[0].mxu0
  %v1798 = vadd.f32 %v1413, %v1797
  %v1799 = vpop.f32.mrb[0].mxu0
  %1800 = vmatprep.mubr.f32.mxu0 0.0
  %1801 = vmatmul.mubr.f32.gmra.mrb[0].mxu0 %v1146
  %v1802 = vpop.f32.mrb[0].mxu0
  %v1803 = vadd.f32 %v1418, %v1802
  %v1804 = vpop.f32.mrb[0].mxu0
  %1805 = vmatprep.mubr.f32.mxu0 0.0
  %1806 = vmatmul.mubr.f32.gmra.mrb[0].mxu0 %v1147
  %v1807 = vpop.f32.mrb[0].mxu0
  %v1808 = vadd.f32 %v1423, %v1807
  %v1809 = vpop.f32.mrb[0].mxu0
  %1810 = vmatprep.mubr.f32.mxu0 0.0
  %1811 = vmatmul.mubr.f32.gmra.mrb[0].mxu0 %v1148
  %v1812 = vpop.f32.mrb[0].mxu0
  %v1813 = vadd.f32 %v1428, %v1812
  %v1814 = vpop.f32.mrb[0].mxu0
  %1815 = vmatprep.mubr.f32.mxu0 0.0
  %1816 = vmatmul.mubr.f32.gmra.mrb[0].mxu0 %v1149
  %v1817 = vpop.f32.mrb[0].mxu0
  %v1818 = vadd.f32 %v1433, %v1817
  %v1819 = vpop.f32.mrb[0].mxu0
  %1820 = vmatprep.mubr.f32.mxu0 0.0
  %1821 = vmatmul.mubr.f32.gmra.mrb[0].mxu0 %v1150
  %v1822 = vpop.f32.mrb[0].mxu0
  %v1823 = vadd.f32 %v1438, %v1822
  %v1824 = vpop.f32.mrb[0].mxu0
  %1825 = vmatprep.mubr.f32.mxu0 0.0
  %1826 = vmatmul.mubr.f32.gmra.mrb[0].mxu0 %v1151
  %v1827 = vpop.f32.mrb[0].mxu0
  %v1828 = vadd.f32 %v1443, %v1827
  %v1829 = vpop.f32.mrb[0].mxu0
  %1830 = vmatprep.mubr.f32.mxu0 0.0
  %1831 = vmatmul.mubr.f32.gmra.mrb[0].mxu0 %v1152
  %v1832 = vpop.f32.mrb[0].mxu0
  %v1833 = vadd.f32 %v1448, %v1832
  %v1834 = vpop.f32.mrb[0].mxu0
  %1835 = vmatprep.mubr.f32.mxu0 0.0
  %1836 = vmatmul.mubr.f32.gmra.mrb[0].mxu0 %v1153
  %v1837 = vpop.f32.mrb[0].mxu0
  %v1838 = vadd.f32 %v1453, %v1837
  %v1839 = vpop.f32.mrb[0].mxu0
  %1840 = vmatprep.mubr.f32.mxu0 0.0
  %1841 = vmatmul.mubr.f32.gmra.mrb[0].mxu0 %v1154
  %v1842 = vpop.f32.mrb[0].mxu0
  %v1843 = vadd.f32 %v1458, %v1842
  %v1844 = vpop.f32.mrb[0].mxu0
  %1845 = vmatprep.mubr.f32.mxu0 0.0
  %1846 = vmatmul.mubr.f32.gmra.mrb[0].mxu0 %v1155
  %v1847 = vpop.f32.mrb[0].mxu0
  %v1848 = vadd.f32 %v1463, %v1847
  %v1849 = vpop.f32.mrb[0].mxu0
  %1850 = vmatprep.mubr.f32.mxu0 0.0
  %1851 = vmatmul.mubr.f32.gmra.mrb[0].mxu0 %v1156
  %v1852 = vpop.f32.mrb[0].mxu0
  %v1853 = vadd.f32 %v1468, %v1852
  %v1854 = vpop.f32.mrb[0].mxu0
  %1855 = vmatprep.mubr.f32.mxu0 0.0
  %1856 = vmatmul.mubr.f32.gmra.mrb[0].mxu0 %v1157
  %v1857 = vpop.f32.mrb[0].mxu0
  %v1858 = vadd.f32 %v1473, %v1857
  %v1859 = vpop.f32.mrb[0].mxu0
  %1860 = vmatprep.mubr.f32.mxu0 0.0
  %1861 = vmatmul.mubr.f32.gmra.mrb[0].mxu0 %v1158
  %v1862 = vpop.f32.mrb[0].mxu0
  %v1863 = vadd.f32 %v1478, %v1862
  %v1864 = vpop.f32.mrb[0].mxu0
  %1865 = vmatprep.mubr.f32.mxu0 0.0
  %1866 = vmatmul.mubr.f32.gmra.mrb[0].mxu0 %v1159
  %v1867 = vpop.f32.mrb[0].mxu0
  %v1868 = vadd.f32 %v1483, %v1867
  %v1869 = vpop.f32.mrb[0].mxu0
  %1870 = vmatprep.mubr.f32.mxu0 0.0
  %1871 = vmatmul.mubr.f32.gmra.mrb[0].mxu0 %v1160
  %v1872 = vpop.f32.mrb[0].mxu0
  %v1873 = vadd.f32 %v1488, %v1872
  %v1874 = vpop.f32.mrb[0].mxu0
  %1875 = vmatprep.mubr.f32.mxu0 0.0
  %1876 = vmatmul.mubr.f32.gmra.mrb[0].mxu0 %v1161
  %v1877 = vpop.f32.mrb[0].mxu0
  %v1878 = vadd.f32 %v1493, %v1877
  %v1879 = vpop.f32.mrb[0].mxu0
  %1880 = vmatprep.mubr.f32.mxu0 0.0
  %1881 = vmatmul.mubr.f32.gmra.mrb[0].mxu0 %v1162
  %v1882 = vpop.f32.mrb[0].mxu0
  %v1883 = vadd.f32 %v1498, %v1882
  %v1884 = vpop.f32.mrb[0].mxu0
  %1885 = vmatprep.mubr.f32.mxu0 0.0
  %1886 = vmatmul.mubr.f32.gmra.mrb[0].mxu0 %v1163
  %v1887 = vpop.f32.mrb[0].mxu0
  %v1888 = vadd.f32 %v1503, %v1887
  %v1889 = vpop.f32.mrb[0].mxu0
  %1890 = vmatprep.mubr.f32.mxu0 0.0
  %1891 = vmatmul.mubr.f32.gmra.mrb[0].mxu0 %v1164
  %v1892 = vpop.f32.mrb[0].mxu0
  %v1893 = vadd.f32 %v1508, %v1892
  %v1894 = vpop.f32.mrb[0].mxu0
  %1895 = vmatprep.mubr.f32.mxu0 0.0
  %1896 = vmatmul.mubr.f32.gmra.mrb[0].mxu0 %v1165
  %v1897 = vpop.f32.mrb[0].mxu0
  %v1898 = vadd.f32 %v1513, %v1897
  %v1899 = vpop.f32.mrb[0].mxu0
  %1900 = vmatprep.mubr.f32.mxu0 0.0
  %1901 = vmatmul.mubr.f32.gmra.mrb[0].mxu0 %v1166
  %v1902 = vpop.f32.mrb[0].mxu0
  %v1903 = vadd.f32 %v1518, %v1902
  %v1904 = vpop.f32.mrb[0].mxu0
  %1905 = vmatprep.mubr.f32.mxu0 0.0
  %1906 = vmatmul.mubr.f32.gmra.mrb[0].mxu0 %v1167
  %v1907 = vpop.f32.mrb[0].mxu0
  %v1908 = vadd.f32 %v1523, %v1907
  %v1909 = vpop.f32.mrb[0].mxu0
  %1910 = vmatprep.mubr.f32.mxu0 0.0
  %1911 = vmatmul.mubr.f32.gmra.mrb[0].mxu0 %v1168
  %v1912 = vpop.f32.mrb[0].mxu0
  %v1913 = vadd.f32 %v1528, %v1912
  %v1914 = vpop.f32.mrb[0].mxu0
  %1915 = vmatprep.mubr.f32.mxu0 0.0
  %1916 = vmatmul.mubr.f32.gmra.mrb[0].mxu0 %v1169
  %v1917 = vpop.f32.mrb[0].mxu0
  %v1918 = vadd.f32 %v1533, %v1917
  %v1919 = vpop.f32.mrb[0].mxu0
  %1920 = vmatprep.mubr.f32.mxu0 0.0
  %1921 = vmatmul.mubr.f32.gmra.mrb[0].mxu0 %v1170
  %v1922 = vpop.f32.mrb[0].mxu0
  %v1923 = vadd.f32 %v1538, %v1922
  %v1924 = vpop.f32.mrb[0].mxu0
  %1925 = vmatprep.mubr.f32.mxu0 0.0
  %1926 = vmatmul.mubr.f32.gmra.mrb[0].mxu0 %v1235
  %v1927 = vpop.f32.mrb[0].mxu0
  %v1928 = vadd.f32 %v1543, %v1927
  %v1929 = vpop.f32.mrb[0].mxu0
  %1930 = vmatprep.mubr.f32.mxu0 0.0
  %1931 = vmatmul.mubr.f32.gmra.mrb[0].mxu0 %v1236
  %v1932 = vpop.f32.mrb[0].mxu0
  %v1933 = vadd.f32 %v1548, %v1932
  %v1934 = vpop.f32.mrb[0].mxu0
  %1935 = vmatprep.mubr.f32.mxu0 0.0
  %1936 = vmatmul.mubr.f32.gmra.mrb[0].mxu0 %v1237
  %v1937 = vpop.f32.mrb[0].mxu0
  %v1938 = vadd.f32 %v1553, %v1937
  %v1939 = vpop.f32.mrb[0].mxu0
  %1940 = vmatprep.mubr.f32.mxu0 0.0
  %1941 = vmatmul.mubr.f32.gmra.mrb[0].mxu0 %v1238
  %v1942 = vpop.f32.mrb[0].mxu0
  %v1943 = vadd.f32 %v1558, %v1942
  %v1944 = vpop.f32.mrb[0].mxu0
  %1945 = vmatprep.mubr.f32.mxu0 0.0
  %1946 = vmatmul.mubr.f32.gmra.mrb[0].mxu0 %v1239
  %v1947 = vpop.f32.mrb[0].mxu0
  %v1948 = vadd.f32 %v1563, %v1947
  %v1949 = vpop.f32.mrb[0].mxu0
  %1950 = vmatprep.mubr.f32.mxu0 0.0
  %1951 = vmatmul.mubr.f32.gmra.mrb[0].mxu0 %v1240
  %v1952 = vpop.f32.mrb[0].mxu0
  %v1953 = vadd.f32 %v1568, %v1952
  %v1954 = vpop.f32.mrb[0].mxu0
  %1955 = vmatprep.mubr.f32.mxu0 0.0
  %1956 = vmatmul.mubr.f32.gmra.mrb[0].mxu0 %v1241
  %v1957 = vpop.f32.mrb[0].mxu0
  %v1958 = vadd.f32 %v1573, %v1957
  %v1959 = vpop.f32.mrb[0].mxu0
  %1960 = vmatprep.mubr.f32.mxu0 0.0
  %1961 = vmatmul.mubr.f32.gmra.mrb[0].mxu0 %v1242
  %v1962 = vpop.f32.mrb[0].mxu0
  %v1963 = vadd.f32 %v1578, %v1962
  %v1964 = vpop.f32.mrb[0].mxu0
  %1965 = vmatprep.mubr.f32.mxu0 0.0
  %1966 = vmatmul.mubr.f32.gmra.mrb[0].mxu0 %v1243
  %v1967 = vpop.f32.mrb[0].mxu0
  %v1968 = vadd.f32 %v1583, %v1967
  %v1969 = vpop.f32.mrb[0].mxu0
  %1970 = vmatprep.mubr.f32.mxu0 0.0
  %1971 = vmatmul.mubr.f32.gmra.mrb[0].mxu0 %v1244
  %v1972 = vpop.f32.mrb[0].mxu0
  %v1973 = vadd.f32 %v1588, %v1972
  %v1974 = vpop.f32.mrb[0].mxu0
  %1975 = vmatprep.mubr.f32.mxu0 0.0
  %1976 = vmatmul.mubr.f32.gmra.mrb[0].mxu0 %v1245
  %v1977 = vpop.f32.mrb[0].mxu0
  %v1978 = vadd.f32 %v1593, %v1977
  %v1979 = vpop.f32.mrb[0].mxu0
  %1980 = vmatprep.mubr.f32.mxu0 0.0
  %1981 = vmatmul.mubr.f32.gmra.mrb[0].mxu0 %v1246
  %v1982 = vpop.f32.mrb[0].mxu0
  %v1983 = vadd.f32 %v1598, %v1982
  %v1984 = vpop.f32.mrb[0].mxu0
  %1985 = vmatprep.mubr.f32.mxu0 0.0
  %1986 = vmatmul.mubr.f32.gmra.mrb[0].mxu0 %v1247
  %v1987 = vpop.f32.mrb[0].mxu0
  %v1988 = vadd.f32 %v1603, %v1987
  %v1989 = vpop.f32.mrb[0].mxu0
  %1990 = vmatprep.mubr.f32.mxu0 0.0
  %1991 = vmatmul.mubr.f32.gmra.mrb[0].mxu0 %v1248
  %v1992 = vpop.f32.mrb[0].mxu0
  %v1993 = vadd.f32 %v1608, %v1992
  %v1994 = vpop.f32.mrb[0].mxu0
  %1995 = vmatprep.mubr.f32.mxu0 0.0
  %1996 = vmatmul.mubr.f32.gmra.mrb[0].mxu0 %v1249
  %v1997 = vpop.f32.mrb[0].mxu0
  %v1998 = vadd.f32 %v1613, %v1997
  %v1999 = vpop.f32.mrb[0].mxu0
  %2000 = vmatprep.mubr.f32.mxu0 0.0
  %2001 = vmatmul.mubr.f32.gmra.mrb[0].mxu0 %v1250
  %v2002 = vpop.f32.mrb[0].mxu0
  %v2003 = vadd.f32 %v1618, %v2002
  %v2004 = vpop.f32.mrb[0].mxu0
  %2005 = vmatprep.mubr.f32.mxu0 0.0
  %2006 = vmatmul.mubr.f32.gmra.mrb[0].mxu0 %v1251
  %v2007 = vpop.f32.mrb[0].mxu0
  %v2008 = vadd.f32 %v1623, %v2007
  %v2009 = vpop.f32.mrb[0].mxu0
  %2010 = vmatprep.mubr.f32.mxu0 0.0
  %2011 = vmatmul.mubr.f32.gmra.mrb[0].mxu0 %v1252
  %v2012 = vpop.f32.mrb[0].mxu0
  %v2013 = vadd.f32 %v1628, %v2012
  %v2014 = vpop.f32.mrb[0].mxu0
  %2015 = vmatprep.mubr.f32.mxu0 0.0
  %2016 = vmatmul.mubr.f32.gmra.mrb[0].mxu0 %v1253
  %v2017 = vpop.f32.mrb[0].mxu0
  %v2018 = vadd.f32 %v1633, %v2017
  %v2019 = vpop.f32.mrb[0].mxu0
  %2020 = vmatprep.mubr.f32.mxu0 0.0
  %2021 = vmatmul.mubr.f32.gmra.mrb[0].mxu0 %v1254
  %v2022 = vpop.f32.mrb[0].mxu0
  %v2023 = vadd.f32 %v1638, %v2022
  %v2024 = vpop.f32.mrb[0].mxu0
  %2025 = vmatprep.mubr.f32.mxu0 0.0
  %2026 = vmatmul.mubr.f32.gmra.mrb[0].mxu0 %v1255
  %v2027 = vpop.f32.mrb[0].mxu0
  %v2028 = vadd.f32 %v1643, %v2027
  %v2029 = vpop.f32.mrb[0].mxu0
  %2030 = vmatprep.mubr.f32.mxu0 0.0
  %2031 = vmatmul.mubr.f32.gmra.mrb[0].mxu0 %v1256
  %v2032 = vpop.f32.mrb[0].mxu0
  %v2033 = vadd.f32 %v1648, %v2032
  %v2034 = vpop.f32.mrb[0].mxu0
  %2035 = vmatprep.mubr.f32.mxu0 0.0
  %2036 = vmatmul.mubr.f32.gmra.mrb[0].mxu0 %v1257
  %v2037 = vpop.f32.mrb[0].mxu0
  %v2038 = vadd.f32 %v1653, %v2037
  %v2039 = vpop.f32.mrb[0].mxu0
  %2040 = vmatprep.mubr.f32.mxu0 0.0
  %2041 = vmatmul.mubr.f32.gmra.mrb[0].mxu0 %v1258
  %v2042 = vpop.f32.mrb[0].mxu0
  %v2043 = vadd.f32 %v1658, %v2042
  %v2044 = vpop.f32.mrb[0].mxu0
  %2045 = vmatprep.mubr.f32.mxu0 0.0
  %2046 = vmatmul.mubr.f32.gmra.mrb[0].mxu0 %v1259
  %v2047 = vpop.f32.mrb[0].mxu0
  %v2048 = vadd.f32 %v1663, %v2047
  %v2049 = vpop.f32.mrb[0].mxu0
  %2050 = vmatprep.mubr.f32.mxu0 0.0
  %2051 = vmatmul.mubr.f32.gmra.mrb[0].mxu0 %v1260
  %v2052 = vpop.f32.mrb[0].mxu0
  %v2053 = vadd.f32 %v1668, %v2052
  %v2054 = vpop.f32.mrb[0].mxu0
  %2055 = vmatprep.mubr.f32.mxu0 0.0
  %2056 = vmatmul.mubr.f32.gmra.mrb[0].mxu0 %v1261
  %v2057 = vpop.f32.mrb[0].mxu0
  %v2058 = vadd.f32 %v1673, %v2057
  %v2059 = vpop.f32.mrb[0].mxu0
  %2060 = vmatprep.mubr.f32.mxu0 0.0
  %2061 = vmatmul.mubr.f32.gmra.mrb[0].mxu0 %v1262
  %v2062 = vpop.f32.mrb[0].mxu0
  %v2063 = vadd.f32 %v1678, %v2062
  %v2064 = vpop.f32.mrb[0].mxu0
  %2065 = vmatprep.mubr.f32.mxu0 0.0
  %2066 = vmatmul.mubr.f32.gmra.mrb[0].mxu0 %v1263
  %v2067 = vpop.f32.mrb[0].mxu0
  %v2068 = vadd.f32 %v1683, %v2067
  %v2069 = vpop.f32.mrb[0].mxu0
  %2070 = vmatprep.mubr.f32.mxu0 0.0
  %2071 = vmatmul.mubr.f32.gmra.mrb[0].mxu0 %v1264
  %v2072 = vpop.f32.mrb[0].mxu0
  %v2073 = vadd.f32 %v1688, %v2072
  %v2074 = vpop.f32.mrb[0].mxu0
  %2075 = vmatprep.mubr.f32.mxu0 0.0
  %2076 = vmatmul.mubr.f32.gmra.mrb[0].mxu0 %v1265
  %v2077 = vpop.f32.mrb[0].mxu0
  %v2078 = vadd.f32 %v1693, %v2077
  %v2079 = vpop.f32.mrb[0].mxu0
  %2080 = vmatprep.mubr.f32.mxu0 0.0
  %2081 = vmatmul.mubr.f32.gmra.mrb[0].mxu0 %v1266
  %v2082 = vpop.f32.mrb[0].mxu0
  %v2083 = vadd.f32 %v1698, %v2082
  %v2084 = vpop.f32.mrb[0].mxu0
  %2085 = vdwg.mxu0
  %2086 = vmatprep.subr.mxu0 0.0
  %2087 = vmatpush1.msra.mxu0 %v1027
  %2088 = vmatprep.subr.mxu0 0.0
  %2089 = vmatpush1.msra.mxu0 %v1028
  %2090 = vmatprep.subr.mxu0 0.0
  %2091 = vmatpush1.msra.mxu0 %v1029
  %2092 = vmatprep.subr.mxu0 0.0
  %2093 = vmatpush1.msra.mxu0 %v1030
  %2094 = vmatprep.subr.mxu0 0.0
  %2095 = vmatpush1.msra.mxu0 %v1031
  %2096 = vmatprep.subr.mxu0 0.0
  %2097 = vmatpush1.msra.mxu0 %v1032
  %2098 = vmatprep.subr.mxu0 0.0
  %2099 = vmatpush1.msra.mxu0 %v1033
  %2100 = vmatprep.subr.mxu0 0.0
  %2101 = vmatpush1.msra.mxu0 %v1034
  %2102 = vmatprep.subr.mxu0 0.0
  %2103 = vmatpush1.msra.mxu0 %v1035
  %2104 = vmatprep.subr.mxu0 0.0
  %2105 = vmatpush1.msra.mxu0 %v1036
  %2106 = vmatprep.subr.mxu0 0.0
  %2107 = vmatpush1.msra.mxu0 %v1037
  %2108 = vmatprep.subr.mxu0 0.0
  %2109 = vmatpush1.msra.mxu0 %v1038
  %2110 = vmatprep.subr.mxu0 0.0
  %2111 = vmatpush1.msra.mxu0 %v1039
  %2112 = vmatprep.subr.mxu0 0.0
  %2113 = vmatpush1.msra.mxu0 %v1040
  %2114 = vmatprep.subr.mxu0 0.0
  %2115 = vmatpush1.msra.mxu0 %v1041
  %2116 = vmatprep.subr.mxu0 0.0
  %2117 = vmatpush1.msra.mxu0 %v1042
  %2118 = vmatprep.subr.mxu0 0.0
  %2119 = vmatpush1.msra.mxu0 %v1043
  %2120 = vmatprep.subr.mxu0 0.0
  %2121 = vmatpush1.msra.mxu0 %v1044
  %2122 = vmatprep.subr.mxu0 0.0
  %2123 = vmatpush1.msra.mxu0 %v1045
  %2124 = vmatprep.subr.mxu0 0.0
  %2125 = vmatpush1.msra.mxu0 %v1046
  %2126 = vmatprep.subr.mxu0 0.0
  %2127 = vmatpush1.msra.mxu0 %v1047
  %2128 = vmatprep.subr.mxu0 0.0
  %2129 = vmatpush1.msra.mxu0 %v1048
  %2130 = vmatprep.subr.mxu0 0.0
  %2131 = vmatpush1.msra.mxu0 %v1049
  %2132 = vmatprep.subr.mxu0 0.0
  %2133 = vmatpush1.msra.mxu0 %v1050
  %2134 = vmatprep.subr.mxu0 0.0
  %2135 = vmatpush1.msra.mxu0 %v1051
  %2136 = vmatprep.subr.mxu0 0.0
  %2137 = vmatpush1.msra.mxu0 %v1052
  %2138 = vmatprep.subr.mxu0 0.0
  %2139 = vmatpush1.msra.mxu0 %v1053
  %2140 = vmatprep.subr.mxu0 0.0
  %2141 = vmatpush1.msra.mxu0 %v1054
  %2142 = vmatprep.subr.mxu0 0.0
  %2143 = vmatpush1.msra.mxu0 %v1055
  %2144 = vmatprep.subr.mxu0 0.0
  %2145 = vmatpush1.msra.mxu0 %v1056
  %2146 = vmatprep.subr.mxu0 0.0
  %2147 = vmatpush1.msra.mxu0 %v1057
  %2148 = vmatprep.subr.mxu0 0.0
  %2149 = vmatpush1.msra.mxu0 %v1058
  %2150 = vmatprep.mubr.f32.mxu0 %v866
  %2151 = vmatmul.mubr.f32.gmra.mrb[0].mxu0 %v834
  %v2152 = vpop.f32.mrb[0].mxu0
  %v2153 = vadd.f32 %v1768, %v2152
  %v2154 = vpop.f32.mrb[0].mxu0
  %2155 = vmatprep.mubr.f32.mxu0 %v867
  %2156 = vmatmul.mubr.f32.gmra.mrb[0].mxu0 %v835
  %v2157 = vpop.f32.mrb[0].mxu0
  %v2158 = vadd.f32 %v1773, %v2157
  %v2159 = vpop.f32.mrb[0].mxu0
  %2160 = vmatprep.mubr.f32.mxu0 %v868
  %2161 = vmatmul.mubr.f32.gmra.mrb[0].mxu0 %v836
  %v2162 = vpop.f32.mrb[0].mxu0
  %v2163 = vadd.f32 %v1778, %v2162
  %v2164 = vpop.f32.mrb[0].mxu0
  %2165 = vmatprep.mubr.f32.mxu0 %v869
  %2166 = vmatmul.mubr.f32.gmra.mrb[0].mxu0 %v837
  %v2167 = vpop.f32.mrb[0].mxu0
  %v2168 = vadd.f32 %v1783, %v2167
  %v2169 = vpop.f32.mrb[0].mxu0
  %2170 = vmatprep.mubr.f32.mxu0 %v870
  %2171 = vmatmul.mubr.f32.gmra.mrb[0].mxu0 %v838
  %v2172 = vpop.f32.mrb[0].mxu0
  %v2173 = vadd.f32 %v1788, %v2172
  %v2174 = vpop.f32.mrb[0].mxu0
  %2175 = vmatprep.mubr.f32.mxu0 %v871
  %2176 = vmatmul.mubr.f32.gmra.mrb[0].mxu0 %v839
  %v2177 = vpop.f32.mrb[0].mxu0
  %v2178 = vadd.f32 %v1793, %v2177
  %v2179 = vpop.f32.mrb[0].mxu0
  %2180 = vmatprep.mubr.f32.mxu0 %v872
  %2181 = vmatmul.mubr.f32.gmra.mrb[0].mxu0 %v840
  %v2182 = vpop.f32.mrb[0].mxu0
  %v2183 = vadd.f32 %v1798, %v2182
  %v2184 = vpop.f32.mrb[0].mxu0
  %2185 = vmatprep.mubr.f32.mxu0 %v873
  %2186 = vmatmul.mubr.f32.gmra.mrb[0].mxu0 %v841
  %v2187 = vpop.f32.mrb[0].mxu0
  %v2188 = vadd.f32 %v1803, %v2187
  %v2189 = vpop.f32.mrb[0].mxu0
  %2190 = vmatprep.mubr.f32.mxu0 %v874
  %2191 = vmatmul.mubr.f32.gmra.mrb[0].mxu0 %v842
  %v2192 = vpop.f32.mrb[0].mxu0
  %v2193 = vadd.f32 %v1808, %v2192
  %v2194 = vpop.f32.mrb[0].mxu0
  %2195 = vmatprep.mubr.f32.mxu0 %v875
  %2196 = vmatmul.mubr.f32.gmra.mrb[0].mxu0 %v843
  %v2197 = vpop.f32.mrb[0].mxu0
  %v2198 = vadd.f32 %v1813, %v2197
  %v2199 = vpop.f32.mrb[0].mxu0
  %2200 = vmatprep.mubr.f32.mxu0 %v876
  %2201 = vmatmul.mubr.f32.gmra.mrb[0].mxu0 %v844
  %v2202 = vpop.f32.mrb[0].mxu0
  %v2203 = vadd.f32 %v1818, %v2202
  %v2204 = vpop.f32.mrb[0].mxu0
  %2205 = vmatprep.mubr.f32.mxu0 %v877
  %2206 = vmatmul.mubr.f32.gmra.mrb[0].mxu0 %v845
  %v2207 = vpop.f32.mrb[0].mxu0
  %v2208 = vadd.f32 %v1823, %v2207
  %v2209 = vpop.f32.mrb[0].mxu0
  %2210 = vmatprep.mubr.f32.mxu0 %v878
  %2211 = vmatmul.mubr.f32.gmra.mrb[0].mxu0 %v846
  %v2212 = vpop.f32.mrb[0].mxu0
  %v2213 = vadd.f32 %v1828, %v2212
  %v2214 = vpop.f32.mrb[0].mxu0
  %2215 = vmatprep.mubr.f32.mxu0 %v879
  %2216 = vmatmul.mubr.f32.gmra.mrb[0].mxu0 %v847
  %v2217 = vpop.f32.mrb[0].mxu0
  %v2218 = vadd.f32 %v1833, %v2217
  %v2219 = vpop.f32.mrb[0].mxu0
  %2220 = vmatprep.mubr.f32.mxu0 %v880
  %2221 = vmatmul.mubr.f32.gmra.mrb[0].mxu0 %v848
  %v2222 = vpop.f32.mrb[0].mxu0
  %v2223 = vadd.f32 %v1838, %v2222
  %v2224 = vpop.f32.mrb[0].mxu0
  %2225 = vmatprep.mubr.f32.mxu0 %v881
  %2226 = vmatmul.mubr.f32.gmra.mrb[0].mxu0 %v849
  %v2227 = vpop.f32.mrb[0].mxu0
  %v2228 = vadd.f32 %v1843, %v2227
  %v2229 = vpop.f32.mrb[0].mxu0
  %2230 = vmatprep.mubr.f32.mxu0 %v882
  %2231 = vmatmul.mubr.f32.gmra.mrb[0].mxu0 %v850
  %v2232 = vpop.f32.mrb[0].mxu0
  %v2233 = vadd.f32 %v1848, %v2232
  %v2234 = vpop.f32.mrb[0].mxu0
  %2235 = vmatprep.mubr.f32.mxu0 %v883
  %2236 = vmatmul.mubr.f32.gmra.mrb[0].mxu0 %v851
  %v2237 = vpop.f32.mrb[0].mxu0
  %v2238 = vadd.f32 %v1853, %v2237
  %v2239 = vpop.f32.mrb[0].mxu0
  %2240 = vmatprep.mubr.f32.mxu0 %v884
  %2241 = vmatmul.mubr.f32.gmra.mrb[0].mxu0 %v852
  %v2242 = vpop.f32.mrb[0].mxu0
  %v2243 = vadd.f32 %v1858, %v2242
  %v2244 = vpop.f32.mrb[0].mxu0
  %2245 = vmatprep.mubr.f32.mxu0 %v885
  %2246 = vmatmul.mubr.f32.gmra.mrb[0].mxu0 %v853
  %v2247 = vpop.f32.mrb[0].mxu0
  %v2248 = vadd.f32 %v1863, %v2247
  %v2249 = vpop.f32.mrb[0].mxu0
  %2250 = vmatprep.mubr.f32.mxu0 %v886
  %2251 = vmatmul.mubr.f32.gmra.mrb[0].mxu0 %v854
  %v2252 = vpop.f32.mrb[0].mxu0
  %v2253 = vadd.f32 %v1868, %v2252
  %v2254 = vpop.f32.mrb[0].mxu0
  %2255 = vmatprep.mubr.f32.mxu0 %v887
  %2256 = vmatmul.mubr.f32.gmra.mrb[0].mxu0 %v855
  %v2257 = vpop.f32.mrb[0].mxu0
  %v2258 = vadd.f32 %v1873, %v2257
  %v2259 = vpop.f32.mrb[0].mxu0
  %2260 = vmatprep.mubr.f32.mxu0 %v888
  %2261 = vmatmul.mubr.f32.gmra.mrb[0].mxu0 %v856
  %v2262 = vpop.f32.mrb[0].mxu0
  %v2263 = vadd.f32 %v1878, %v2262
  %v2264 = vpop.f32.mrb[0].mxu0
  %2265 = vmatprep.mubr.f32.mxu0 %v889
  %2266 = vmatmul.mubr.f32.gmra.mrb[0].mxu0 %v857
  %v2267 = vpop.f32.mrb[0].mxu0
  %v2268 = vadd.f32 %v1883, %v2267
  %v2269 = vpop.f32.mrb[0].mxu0
  %2270 = vmatprep.mubr.f32.mxu0 %v890
  %2271 = vmatmul.mubr.f32.gmra.mrb[0].mxu0 %v858
  %v2272 = vpop.f32.mrb[0].mxu0
  %v2273 = vadd.f32 %v1888, %v2272
  %v2274 = vpop.f32.mrb[0].mxu0
  %2275 = vmatprep.mubr.f32.mxu0 %v891
  %2276 = vmatmul.mubr.f32.gmra.mrb[0].mxu0 %v859
  %v2277 = vpop.f32.mrb[0].mxu0
  %v2278 = vadd.f32 %v1893, %v2277
  %v2279 = vpop.f32.mrb[0].mxu0
  %2280 = vmatprep.mubr.f32.mxu0 %v892
  %2281 = vmatmul.mubr.f32.gmra.mrb[0].mxu0 %v860
  %v2282 = vpop.f32.mrb[0].mxu0
  %v2283 = vadd.f32 %v1898, %v2282
  %v2284 = vpop.f32.mrb[0].mxu0
  %2285 = vmatprep.mubr.f32.mxu0 %v893
  %2286 = vmatmul.mubr.f32.gmra.mrb[0].mxu0 %v861
  %v2287 = vpop.f32.mrb[0].mxu0
  %v2288 = vadd.f32 %v1903, %v2287
  %v2289 = vpop.f32.mrb[0].mxu0
  %2290 = vmatprep.mubr.f32.mxu0 %v894
  %2291 = vmatmul.mubr.f32.gmra.mrb[0].mxu0 %v862
  %v2292 = vpop.f32.mrb[0].mxu0
  %v2293 = vadd.f32 %v1908, %v2292
  %v2294 = vpop.f32.mrb[0].mxu0
  %2295 = vmatprep.mubr.f32.mxu0 %v895
  %2296 = vmatmul.mubr.f32.gmra.mrb[0].mxu0 %v863
  %v2297 = vpop.f32.mrb[0].mxu0
  %v2298 = vadd.f32 %v1913, %v2297
  %v2299 = vpop.f32.mrb[0].mxu0
  %2300 = vmatprep.mubr.f32.mxu0 %v896
  %2301 = vmatmul.mubr.f32.gmra.mrb[0].mxu0 %v864
  %v2302 = vpop.f32.mrb[0].mxu0
  %v2303 = vadd.f32 %v1918, %v2302
  %v2304 = vpop.f32.mrb[0].mxu0
  %2305 = vmatprep.mubr.f32.mxu0 %v897
  %2306 = vmatmul.mubr.f32.gmra.mrb[0].mxu0 %v865
  %v2307 = vpop.f32.mrb[0].mxu0
  %v2308 = vadd.f32 %v1923, %v2307
  %v2309 = vpop.f32.mrb[0].mxu0
  %2310 = vmatprep.mubr.f32.mxu0 %v963
  %2311 = vmatmul.mubr.f32.gmra.mrb[0].mxu0 %v931
  %v2312 = vpop.f32.mrb[0].mxu0
  %v2313 = vadd.f32 %v1928, %v2312
  %v2314 = vpop.f32.mrb[0].mxu0
  %2315 = vmatprep.mubr.f32.mxu0 %v964
  %2316 = vmatmul.mubr.f32.gmra.mrb[0].mxu0 %v932
  %v2317 = vpop.f32.mrb[0].mxu0
  %v2318 = vadd.f32 %v1933, %v2317
  %v2319 = vpop.f32.mrb[0].mxu0
  %2320 = vmatprep.mubr.f32.mxu0 %v965
  %2321 = vmatmul.mubr.f32.gmra.mrb[0].mxu0 %v933
  %v2322 = vpop.f32.mrb[0].mxu0
  %v2323 = vadd.f32 %v1938, %v2322
  %v2324 = vpop.f32.mrb[0].mxu0
  %2325 = vmatprep.mubr.f32.mxu0 %v966
  %2326 = vmatmul.mubr.f32.gmra.mrb[0].mxu0 %v934
  %v2327 = vpop.f32.mrb[0].mxu0
  %v2328 = vadd.f32 %v1943, %v2327
  %v2329 = vpop.f32.mrb[0].mxu0
  %2330 = vmatprep.mubr.f32.mxu0 %v967
  %2331 = vmatmul.mubr.f32.gmra.mrb[0].mxu0 %v935
  %v2332 = vpop.f32.mrb[0].mxu0
  %v2333 = vadd.f32 %v1948, %v2332
  %v2334 = vpop.f32.mrb[0].mxu0
  %2335 = vmatprep.mubr.f32.mxu0 %v968
  %2336 = vmatmul.mubr.f32.gmra.mrb[0].mxu0 %v936
  %v2337 = vpop.f32.mrb[0].mxu0
  %v2338 = vadd.f32 %v1953, %v2337
  %v2339 = vpop.f32.mrb[0].mxu0
  %2340 = vmatprep.mubr.f32.mxu0 %v969
  %2341 = vmatmul.mubr.f32.gmra.mrb[0].mxu0 %v937
  %v2342 = vpop.f32.mrb[0].mxu0
  %v2343 = vadd.f32 %v1958, %v2342
  %v2344 = vpop.f32.mrb[0].mxu0
  %2345 = vmatprep.mubr.f32.mxu0 %v970
  %2346 = vmatmul.mubr.f32.gmra.mrb[0].mxu0 %v938
  %v2347 = vpop.f32.mrb[0].mxu0
  %v2348 = vadd.f32 %v1963, %v2347
  %v2349 = vpop.f32.mrb[0].mxu0
  %2350 = vmatprep.mubr.f32.mxu0 %v971
  %2351 = vmatmul.mubr.f32.gmra.mrb[0].mxu0 %v939
  %v2352 = vpop.f32.mrb[0].mxu0
  %v2353 = vadd.f32 %v1968, %v2352
  %v2354 = vpop.f32.mrb[0].mxu0
  %2355 = vmatprep.mubr.f32.mxu0 %v972
  %2356 = vmatmul.mubr.f32.gmra.mrb[0].mxu0 %v940
  %v2357 = vpop.f32.mrb[0].mxu0
  %v2358 = vadd.f32 %v1973, %v2357
  %v2359 = vpop.f32.mrb[0].mxu0
  %2360 = vmatprep.mubr.f32.mxu0 %v973
  %2361 = vmatmul.mubr.f32.gmra.mrb[0].mxu0 %v941
  %v2362 = vpop.f32.mrb[0].mxu0
  %v2363 = vadd.f32 %v1978, %v2362
  %v2364 = vpop.f32.mrb[0].mxu0
  %2365 = vmatprep.mubr.f32.mxu0 %v974
  %2366 = vmatmul.mubr.f32.gmra.mrb[0].mxu0 %v942
  %v2367 = vpop.f32.mrb[0].mxu0
  %v2368 = vadd.f32 %v1983, %v2367
  %v2369 = vpop.f32.mrb[0].mxu0
  %2370 = vmatprep.mubr.f32.mxu0 %v975
  %2371 = vmatmul.mubr.f32.gmra.mrb[0].mxu0 %v943
  %v2372 = vpop.f32.mrb[0].mxu0
  %v2373 = vadd.f32 %v1988, %v2372
  %v2374 = vpop.f32.mrb[0].mxu0
  %2375 = vmatprep.mubr.f32.mxu0 %v976
  %2376 = vmatmul.mubr.f32.gmra.mrb[0].mxu0 %v944
  %v2377 = vpop.f32.mrb[0].mxu0
  %v2378 = vadd.f32 %v1993, %v2377
  %v2379 = vpop.f32.mrb[0].mxu0
  %2380 = vmatprep.mubr.f32.mxu0 %v977
  %2381 = vmatmul.mubr.f32.gmra.mrb[0].mxu0 %v945
  %v2382 = vpop.f32.mrb[0].mxu0
  %v2383 = vadd.f32 %v1998, %v2382
  %v2384 = vpop.f32.mrb[0].mxu0
  %2385 = vmatprep.mubr.f32.mxu0 %v978
  %2386 = vmatmul.mubr.f32.gmra.mrb[0].mxu0 %v946
  %v2387 = vpop.f32.mrb[0].mxu0
  %v2388 = vadd.f32 %v2003, %v2387
  %v2389 = vpop.f32.mrb[0].mxu0
  %2390 = vmatprep.mubr.f32.mxu0 %v979
  %2391 = vmatmul.mubr.f32.gmra.mrb[0].mxu0 %v947
  %v2392 = vpop.f32.mrb[0].mxu0
  %v2393 = vadd.f32 %v2008, %v2392
  %v2394 = vpop.f32.mrb[0].mxu0
  %2395 = vmatprep.mubr.f32.mxu0 %v980
  %2396 = vmatmul.mubr.f32.gmra.mrb[0].mxu0 %v948
  %v2397 = vpop.f32.mrb[0].mxu0
  %v2398 = vadd.f32 %v2013, %v2397
  %v2399 = vpop.f32.mrb[0].mxu0
  %2400 = vmatprep.mubr.f32.mxu0 %v981
  %2401 = vmatmul.mubr.f32.gmra.mrb[0].mxu0 %v949
  %v2402 = vpop.f32.mrb[0].mxu0
  %v2403 = vadd.f32 %v2018, %v2402
  %v2404 = vpop.f32.mrb[0].mxu0
  %2405 = vmatprep.mubr.f32.mxu0 %v982
  %2406 = vmatmul.mubr.f32.gmra.mrb[0].mxu0 %v950
  %v2407 = vpop.f32.mrb[0].mxu0
  %v2408 = vadd.f32 %v2023, %v2407
  %v2409 = vpop.f32.mrb[0].mxu0
  %2410 = vmatprep.mubr.f32.mxu0 %v983
  %2411 = vmatmul.mubr.f32.gmra.mrb[0].mxu0 %v951
  %v2412 = vpop.f32.mrb[0].mxu0
  %v2413 = vadd.f32 %v2028, %v2412
  %v2414 = vpop.f32.mrb[0].mxu0
  %2415 = vmatprep.mubr.f32.mxu0 %v984
  %2416 = vmatmul.mubr.f32.gmra.mrb[0].mxu0 %v952
  %v2417 = vpop.f32.mrb[0].mxu0
  %v2418 = vadd.f32 %v2033, %v2417
  %v2419 = vpop.f32.mrb[0].mxu0
  %2420 = vmatprep.mubr.f32.mxu0 %v985
  %2421 = vmatmul.mubr.f32.gmra.mrb[0].mxu0 %v953
  %v2422 = vpop.f32.mrb[0].mxu0
  %v2423 = vadd.f32 %v2038, %v2422
  %v2424 = vpop.f32.mrb[0].mxu0
  %2425 = vmatprep.mubr.f32.mxu0 %v986
  %2426 = vmatmul.mubr.f32.gmra.mrb[0].mxu0 %v954
  %v2427 = vpop.f32.mrb[0].mxu0
  %v2428 = vadd.f32 %v2043, %v2427
  %v2429 = vpop.f32.mrb[0].mxu0
  %2430 = vmatprep.mubr.f32.mxu0 %v987
  %2431 = vmatmul.mubr.f32.gmra.mrb[0].mxu0 %v955
  %v2432 = vpop.f32.mrb[0].mxu0
  %v2433 = vadd.f32 %v2048, %v2432
  %v2434 = vpop.f32.mrb[0].mxu0
  %2435 = vmatprep.mubr.f32.mxu0 %v988
  %2436 = vmatmul.mubr.f32.gmra.mrb[0].mxu0 %v956
  %v2437 = vpop.f32.mrb[0].mxu0
  %v2438 = vadd.f32 %v2053, %v2437
  %v2439 = vpop.f32.mrb[0].mxu0
  %2440 = vmatprep.mubr.f32.mxu0 %v989
  %2441 = vmatmul.mubr.f32.gmra.mrb[0].mxu0 %v957
  %v2442 = vpop.f32.mrb[0].mxu0
  %v2443 = vadd.f32 %v2058, %v2442
  %v2444 = vpop.f32.mrb[0].mxu0
  %2445 = vmatprep.mubr.f32.mxu0 %v990
  %2446 = vmatmul.mubr.f32.gmra.mrb[0].mxu0 %v958
  %v2447 = vpop.f32.mrb[0].mxu0
  %v2448 = vadd.f32 %v2063, %v2447
  %v2449 = vpop.f32.mrb[0].mxu0
  %2450 = vmatprep.mubr.f32.mxu0 %v991
  %2451 = vmatmul.mubr.f32.gmra.mrb[0].mxu0 %v959
  %v2452 = vpop.f32.mrb[0].mxu0
  %v2453 = vadd.f32 %v2068, %v2452
  %v2454 = vpop.f32.mrb[0].mxu0
  %2455 = vmatprep.mubr.f32.mxu0 %v992
  %2456 = vmatmul.mubr.f32.gmra.mrb[0].mxu0 %v960
  %v2457 = vpop.f32.mrb[0].mxu0
  %v2458 = vadd.f32 %v2073, %v2457
  %v2459 = vpop.f32.mrb[0].mxu0
  %2460 = vmatprep.mubr.f32.mxu0 %v993
  %2461 = vmatmul.mubr.f32.gmra.mrb[0].mxu0 %v961
  %v2462 = vpop.f32.mrb[0].mxu0
  %v2463 = vadd.f32 %v2078, %v2462
  %v2464 = vpop.f32.mrb[0].mxu0
  %2465 = vmatprep.mubr.f32.mxu0 %v994
  %2466 = vmatmul.mubr.f32.gmra.mrb[0].mxu0 %v962
  %v2467 = vpop.f32.mrb[0].mxu0
  %v2468 = vadd.f32 %v2083, %v2467
  %v2469 = vpop.f32.mrb[0].mxu0
  %2470 = vdwg.mxu0
  %2471 = vmatprep.subr.mxu0 0.0
  %2472 = vmatpush1.msra.mxu0 %v1059
  %2473 = vmatprep.subr.mxu0 0.0
  %2474 = vmatpush1.msra.mxu0 %v1060
  %2475 = vmatprep.subr.mxu0 0.0
  %2476 = vmatpush1.msra.mxu0 %v1061
  %2477 = vmatprep.subr.mxu0 0.0
  %2478 = vmatpush1.msra.mxu0 %v1062
  %2479 = vmatprep.subr.mxu0 0.0
  %2480 = vmatpush1.msra.mxu0 %v1063
  %2481 = vmatprep.subr.mxu0 0.0
  %2482 = vmatpush1.msra.mxu0 %v1064
  %2483 = vmatprep.subr.mxu0 0.0
  %2484 = vmatpush1.msra.mxu0 %v1065
  %2485 = vmatprep.subr.mxu0 0.0
  %2486 = vmatpush1.msra.mxu0 %v1066
  %2487 = vmatprep.subr.mxu0 0.0
  %2488 = vmatpush1.msra.mxu0 %v1067
  %2489 = vmatprep.subr.mxu0 0.0
  %2490 = vmatpush1.msra.mxu0 %v1068
  %2491 = vmatprep.subr.mxu0 0.0
  %2492 = vmatpush1.msra.mxu0 %v1069
  %2493 = vmatprep.subr.mxu0 0.0
  %2494 = vmatpush1.msra.mxu0 %v1070
  %2495 = vmatprep.subr.mxu0 0.0
  %2496 = vmatpush1.msra.mxu0 %v1071
  %2497 = vmatprep.subr.mxu0 0.0
  %2498 = vmatpush1.msra.mxu0 %v1072
  %2499 = vmatprep.subr.mxu0 0.0
  %2500 = vmatpush1.msra.mxu0 %v1073
  %2501 = vmatprep.subr.mxu0 0.0
  %2502 = vmatpush1.msra.mxu0 %v1074
  %2503 = vmatprep.subr.mxu0 0.0
  %2504 = vmatpush1.msra.mxu0 0.0
  %2505 = vmatprep.subr.mxu0 0.0
  %2506 = vmatpush1.msra.mxu0 0.0
  %2507 = vmatprep.subr.mxu0 0.0
  %2508 = vmatpush1.msra.mxu0 0.0
  %2509 = vmatprep.subr.mxu0 0.0
  %2510 = vmatpush1.msra.mxu0 0.0
  %2511 = vmatprep.subr.mxu0 0.0
  %2512 = vmatpush1.msra.mxu0 0.0
  %2513 = vmatprep.subr.mxu0 0.0
  %2514 = vmatpush1.msra.mxu0 0.0
  %2515 = vmatprep.subr.mxu0 0.0
  %2516 = vmatpush1.msra.mxu0 0.0
  %2517 = vmatprep.subr.mxu0 0.0
  %2518 = vmatpush1.msra.mxu0 0.0
  %2519 = vmatprep.subr.mxu0 0.0
  %2520 = vmatpush1.msra.mxu0 0.0
  %2521 = vmatprep.subr.mxu0 0.0
  %2522 = vmatpush1.msra.mxu0 0.0
  %2523 = vmatprep.subr.mxu0 0.0
  %2524 = vmatpush1.msra.mxu0 0.0
  %2525 = vmatprep.subr.mxu0 0.0
  %2526 = vmatpush1.msra.mxu0 0.0
  %2527 = vmatprep.subr.mxu0 0.0
  %2528 = vmatpush1.msra.mxu0 0.0
  %2529 = vmatprep.subr.mxu0 0.0
  %2530 = vmatpush1.msra.mxu0 0.0
  %2531 = vmatprep.subr.mxu0 0.0
  %2532 = vmatpush1.msra.mxu0 0.0
  %2533 = vmatprep.subr.mxu0 0.0
  %2534 = vmatpush1.msra.mxu0 0.0
  %2535 = vmatprep.mubr.f32.mxu0 0.0
  %2536 = vmatmul.mubr.f32.gmra.mrb[0].mxu0 %v898
  %v2537 = vpop.f32.mrb[0].mxu0
  %v2538 = vadd.f32 %v2153, %v2537
  %v2539 = vpop.f32.mrb[0].mxu0
  %2540 = vmatprep.mubr.f32.mxu0 0.0
  %2541 = vmatmul.mubr.f32.gmra.mrb[0].mxu0 %v899
  %v2542 = vpop.f32.mrb[0].mxu0
  %v2543 = vadd.f32 %v2158, %v2542
  %v2544 = vpop.f32.mrb[0].mxu0
  %2545 = vmatprep.mubr.f32.mxu0 0.0
  %2546 = vmatmul.mubr.f32.gmra.mrb[0].mxu0 %v900
  %v2547 = vpop.f32.mrb[0].mxu0
  %v2548 = vadd.f32 %v2163, %v2547
  %v2549 = vpop.f32.mrb[0].mxu0
  %2550 = vmatprep.mubr.f32.mxu0 0.0
  %2551 = vmatmul.mubr.f32.gmra.mrb[0].mxu0 %v901
  %v2552 = vpop.f32.mrb[0].mxu0
  %v2553 = vadd.f32 %v2168, %v2552
  %v2554 = vpop.f32.mrb[0].mxu0
  %2555 = vmatprep.mubr.f32.mxu0 0.0
  %2556 = vmatmul.mubr.f32.gmra.mrb[0].mxu0 %v902
  %v2557 = vpop.f32.mrb[0].mxu0
  %v2558 = vadd.f32 %v2173, %v2557
  %v2559 = vpop.f32.mrb[0].mxu0
  %2560 = vmatprep.mubr.f32.mxu0 0.0
  %2561 = vmatmul.mubr.f32.gmra.mrb[0].mxu0 %v903
  %v2562 = vpop.f32.mrb[0].mxu0
  %v2563 = vadd.f32 %v2178, %v2562
  %v2564 = vpop.f32.mrb[0].mxu0
  %2565 = vmatprep.mubr.f32.mxu0 0.0
  %2566 = vmatmul.mubr.f32.gmra.mrb[0].mxu0 %v904
  %v2567 = vpop.f32.mrb[0].mxu0
  %v2568 = vadd.f32 %v2183, %v2567
  %v2569 = vpop.f32.mrb[0].mxu0
  %2570 = vmatprep.mubr.f32.mxu0 0.0
  %2571 = vmatmul.mubr.f32.gmra.mrb[0].mxu0 %v905
  %v2572 = vpop.f32.mrb[0].mxu0
  %v2573 = vadd.f32 %v2188, %v2572
  %v2574 = vpop.f32.mrb[0].mxu0
  %2575 = vmatprep.mubr.f32.mxu0 0.0
  %2576 = vmatmul.mubr.f32.gmra.mrb[0].mxu0 %v906
  %v2577 = vpop.f32.mrb[0].mxu0
  %v2578 = vadd.f32 %v2193, %v2577
  %v2579 = vpop.f32.mrb[0].mxu0
  %2580 = vmatprep.mubr.f32.mxu0 0.0
  %2581 = vmatmul.mubr.f32.gmra.mrb[0].mxu0 %v907
  %v2582 = vpop.f32.mrb[0].mxu0
  %v2583 = vadd.f32 %v2198, %v2582
  %v2584 = vpop.f32.mrb[0].mxu0
  %2585 = vmatprep.mubr.f32.mxu0 0.0
  %2586 = vmatmul.mubr.f32.gmra.mrb[0].mxu0 %v908
  %v2587 = vpop.f32.mrb[0].mxu0
  %v2588 = vadd.f32 %v2203, %v2587
  %v2589 = vpop.f32.mrb[0].mxu0
  %2590 = vmatprep.mubr.f32.mxu0 0.0
  %2591 = vmatmul.mubr.f32.gmra.mrb[0].mxu0 %v909
  %v2592 = vpop.f32.mrb[0].mxu0
  %v2593 = vadd.f32 %v2208, %v2592
  %v2594 = vpop.f32.mrb[0].mxu0
  %2595 = vmatprep.mubr.f32.mxu0 0.0
  %2596 = vmatmul.mubr.f32.gmra.mrb[0].mxu0 %v910
  %v2597 = vpop.f32.mrb[0].mxu0
  %v2598 = vadd.f32 %v2213, %v2597
  %v2599 = vpop.f32.mrb[0].mxu0
  %2600 = vmatprep.mubr.f32.mxu0 0.0
  %2601 = vmatmul.mubr.f32.gmra.mrb[0].mxu0 %v911
  %v2602 = vpop.f32.mrb[0].mxu0
  %v2603 = vadd.f32 %v2218, %v2602
  %v2604 = vpop.f32.mrb[0].mxu0
  %2605 = vmatprep.mubr.f32.mxu0 0.0
  %2606 = vmatmul.mubr.f32.gmra.mrb[0].mxu0 %v912
  %v2607 = vpop.f32.mrb[0].mxu0
  %v2608 = vadd.f32 %v2223, %v2607
  %v2609 = vpop.f32.mrb[0].mxu0
  %2610 = vmatprep.mubr.f32.mxu0 0.0
  %2611 = vmatmul.mubr.f32.gmra.mrb[0].mxu0 %v913
  %v2612 = vpop.f32.mrb[0].mxu0
  %v2613 = vadd.f32 %v2228, %v2612
  %v2614 = vpop.f32.mrb[0].mxu0
  %2615 = vmatprep.mubr.f32.mxu0 0.0
  %2616 = vmatmul.mubr.f32.gmra.mrb[0].mxu0 %v914
  %v2617 = vpop.f32.mrb[0].mxu0
  %v2618 = vadd.f32 %v2233, %v2617
  %v2619 = vpop.f32.mrb[0].mxu0
  %2620 = vmatprep.mubr.f32.mxu0 0.0
  %2621 = vmatmul.mubr.f32.gmra.mrb[0].mxu0 %v915
  %v2622 = vpop.f32.mrb[0].mxu0
  %v2623 = vadd.f32 %v2238, %v2622
  %v2624 = vpop.f32.mrb[0].mxu0
  %2625 = vmatprep.mubr.f32.mxu0 0.0
  %2626 = vmatmul.mubr.f32.gmra.mrb[0].mxu0 %v916
  %v2627 = vpop.f32.mrb[0].mxu0
  %v2628 = vadd.f32 %v2243, %v2627
  %v2629 = vpop.f32.mrb[0].mxu0
  %2630 = vmatprep.mubr.f32.mxu0 0.0
  %2631 = vmatmul.mubr.f32.gmra.mrb[0].mxu0 %v917
  %v2632 = vpop.f32.mrb[0].mxu0
  %v2633 = vadd.f32 %v2248, %v2632
  %v2634 = vpop.f32.mrb[0].mxu0
  %2635 = vmatprep.mubr.f32.mxu0 0.0
  %2636 = vmatmul.mubr.f32.gmra.mrb[0].mxu0 %v918
  %v2637 = vpop.f32.mrb[0].mxu0
  %v2638 = vadd.f32 %v2253, %v2637
  %v2639 = vpop.f32.mrb[0].mxu0
  %2640 = vmatprep.mubr.f32.mxu0 0.0
  %2641 = vmatmul.mubr.f32.gmra.mrb[0].mxu0 %v919
  %v2642 = vpop.f32.mrb[0].mxu0
  %v2643 = vadd.f32 %v2258, %v2642
  %v2644 = vpop.f32.mrb[0].mxu0
  %2645 = vmatprep.mubr.f32.mxu0 0.0
  %2646 = vmatmul.mubr.f32.gmra.mrb[0].mxu0 %v920
  %v2647 = vpop.f32.mrb[0].mxu0
  %v2648 = vadd.f32 %v2263, %v2647
  %v2649 = vpop.f32.mrb[0].mxu0
  %2650 = vmatprep.mubr.f32.mxu0 0.0
  %2651 = vmatmul.mubr.f32.gmra.mrb[0].mxu0 %v921
  %v2652 = vpop.f32.mrb[0].mxu0
  %v2653 = vadd.f32 %v2268, %v2652
  %v2654 = vpop.f32.mrb[0].mxu0
  %2655 = vmatprep.mubr.f32.mxu0 0.0
  %2656 = vmatmul.mubr.f32.gmra.mrb[0].mxu0 %v922
  %v2657 = vpop.f32.mrb[0].mxu0
  %v2658 = vadd.f32 %v2273, %v2657
  %v2659 = vpop.f32.mrb[0].mxu0
  %2660 = vmatprep.mubr.f32.mxu0 0.0
  %2661 = vmatmul.mubr.f32.gmra.mrb[0].mxu0 %v923
  %v2662 = vpop.f32.mrb[0].mxu0
  %v2663 = vadd.f32 %v2278, %v2662
  %v2664 = vpop.f32.mrb[0].mxu0
  %2665 = vmatprep.mubr.f32.mxu0 0.0
  %2666 = vmatmul.mubr.f32.gmra.mrb[0].mxu0 %v924
  %v2667 = vpop.f32.mrb[0].mxu0
  %v2668 = vadd.f32 %v2283, %v2667
  %v2669 = vpop.f32.mrb[0].mxu0
  %2670 = vmatprep.mubr.f32.mxu0 0.0
  %2671 = vmatmul.mubr.f32.gmra.mrb[0].mxu0 %v925
  %v2672 = vpop.f32.mrb[0].mxu0
  %v2673 = vadd.f32 %v2288, %v2672
  %v2674 = vpop.f32.mrb[0].mxu0
  %2675 = vmatprep.mubr.f32.mxu0 0.0
  %2676 = vmatmul.mubr.f32.gmra.mrb[0].mxu0 %v926
  %v2677 = vpop.f32.mrb[0].mxu0
  %v2678 = vadd.f32 %v2293, %v2677
  %v2679 = vpop.f32.mrb[0].mxu0
  %2680 = vmatprep.mubr.f32.mxu0 0.0
  %2681 = vmatmul.mubr.f32.gmra.mrb[0].mxu0 %v927
  %v2682 = vpop.f32.mrb[0].mxu0
  %v2683 = vadd.f32 %v2298, %v2682
  %v2684 = vpop.f32.mrb[0].mxu0
  %2685 = vmatprep.mubr.f32.mxu0 0.0
  %2686 = vmatmul.mubr.f32.gmra.mrb[0].mxu0 %v928
  %v2687 = vpop.f32.mrb[0].mxu0
  %v2688 = vadd.f32 %v2303, %v2687
  %v2689 = vpop.f32.mrb[0].mxu0
  %2690 = vmatprep.mubr.f32.mxu0 0.0
  %2691 = vmatmul.mubr.f32.gmra.mrb[0].mxu0 %v929
  %v2692 = vpop.f32.mrb[0].mxu0
  %v2693 = vadd.f32 %v2308, %v2692
  %v2694 = vpop.f32.mrb[0].mxu0
  %2695 = vmatprep.mubr.f32.mxu0 0.0
  %2696 = vmatmul.mubr.f32.gmra.mrb[0].mxu0 %v995
  %v2697 = vpop.f32.mrb[0].mxu0
  %v2698 = vadd.f32 %v2313, %v2697
  %v2699 = vpop.f32.mrb[0].mxu0
  %2700 = vmatprep.mubr.f32.mxu0 0.0
  %2701 = vmatmul.mubr.f32.gmra.mrb[0].mxu0 %v996
  %v2702 = vpop.f32.mrb[0].mxu0
  %v2703 = vadd.f32 %v2318, %v2702
  %v2704 = vpop.f32.mrb[0].mxu0
  %2705 = vmatprep.mubr.f32.mxu0 0.0
  %2706 = vmatmul.mubr.f32.gmra.mrb[0].mxu0 %v997
  %v2707 = vpop.f32.mrb[0].mxu0
  %v2708 = vadd.f32 %v2323, %v2707
  %v2709 = vpop.f32.mrb[0].mxu0
  %2710 = vmatprep.mubr.f32.mxu0 0.0
  %2711 = vmatmul.mubr.f32.gmra.mrb[0].mxu0 %v998
  %v2712 = vpop.f32.mrb[0].mxu0
  %v2713 = vadd.f32 %v2328, %v2712
  %v2714 = vpop.f32.mrb[0].mxu0
  %2715 = vmatprep.mubr.f32.mxu0 0.0
  %2716 = vmatmul.mubr.f32.gmra.mrb[0].mxu0 %v999
  %v2717 = vpop.f32.mrb[0].mxu0
  %v2718 = vadd.f32 %v2333, %v2717
  %v2719 = vpop.f32.mrb[0].mxu0
  %2720 = vmatprep.mubr.f32.mxu0 0.0
  %2721 = vmatmul.mubr.f32.gmra.mrb[0].mxu0 %v1000
  %v2722 = vpop.f32.mrb[0].mxu0
  %v2723 = vadd.f32 %v2338, %v2722
  %v2724 = vpop.f32.mrb[0].mxu0
  %2725 = vmatprep.mubr.f32.mxu0 0.0
  %2726 = vmatmul.mubr.f32.gmra.mrb[0].mxu0 %v1001
  %v2727 = vpop.f32.mrb[0].mxu0
  %v2728 = vadd.f32 %v2343, %v2727
  %v2729 = vpop.f32.mrb[0].mxu0
  %2730 = vmatprep.mubr.f32.mxu0 0.0
  %2731 = vmatmul.mubr.f32.gmra.mrb[0].mxu0 %v1002
  %v2732 = vpop.f32.mrb[0].mxu0
  %v2733 = vadd.f32 %v2348, %v2732
  %v2734 = vpop.f32.mrb[0].mxu0
  %2735 = vmatprep.mubr.f32.mxu0 0.0
  %2736 = vmatmul.mubr.f32.gmra.mrb[0].mxu0 %v1003
  %v2737 = vpop.f32.mrb[0].mxu0
  %v2738 = vadd.f32 %v2353, %v2737
  %v2739 = vpop.f32.mrb[0].mxu0
  %2740 = vmatprep.mubr.f32.mxu0 0.0
  %2741 = vmatmul.mubr.f32.gmra.mrb[0].mxu0 %v1004
  %v2742 = vpop.f32.mrb[0].mxu0
  %v2743 = vadd.f32 %v2358, %v2742
  %v2744 = vpop.f32.mrb[0].mxu0
  %2745 = vmatprep.mubr.f32.mxu0 0.0
  %2746 = vmatmul.mubr.f32.gmra.mrb[0].mxu0 %v1005
  %v2747 = vpop.f32.mrb[0].mxu0
  %v2748 = vadd.f32 %v2363, %v2747
  %v2749 = vpop.f32.mrb[0].mxu0
  %2750 = vmatprep.mubr.f32.mxu0 0.0
  %2751 = vmatmul.mubr.f32.gmra.mrb[0].mxu0 %v1006
  %v2752 = vpop.f32.mrb[0].mxu0
  %v2753 = vadd.f32 %v2368, %v2752
  %v2754 = vpop.f32.mrb[0].mxu0
  %2755 = vmatprep.mubr.f32.mxu0 0.0
  %2756 = vmatmul.mubr.f32.gmra.mrb[0].mxu0 %v1007
  %v2757 = vpop.f32.mrb[0].mxu0
  %v2758 = vadd.f32 %v2373, %v2757
  %v2759 = vpop.f32.mrb[0].mxu0
  %2760 = vmatprep.mubr.f32.mxu0 0.0
  %2761 = vmatmul.mubr.f32.gmra.mrb[0].mxu0 %v1008
  %v2762 = vpop.f32.mrb[0].mxu0
  %v2763 = vadd.f32 %v2378, %v2762
  %v2764 = vpop.f32.mrb[0].mxu0
  %2765 = vmatprep.mubr.f32.mxu0 0.0
  %2766 = vmatmul.mubr.f32.gmra.mrb[0].mxu0 %v1009
  %v2767 = vpop.f32.mrb[0].mxu0
  %v2768 = vadd.f32 %v2383, %v2767
  %v2769 = vpop.f32.mrb[0].mxu0
  %2770 = vmatprep.mubr.f32.mxu0 0.0
  %2771 = vmatmul.mubr.f32.gmra.mrb[0].mxu0 %v1010
  %v2772 = vpop.f32.mrb[0].mxu0
  %v2773 = vadd.f32 %v2388, %v2772
  %v2774 = vpop.f32.mrb[0].mxu0
  %2775 = vmatprep.mubr.f32.mxu0 0.0
  %2776 = vmatmul.mubr.f32.gmra.mrb[0].mxu0 %v1011
  %v2777 = vpop.f32.mrb[0].mxu0
  %v2778 = vadd.f32 %v2393, %v2777
  %v2779 = vpop.f32.mrb[0].mxu0
  %2780 = vmatprep.mubr.f32.mxu0 0.0
  %2781 = vmatmul.mubr.f32.gmra.mrb[0].mxu0 %v1012
  %v2782 = vpop.f32.mrb[0].mxu0
  %v2783 = vadd.f32 %v2398, %v2782
  %v2784 = vpop.f32.mrb[0].mxu0
  %2785 = vmatprep.mubr.f32.mxu0 0.0
  %2786 = vmatmul.mubr.f32.gmra.mrb[0].mxu0 %v1013
  %v2787 = vpop.f32.mrb[0].mxu0
  %v2788 = vadd.f32 %v2403, %v2787
  %v2789 = vpop.f32.mrb[0].mxu0
  %2790 = vmatprep.mubr.f32.mxu0 0.0
  %2791 = vmatmul.mubr.f32.gmra.mrb[0].mxu0 %v1014
  %v2792 = vpop.f32.mrb[0].mxu0
  %v2793 = vadd.f32 %v2408, %v2792
  %v2794 = vpop.f32.mrb[0].mxu0
  %2795 = vmatprep.mubr.f32.mxu0 0.0
  %2796 = vmatmul.mubr.f32.gmra.mrb[0].mxu0 %v1015
  %v2797 = vpop.f32.mrb[0].mxu0
  %v2798 = vadd.f32 %v2413, %v2797
  %v2799 = vpop.f32.mrb[0].mxu0
  %2800 = vmatprep.mubr.f32.mxu0 0.0
  %2801 = vmatmul.mubr.f32.gmra.mrb[0].mxu0 %v1016
  %v2802 = vpop.f32.mrb[0].mxu0
  %v2803 = vadd.f32 %v2418, %v2802
  %v2804 = vpop.f32.mrb[0].mxu0
  %2805 = vmatprep.mubr.f32.mxu0 0.0
  %2806 = vmatmul.mubr.f32.gmra.mrb[0].mxu0 %v1017
  %v2807 = vpop.f32.mrb[0].mxu0
  %v2808 = vadd.f32 %v2423, %v2807
  %v2809 = vpop.f32.mrb[0].mxu0
  %2810 = vmatprep.mubr.f32.mxu0 0.0
  %2811 = vmatmul.mubr.f32.gmra.mrb[0].mxu0 %v1018
  %v2812 = vpop.f32.mrb[0].mxu0
  %v2813 = vadd.f32 %v2428, %v2812
  %v2814 = vpop.f32.mrb[0].mxu0
  %2815 = vmatprep.mubr.f32.mxu0 0.0
  %2816 = vmatmul.mubr.f32.gmra.mrb[0].mxu0 %v1019
  %v2817 = vpop.f32.mrb[0].mxu0
  %v2818 = vadd.f32 %v2433, %v2817
  %v2819 = vpop.f32.mrb[0].mxu0
  %2820 = vmatprep.mubr.f32.mxu0 0.0
  %2821 = vmatmul.mubr.f32.gmra.mrb[0].mxu0 %v1020
  %v2822 = vpop.f32.mrb[0].mxu0
  %v2823 = vadd.f32 %v2438, %v2822
  %v2824 = vpop.f32.mrb[0].mxu0
  %2825 = vmatprep.mubr.f32.mxu0 0.0
  %2826 = vmatmul.mubr.f32.gmra.mrb[0].mxu0 %v1021
  %v2827 = vpop.f32.mrb[0].mxu0
  %v2828 = vadd.f32 %v2443, %v2827
  %v2829 = vpop.f32.mrb[0].mxu0
  %2830 = vmatprep.mubr.f32.mxu0 0.0
  %2831 = vmatmul.mubr.f32.gmra.mrb[0].mxu0 %v1022
  %v2832 = vpop.f32.mrb[0].mxu0
  %v2833 = vadd.f32 %v2448, %v2832
  %v2834 = vpop.f32.mrb[0].mxu0
  %2835 = vmatprep.mubr.f32.mxu0 0.0
  %2836 = vmatmul.mubr.f32.gmra.mrb[0].mxu0 %v1023
  %v2837 = vpop.f32.mrb[0].mxu0
  %v2838 = vadd.f32 %v2453, %v2837
  %v2839 = vpop.f32.mrb[0].mxu0
  %2840 = vmatprep.mubr.f32.mxu0 0.0
  %2841 = vmatmul.mubr.f32.gmra.mrb[0].mxu0 %v1024
  %v2842 = vpop.f32.mrb[0].mxu0
  %v2843 = vadd.f32 %v2458, %v2842
  %v2844 = vpop.f32.mrb[0].mxu0
  %2845 = vmatprep.mubr.f32.mxu0 0.0
  %2846 = vmatmul.mubr.f32.gmra.mrb[0].mxu0 %v1025
  %v2847 = vpop.f32.mrb[0].mxu0
  %v2848 = vadd.f32 %v2463, %v2847
  %v2849 = vpop.f32.mrb[0].mxu0
  %2850 = vmatprep.mubr.f32.mxu0 0.0
  %2851 = vmatmul.mubr.f32.gmra.mrb[0].mxu0 %v1026
  %v2852 = vpop.f32.mrb[0].mxu0
  %v2853 = vadd.f32 %v2468, %v2852
  %v2854 = vpop.f32.mrb[0].mxu0
  %2855 = vdwg.mxu0
  %s2856 = scalar_lea.vmem [#allocation2], 64
  %v2857 = vld [vmem:[%s2856 + $0x7] sm:$0xff]
  %v2858 = vld [vmem:[%s2856 + $0xf] sm:$0xff]
  %v2859 = vld [vmem:[%s2856 + $0x27] sm:$0xff]
  %v2860 = vld [vmem:[%s2856 + $0x2f] sm:$0xff]
  %v2861 = vld [vmem:[%s2856 + $0x47] sm:$0xff]
  %v2862 = vld [vmem:[%s2856 + $0x4f] sm:$0xff]
  %v2863 = vld [vmem:[%s2856 + $0x67] sm:$0xff]
  %v2864 = vld [vmem:[%s2856 + $0x6f] sm:$0xff]
  %v2865 = vld [vmem:[%s2856 + $0x87] sm:$0xff]
  %v2866 = vld [vmem:[%s2856 + $0x8f] sm:$0xff]
  %v2867 = vld [vmem:[%s2856 + $0xa7] sm:$0xff]
  %v2868 = vld [vmem:[%s2856 + $0xaf] sm:$0xff]
  %v2869 = vld [vmem:[%s2856 + $0xc7] sm:$0xff]
  %v2870 = vld [vmem:[%s2856 + $0xcf] sm:$0xff]
  %v2871 = vld [vmem:[%s2856 + $0xe7] sm:$0xff]
  %v2872 = vld [vmem:[%s2856 + $0xef] sm:$0xff]
  %v2873 = vld [vmem:[%s2856 + $0x107] sm:$0xff]
  %v2874 = vld [vmem:[%s2856 + $0x10f] sm:$0xff]
  %v2875 = vld [vmem:[%s2856 + $0x127] sm:$0xff]
  %v2876 = vld [vmem:[%s2856 + $0x12f] sm:$0xff]
  %v2877 = vld [vmem:[%s2856 + $0x147] sm:$0xff]
  %v2878 = vld [vmem:[%s2856 + $0x14f] sm:$0xff]
  %v2879 = vld [vmem:[%s2856 + $0x167] sm:$0xff]
  %v2880 = vld [vmem:[%s2856 + $0x16f] sm:$0xff]
  %v2881 = vld [vmem:[%s2856 + $0x187] sm:$0xff]
  %v2882 = vld [vmem:[%s2856 + $0x18f] sm:$0xff]
  %v2883 = vld [vmem:[%s2856 + $0x1a7] sm:$0xff]
  %v2884 = vld [vmem:[%s2856 + $0x1af] sm:$0xff]
  %v2885 = vld [vmem:[%s2856 + $0x1c7] sm:$0xff]
  %v2886 = vld [vmem:[%s2856 + $0x1cf] sm:$0xff]
  %v2887 = vld [vmem:[%s2856 + $0x1e7] sm:$0xff]
  %v2888 = vld [vmem:[%s2856 + $0x1ef] sm:$0xff]
  %v2889 = vld [vmem:[%s2856 + $0x8] sm:$0xff]
  %v2890 = vld [vmem:[%s2856 + $0x10] sm:$0xff]
  %v2891 = vld [vmem:[%s2856 + $0x28] sm:$0xff]
  %v2892 = vld [vmem:[%s2856 + $0x30] sm:$0xff]
  %v2893 = vld [vmem:[%s2856 + $0x48] sm:$0xff]
  %v2894 = vld [vmem:[%s2856 + $0x50] sm:$0xff]
  %v2895 = vld [vmem:[%s2856 + $0x68] sm:$0xff]
  %v2896 = vld [vmem:[%s2856 + $0x70] sm:$0xff]
  %v2897 = vld [vmem:[%s2856 + $0x88] sm:$0xff]
  %v2898 = vld [vmem:[%s2856 + $0x90] sm:$0xff]
  %v2899 = vld [vmem:[%s2856 + $0xa8] sm:$0xff]
  %v2900 = vld [vmem:[%s2856 + $0xb0] sm:$0xff]
  %v2901 = vld [vmem:[%s2856 + $0xc8] sm:$0xff]
  %v2902 = vld [vmem:[%s2856 + $0xd0] sm:$0xff]
  %v2903 = vld [vmem:[%s2856 + $0xe8] sm:$0xff]
  %v2904 = vld [vmem:[%s2856 + $0xf0] sm:$0xff]
  %v2905 = vld [vmem:[%s2856 + $0x108] sm:$0xff]
  %v2906 = vld [vmem:[%s2856 + $0x110] sm:$0xff]
  %v2907 = vld [vmem:[%s2856 + $0x128] sm:$0xff]
  %v2908 = vld [vmem:[%s2856 + $0x130] sm:$0xff]
  %v2909 = vld [vmem:[%s2856 + $0x148] sm:$0xff]
  %v2910 = vld [vmem:[%s2856 + $0x150] sm:$0xff]
  %v2911 = vld [vmem:[%s2856 + $0x168] sm:$0xff]
  %v2912 = vld [vmem:[%s2856 + $0x170] sm:$0xff]
  %v2913 = vld [vmem:[%s2856 + $0x188] sm:$0xff]
  %v2914 = vld [vmem:[%s2856 + $0x190] sm:$0xff]
  %v2915 = vld [vmem:[%s2856 + $0x1a8] sm:$0xff]
  %v2916 = vld [vmem:[%s2856 + $0x1b0] sm:$0xff]
  %v2917 = vld [vmem:[%s2856 + $0x1c8] sm:$0xff]
  %v2918 = vld [vmem:[%s2856 + $0x1d0] sm:$0xff]
  %v2919 = vld [vmem:[%s2856 + $0x1e8] sm:$0xff]
  %v2920 = vld [vmem:[%s2856 + $0x1f0] sm:$0xff]
  %v2921 = vld [vmem:[%s2856 + $0x9] sm:$0xff]
  %v2922 = vld [vmem:[%s2856 + $0x11] sm:$0xff]
  %v2923 = vld [vmem:[%s2856 + $0x29] sm:$0xff]
  %v2924 = vld [vmem:[%s2856 + $0x31] sm:$0xff]
  %v2925 = vld [vmem:[%s2856 + $0x49] sm:$0xff]
  %v2926 = vld [vmem:[%s2856 + $0x51] sm:$0xff]
  %v2927 = vld [vmem:[%s2856 + $0x69] sm:$0xff]
  %v2928 = vld [vmem:[%s2856 + $0x71] sm:$0xff]
  %v2929 = vld [vmem:[%s2856 + $0x89] sm:$0xff]
  %v2930 = vld [vmem:[%s2856 + $0x91] sm:$0xff]
  %v2931 = vld [vmem:[%s2856 + $0xa9] sm:$0xff]
  %v2932 = vld [vmem:[%s2856 + $0xb1] sm:$0xff]
  %v2933 = vld [vmem:[%s2856 + $0xc9] sm:$0xff]
  %v2934 = vld [vmem:[%s2856 + $0xd1] sm:$0xff]
  %v2935 = vld [vmem:[%s2856 + $0xe9] sm:$0xff]
  %v2936 = vld [vmem:[%s2856 + $0xf1] sm:$0xff]
  %v2937 = vld [vmem:[%s2856 + $0x109] sm:$0xff]
  %v2938 = vld [vmem:[%s2856 + $0x111] sm:$0xff]
  %v2939 = vld [vmem:[%s2856 + $0x129] sm:$0xff]
  %v2940 = vld [vmem:[%s2856 + $0x131] sm:$0xff]
  %v2941 = vld [vmem:[%s2856 + $0x149] sm:$0xff]
  %v2942 = vld [vmem:[%s2856 + $0x151] sm:$0xff]
  %v2943 = vld [vmem:[%s2856 + $0x169] sm:$0xff]
  %v2944 = vld [vmem:[%s2856 + $0x171] sm:$0xff]
  %v2945 = vld [vmem:[%s2856 + $0x189] sm:$0xff]
  %v2946 = vld [vmem:[%s2856 + $0x191] sm:$0xff]
  %v2947 = vld [vmem:[%s2856 + $0x1a9] sm:$0xff]
  %v2948 = vld [vmem:[%s2856 + $0x1b1] sm:$0xff]
  %v2949 = vld [vmem:[%s2856 + $0x1c9] sm:$0xff]
  %v2950 = vld [vmem:[%s2856 + $0x1d1] sm:$0xff]
  %v2951 = vld [vmem:[%s2856 + $0x1e9] sm:$0xff]
  %v2952 = vld [vmem:[%s2856 + $0x1f1] sm:$0xff]
  %s2953 = scalar_lea.vmem [#allocation2], 640
  %v2954 = vld [vmem:[%s2953 + $0x7] sm:$0xff]
  %v2955 = vld [vmem:[%s2953 + $0xf] sm:$0xff]
  %v2956 = vld [vmem:[%s2953 + $0x27] sm:$0xff]
  %v2957 = vld [vmem:[%s2953 + $0x2f] sm:$0xff]
  %v2958 = vld [vmem:[%s2953 + $0x47] sm:$0xff]
  %v2959 = vld [vmem:[%s2953 + $0x4f] sm:$0xff]
  %v2960 = vld [vmem:[%s2953 + $0x67] sm:$0xff]
  %v2961 = vld [vmem:[%s2953 + $0x6f] sm:$0xff]
  %v2962 = vld [vmem:[%s2953 + $0x87] sm:$0xff]
  %v2963 = vld [vmem:[%s2953 + $0x8f] sm:$0xff]
  %v2964 = vld [vmem:[%s2953 + $0xa7] sm:$0xff]
  %v2965 = vld [vmem:[%s2953 + $0xaf] sm:$0xff]
  %v2966 = vld [vmem:[%s2953 + $0xc7] sm:$0xff]
  %v2967 = vld [vmem:[%s2953 + $0xcf] sm:$0xff]
  %v2968 = vld [vmem:[%s2953 + $0xe7] sm:$0xff]
  %v2969 = vld [vmem:[%s2953 + $0xef] sm:$0xff]
  %v2970 = vld [vmem:[%s2953 + $0x107] sm:$0xff]
  %v2971 = vld [vmem:[%s2953 + $0x10f] sm:$0xff]
  %v2972 = vld [vmem:[%s2953 + $0x127] sm:$0xff]
  %v2973 = vld [vmem:[%s2953 + $0x12f] sm:$0xff]
  %v2974 = vld [vmem:[%s2953 + $0x147] sm:$0xff]
  %v2975 = vld [vmem:[%s2953 + $0x14f] sm:$0xff]
  %v2976 = vld [vmem:[%s2953 + $0x167] sm:$0xff]
  %v2977 = vld [vmem:[%s2953 + $0x16f] sm:$0xff]
  %v2978 = vld [vmem:[%s2953 + $0x187] sm:$0xff]
  %v2979 = vld [vmem:[%s2953 + $0x18f] sm:$0xff]
  %v2980 = vld [vmem:[%s2953 + $0x1a7] sm:$0xff]
  %v2981 = vld [vmem:[%s2953 + $0x1af] sm:$0xff]
  %v2982 = vld [vmem:[%s2953 + $0x1c7] sm:$0xff]
  %v2983 = vld [vmem:[%s2953 + $0x1cf] sm:$0xff]
  %v2984 = vld [vmem:[%s2953 + $0x1e7] sm:$0xff]
  %v2985 = vld [vmem:[%s2953 + $0x1ef] sm:$0xff]
  %v2986 = vld [vmem:[%s2953 + $0x8] sm:$0xff]
  %v2987 = vld [vmem:[%s2953 + $0x10] sm:$0xff]
  %v2988 = vld [vmem:[%s2953 + $0x28] sm:$0xff]
  %v2989 = vld [vmem:[%s2953 + $0x30] sm:$0xff]
  %v2990 = vld [vmem:[%s2953 + $0x48] sm:$0xff]
  %v2991 = vld [vmem:[%s2953 + $0x50] sm:$0xff]
  %v2992 = vld [vmem:[%s2953 + $0x68] sm:$0xff]
  %v2993 = vld [vmem:[%s2953 + $0x70] sm:$0xff]
  %v2994 = vld [vmem:[%s2953 + $0x88] sm:$0xff]
  %v2995 = vld [vmem:[%s2953 + $0x90] sm:$0xff]
  %v2996 = vld [vmem:[%s2953 + $0xa8] sm:$0xff]
  %v2997 = vld [vmem:[%s2953 + $0xb0] sm:$0xff]
  %v2998 = vld [vmem:[%s2953 + $0xc8] sm:$0xff]
  %v2999 = vld [vmem:[%s2953 + $0xd0] sm:$0xff]
  %v3000 = vld [vmem:[%s2953 + $0xe8] sm:$0xff]
  %v3001 = vld [vmem:[%s2953 + $0xf0] sm:$0xff]
  %v3002 = vld [vmem:[%s2953 + $0x108] sm:$0xff]
  %v3003 = vld [vmem:[%s2953 + $0x110] sm:$0xff]
  %v3004 = vld [vmem:[%s2953 + $0x128] sm:$0xff]
  %v3005 = vld [vmem:[%s2953 + $0x130] sm:$0xff]
  %v3006 = vld [vmem:[%s2953 + $0x148] sm:$0xff]
  %v3007 = vld [vmem:[%s2953 + $0x150] sm:$0xff]
  %v3008 = vld [vmem:[%s2953 + $0x168] sm:$0xff]
  %v3009 = vld [vmem:[%s2953 + $0x170] sm:$0xff]
  %v3010 = vld [vmem:[%s2953 + $0x188] sm:$0xff]
  %v3011 = vld [vmem:[%s2953 + $0x190] sm:$0xff]
  %v3012 = vld [vmem:[%s2953 + $0x1a8] sm:$0xff]
  %v3013 = vld [vmem:[%s2953 + $0x1b0] sm:$0xff]
  %v3014 = vld [vmem:[%s2953 + $0x1c8] sm:$0xff]
  %v3015 = vld [vmem:[%s2953 + $0x1d0] sm:$0xff]
  %v3016 = vld [vmem:[%s2953 + $0x1e8] sm:$0xff]
  %v3017 = vld [vmem:[%s2953 + $0x1f0] sm:$0xff]
  %v3018 = vld [vmem:[%s2953 + $0x9] sm:$0xff]
  %v3019 = vld [vmem:[%s2953 + $0x11] sm:$0xff]
  %v3020 = vld [vmem:[%s2953 + $0x29] sm:$0xff]
  %v3021 = vld [vmem:[%s2953 + $0x31] sm:$0xff]
  %v3022 = vld [vmem:[%s2953 + $0x49] sm:$0xff]
  %v3023 = vld [vmem:[%s2953 + $0x51] sm:$0xff]
  %v3024 = vld [vmem:[%s2953 + $0x69] sm:$0xff]
  %v3025 = vld [vmem:[%s2953 + $0x71] sm:$0xff]
  %v3026 = vld [vmem:[%s2953 + $0x89] sm:$0xff]
  %v3027 = vld [vmem:[%s2953 + $0x91] sm:$0xff]
  %v3028 = vld [vmem:[%s2953 + $0xa9] sm:$0xff]
  %v3029 = vld [vmem:[%s2953 + $0xb1] sm:$0xff]
  %v3030 = vld [vmem:[%s2953 + $0xc9] sm:$0xff]
  %v3031 = vld [vmem:[%s2953 + $0xd1] sm:$0xff]
  %v3032 = vld [vmem:[%s2953 + $0xe9] sm:$0xff]
  %v3033 = vld [vmem:[%s2953 + $0xf1] sm:$0xff]
  %v3034 = vld [vmem:[%s2953 + $0x109] sm:$0xff]
  %v3035 = vld [vmem:[%s2953 + $0x111] sm:$0xff]
  %v3036 = vld [vmem:[%s2953 + $0x129] sm:$0xff]
  %v3037 = vld [vmem:[%s2953 + $0x131] sm:$0xff]
  %v3038 = vld [vmem:[%s2953 + $0x149] sm:$0xff]
  %v3039 = vld [vmem:[%s2953 + $0x151] sm:$0xff]
  %v3040 = vld [vmem:[%s2953 + $0x169] sm:$0xff]
  %v3041 = vld [vmem:[%s2953 + $0x171] sm:$0xff]
  %v3042 = vld [vmem:[%s2953 + $0x189] sm:$0xff]
  %v3043 = vld [vmem:[%s2953 + $0x191] sm:$0xff]
  %v3044 = vld [vmem:[%s2953 + $0x1a9] sm:$0xff]
  %v3045 = vld [vmem:[%s2953 + $0x1b1] sm:$0xff]
  %v3046 = vld [vmem:[%s2953 + $0x1c9] sm:$0xff]
  %v3047 = vld [vmem:[%s2953 + $0x1d1] sm:$0xff]
  %v3048 = vld [vmem:[%s2953 + $0x1e9] sm:$0xff]
  %v3049 = vld [vmem:[%s2953 + $0x1f1] sm:$0xff]
  %s3050 = scalar_lea.vmem %s2, 768
  %v3051 = vld [vmem:[%s3050] sm:$0xff]
  %v3052 = vld [vmem:[%s3050 + $0x8] sm:$0xff]
  %v3053 = vld [vmem:[%s3050 + $0x10] sm:$0xff]
  %v3054 = vld [vmem:[%s3050 + $0x18] sm:$0xff]
  %v3055 = vld [vmem:[%s3050 + $0x20] sm:$0xff]
  %v3056 = vld [vmem:[%s3050 + $0x28] sm:$0xff]
  %v3057 = vld [vmem:[%s3050 + $0x30] sm:$0xff]
  %v3058 = vld [vmem:[%s3050 + $0x38] sm:$0xff]
  %v3059 = vld [vmem:[%s3050 + $0x40] sm:$0xff]
  %v3060 = vld [vmem:[%s3050 + $0x48] sm:$0xff]
  %v3061 = vld [vmem:[%s3050 + $0x50] sm:$0xff]
  %v3062 = vld [vmem:[%s3050 + $0x58] sm:$0xff]
  %v3063 = vld [vmem:[%s3050 + $0x60] sm:$0xff]
  %v3064 = vld [vmem:[%s3050 + $0x68] sm:$0xff]
  %v3065 = vld [vmem:[%s3050 + $0x70] sm:$0xff]
  %v3066 = vld [vmem:[%s3050 + $0x78] sm:$0xff]
  %v3067 = vld [vmem:[%s3050 + $0x80] sm:$0xff]
  %v3068 = vld [vmem:[%s3050 + $0x88] sm:$0xff]
  %v3069 = vld [vmem:[%s3050 + $0x90] sm:$0xff]
  %v3070 = vld [vmem:[%s3050 + $0x98] sm:$0xff]
  %v3071 = vld [vmem:[%s3050 + $0xa0] sm:$0xff]
  %v3072 = vld [vmem:[%s3050 + $0xa8] sm:$0xff]
  %v3073 = vld [vmem:[%s3050 + $0xb0] sm:$0xff]
  %v3074 = vld [vmem:[%s3050 + $0xb8] sm:$0xff]
  %v3075 = vld [vmem:[%s3050 + $0xc0] sm:$0xff]
  %v3076 = vld [vmem:[%s3050 + $0xc8] sm:$0xff]
  %v3077 = vld [vmem:[%s3050 + $0xd0] sm:$0xff]
  %v3078 = vld [vmem:[%s3050 + $0xd8] sm:$0xff]
  %v3079 = vld [vmem:[%s3050 + $0xe0] sm:$0xff]
  %v3080 = vld [vmem:[%s3050 + $0xe8] sm:$0xff]
  %v3081 = vld [vmem:[%s3050 + $0xf0] sm:$0xff]
  %v3082 = vld [vmem:[%s3050 + $0xf8] sm:$0xff]
  %v3083 = vld [vmem:[%s3050 + $0x100] sm:$0xff]
  %v3084 = vld [vmem:[%s3050 + $0x108] sm:$0xff]
  %v3085 = vld [vmem:[%s3050 + $0x110] sm:$0xff]
  %v3086 = vld [vmem:[%s3050 + $0x118] sm:$0xff]
  %v3087 = vld [vmem:[%s3050 + $0x120] sm:$0xff]
  %v3088 = vld [vmem:[%s3050 + $0x128] sm:$0xff]
  %v3089 = vld [vmem:[%s3050 + $0x130] sm:$0xff]
  %v3090 = vld [vmem:[%s3050 + $0x138] sm:$0xff]
  %v3091 = vld [vmem:[%s3050 + $0x140] sm:$0xff]
  %v3092 = vld [vmem:[%s3050 + $0x148] sm:$0xff]
  %v3093 = vld [vmem:[%s3050 + $0x150] sm:$0xff]
  %v3094 = vld [vmem:[%s3050 + $0x158] sm:$0xff]
  %v3095 = vld [vmem:[%s3050 + $0x160] sm:$0xff]
  %v3096 = vld [vmem:[%s3050 + $0x168] sm:$0xff]
  %v3097 = vld [vmem:[%s3050 + $0x170] sm:$0xff]
  %v3098 = vld [vmem:[%s3050 + $0x178] sm:$0xff]
  %3099 = vmatprep.subr.mxu0 0.0
  %3100 = vmatpush1.msra.mxu0 %v3051
  %3101 = vmatprep.subr.mxu0 0.0
  %3102 = vmatpush1.msra.mxu0 %v3052
  %3103 = vmatprep.subr.mxu0 0.0
  %3104 = vmatpush1.msra.mxu0 %v3053
  %3105 = vmatprep.subr.mxu0 0.0
  %3106 = vmatpush1.msra.mxu0 %v3054
  %3107 = vmatprep.subr.mxu0 0.0
  %3108 = vmatpush1.msra.mxu0 %v3055
  %3109 = vmatprep.subr.mxu0 0.0
  %3110 = vmatpush1.msra.mxu0 %v3056
  %3111 = vmatprep.subr.mxu0 0.0
  %3112 = vmatpush1.msra.mxu0 %v3057
  %3113 = vmatprep.subr.mxu0 0.0
  %3114 = vmatpush1.msra.mxu0 %v3058
  %3115 = vmatprep.subr.mxu0 0.0
  %3116 = vmatpush1.msra.mxu0 %v3059
  %3117 = vmatprep.subr.mxu0 0.0
  %3118 = vmatpush1.msra.mxu0 %v3060
  %3119 = vmatprep.subr.mxu0 0.0
  %3120 = vmatpush1.msra.mxu0 %v3061
  %3121 = vmatprep.subr.mxu0 0.0
  %3122 = vmatpush1.msra.mxu0 %v3062
  %3123 = vmatprep.subr.mxu0 0.0
  %3124 = vmatpush1.msra.mxu0 %v3063
  %3125 = vmatprep.subr.mxu0 0.0
  %3126 = vmatpush1.msra.mxu0 %v3064
  %3127 = vmatprep.subr.mxu0 0.0
  %3128 = vmatpush1.msra.mxu0 %v3065
  %3129 = vmatprep.subr.mxu0 0.0
  %3130 = vmatpush1.msra.mxu0 %v3066
  %3131 = vmatprep.subr.mxu0 0.0
  %3132 = vmatpush1.msra.mxu0 %v3067
  %3133 = vmatprep.subr.mxu0 0.0
  %3134 = vmatpush1.msra.mxu0 %v3068
  %3135 = vmatprep.subr.mxu0 0.0
  %3136 = vmatpush1.msra.mxu0 %v3069
  %3137 = vmatprep.subr.mxu0 0.0
  %3138 = vmatpush1.msra.mxu0 %v3070
  %3139 = vmatprep.subr.mxu0 0.0
  %3140 = vmatpush1.msra.mxu0 %v3071
  %3141 = vmatprep.subr.mxu0 0.0
  %3142 = vmatpush1.msra.mxu0 %v3072
  %3143 = vmatprep.subr.mxu0 0.0
  %3144 = vmatpush1.msra.mxu0 %v3073
  %3145 = vmatprep.subr.mxu0 0.0
  %3146 = vmatpush1.msra.mxu0 %v3074
  %3147 = vmatprep.subr.mxu0 0.0
  %3148 = vmatpush1.msra.mxu0 %v3075
  %3149 = vmatprep.subr.mxu0 0.0
  %3150 = vmatpush1.msra.mxu0 %v3076
  %3151 = vmatprep.subr.mxu0 0.0
  %3152 = vmatpush1.msra.mxu0 %v3077
  %3153 = vmatprep.subr.mxu0 0.0
  %3154 = vmatpush1.msra.mxu0 %v3078
  %3155 = vmatprep.subr.mxu0 0.0
  %3156 = vmatpush1.msra.mxu0 %v3079
  %3157 = vmatprep.subr.mxu0 0.0
  %3158 = vmatpush1.msra.mxu0 %v3080
  %3159 = vmatprep.subr.mxu0 0.0
  %3160 = vmatpush1.msra.mxu0 %v3081
  %3161 = vmatprep.subr.mxu0 0.0
  %3162 = vmatpush1.msra.mxu0 %v3082
  %3163 = vmatprep.mubr.f32.mxu0 %v2889
  %3164 = vmatmul.mubr.f32.gmra.mrb[0].mxu0 %v2857
  %v3165 = vpop.f32.mrb[0].mxu0
  %v3166 = vadd.f32 0.0, %v3165
  %v3167 = vpop.f32.mrb[0].mxu0
  %3168 = vmatprep.mubr.f32.mxu0 %v2890
  %3169 = vmatmul.mubr.f32.gmra.mrb[0].mxu0 %v2858
  %v3170 = vpop.f32.mrb[0].mxu0
  %v3171 = vadd.f32 0.0, %v3170
  %v3172 = vpop.f32.mrb[0].mxu0
  %3173 = vmatprep.mubr.f32.mxu0 %v2891
  %3174 = vmatmul.mubr.f32.gmra.mrb[0].mxu0 %v2859
  %v3175 = vpop.f32.mrb[0].mxu0
  %v3176 = vadd.f32 0.0, %v3175
  %v3177 = vpop.f32.mrb[0].mxu0
  %3178 = vmatprep.mubr.f32.mxu0 %v2892
  %3179 = vmatmul.mubr.f32.gmra.mrb[0].mxu0 %v2860
  %v3180 = vpop.f32.mrb[0].mxu0
  %v3181 = vadd.f32 0.0, %v3180
  %v3182 = vpop.f32.mrb[0].mxu0
  %3183 = vmatprep.mubr.f32.mxu0 %v2893
  %3184 = vmatmul.mubr.f32.gmra.mrb[0].mxu0 %v2861
  %v3185 = vpop.f32.mrb[0].mxu0
  %v3186 = vadd.f32 0.0, %v3185
  %v3187 = vpop.f32.mrb[0].mxu0
  %3188 = vmatprep.mubr.f32.mxu0 %v2894
  %3189 = vmatmul.mubr.f32.gmra.mrb[0].mxu0 %v2862
  %v3190 = vpop.f32.mrb[0].mxu0
  %v3191 = vadd.f32 0.0, %v3190
  %v3192 = vpop.f32.mrb[0].mxu0
  %3193 = vmatprep.mubr.f32.mxu0 %v2895
  %3194 = vmatmul.mubr.f32.gmra.mrb[0].mxu0 %v2863
  %v3195 = vpop.f32.mrb[0].mxu0
  %v3196 = vadd.f32 0.0, %v3195
  %v3197 = vpop.f32.mrb[0].mxu0
  %3198 = vmatprep.mubr.f32.mxu0 %v2896
  %3199 = vmatmul.mubr.f32.gmra.mrb[0].mxu0 %v2864
  %v3200 = vpop.f32.mrb[0].mxu0
  %v3201 = vadd.f32 0.0, %v3200
  %v3202 = vpop.f32.mrb[0].mxu0
  %3203 = vmatprep.mubr.f32.mxu0 %v2897
  %3204 = vmatmul.mubr.f32.gmra.mrb[0].mxu0 %v2865
  %v3205 = vpop.f32.mrb[0].mxu0
  %v3206 = vadd.f32 0.0, %v3205
  %v3207 = vpop.f32.mrb[0].mxu0
  %3208 = vmatprep.mubr.f32.mxu0 %v2898
  %3209 = vmatmul.mubr.f32.gmra.mrb[0].mxu0 %v2866
  %v3210 = vpop.f32.mrb[0].mxu0
  %v3211 = vadd.f32 0.0, %v3210
  %v3212 = vpop.f32.mrb[0].mxu0
  %3213 = vmatprep.mubr.f32.mxu0 %v2899
  %3214 = vmatmul.mubr.f32.gmra.mrb[0].mxu0 %v2867
  %v3215 = vpop.f32.mrb[0].mxu0
  %v3216 = vadd.f32 0.0, %v3215
  %v3217 = vpop.f32.mrb[0].mxu0
  %3218 = vmatprep.mubr.f32.mxu0 %v2900
  %3219 = vmatmul.mubr.f32.gmra.mrb[0].mxu0 %v2868
  %v3220 = vpop.f32.mrb[0].mxu0
  %v3221 = vadd.f32 0.0, %v3220
  %v3222 = vpop.f32.mrb[0].mxu0
  %3223 = vmatprep.mubr.f32.mxu0 %v2901
  %3224 = vmatmul.mubr.f32.gmra.mrb[0].mxu0 %v2869
  %v3225 = vpop.f32.mrb[0].mxu0
  %v3226 = vadd.f32 0.0, %v3225
  %v3227 = vpop.f32.mrb[0].mxu0
  %3228 = vmatprep.mubr.f32.mxu0 %v2902
  %3229 = vmatmul.mubr.f32.gmra.mrb[0].mxu0 %v2870
  %v3230 = vpop.f32.mrb[0].mxu0
  %v3231 = vadd.f32 0.0, %v3230
  %v3232 = vpop.f32.mrb[0].mxu0
  %3233 = vmatprep.mubr.f32.mxu0 %v2903
  %3234 = vmatmul.mubr.f32.gmra.mrb[0].mxu0 %v2871
  %v3235 = vpop.f32.mrb[0].mxu0
  %v3236 = vadd.f32 0.0, %v3235
  %v3237 = vpop.f32.mrb[0].mxu0
  %3238 = vmatprep.mubr.f32.mxu0 %v2904
  %3239 = vmatmul.mubr.f32.gmra.mrb[0].mxu0 %v2872
  %v3240 = vpop.f32.mrb[0].mxu0
  %v3241 = vadd.f32 0.0, %v3240
  %v3242 = vpop.f32.mrb[0].mxu0
  %3243 = vmatprep.mubr.f32.mxu0 %v2905
  %3244 = vmatmul.mubr.f32.gmra.mrb[0].mxu0 %v2873
  %v3245 = vpop.f32.mrb[0].mxu0
  %v3246 = vadd.f32 0.0, %v3245
  %v3247 = vpop.f32.mrb[0].mxu0
  %3248 = vmatprep.mubr.f32.mxu0 %v2906
  %3249 = vmatmul.mubr.f32.gmra.mrb[0].mxu0 %v2874
  %v3250 = vpop.f32.mrb[0].mxu0
  %v3251 = vadd.f32 0.0, %v3250
  %v3252 = vpop.f32.mrb[0].mxu0
  %3253 = vmatprep.mubr.f32.mxu0 %v2907
  %3254 = vmatmul.mubr.f32.gmra.mrb[0].mxu0 %v2875
  %v3255 = vpop.f32.mrb[0].mxu0
  %v3256 = vadd.f32 0.0, %v3255
  %v3257 = vpop.f32.mrb[0].mxu0
  %3258 = vmatprep.mubr.f32.mxu0 %v2908
  %3259 = vmatmul.mubr.f32.gmra.mrb[0].mxu0 %v2876
  %v3260 = vpop.f32.mrb[0].mxu0
  %v3261 = vadd.f32 0.0, %v3260
  %v3262 = vpop.f32.mrb[0].mxu0
  %3263 = vmatprep.mubr.f32.mxu0 %v2909
  %3264 = vmatmul.mubr.f32.gmra.mrb[0].mxu0 %v2877
  %v3265 = vpop.f32.mrb[0].mxu0
  %v3266 = vadd.f32 0.0, %v3265
  %v3267 = vpop.f32.mrb[0].mxu0
  %3268 = vmatprep.mubr.f32.mxu0 %v2910
  %3269 = vmatmul.mubr.f32.gmra.mrb[0].mxu0 %v2878
  %v3270 = vpop.f32.mrb[0].mxu0
  %v3271 = vadd.f32 0.0, %v3270
  %v3272 = vpop.f32.mrb[0].mxu0
  %3273 = vmatprep.mubr.f32.mxu0 %v2911
  %3274 = vmatmul.mubr.f32.gmra.mrb[0].mxu0 %v2879
  %v3275 = vpop.f32.mrb[0].mxu0
  %v3276 = vadd.f32 0.0, %v3275
  %v3277 = vpop.f32.mrb[0].mxu0
  %3278 = vmatprep.mubr.f32.mxu0 %v2912
  %3279 = vmatmul.mubr.f32.gmra.mrb[0].mxu0 %v2880
  %v3280 = vpop.f32.mrb[0].mxu0
  %v3281 = vadd.f32 0.0, %v3280
  %v3282 = vpop.f32.mrb[0].mxu0
  %3283 = vmatprep.mubr.f32.mxu0 %v2913
  %3284 = vmatmul.mubr.f32.gmra.mrb[0].mxu0 %v2881
  %v3285 = vpop.f32.mrb[0].mxu0
  %v3286 = vadd.f32 0.0, %v3285
  %v3287 = vpop.f32.mrb[0].mxu0
  %3288 = vmatprep.mubr.f32.mxu0 %v2914
  %3289 = vmatmul.mubr.f32.gmra.mrb[0].mxu0 %v2882
  %v3290 = vpop.f32.mrb[0].mxu0
  %v3291 = vadd.f32 0.0, %v3290
  %v3292 = vpop.f32.mrb[0].mxu0
  %3293 = vmatprep.mubr.f32.mxu0 %v2915
  %3294 = vmatmul.mubr.f32.gmra.mrb[0].mxu0 %v2883
  %v3295 = vpop.f32.mrb[0].mxu0
  %v3296 = vadd.f32 0.0, %v3295
  %v3297 = vpop.f32.mrb[0].mxu0
  %3298 = vmatprep.mubr.f32.mxu0 %v2916
  %3299 = vmatmul.mubr.f32.gmra.mrb[0].mxu0 %v2884
  %v3300 = vpop.f32.mrb[0].mxu0
  %v3301 = vadd.f32 0.0, %v3300
  %v3302 = vpop.f32.mrb[0].mxu0
  %3303 = vmatprep.mubr.f32.mxu0 %v2917
  %3304 = vmatmul.mubr.f32.gmra.mrb[0].mxu0 %v2885
  %v3305 = vpop.f32.mrb[0].mxu0
  %v3306 = vadd.f32 0.0, %v3305
  %v3307 = vpop.f32.mrb[0].mxu0
  %3308 = vmatprep.mubr.f32.mxu0 %v2918
  %3309 = vmatmul.mubr.f32.gmra.mrb[0].mxu0 %v2886
  %v3310 = vpop.f32.mrb[0].mxu0
  %v3311 = vadd.f32 0.0, %v3310
  %v3312 = vpop.f32.mrb[0].mxu0
  %3313 = vmatprep.mubr.f32.mxu0 %v2919
  %3314 = vmatmul.mubr.f32.gmra.mrb[0].mxu0 %v2887
  %v3315 = vpop.f32.mrb[0].mxu0
  %v3316 = vadd.f32 0.0, %v3315
  %v3317 = vpop.f32.mrb[0].mxu0
  %3318 = vmatprep.mubr.f32.mxu0 %v2920
  %3319 = vmatmul.mubr.f32.gmra.mrb[0].mxu0 %v2888
  %v3320 = vpop.f32.mrb[0].mxu0
  %v3321 = vadd.f32 0.0, %v3320
  %v3322 = vpop.f32.mrb[0].mxu0
  %3323 = vmatprep.mubr.f32.mxu0 %v2986
  %3324 = vmatmul.mubr.f32.gmra.mrb[0].mxu0 %v2954
  %v3325 = vpop.f32.mrb[0].mxu0
  %v3326 = vadd.f32 0.0, %v3325
  %v3327 = vpop.f32.mrb[0].mxu0
  %3328 = vmatprep.mubr.f32.mxu0 %v2987
  %3329 = vmatmul.mubr.f32.gmra.mrb[0].mxu0 %v2955
  %v3330 = vpop.f32.mrb[0].mxu0
  %v3331 = vadd.f32 0.0, %v3330
  %v3332 = vpop.f32.mrb[0].mxu0
  %3333 = vmatprep.mubr.f32.mxu0 %v2988
  %3334 = vmatmul.mubr.f32.gmra.mrb[0].mxu0 %v2956
  %v3335 = vpop.f32.mrb[0].mxu0
  %v3336 = vadd.f32 0.0, %v3335
  %v3337 = vpop.f32.mrb[0].mxu0
  %3338 = vmatprep.mubr.f32.mxu0 %v2989
  %3339 = vmatmul.mubr.f32.gmra.mrb[0].mxu0 %v2957
  %v3340 = vpop.f32.mrb[0].mxu0
  %v3341 = vadd.f32 0.0, %v3340
  %v3342 = vpop.f32.mrb[0].mxu0
  %3343 = vmatprep.mubr.f32.mxu0 %v2990
  %3344 = vmatmul.mubr.f32.gmra.mrb[0].mxu0 %v2958
  %v3345 = vpop.f32.mrb[0].mxu0
  %v3346 = vadd.f32 0.0, %v3345
  %v3347 = vpop.f32.mrb[0].mxu0
  %3348 = vmatprep.mubr.f32.mxu0 %v2991
  %3349 = vmatmul.mubr.f32.gmra.mrb[0].mxu0 %v2959
  %v3350 = vpop.f32.mrb[0].mxu0
  %v3351 = vadd.f32 0.0, %v3350
  %v3352 = vpop.f32.mrb[0].mxu0
  %3353 = vmatprep.mubr.f32.mxu0 %v2992
  %3354 = vmatmul.mubr.f32.gmra.mrb[0].mxu0 %v2960
  %v3355 = vpop.f32.mrb[0].mxu0
  %v3356 = vadd.f32 0.0, %v3355
  %v3357 = vpop.f32.mrb[0].mxu0
  %3358 = vmatprep.mubr.f32.mxu0 %v2993
  %3359 = vmatmul.mubr.f32.gmra.mrb[0].mxu0 %v2961
  %v3360 = vpop.f32.mrb[0].mxu0
  %v3361 = vadd.f32 0.0, %v3360
  %v3362 = vpop.f32.mrb[0].mxu0
  %3363 = vmatprep.mubr.f32.mxu0 %v2994
  %3364 = vmatmul.mubr.f32.gmra.mrb[0].mxu0 %v2962
  %v3365 = vpop.f32.mrb[0].mxu0
  %v3366 = vadd.f32 0.0, %v3365
  %v3367 = vpop.f32.mrb[0].mxu0
  %3368 = vmatprep.mubr.f32.mxu0 %v2995
  %3369 = vmatmul.mubr.f32.gmra.mrb[0].mxu0 %v2963
  %v3370 = vpop.f32.mrb[0].mxu0
  %v3371 = vadd.f32 0.0, %v3370
  %v3372 = vpop.f32.mrb[0].mxu0
  %3373 = vmatprep.mubr.f32.mxu0 %v2996
  %3374 = vmatmul.mubr.f32.gmra.mrb[0].mxu0 %v2964
  %v3375 = vpop.f32.mrb[0].mxu0
  %v3376 = vadd.f32 0.0, %v3375
  %v3377 = vpop.f32.mrb[0].mxu0
  %3378 = vmatprep.mubr.f32.mxu0 %v2997
  %3379 = vmatmul.mubr.f32.gmra.mrb[0].mxu0 %v2965
  %v3380 = vpop.f32.mrb[0].mxu0
  %v3381 = vadd.f32 0.0, %v3380
  %v3382 = vpop.f32.mrb[0].mxu0
  %3383 = vmatprep.mubr.f32.mxu0 %v2998
  %3384 = vmatmul.mubr.f32.gmra.mrb[0].mxu0 %v2966
  %v3385 = vpop.f32.mrb[0].mxu0
  %v3386 = vadd.f32 0.0, %v3385
  %v3387 = vpop.f32.mrb[0].mxu0
  %3388 = vmatprep.mubr.f32.mxu0 %v2999
  %3389 = vmatmul.mubr.f32.gmra.mrb[0].mxu0 %v2967
  %v3390 = vpop.f32.mrb[0].mxu0
  %v3391 = vadd.f32 0.0, %v3390
  %v3392 = vpop.f32.mrb[0].mxu0
  %3393 = vmatprep.mubr.f32.mxu0 %v3000
  %3394 = vmatmul.mubr.f32.gmra.mrb[0].mxu0 %v2968
  %v3395 = vpop.f32.mrb[0].mxu0
  %v3396 = vadd.f32 0.0, %v3395
  %v3397 = vpop.f32.mrb[0].mxu0
  %3398 = vmatprep.mubr.f32.mxu0 %v3001
  %3399 = vmatmul.mubr.f32.gmra.mrb[0].mxu0 %v2969
  %v3400 = vpop.f32.mrb[0].mxu0
  %v3401 = vadd.f32 0.0, %v3400
  %v3402 = vpop.f32.mrb[0].mxu0
  %3403 = vmatprep.mubr.f32.mxu0 %v3002
  %3404 = vmatmul.mubr.f32.gmra.mrb[0].mxu0 %v2970
  %v3405 = vpop.f32.mrb[0].mxu0
  %v3406 = vadd.f32 0.0, %v3405
  %v3407 = vpop.f32.mrb[0].mxu0
  %3408 = vmatprep.mubr.f32.mxu0 %v3003
  %3409 = vmatmul.mubr.f32.gmra.mrb[0].mxu0 %v2971
  %v3410 = vpop.f32.mrb[0].mxu0
  %v3411 = vadd.f32 0.0, %v3410
  %v3412 = vpop.f32.mrb[0].mxu0
  %3413 = vmatprep.mubr.f32.mxu0 %v3004
  %3414 = vmatmul.mubr.f32.gmra.mrb[0].mxu0 %v2972
  %v3415 = vpop.f32.mrb[0].mxu0
  %v3416 = vadd.f32 0.0, %v3415
  %v3417 = vpop.f32.mrb[0].mxu0
  %3418 = vmatprep.mubr.f32.mxu0 %v3005
  %3419 = vmatmul.mubr.f32.gmra.mrb[0].mxu0 %v2973
  %v3420 = vpop.f32.mrb[0].mxu0
  %v3421 = vadd.f32 0.0, %v3420
  %v3422 = vpop.f32.mrb[0].mxu0
  %3423 = vmatprep.mubr.f32.mxu0 %v3006
  %3424 = vmatmul.mubr.f32.gmra.mrb[0].mxu0 %v2974
  %v3425 = vpop.f32.mrb[0].mxu0
  %v3426 = vadd.f32 0.0, %v3425
  %v3427 = vpop.f32.mrb[0].mxu0
  %3428 = vmatprep.mubr.f32.mxu0 %v3007
  %3429 = vmatmul.mubr.f32.gmra.mrb[0].mxu0 %v2975
  %v3430 = vpop.f32.mrb[0].mxu0
  %v3431 = vadd.f32 0.0, %v3430
  %v3432 = vpop.f32.mrb[0].mxu0
  %3433 = vmatprep.mubr.f32.mxu0 %v3008
  %3434 = vmatmul.mubr.f32.gmra.mrb[0].mxu0 %v2976
  %v3435 = vpop.f32.mrb[0].mxu0
  %v3436 = vadd.f32 0.0, %v3435
  %v3437 = vpop.f32.mrb[0].mxu0
  %3438 = vmatprep.mubr.f32.mxu0 %v3009
  %3439 = vmatmul.mubr.f32.gmra.mrb[0].mxu0 %v2977
  %v3440 = vpop.f32.mrb[0].mxu0
  %v3441 = vadd.f32 0.0, %v3440
  %v3442 = vpop.f32.mrb[0].mxu0
  %3443 = vmatprep.mubr.f32.mxu0 %v3010
  %3444 = vmatmul.mubr.f32.gmra.mrb[0].mxu0 %v2978
  %v3445 = vpop.f32.mrb[0].mxu0
  %v3446 = vadd.f32 0.0, %v3445
  %v3447 = vpop.f32.mrb[0].mxu0
  %3448 = vmatprep.mubr.f32.mxu0 %v3011
  %3449 = vmatmul.mubr.f32.gmra.mrb[0].mxu0 %v2979
  %v3450 = vpop.f32.mrb[0].mxu0
  %v3451 = vadd.f32 0.0, %v3450
  %v3452 = vpop.f32.mrb[0].mxu0
  %3453 = vmatprep.mubr.f32.mxu0 %v3012
  %3454 = vmatmul.mubr.f32.gmra.mrb[0].mxu0 %v2980
  %v3455 = vpop.f32.mrb[0].mxu0
  %v3456 = vadd.f32 0.0, %v3455
  %v3457 = vpop.f32.mrb[0].mxu0
  %3458 = vmatprep.mubr.f32.mxu0 %v3013
  %3459 = vmatmul.mubr.f32.gmra.mrb[0].mxu0 %v2981
  %v3460 = vpop.f32.mrb[0].mxu0
  %v3461 = vadd.f32 0.0, %v3460
  %v3462 = vpop.f32.mrb[0].mxu0
  %3463 = vmatprep.mubr.f32.mxu0 %v3014
  %3464 = vmatmul.mubr.f32.gmra.mrb[0].mxu0 %v2982
  %v3465 = vpop.f32.mrb[0].mxu0
  %v3466 = vadd.f32 0.0, %v3465
  %v3467 = vpop.f32.mrb[0].mxu0
  %3468 = vmatprep.mubr.f32.mxu0 %v3015
  %3469 = vmatmul.mubr.f32.gmra.mrb[0].mxu0 %v2983
  %v3470 = vpop.f32.mrb[0].mxu0
  %v3471 = vadd.f32 0.0, %v3470
  %v3472 = vpop.f32.mrb[0].mxu0
  %3473 = vmatprep.mubr.f32.mxu0 %v3016
  %3474 = vmatmul.mubr.f32.gmra.mrb[0].mxu0 %v2984
  %v3475 = vpop.f32.mrb[0].mxu0
  %v3476 = vadd.f32 0.0, %v3475
  %v3477 = vpop.f32.mrb[0].mxu0
  %3478 = vmatprep.mubr.f32.mxu0 %v3017
  %3479 = vmatmul.mubr.f32.gmra.mrb[0].mxu0 %v2985
  %v3480 = vpop.f32.mrb[0].mxu0
  %v3481 = vadd.f32 0.0, %v3480
  %v3482 = vpop.f32.mrb[0].mxu0
  %3483 = vdwg.mxu0
  %3484 = vmatprep.subr.mxu0 0.0
  %3485 = vmatpush1.msra.mxu0 %v3083
  %3486 = vmatprep.subr.mxu0 0.0
  %3487 = vmatpush1.msra.mxu0 %v3084
  %3488 = vmatprep.subr.mxu0 0.0
  %3489 = vmatpush1.msra.mxu0 %v3085
  %3490 = vmatprep.subr.mxu0 0.0
  %3491 = vmatpush1.msra.mxu0 %v3086
  %3492 = vmatprep.subr.mxu0 0.0
  %3493 = vmatpush1.msra.mxu0 %v3087
  %3494 = vmatprep.subr.mxu0 0.0
  %3495 = vmatpush1.msra.mxu0 %v3088
  %3496 = vmatprep.subr.mxu0 0.0
  %3497 = vmatpush1.msra.mxu0 %v3089
  %3498 = vmatprep.subr.mxu0 0.0
  %3499 = vmatpush1.msra.mxu0 %v3090
  %3500 = vmatprep.subr.mxu0 0.0
  %3501 = vmatpush1.msra.mxu0 %v3091
  %3502 = vmatprep.subr.mxu0 0.0
  %3503 = vmatpush1.msra.mxu0 %v3092
  %3504 = vmatprep.subr.mxu0 0.0
  %3505 = vmatpush1.msra.mxu0 %v3093
  %3506 = vmatprep.subr.mxu0 0.0
  %3507 = vmatpush1.msra.mxu0 %v3094
  %3508 = vmatprep.subr.mxu0 0.0
  %3509 = vmatpush1.msra.mxu0 %v3095
  %3510 = vmatprep.subr.mxu0 0.0
  %3511 = vmatpush1.msra.mxu0 %v3096
  %3512 = vmatprep.subr.mxu0 0.0
  %3513 = vmatpush1.msra.mxu0 %v3097
  %3514 = vmatprep.subr.mxu0 0.0
  %3515 = vmatpush1.msra.mxu0 %v3098
  %3516 = vmatprep.subr.mxu0 0.0
  %3517 = vmatpush1.msra.mxu0 0.0
  %3518 = vmatprep.subr.mxu0 0.0
  %3519 = vmatpush1.msra.mxu0 0.0
  %3520 = vmatprep.subr.mxu0 0.0
  %3521 = vmatpush1.msra.mxu0 0.0
  %3522 = vmatprep.subr.mxu0 0.0
  %3523 = vmatpush1.msra.mxu0 0.0
  %3524 = vmatprep.subr.mxu0 0.0
  %3525 = vmatpush1.msra.mxu0 0.0
  %3526 = vmatprep.subr.mxu0 0.0
  %3527 = vmatpush1.msra.mxu0 0.0
  %3528 = vmatprep.subr.mxu0 0.0
  %3529 = vmatpush1.msra.mxu0 0.0
  %3530 = vmatprep.subr.mxu0 0.0
  %3531 = vmatpush1.msra.mxu0 0.0
  %3532 = vmatprep.subr.mxu0 0.0
  %3533 = vmatpush1.msra.mxu0 0.0
  %3534 = vmatprep.subr.mxu0 0.0
  %3535 = vmatpush1.msra.mxu0 0.0
  %3536 = vmatprep.subr.mxu0 0.0
  %3537 = vmatpush1.msra.mxu0 0.0
  %3538 = vmatprep.subr.mxu0 0.0
  %3539 = vmatpush1.msra.mxu0 0.0
  %3540 = vmatprep.subr.mxu0 0.0
  %3541 = vmatpush1.msra.mxu0 0.0
  %3542 = vmatprep.subr.mxu0 0.0
  %3543 = vmatpush1.msra.mxu0 0.0
  %3544 = vmatprep.subr.mxu0 0.0
  %3545 = vmatpush1.msra.mxu0 0.0
  %3546 = vmatprep.subr.mxu0 0.0
  %3547 = vmatpush1.msra.mxu0 0.0
  %3548 = vmatprep.mubr.f32.mxu0 0.0
  %3549 = vmatmul.mubr.f32.gmra.mrb[0].mxu0 %v2921
  %v3550 = vpop.f32.mrb[0].mxu0
  %v3551 = vadd.f32 %v3166, %v3550
  %v3552 = vpop.f32.mrb[0].mxu0
  %3553 = vmatprep.mubr.f32.mxu0 0.0
  %3554 = vmatmul.mubr.f32.gmra.mrb[0].mxu0 %v2922
  %v3555 = vpop.f32.mrb[0].mxu0
  %v3556 = vadd.f32 %v3171, %v3555
  %v3557 = vpop.f32.mrb[0].mxu0
  %3558 = vmatprep.mubr.f32.mxu0 0.0
  %3559 = vmatmul.mubr.f32.gmra.mrb[0].mxu0 %v2923
  %v3560 = vpop.f32.mrb[0].mxu0
  %v3561 = vadd.f32 %v3176, %v3560
  %v3562 = vpop.f32.mrb[0].mxu0
  %3563 = vmatprep.mubr.f32.mxu0 0.0
  %3564 = vmatmul.mubr.f32.gmra.mrb[0].mxu0 %v2924
  %v3565 = vpop.f32.mrb[0].mxu0
  %v3566 = vadd.f32 %v3181, %v3565
  %v3567 = vpop.f32.mrb[0].mxu0
  %3568 = vmatprep.mubr.f32.mxu0 0.0
  %3569 = vmatmul.mubr.f32.gmra.mrb[0].mxu0 %v2925
  %v3570 = vpop.f32.mrb[0].mxu0
  %v3571 = vadd.f32 %v3186, %v3570
  %v3572 = vpop.f32.mrb[0].mxu0
  %3573 = vmatprep.mubr.f32.mxu0 0.0
  %3574 = vmatmul.mubr.f32.gmra.mrb[0].mxu0 %v2926
  %v3575 = vpop.f32.mrb[0].mxu0
  %v3576 = vadd.f32 %v3191, %v3575
  %v3577 = vpop.f32.mrb[0].mxu0
  %3578 = vmatprep.mubr.f32.mxu0 0.0
  %3579 = vmatmul.mubr.f32.gmra.mrb[0].mxu0 %v2927
  %v3580 = vpop.f32.mrb[0].mxu0
  %v3581 = vadd.f32 %v3196, %v3580
  %v3582 = vpop.f32.mrb[0].mxu0
  %3583 = vmatprep.mubr.f32.mxu0 0.0
  %3584 = vmatmul.mubr.f32.gmra.mrb[0].mxu0 %v2928
  %v3585 = vpop.f32.mrb[0].mxu0
  %v3586 = vadd.f32 %v3201, %v3585
  %v3587 = vpop.f32.mrb[0].mxu0
  %3588 = vmatprep.mubr.f32.mxu0 0.0
  %3589 = vmatmul.mubr.f32.gmra.mrb[0].mxu0 %v2929
  %v3590 = vpop.f32.mrb[0].mxu0
  %v3591 = vadd.f32 %v3206, %v3590
  %v3592 = vpop.f32.mrb[0].mxu0
  %3593 = vmatprep.mubr.f32.mxu0 0.0
  %3594 = vmatmul.mubr.f32.gmra.mrb[0].mxu0 %v2930
  %v3595 = vpop.f32.mrb[0].mxu0
  %v3596 = vadd.f32 %v3211, %v3595
  %v3597 = vpop.f32.mrb[0].mxu0
  %3598 = vmatprep.mubr.f32.mxu0 0.0
  %3599 = vmatmul.mubr.f32.gmra.mrb[0].mxu0 %v2931
  %v3600 = vpop.f32.mrb[0].mxu0
  %v3601 = vadd.f32 %v3216, %v3600
  %v3602 = vpop.f32.mrb[0].mxu0
  %3603 = vmatprep.mubr.f32.mxu0 0.0
  %3604 = vmatmul.mubr.f32.gmra.mrb[0].mxu0 %v2932
  %v3605 = vpop.f32.mrb[0].mxu0
  %v3606 = vadd.f32 %v3221, %v3605
  %v3607 = vpop.f32.mrb[0].mxu0
  %3608 = vmatprep.mubr.f32.mxu0 0.0
  %3609 = vmatmul.mubr.f32.gmra.mrb[0].mxu0 %v2933
  %v3610 = vpop.f32.mrb[0].mxu0
  %v3611 = vadd.f32 %v3226, %v3610
  %v3612 = vpop.f32.mrb[0].mxu0
  %3613 = vmatprep.mubr.f32.mxu0 0.0
  %3614 = vmatmul.mubr.f32.gmra.mrb[0].mxu0 %v2934
  %v3615 = vpop.f32.mrb[0].mxu0
  %v3616 = vadd.f32 %v3231, %v3615
  %v3617 = vpop.f32.mrb[0].mxu0
  %3618 = vmatprep.mubr.f32.mxu0 0.0
  %3619 = vmatmul.mubr.f32.gmra.mrb[0].mxu0 %v2935
  %v3620 = vpop.f32.mrb[0].mxu0
  %v3621 = vadd.f32 %v3236, %v3620
  %v3622 = vpop.f32.mrb[0].mxu0
  %3623 = vmatprep.mubr.f32.mxu0 0.0
  %3624 = vmatmul.mubr.f32.gmra.mrb[0].mxu0 %v2936
  %v3625 = vpop.f32.mrb[0].mxu0
  %v3626 = vadd.f32 %v3241, %v3625
  %v3627 = vpop.f32.mrb[0].mxu0
  %3628 = vmatprep.mubr.f32.mxu0 0.0
  %3629 = vmatmul.mubr.f32.gmra.mrb[0].mxu0 %v2937
  %v3630 = vpop.f32.mrb[0].mxu0
  %v3631 = vadd.f32 %v3246, %v3630
  %v3632 = vpop.f32.mrb[0].mxu0
  %3633 = vmatprep.mubr.f32.mxu0 0.0
  %3634 = vmatmul.mubr.f32.gmra.mrb[0].mxu0 %v2938
  %v3635 = vpop.f32.mrb[0].mxu0
  %v3636 = vadd.f32 %v3251, %v3635
  %v3637 = vpop.f32.mrb[0].mxu0
  %3638 = vmatprep.mubr.f32.mxu0 0.0
  %3639 = vmatmul.mubr.f32.gmra.mrb[0].mxu0 %v2939
  %v3640 = vpop.f32.mrb[0].mxu0
  %v3641 = vadd.f32 %v3256, %v3640
  %v3642 = vpop.f32.mrb[0].mxu0
  %3643 = vmatprep.mubr.f32.mxu0 0.0
  %3644 = vmatmul.mubr.f32.gmra.mrb[0].mxu0 %v2940
  %v3645 = vpop.f32.mrb[0].mxu0
  %v3646 = vadd.f32 %v3261, %v3645
  %v3647 = vpop.f32.mrb[0].mxu0
  %3648 = vmatprep.mubr.f32.mxu0 0.0
  %3649 = vmatmul.mubr.f32.gmra.mrb[0].mxu0 %v2941
  %v3650 = vpop.f32.mrb[0].mxu0
  %v3651 = vadd.f32 %v3266, %v3650
  %v3652 = vpop.f32.mrb[0].mxu0
  %3653 = vmatprep.mubr.f32.mxu0 0.0
  %3654 = vmatmul.mubr.f32.gmra.mrb[0].mxu0 %v2942
  %v3655 = vpop.f32.mrb[0].mxu0
  %v3656 = vadd.f32 %v3271, %v3655
  %v3657 = vpop.f32.mrb[0].mxu0
  %3658 = vmatprep.mubr.f32.mxu0 0.0
  %3659 = vmatmul.mubr.f32.gmra.mrb[0].mxu0 %v2943
  %v3660 = vpop.f32.mrb[0].mxu0
  %v3661 = vadd.f32 %v3276, %v3660
  %v3662 = vpop.f32.mrb[0].mxu0
  %3663 = vmatprep.mubr.f32.mxu0 0.0
  %3664 = vmatmul.mubr.f32.gmra.mrb[0].mxu0 %v2944
  %v3665 = vpop.f32.mrb[0].mxu0
  %v3666 = vadd.f32 %v3281, %v3665
  %v3667 = vpop.f32.mrb[0].mxu0
  %3668 = vmatprep.mubr.f32.mxu0 0.0
  %3669 = vmatmul.mubr.f32.gmra.mrb[0].mxu0 %v2945
  %v3670 = vpop.f32.mrb[0].mxu0
  %v3671 = vadd.f32 %v3286, %v3670
  %v3672 = vpop.f32.mrb[0].mxu0
  %3673 = vmatprep.mubr.f32.mxu0 0.0
  %3674 = vmatmul.mubr.f32.gmra.mrb[0].mxu0 %v2946
  %v3675 = vpop.f32.mrb[0].mxu0
  %v3676 = vadd.f32 %v3291, %v3675
  %v3677 = vpop.f32.mrb[0].mxu0
  %3678 = vmatprep.mubr.f32.mxu0 0.0
  %3679 = vmatmul.mubr.f32.gmra.mrb[0].mxu0 %v2947
  %v3680 = vpop.f32.mrb[0].mxu0
  %v3681 = vadd.f32 %v3296, %v3680
  %v3682 = vpop.f32.mrb[0].mxu0
  %3683 = vmatprep.mubr.f32.mxu0 0.0
  %3684 = vmatmul.mubr.f32.gmra.mrb[0].mxu0 %v2948
  %v3685 = vpop.f32.mrb[0].mxu0
  %v3686 = vadd.f32 %v3301, %v3685
  %v3687 = vpop.f32.mrb[0].mxu0
  %3688 = vmatprep.mubr.f32.mxu0 0.0
  %3689 = vmatmul.mubr.f32.gmra.mrb[0].mxu0 %v2949
  %v3690 = vpop.f32.mrb[0].mxu0
  %v3691 = vadd.f32 %v3306, %v3690
  %v3692 = vpop.f32.mrb[0].mxu0
  %3693 = vmatprep.mubr.f32.mxu0 0.0
  %3694 = vmatmul.mubr.f32.gmra.mrb[0].mxu0 %v2950
  %v3695 = vpop.f32.mrb[0].mxu0
  %v3696 = vadd.f32 %v3311, %v3695
  %v3697 = vpop.f32.mrb[0].mxu0
  %3698 = vmatprep.mubr.f32.mxu0 0.0
  %3699 = vmatmul.mubr.f32.gmra.mrb[0].mxu0 %v2951
  %v3700 = vpop.f32.mrb[0].mxu0
  %v3701 = vadd.f32 %v3316, %v3700
  %v3702 = vpop.f32.mrb[0].mxu0
  %3703 = vmatprep.mubr.f32.mxu0 0.0
  %3704 = vmatmul.mubr.f32.gmra.mrb[0].mxu0 %v2952
  %v3705 = vpop.f32.mrb[0].mxu0
  %v3706 = vadd.f32 %v3321, %v3705
  %v3707 = vpop.f32.mrb[0].mxu0
  %3708 = vmatprep.mubr.f32.mxu0 0.0
  %3709 = vmatmul.mubr.f32.gmra.mrb[0].mxu0 %v3018
  %v3710 = vpop.f32.mrb[0].mxu0
  %v3711 = vadd.f32 %v3326, %v3710
  %v3712 = vpop.f32.mrb[0].mxu0
  %3713 = vmatprep.mubr.f32.mxu0 0.0
  %3714 = vmatmul.mubr.f32.gmra.mrb[0].mxu0 %v3019
  %v3715 = vpop.f32.mrb[0].mxu0
  %v3716 = vadd.f32 %v3331, %v3715
  %v3717 = vpop.f32.mrb[0].mxu0
  %3718 = vmatprep.mubr.f32.mxu0 0.0
  %3719 = vmatmul.mubr.f32.gmra.mrb[0].mxu0 %v3020
  %v3720 = vpop.f32.mrb[0].mxu0
  %v3721 = vadd.f32 %v3336, %v3720
  %v3722 = vpop.f32.mrb[0].mxu0
  %3723 = vmatprep.mubr.f32.mxu0 0.0
  %3724 = vmatmul.mubr.f32.gmra.mrb[0].mxu0 %v3021
  %v3725 = vpop.f32.mrb[0].mxu0
  %v3726 = vadd.f32 %v3341, %v3725
  %v3727 = vpop.f32.mrb[0].mxu0
  %3728 = vmatprep.mubr.f32.mxu0 0.0
  %3729 = vmatmul.mubr.f32.gmra.mrb[0].mxu0 %v3022
  %v3730 = vpop.f32.mrb[0].mxu0
  %v3731 = vadd.f32 %v3346, %v3730
  %v3732 = vpop.f32.mrb[0].mxu0
  %3733 = vmatprep.mubr.f32.mxu0 0.0
  %3734 = vmatmul.mubr.f32.gmra.mrb[0].mxu0 %v3023
  %v3735 = vpop.f32.mrb[0].mxu0
  %v3736 = vadd.f32 %v3351, %v3735
  %v3737 = vpop.f32.mrb[0].mxu0
  %3738 = vmatprep.mubr.f32.mxu0 0.0
  %3739 = vmatmul.mubr.f32.gmra.mrb[0].mxu0 %v3024
  %v3740 = vpop.f32.mrb[0].mxu0
  %v3741 = vadd.f32 %v3356, %v3740
  %v3742 = vpop.f32.mrb[0].mxu0
  %3743 = vmatprep.mubr.f32.mxu0 0.0
  %3744 = vmatmul.mubr.f32.gmra.mrb[0].mxu0 %v3025
  %v3745 = vpop.f32.mrb[0].mxu0
  %v3746 = vadd.f32 %v3361, %v3745
  %v3747 = vpop.f32.mrb[0].mxu0
  %3748 = vmatprep.mubr.f32.mxu0 0.0
  %3749 = vmatmul.mubr.f32.gmra.mrb[0].mxu0 %v3026
  %v3750 = vpop.f32.mrb[0].mxu0
  %v3751 = vadd.f32 %v3366, %v3750
  %v3752 = vpop.f32.mrb[0].mxu0
  %3753 = vmatprep.mubr.f32.mxu0 0.0
  %3754 = vmatmul.mubr.f32.gmra.mrb[0].mxu0 %v3027
  %v3755 = vpop.f32.mrb[0].mxu0
  %v3756 = vadd.f32 %v3371, %v3755
  %v3757 = vpop.f32.mrb[0].mxu0
  %3758 = vmatprep.mubr.f32.mxu0 0.0
  %3759 = vmatmul.mubr.f32.gmra.mrb[0].mxu0 %v3028
  %v3760 = vpop.f32.mrb[0].mxu0
  %v3761 = vadd.f32 %v3376, %v3760
  %v3762 = vpop.f32.mrb[0].mxu0
  %3763 = vmatprep.mubr.f32.mxu0 0.0
  %3764 = vmatmul.mubr.f32.gmra.mrb[0].mxu0 %v3029
  %v3765 = vpop.f32.mrb[0].mxu0
  %v3766 = vadd.f32 %v3381, %v3765
  %v3767 = vpop.f32.mrb[0].mxu0
  %3768 = vmatprep.mubr.f32.mxu0 0.0
  %3769 = vmatmul.mubr.f32.gmra.mrb[0].mxu0 %v3030
  %v3770 = vpop.f32.mrb[0].mxu0
  %v3771 = vadd.f32 %v3386, %v3770
  %v3772 = vpop.f32.mrb[0].mxu0
  %3773 = vmatprep.mubr.f32.mxu0 0.0
  %3774 = vmatmul.mubr.f32.gmra.mrb[0].mxu0 %v3031
  %v3775 = vpop.f32.mrb[0].mxu0
  %v3776 = vadd.f32 %v3391, %v3775
  %v3777 = vpop.f32.mrb[0].mxu0
  %3778 = vmatprep.mubr.f32.mxu0 0.0
  %3779 = vmatmul.mubr.f32.gmra.mrb[0].mxu0 %v3032
  %v3780 = vpop.f32.mrb[0].mxu0
  %v3781 = vadd.f32 %v3396, %v3780
  %v3782 = vpop.f32.mrb[0].mxu0
  %3783 = vmatprep.mubr.f32.mxu0 0.0
  %3784 = vmatmul.mubr.f32.gmra.mrb[0].mxu0 %v3033
  %v3785 = vpop.f32.mrb[0].mxu0
  %v3786 = vadd.f32 %v3401, %v3785
  %v3787 = vpop.f32.mrb[0].mxu0
  %3788 = vmatprep.mubr.f32.mxu0 0.0
  %3789 = vmatmul.mubr.f32.gmra.mrb[0].mxu0 %v3034
  %v3790 = vpop.f32.mrb[0].mxu0
  %v3791 = vadd.f32 %v3406, %v3790
  %v3792 = vpop.f32.mrb[0].mxu0
  %3793 = vmatprep.mubr.f32.mxu0 0.0
  %3794 = vmatmul.mubr.f32.gmra.mrb[0].mxu0 %v3035
  %v3795 = vpop.f32.mrb[0].mxu0
  %v3796 = vadd.f32 %v3411, %v3795
  %v3797 = vpop.f32.mrb[0].mxu0
  %3798 = vmatprep.mubr.f32.mxu0 0.0
  %3799 = vmatmul.mubr.f32.gmra.mrb[0].mxu0 %v3036
  %v3800 = vpop.f32.mrb[0].mxu0
  %v3801 = vadd.f32 %v3416, %v3800
  %v3802 = vpop.f32.mrb[0].mxu0
  %3803 = vmatprep.mubr.f32.mxu0 0.0
  %3804 = vmatmul.mubr.f32.gmra.mrb[0].mxu0 %v3037
  %v3805 = vpop.f32.mrb[0].mxu0
  %v3806 = vadd.f32 %v3421, %v3805
  %v3807 = vpop.f32.mrb[0].mxu0
  %3808 = vmatprep.mubr.f32.mxu0 0.0
  %3809 = vmatmul.mubr.f32.gmra.mrb[0].mxu0 %v3038
  %v3810 = vpop.f32.mrb[0].mxu0
  %v3811 = vadd.f32 %v3426, %v3810
  %v3812 = vpop.f32.mrb[0].mxu0
  %3813 = vmatprep.mubr.f32.mxu0 0.0
  %3814 = vmatmul.mubr.f32.gmra.mrb[0].mxu0 %v3039
  %v3815 = vpop.f32.mrb[0].mxu0
  %v3816 = vadd.f32 %v3431, %v3815
  %v3817 = vpop.f32.mrb[0].mxu0
  %3818 = vmatprep.mubr.f32.mxu0 0.0
  %3819 = vmatmul.mubr.f32.gmra.mrb[0].mxu0 %v3040
  %v3820 = vpop.f32.mrb[0].mxu0
  %v3821 = vadd.f32 %v3436, %v3820
  %v3822 = vpop.f32.mrb[0].mxu0
  %3823 = vmatprep.mubr.f32.mxu0 0.0
  %3824 = vmatmul.mubr.f32.gmra.mrb[0].mxu0 %v3041
  %v3825 = vpop.f32.mrb[0].mxu0
  %v3826 = vadd.f32 %v3441, %v3825
  %v3827 = vpop.f32.mrb[0].mxu0
  %3828 = vmatprep.mubr.f32.mxu0 0.0
  %3829 = vmatmul.mubr.f32.gmra.mrb[0].mxu0 %v3042
  %v3830 = vpop.f32.mrb[0].mxu0
  %v3831 = vadd.f32 %v3446, %v3830
  %v3832 = vpop.f32.mrb[0].mxu0
  %3833 = vmatprep.mubr.f32.mxu0 0.0
  %3834 = vmatmul.mubr.f32.gmra.mrb[0].mxu0 %v3043
  %v3835 = vpop.f32.mrb[0].mxu0
  %v3836 = vadd.f32 %v3451, %v3835
  %v3837 = vpop.f32.mrb[0].mxu0
  %3838 = vmatprep.mubr.f32.mxu0 0.0
  %3839 = vmatmul.mubr.f32.gmra.mrb[0].mxu0 %v3044
  %v3840 = vpop.f32.mrb[0].mxu0
  %v3841 = vadd.f32 %v3456, %v3840
  %v3842 = vpop.f32.mrb[0].mxu0
  %3843 = vmatprep.mubr.f32.mxu0 0.0
  %3844 = vmatmul.mubr.f32.gmra.mrb[0].mxu0 %v3045
  %v3845 = vpop.f32.mrb[0].mxu0
  %v3846 = vadd.f32 %v3461, %v3845
  %v3847 = vpop.f32.mrb[0].mxu0
  %3848 = vmatprep.mubr.f32.mxu0 0.0
  %3849 = vmatmul.mubr.f32.gmra.mrb[0].mxu0 %v3046
  %v3850 = vpop.f32.mrb[0].mxu0
  %v3851 = vadd.f32 %v3466, %v3850
  %v3852 = vpop.f32.mrb[0].mxu0
  %3853 = vmatprep.mubr.f32.mxu0 0.0
  %3854 = vmatmul.mubr.f32.gmra.mrb[0].mxu0 %v3047
  %v3855 = vpop.f32.mrb[0].mxu0
  %v3856 = vadd.f32 %v3471, %v3855
  %v3857 = vpop.f32.mrb[0].mxu0
  %3858 = vmatprep.mubr.f32.mxu0 0.0
  %3859 = vmatmul.mubr.f32.gmra.mrb[0].mxu0 %v3048
  %v3860 = vpop.f32.mrb[0].mxu0
  %v3861 = vadd.f32 %v3476, %v3860
  %v3862 = vpop.f32.mrb[0].mxu0
  %3863 = vmatprep.mubr.f32.mxu0 0.0
  %3864 = vmatmul.mubr.f32.gmra.mrb[0].mxu0 %v3049
  %v3865 = vpop.f32.mrb[0].mxu0
  %v3866 = vadd.f32 %v3481, %v3865
  %v3867 = vpop.f32.mrb[0].mxu0
  %3868 = vdwg.mxu0
  %v3869 = vadd.f32 %v2538, %v3551
  %v3870 = vadd.f32 %v2543, %v3556
  %v3871 = vadd.f32 %v2548, %v3561
  %v3872 = vadd.f32 %v2553, %v3566
  %v3873 = vadd.f32 %v2558, %v3571
  %v3874 = vadd.f32 %v2563, %v3576
  %v3875 = vadd.f32 %v2568, %v3581
  %v3876 = vadd.f32 %v2573, %v3586
  %v3877 = vadd.f32 %v2578, %v3591
  %v3878 = vadd.f32 %v2583, %v3596
  %v3879 = vadd.f32 %v2588, %v3601
  %v3880 = vadd.f32 %v2593, %v3606
  %v3881 = vadd.f32 %v2598, %v3611
  %v3882 = vadd.f32 %v2603, %v3616
  %v3883 = vadd.f32 %v2608, %v3621
  %v3884 = vadd.f32 %v2613, %v3626
  %v3885 = vadd.f32 %v2618, %v3631
  %v3886 = vadd.f32 %v2623, %v3636
  %v3887 = vadd.f32 %v2628, %v3641
  %v3888 = vadd.f32 %v2633, %v3646
  %v3889 = vadd.f32 %v2638, %v3651
  %v3890 = vadd.f32 %v2643, %v3656
  %v3891 = vadd.f32 %v2648, %v3661
  %v3892 = vadd.f32 %v2653, %v3666
  %v3893 = vadd.f32 %v2658, %v3671
  %v3894 = vadd.f32 %v2663, %v3676
  %v3895 = vadd.f32 %v2668, %v3681
  %v3896 = vadd.f32 %v2673, %v3686
  %v3897 = vadd.f32 %v2678, %v3691
  %v3898 = vadd.f32 %v2683, %v3696
  %v3899 = vadd.f32 %v2688, %v3701
  %v3900 = vadd.f32 %v2693, %v3706
  %v3901 = vadd.f32 %v2698, %v3711
  %v3902 = vadd.f32 %v2703, %v3716
  %v3903 = vadd.f32 %v2708, %v3721
  %v3904 = vadd.f32 %v2713, %v3726
  %v3905 = vadd.f32 %v2718, %v3731
  %v3906 = vadd.f32 %v2723, %v3736
  %v3907 = vadd.f32 %v2728, %v3741
  %v3908 = vadd.f32 %v2733, %v3746
  %v3909 = vadd.f32 %v2738, %v3751
  %v3910 = vadd.f32 %v2743, %v3756
  %v3911 = vadd.f32 %v2748, %v3761
  %v3912 = vadd.f32 %v2753, %v3766
  %v3913 = vadd.f32 %v2758, %v3771
  %v3914 = vadd.f32 %v2763, %v3776
  %v3915 = vadd.f32 %v2768, %v3781
  %v3916 = vadd.f32 %v2773, %v3786
  %v3917 = vadd.f32 %v2778, %v3791
  %v3918 = vadd.f32 %v2783, %v3796
  %v3919 = vadd.f32 %v2788, %v3801
  %v3920 = vadd.f32 %v2793, %v3806
  %v3921 = vadd.f32 %v2798, %v3811
  %v3922 = vadd.f32 %v2803, %v3816
  %v3923 = vadd.f32 %v2808, %v3821
  %v3924 = vadd.f32 %v2813, %v3826
  %v3925 = vadd.f32 %v2818, %v3831
  %v3926 = vadd.f32 %v2823, %v3836
  %v3927 = vadd.f32 %v2828, %v3841
  %v3928 = vadd.f32 %v2833, %v3846
  %v3929 = vadd.f32 %v2838, %v3851
  %v3930 = vadd.f32 %v2843, %v3856
  %v3931 = vadd.f32 %v2848, %v3861
  %v3932 = vadd.f32 %v2853, %v3866
  %v3933 = vld [vmem:[%s3] sm:$0x1]
  %v3935 = vlaneseq
  %v3936 = vshrl.u32 %v3935, 7
  %v3937 = vsub.s32 0, %v3936
  %v3938 = vrot.slane %v3933, %v3937
  %v3940 = vadd.f32 %v3869, %v3938
  %v3941 = vadd.f32 %v3870, %v3938
  %v3942 = vadd.f32 %v3871, %v3938
  %v3943 = vadd.f32 %v3872, %v3938
  %v3944 = vadd.f32 %v3873, %v3938
  %v3945 = vadd.f32 %v3874, %v3938
  %v3946 = vadd.f32 %v3875, %v3938
  %v3947 = vadd.f32 %v3876, %v3938
  %v3948 = vadd.f32 %v3877, %v3938
  %v3949 = vadd.f32 %v3878, %v3938
  %v3950 = vadd.f32 %v3879, %v3938
  %v3951 = vadd.f32 %v3880, %v3938
  %v3952 = vadd.f32 %v3881, %v3938
  %v3953 = vadd.f32 %v3882, %v3938
  %v3954 = vadd.f32 %v3883, %v3938
  %v3955 = vadd.f32 %v3884, %v3938
  %v3956 = vadd.f32 %v3885, %v3938
  %v3957 = vadd.f32 %v3886, %v3938
  %v3958 = vadd.f32 %v3887, %v3938
  %v3959 = vadd.f32 %v3888, %v3938
  %v3960 = vadd.f32 %v3889, %v3938
  %v3961 = vadd.f32 %v3890, %v3938
  %v3962 = vadd.f32 %v3891, %v3938
  %v3963 = vadd.f32 %v3892, %v3938
  %v3964 = vadd.f32 %v3893, %v3938
  %v3965 = vadd.f32 %v3894, %v3938
  %v3966 = vadd.f32 %v3895, %v3938
  %v3967 = vadd.f32 %v3896, %v3938
  %v3968 = vadd.f32 %v3897, %v3938
  %v3969 = vadd.f32 %v3898, %v3938
  %v3970 = vadd.f32 %v3899, %v3938
  %v3971 = vadd.f32 %v3900, %v3938
  %v3972 = vadd.f32 %v3901, %v3938
  %v3973 = vadd.f32 %v3902, %v3938
  %v3974 = vadd.f32 %v3903, %v3938
  %v3975 = vadd.f32 %v3904, %v3938
  %v3976 = vadd.f32 %v3905, %v3938
  %v3977 = vadd.f32 %v3906, %v3938
  %v3978 = vadd.f32 %v3907, %v3938
  %v3979 = vadd.f32 %v3908, %v3938
  %v3980 = vadd.f32 %v3909, %v3938
  %v3981 = vadd.f32 %v3910, %v3938
  %v3982 = vadd.f32 %v3911, %v3938
  %v3983 = vadd.f32 %v3912, %v3938
  %v3984 = vadd.f32 %v3913, %v3938
  %v3985 = vadd.f32 %v3914, %v3938
  %v3986 = vadd.f32 %v3915, %v3938
  %v3987 = vadd.f32 %v3916, %v3938
  %v3988 = vadd.f32 %v3917, %v3938
  %v3989 = vadd.f32 %v3918, %v3938
  %v3990 = vadd.f32 %v3919, %v3938
  %v3991 = vadd.f32 %v3920, %v3938
  %v3992 = vadd.f32 %v3921, %v3938
  %v3993 = vadd.f32 %v3922, %v3938
  %v3994 = vadd.f32 %v3923, %v3938
  %v3995 = vadd.f32 %v3924, %v3938
  %v3996 = vadd.f32 %v3925, %v3938
  %v3997 = vadd.f32 %v3926, %v3938
  %v3998 = vadd.f32 %v3927, %v3938
  %v3999 = vadd.f32 %v3928, %v3938
  %v4000 = vadd.f32 %v3929, %v3938
  %v4001 = vadd.f32 %v3930, %v3938
  %v4002 = vadd.f32 %v3931, %v3938
  %v4003 = vadd.f32 %v3932, %v3938
  %v4004 = vld [vmem:[%s6] sm:$0x1]
  %v4005 = vld [vmem:[%s7] sm:$0x1]
  %v4006 = vadd.f32 %v3940, %v3941
  %v4007 = vadd.f32 %v4006, %v3942
  %v4008 = vadd.f32 %v4007, %v3943
  %v4009 = vadd.f32 %v4008, %v3944
  %v4010 = vadd.f32 %v4009, %v3945
  %v4011 = vadd.f32 %v4010, %v3946
  %v4012 = vadd.f32 %v4011, %v3947
  %v4013 = vadd.f32 %v4012, %v3948
  %v4014 = vadd.f32 %v4013, %v3949
  %v4015 = vadd.f32 %v4014, %v3950
  %v4016 = vadd.f32 %v4015, %v3951
  %v4017 = vadd.f32 %v4016, %v3952
  %v4018 = vadd.f32 %v4017, %v3953
  %v4019 = vadd.f32 %v4018, %v3954
  %v4020 = vadd.f32 %v4019, %v3955
  %v4021 = vadd.f32 %v4020, %v3956
  %v4022 = vadd.f32 %v4021, %v3957
  %v4023 = vadd.f32 %v4022, %v3958
  %v4024 = vadd.f32 %v4023, %v3959
  %v4025 = vadd.f32 %v4024, %v3960
  %v4026 = vadd.f32 %v4025, %v3961
  %v4027 = vadd.f32 %v4026, %v3962
  %v4028 = vadd.f32 %v4027, %v3963
  %v4029 = vadd.f32 %v4028, %v3964
  %v4030 = vadd.f32 %v4029, %v3965
  %v4031 = vadd.f32 %v4030, %v3966
  %v4032 = vadd.f32 %v4031, %v3967
  %v4033 = vadd.f32 %v4032, %v3968
  %v4034 = vadd.f32 %v4033, %v3969
  %v4035 = vadd.f32 %v4034, %v3970
  %v4036 = vadd.f32 %v4035, %v3971
  %v4037 = vadd.f32 %v4036, %v3972
  %v4038 = vadd.f32 %v4037, %v3973
  %v4039 = vadd.f32 %v4038, %v3974
  %v4040 = vadd.f32 %v4039, %v3975
  %v4041 = vadd.f32 %v4040, %v3976
  %v4042 = vadd.f32 %v4041, %v3977
  %v4043 = vadd.f32 %v4042, %v3978
  %v4044 = vadd.f32 %v4043, %v3979
  %v4045 = vadd.f32 %v4044, %v3980
  %v4046 = vadd.f32 %v4045, %v3981
  %v4047 = vadd.f32 %v4046, %v3982
  %v4048 = vadd.f32 %v4047, %v3983
  %v4049 = vadd.f32 %v4048, %v3984
  %v4050 = vadd.f32 %v4049, %v3985
  %v4051 = vadd.f32 %v4050, %v3986
  %v4052 = vadd.f32 %v4051, %v3987
  %v4053 = vadd.f32 %v4052, %v3988
  %v4054 = vadd.f32 %v4053, %v3989
  %v4055 = vadd.f32 %v4054, %v3990
  %v4056 = vadd.f32 %v4055, %v3991
  %v4057 = vadd.f32 %v4056, %v3992
  %v4058 = vadd.f32 %v4057, %v3993
  %v4059 = vadd.f32 %v4058, %v3994
  %v4060 = vadd.f32 %v4059, %v3995
  %v4061 = vadd.f32 %v4060, %v3996
  %v4062 = vadd.f32 %v4061, %v3997
  %v4063 = vadd.f32 %v4062, %v3998
  %v4064 = vadd.f32 %v4063, %v3999
  %v4065 = vadd.f32 %v4064, %v4000
  %v4066 = vadd.f32 %v4065, %v4001
  %v4067 = vadd.f32 %v4066, %v4002
  %v4068 = vadd.f32 %v4067, %v4003
  %v4069 = vrot.slane %v4068, 4
  %v4070 = vadd.f32 %v4068, %v4069
  %v4071 = vrot.slane %v4070, 2
  %v4072 = vadd.f32 %v4070, %v4071
  %v4073 = vrot.slane %v4072, 1
  %v4074 = vadd.f32 %v4072, %v4073
  %v4075 = vrcp.pop 512.0
  %v4076 = vmul.f32 %v4074, %v4075
  %v4077 = vsub.f32 %v3940, %v4076
  %v4078 = vsub.f32 %v3941, %v4076
  %v4079 = vsub.f32 %v3942, %v4076
  %v4080 = vsub.f32 %v3943, %v4076
  %v4081 = vsub.f32 %v3944, %v4076
  %v4082 = vsub.f32 %v3945, %v4076
  %v4083 = vsub.f32 %v3946, %v4076
  %v4084 = vsub.f32 %v3947, %v4076
  %v4085 = vsub.f32 %v3948, %v4076
  %v4086 = vsub.f32 %v3949, %v4076
  %v4087 = vsub.f32 %v3950, %v4076
  %v4088 = vsub.f32 %v3951, %v4076
  %v4089 = vsub.f32 %v3952, %v4076
  %v4090 = vsub.f32 %v3953, %v4076
  %v4091 = vsub.f32 %v3954, %v4076
  %v4092 = vsub.f32 %v3955, %v4076
  %v4093 = vsub.f32 %v3956, %v4076
  %v4094 = vsub.f32 %v3957, %v4076
  %v4095 = vsub.f32 %v3958, %v4076
  %v4096 = vsub.f32 %v3959, %v4076
  %v4097 = vsub.f32 %v3960, %v4076
  %v4098 = vsub.f32 %v3961, %v4076
  %v4099 = vsub.f32 %v3962, %v4076
  %v4100 = vsub.f32 %v3963, %v4076
  %v4101 = vsub.f32 %v3964, %v4076
  %v4102 = vsub.f32 %v3965, %v4076
  %v4103 = vsub.f32 %v3966, %v4076
  %v4104 = vsub.f32 %v3967, %v4076
  %v4105 = vsub.f32 %v3968, %v4076
  %v4106 = vsub.f32 %v3969, %v4076
  %v4107 = vsub.f32 %v3970, %v4076
  %v4108 = vsub.f32 %v3971, %v4076
  %v4109 = vsub.f32 %v3972, %v4076
  %v4110 = vsub.f32 %v3973, %v4076
  %v4111 = vsub.f32 %v3974, %v4076
  %v4112 = vsub.f32 %v3975, %v4076
  %v4113 = vsub.f32 %v3976, %v4076
  %v4114 = vsub.f32 %v3977, %v4076
  %v4115 = vsub.f32 %v3978, %v4076
  %v4116 = vsub.f32 %v3979, %v4076
  %v4117 = vsub.f32 %v3980, %v4076
  %v4118 = vsub.f32 %v3981, %v4076
  %v4119 = vsub.f32 %v3982, %v4076
  %v4120 = vsub.f32 %v3983, %v4076
  %v4121 = vsub.f32 %v3984, %v4076
  %v4122 = vsub.f32 %v3985, %v4076
  %v4123 = vsub.f32 %v3986, %v4076
  %v4124 = vsub.f32 %v3987, %v4076
  %v4125 = vsub.f32 %v3988, %v4076
  %v4126 = vsub.f32 %v3989, %v4076
  %v4127 = vsub.f32 %v3990, %v4076
  %v4128 = vsub.f32 %v3991, %v4076
  %v4129 = vsub.f32 %v3992, %v4076
  %v4130 = vsub.f32 %v3993, %v4076
  %v4131 = vsub.f32 %v3994, %v4076
  %v4132 = vsub.f32 %v3995, %v4076
  %v4133 = vsub.f32 %v3996, %v4076
  %v4134 = vsub.f32 %v3997, %v4076
  %v4135 = vsub.f32 %v3998, %v4076
  %v4136 = vsub.f32 %v3999, %v4076
  %v4137 = vsub.f32 %v4000, %v4076
  %v4138 = vsub.f32 %v4001, %v4076
  %v4139 = vsub.f32 %v4002, %v4076
  %v4140 = vsub.f32 %v4003, %v4076
  %v4141 = vmul.f32 %v4077, %v4077
  %v4142 = vmul.f32 %v4078, %v4078
  %v4143 = vmul.f32 %v4079, %v4079
  %v4144 = vmul.f32 %v4080, %v4080
  %v4145 = vmul.f32 %v4081, %v4081
  %v4146 = vmul.f32 %v4082, %v4082
  %v4147 = vmul.f32 %v4083, %v4083
  %v4148 = vmul.f32 %v4084, %v4084
  %v4149 = vmul.f32 %v4085, %v4085
  %v4150 = vmul.f32 %v4086, %v4086
  %v4151 = vmul.f32 %v4087, %v4087
  %v4152 = vmul.f32 %v4088, %v4088
  %v4153 = vmul.f32 %v4089, %v4089
  %v4154 = vmul.f32 %v4090, %v4090
  %v4155 = vmul.f32 %v4091, %v4091
  %v4156 = vmul.f32 %v4092, %v4092
  %v4157 = vmul.f32 %v4093, %v4093
  %v4158 = vmul.f32 %v4094, %v4094
  %v4159 = vmul.f32 %v4095, %v4095
  %v4160 = vmul.f32 %v4096, %v4096
  %v4161 = vmul.f32 %v4097, %v4097
  %v4162 = vmul.f32 %v4098, %v4098
  %v4163 = vmul.f32 %v4099, %v4099
  %v4164 = vmul.f32 %v4100, %v4100
  %v4165 = vmul.f32 %v4101, %v4101
  %v4166 = vmul.f32 %v4102, %v4102
  %v4167 = vmul.f32 %v4103, %v4103
  %v4168 = vmul.f32 %v4104, %v4104
  %v4169 = vmul.f32 %v4105, %v4105
  %v4170 = vmul.f32 %v4106, %v4106
  %v4171 = vmul.f32 %v4107, %v4107
  %v4172 = vmul.f32 %v4108, %v4108
  %v4173 = vmul.f32 %v4109, %v4109
  %v4174 = vmul.f32 %v4110, %v4110
  %v4175 = vmul.f32 %v4111, %v4111
  %v4176 = vmul.f32 %v4112, %v4112
  %v4177 = vmul.f32 %v4113, %v4113
  %v4178 = vmul.f32 %v4114, %v4114
  %v4179 = vmul.f32 %v4115, %v4115
  %v4180 = vmul.f32 %v4116, %v4116
  %v4181 = vmul.f32 %v4117, %v4117
  %v4182 = vmul.f32 %v4118, %v4118
  %v4183 = vmul.f32 %v4119, %v4119
  %v4184 = vmul.f32 %v4120, %v4120
  %v4185 = vmul.f32 %v4121, %v4121
  %v4186 = vmul.f32 %v4122, %v4122
  %v4187 = vmul.f32 %v4123, %v4123
  %v4188 = vmul.f32 %v4124, %v4124
  %v4189 = vmul.f32 %v4125, %v4125
  %v4190 = vmul.f32 %v4126, %v4126
  %v4191 = vmul.f32 %v4127, %v4127
  %v4192 = vmul.f32 %v4128, %v4128
  %v4193 = vmul.f32 %v4129, %v4129
  %v4194 = vmul.f32 %v4130, %v4130
  %v4195 = vmul.f32 %v4131, %v4131
  %v4196 = vmul.f32 %v4132, %v4132
  %v4197 = vmul.f32 %v4133, %v4133
  %v4198 = vmul.f32 %v4134, %v4134
  %v4199 = vmul.f32 %v4135, %v4135
  %v4200 = vmul.f32 %v4136, %v4136
  %v4201 = vmul.f32 %v4137, %v4137
  %v4202 = vmul.f32 %v4138, %v4138
  %v4203 = vmul.f32 %v4139, %v4139
  %v4204 = vmul.f32 %v4140, %v4140
  %v4205 = vadd.f32 %v4141, %v4142
  %v4206 = vadd.f32 %v4205, %v4143
  %v4207 = vadd.f32 %v4206, %v4144
  %v4208 = vadd.f32 %v4207, %v4145
  %v4209 = vadd.f32 %v4208, %v4146
  %v4210 = vadd.f32 %v4209, %v4147
  %v4211 = vadd.f32 %v4210, %v4148
  %v4212 = vadd.f32 %v4211, %v4149
  %v4213 = vadd.f32 %v4212, %v4150
  %v4214 = vadd.f32 %v4213, %v4151
  %v4215 = vadd.f32 %v4214, %v4152
  %v4216 = vadd.f32 %v4215, %v4153
  %v4217 = vadd.f32 %v4216, %v4154
  %v4218 = vadd.f32 %v4217, %v4155
  %v4219 = vadd.f32 %v4218, %v4156
  %v4220 = vadd.f32 %v4219, %v4157
  %v4221 = vadd.f32 %v4220, %v4158
  %v4222 = vadd.f32 %v4221, %v4159
  %v4223 = vadd.f32 %v4222, %v4160
  %v4224 = vadd.f32 %v4223, %v4161
  %v4225 = vadd.f32 %v4224, %v4162
  %v4226 = vadd.f32 %v4225, %v4163
  %v4227 = vadd.f32 %v4226, %v4164
  %v4228 = vadd.f32 %v4227, %v4165
  %v4229 = vadd.f32 %v4228, %v4166
  %v4230 = vadd.f32 %v4229, %v4167
  %v4231 = vadd.f32 %v4230, %v4168
  %v4232 = vadd.f32 %v4231, %v4169
  %v4233 = vadd.f32 %v4232, %v4170
  %v4234 = vadd.f32 %v4233, %v4171
  %v4235 = vadd.f32 %v4234, %v4172
  %v4236 = vadd.f32 %v4235, %v4173
  %v4237 = vadd.f32 %v4236, %v4174
  %v4238 = vadd.f32 %v4237, %v4175
  %v4239 = vadd.f32 %v4238, %v4176
  %v4240 = vadd.f32 %v4239, %v4177
  %v4241 = vadd.f32 %v4240, %v4178
  %v4242 = vadd.f32 %v4241, %v4179
  %v4243 = vadd.f32 %v4242, %v4180
  %v4244 = vadd.f32 %v4243, %v4181
  %v4245 = vadd.f32 %v4244, %v4182
  %v4246 = vadd.f32 %v4245, %v4183
  %v4247 = vadd.f32 %v4246, %v4184
  %v4248 = vadd.f32 %v4247, %v4185
  %v4249 = vadd.f32 %v4248, %v4186
  %v4250 = vadd.f32 %v4249, %v4187
  %v4251 = vadd.f32 %v4250, %v4188
  %v4252 = vadd.f32 %v4251, %v4189
  %v4253 = vadd.f32 %v4252, %v4190
  %v4254 = vadd.f32 %v4253, %v4191
  %v4255 = vadd.f32 %v4254, %v4192
  %v4256 = vadd.f32 %v4255, %v4193
  %v4257 = vadd.f32 %v4256, %v4194
  %v4258 = vadd.f32 %v4257, %v4195
  %v4259 = vadd.f32 %v4258, %v4196
  %v4260 = vadd.f32 %v4259, %v4197
  %v4261 = vadd.f32 %v4260, %v4198
  %v4262 = vadd.f32 %v4261, %v4199
  %v4263 = vadd.f32 %v4262, %v4200
  %v4264 = vadd.f32 %v4263, %v4201
  %v4265 = vadd.f32 %v4264, %v4202
  %v4266 = vadd.f32 %v4265, %v4203
  %v4267 = vadd.f32 %v4266, %v4204
  %v4268 = vrot.slane %v4267, 4
  %v4269 = vadd.f32 %v4267, %v4268
  %v4270 = vrot.slane %v4269, 2
  %v4271 = vadd.f32 %v4269, %v4270
  %v4272 = vrot.slane %v4271, 1
  %v4273 = vadd.f32 %v4271, %v4272
  %v4274 = vmul.f32 %v4273, %v4075
  %v4275 = vadd.f32 %v4274, 1e-05
  %v4276 = vrsqrt.pop %v4275
  %v4277 = vmul.f32 %v4004, %v4276
  %v4279 = vlaneseq
  %v4280 = vshrl.u32 %v4279, 7
  %v4281 = vsub.s32 0, %v4280
  %v4282 = vrot.slane %v4277, %v4281
  %v4284 = vmul.f32 %v3940, %v4282
  %v4285 = vmul.f32 %v3941, %v4282
  %v4286 = vmul.f32 %v3942, %v4282
  %v4287 = vmul.f32 %v3943, %v4282
  %v4288 = vmul.f32 %v3944, %v4282
  %v4289 = vmul.f32 %v3945, %v4282
  %v4290 = vmul.f32 %v3946, %v4282
  %v4291 = vmul.f32 %v3947, %v4282
  %v4292 = vmul.f32 %v3948, %v4282
  %v4293 = vmul.f32 %v3949, %v4282
  %v4294 = vmul.f32 %v3950, %v4282
  %v4295 = vmul.f32 %v3951, %v4282
  %v4296 = vmul.f32 %v3952, %v4282
  %v4297 = vmul.f32 %v3953, %v4282
  %v4298 = vmul.f32 %v3954, %v4282
  %v4299 = vmul.f32 %v3955, %v4282
  %v4300 = vmul.f32 %v3956, %v4282
  %v4301 = vmul.f32 %v3957, %v4282
  %v4302 = vmul.f32 %v3958, %v4282
  %v4303 = vmul.f32 %v3959, %v4282
  %v4304 = vmul.f32 %v3960, %v4282
  %v4305 = vmul.f32 %v3961, %v4282
  %v4306 = vmul.f32 %v3962, %v4282
  %v4307 = vmul.f32 %v3963, %v4282
  %v4308 = vmul.f32 %v3964, %v4282
  %v4309 = vmul.f32 %v3965, %v4282
  %v4310 = vmul.f32 %v3966, %v4282
  %v4311 = vmul.f32 %v3967, %v4282
  %v4312 = vmul.f32 %v3968, %v4282
  %v4313 = vmul.f32 %v3969, %v4282
  %v4314 = vmul.f32 %v3970, %v4282
  %v4315 = vmul.f32 %v3971, %v4282
  %v4316 = vmul.f32 %v3972, %v4282
  %v4317 = vmul.f32 %v3973, %v4282
  %v4318 = vmul.f32 %v3974, %v4282
  %v4319 = vmul.f32 %v3975, %v4282
  %v4320 = vmul.f32 %v3976, %v4282
  %v4321 = vmul.f32 %v3977, %v4282
  %v4322 = vmul.f32 %v3978, %v4282
  %v4323 = vmul.f32 %v3979, %v4282
  %v4324 = vmul.f32 %v3980, %v4282
  %v4325 = vmul.f32 %v3981, %v4282
  %v4326 = vmul.f32 %v3982, %v4282
  %v4327 = vmul.f32 %v3983, %v4282
  %v4328 = vmul.f32 %v3984, %v4282
  %v4329 = vmul.f32 %v3985, %v4282
  %v4330 = vmul.f32 %v3986, %v4282
  %v4331 = vmul.f32 %v3987, %v4282
  %v4332 = vmul.f32 %v3988, %v4282
  %v4333 = vmul.f32 %v3989, %v4282
  %v4334 = vmul.f32 %v3990, %v4282
  %v4335 = vmul.f32 %v3991, %v4282
  %v4336 = vmul.f32 %v3992, %v4282
  %v4337 = vmul.f32 %v3993, %v4282
  %v4338 = vmul.f32 %v3994, %v4282
  %v4339 = vmul.f32 %v3995, %v4282
  %v4340 = vmul.f32 %v3996, %v4282
  %v4341 = vmul.f32 %v3997, %v4282
  %v4342 = vmul.f32 %v3998, %v4282
  %v4343 = vmul.f32 %v3999, %v4282
  %v4344 = vmul.f32 %v4000, %v4282
  %v4345 = vmul.f32 %v4001, %v4282
  %v4346 = vmul.f32 %v4002, %v4282
  %v4347 = vmul.f32 %v4003, %v4282
  %v4348 = vmul.f32 %v4076, %v4277
  %v4349 = vsub.f32 %v4005, %v4348
  %v4351 = vlaneseq
  %v4352 = vshrl.u32 %v4351, 7
  %v4353 = vsub.s32 0, %v4352
  %v4354 = vrot.slane %v4349, %v4353
  %v4356 = vadd.f32 %v4284, %v4354
  %v4357 = vadd.f32 %v4285, %v4354
  %v4358 = vadd.f32 %v4286, %v4354
  %v4359 = vadd.f32 %v4287, %v4354
  %v4360 = vadd.f32 %v4288, %v4354
  %v4361 = vadd.f32 %v4289, %v4354
  %v4362 = vadd.f32 %v4290, %v4354
  %v4363 = vadd.f32 %v4291, %v4354
  %v4364 = vadd.f32 %v4292, %v4354
  %v4365 = vadd.f32 %v4293, %v4354
  %v4366 = vadd.f32 %v4294, %v4354
  %v4367 = vadd.f32 %v4295, %v4354
  %v4368 = vadd.f32 %v4296, %v4354
  %v4369 = vadd.f32 %v4297, %v4354
  %v4370 = vadd.f32 %v4298, %v4354
  %v4371 = vadd.f32 %v4299, %v4354
  %v4372 = vadd.f32 %v4300, %v4354
  %v4373 = vadd.f32 %v4301, %v4354
  %v4374 = vadd.f32 %v4302, %v4354
  %v4375 = vadd.f32 %v4303, %v4354
  %v4376 = vadd.f32 %v4304, %v4354
  %v4377 = vadd.f32 %v4305, %v4354
  %v4378 = vadd.f32 %v4306, %v4354
  %v4379 = vadd.f32 %v4307, %v4354
  %v4380 = vadd.f32 %v4308, %v4354
  %v4381 = vadd.f32 %v4309, %v4354
  %v4382 = vadd.f32 %v4310, %v4354
  %v4383 = vadd.f32 %v4311, %v4354
  %v4384 = vadd.f32 %v4312, %v4354
  %v4385 = vadd.f32 %v4313, %v4354
  %v4386 = vadd.f32 %v4314, %v4354
  %v4387 = vadd.f32 %v4315, %v4354
  %v4388 = vadd.f32 %v4316, %v4354
  %v4389 = vadd.f32 %v4317, %v4354
  %v4390 = vadd.f32 %v4318, %v4354
  %v4391 = vadd.f32 %v4319, %v4354
  %v4392 = vadd.f32 %v4320, %v4354
  %v4393 = vadd.f32 %v4321, %v4354
  %v4394 = vadd.f32 %v4322, %v4354
  %v4395 = vadd.f32 %v4323, %v4354
  %v4396 = vadd.f32 %v4324, %v4354
  %v4397 = vadd.f32 %v4325, %v4354
  %v4398 = vadd.f32 %v4326, %v4354
  %v4399 = vadd.f32 %v4327, %v4354
  %v4400 = vadd.f32 %v4328, %v4354
  %v4401 = vadd.f32 %v4329, %v4354
  %v4402 = vadd.f32 %v4330, %v4354
  %v4403 = vadd.f32 %v4331, %v4354
  %v4404 = vadd.f32 %v4332, %v4354
  %v4405 = vadd.f32 %v4333, %v4354
  %v4406 = vadd.f32 %v4334, %v4354
  %v4407 = vadd.f32 %v4335, %v4354
  %v4408 = vadd.f32 %v4336, %v4354
  %v4409 = vadd.f32 %v4337, %v4354
  %v4410 = vadd.f32 %v4338, %v4354
  %v4411 = vadd.f32 %v4339, %v4354
  %v4412 = vadd.f32 %v4340, %v4354
  %v4413 = vadd.f32 %v4341, %v4354
  %v4414 = vadd.f32 %v4342, %v4354
  %v4415 = vadd.f32 %v4343, %v4354
  %v4416 = vadd.f32 %v4344, %v4354
  %v4417 = vadd.f32 %v4345, %v4354
  %v4418 = vadd.f32 %v4346, %v4354
  %v4419 = vadd.f32 %v4347, %v4354
  %vm4420 = vcmp.gt.f32.partialorder %v4356, 0.0
  %vm4421 = vcmp.gt.f32.partialorder %v4357, 0.0
  %vm4422 = vcmp.gt.f32.partialorder %v4358, 0.0
  %vm4423 = vcmp.gt.f32.partialorder %v4359, 0.0
  %vm4424 = vcmp.gt.f32.partialorder %v4360, 0.0
  %vm4425 = vcmp.gt.f32.partialorder %v4361, 0.0
  %vm4426 = vcmp.gt.f32.partialorder %v4362, 0.0
  %vm4427 = vcmp.gt.f32.partialorder %v4363, 0.0
  %vm4428 = vcmp.gt.f32.partialorder %v4364, 0.0
  %vm4429 = vcmp.gt.f32.partialorder %v4365, 0.0
  %vm4430 = vcmp.gt.f32.partialorder %v4366, 0.0
  %vm4431 = vcmp.gt.f32.partialorder %v4367, 0.0
  %vm4432 = vcmp.gt.f32.partialorder %v4368, 0.0
  %vm4433 = vcmp.gt.f32.partialorder %v4369, 0.0
  %vm4434 = vcmp.gt.f32.partialorder %v4370, 0.0
  %vm4435 = vcmp.gt.f32.partialorder %v4371, 0.0
  %vm4436 = vcmp.gt.f32.partialorder %v4372, 0.0
  %vm4437 = vcmp.gt.f32.partialorder %v4373, 0.0
  %vm4438 = vcmp.gt.f32.partialorder %v4374, 0.0
  %vm4439 = vcmp.gt.f32.partialorder %v4375, 0.0
  %vm4440 = vcmp.gt.f32.partialorder %v4376, 0.0
  %vm4441 = vcmp.gt.f32.partialorder %v4377, 0.0
  %vm4442 = vcmp.gt.f32.partialorder %v4378, 0.0
  %vm4443 = vcmp.gt.f32.partialorder %v4379, 0.0
  %vm4444 = vcmp.gt.f32.partialorder %v4380, 0.0
  %vm4445 = vcmp.gt.f32.partialorder %v4381, 0.0
  %vm4446 = vcmp.gt.f32.partialorder %v4382, 0.0
  %vm4447 = vcmp.gt.f32.partialorder %v4383, 0.0
  %vm4448 = vcmp.gt.f32.partialorder %v4384, 0.0
  %vm4449 = vcmp.gt.f32.partialorder %v4385, 0.0
  %vm4450 = vcmp.gt.f32.partialorder %v4386, 0.0
  %vm4451 = vcmp.gt.f32.partialorder %v4387, 0.0
  %vm4452 = vcmp.gt.f32.partialorder %v4388, 0.0
  %vm4453 = vcmp.gt.f32.partialorder %v4389, 0.0
  %vm4454 = vcmp.gt.f32.partialorder %v4390, 0.0
  %vm4455 = vcmp.gt.f32.partialorder %v4391, 0.0
  %vm4456 = vcmp.gt.f32.partialorder %v4392, 0.0
  %vm4457 = vcmp.gt.f32.partialorder %v4393, 0.0
  %vm4458 = vcmp.gt.f32.partialorder %v4394, 0.0
  %vm4459 = vcmp.gt.f32.partialorder %v4395, 0.0
  %vm4460 = vcmp.gt.f32.partialorder %v4396, 0.0
  %vm4461 = vcmp.gt.f32.partialorder %v4397, 0.0
  %vm4462 = vcmp.gt.f32.partialorder %v4398, 0.0
  %vm4463 = vcmp.gt.f32.partialorder %v4399, 0.0
  %vm4464 = vcmp.gt.f32.partialorder %v4400, 0.0
  %vm4465 = vcmp.gt.f32.partialorder %v4401, 0.0
  %vm4466 = vcmp.gt.f32.partialorder %v4402, 0.0
  %vm4467 = vcmp.gt.f32.partialorder %v4403, 0.0
  %vm4468 = vcmp.gt.f32.partialorder %v4404, 0.0
  %vm4469 = vcmp.gt.f32.partialorder %v4405, 0.0
  %vm4470 = vcmp.gt.f32.partialorder %v4406, 0.0
  %vm4471 = vcmp.gt.f32.partialorder %v4407, 0.0
  %vm4472 = vcmp.gt.f32.partialorder %v4408, 0.0
  %vm4473 = vcmp.gt.f32.partialorder %v4409, 0.0
  %vm4474 = vcmp.gt.f32.partialorder %v4410, 0.0
  %vm4475 = vcmp.gt.f32.partialorder %v4411, 0.0
  %vm4476 = vcmp.gt.f32.partialorder %v4412, 0.0
  %vm4477 = vcmp.gt.f32.partialorder %v4413, 0.0
  %vm4478 = vcmp.gt.f32.partialorder %v4414, 0.0
  %vm4479 = vcmp.gt.f32.partialorder %v4415, 0.0
  %vm4480 = vcmp.gt.f32.partialorder %v4416, 0.0
  %vm4481 = vcmp.gt.f32.partialorder %v4417, 0.0
  %vm4482 = vcmp.gt.f32.partialorder %v4418, 0.0
  %vm4483 = vcmp.gt.f32.partialorder %v4419, 0.0
  %v4484 = vmul.f32 %v4356, 0.2
  %v4485 = vmul.f32 %v4357, 0.2
  %v4486 = vmul.f32 %v4358, 0.2
  %v4487 = vmul.f32 %v4359, 0.2
  %v4488 = vmul.f32 %v4360, 0.2
  %v4489 = vmul.f32 %v4361, 0.2
  %v4490 = vmul.f32 %v4362, 0.2
  %v4491 = vmul.f32 %v4363, 0.2
  %v4492 = vmul.f32 %v4364, 0.2
  %v4493 = vmul.f32 %v4365, 0.2
  %v4494 = vmul.f32 %v4366, 0.2
  %v4495 = vmul.f32 %v4367, 0.2
  %v4496 = vmul.f32 %v4368, 0.2
  %v4497 = vmul.f32 %v4369, 0.2
  %v4498 = vmul.f32 %v4370, 0.2
  %v4499 = vmul.f32 %v4371, 0.2
  %v4500 = vmul.f32 %v4372, 0.2
  %v4501 = vmul.f32 %v4373, 0.2
  %v4502 = vmul.f32 %v4374, 0.2
  %v4503 = vmul.f32 %v4375, 0.2
  %v4504 = vmul.f32 %v4376, 0.2
  %v4505 = vmul.f32 %v4377, 0.2
  %v4506 = vmul.f32 %v4378, 0.2
  %v4507 = vmul.f32 %v4379, 0.2
  %v4508 = vmul.f32 %v4380, 0.2
  %v4509 = vmul.f32 %v4381, 0.2
  %v4510 = vmul.f32 %v4382, 0.2
  %v4511 = vmul.f32 %v4383, 0.2
  %v4512 = vmul.f32 %v4384, 0.2
  %v4513 = vmul.f32 %v4385, 0.2
  %v4514 = vmul.f32 %v4386, 0.2
  %v4515 = vmul.f32 %v4387, 0.2
  %v4516 = vmul.f32 %v4388, 0.2
  %v4517 = vmul.f32 %v4389, 0.2
  %v4518 = vmul.f32 %v4390, 0.2
  %v4519 = vmul.f32 %v4391, 0.2
  %v4520 = vmul.f32 %v4392, 0.2
  %v4521 = vmul.f32 %v4393, 0.2
  %v4522 = vmul.f32 %v4394, 0.2
  %v4523 = vmul.f32 %v4395, 0.2
  %v4524 = vmul.f32 %v4396, 0.2
  %v4525 = vmul.f32 %v4397, 0.2
  %v4526 = vmul.f32 %v4398, 0.2
  %v4527 = vmul.f32 %v4399, 0.2
  %v4528 = vmul.f32 %v4400, 0.2
  %v4529 = vmul.f32 %v4401, 0.2
  %v4530 = vmul.f32 %v4402, 0.2
  %v4531 = vmul.f32 %v4403, 0.2
  %v4532 = vmul.f32 %v4404, 0.2
  %v4533 = vmul.f32 %v4405, 0.2
  %v4534 = vmul.f32 %v4406, 0.2
  %v4535 = vmul.f32 %v4407, 0.2
  %v4536 = vmul.f32 %v4408, 0.2
  %v4537 = vmul.f32 %v4409, 0.2
  %v4538 = vmul.f32 %v4410, 0.2
  %v4539 = vmul.f32 %v4411, 0.2
  %v4540 = vmul.f32 %v4412, 0.2
  %v4541 = vmul.f32 %v4413, 0.2
  %v4542 = vmul.f32 %v4414, 0.2
  %v4543 = vmul.f32 %v4415, 0.2
  %v4544 = vmul.f32 %v4416, 0.2
  %v4545 = vmul.f32 %v4417, 0.2
  %v4546 = vmul.f32 %v4418, 0.2
  %v4547 = vmul.f32 %v4419, 0.2
  %v4548 = vsel %vm4420, %v4356, %v4484
  %v4549 = vsel %vm4421, %v4357, %v4485
  %v4550 = vsel %vm4422, %v4358, %v4486
  %v4551 = vsel %vm4423, %v4359, %v4487
  %v4552 = vsel %vm4424, %v4360, %v4488
  %v4553 = vsel %vm4425, %v4361, %v4489
  %v4554 = vsel %vm4426, %v4362, %v4490
  %v4555 = vsel %vm4427, %v4363, %v4491
  %v4556 = vsel %vm4428, %v4364, %v4492
  %v4557 = vsel %vm4429, %v4365, %v4493
  %v4558 = vsel %vm4430, %v4366, %v4494
  %v4559 = vsel %vm4431, %v4367, %v4495
  %v4560 = vsel %vm4432, %v4368, %v4496
  %v4561 = vsel %vm4433, %v4369, %v4497
  %v4562 = vsel %vm4434, %v4370, %v4498
  %v4563 = vsel %vm4435, %v4371, %v4499
  %v4564 = vsel %vm4436, %v4372, %v4500
  %v4565 = vsel %vm4437, %v4373, %v4501
  %v4566 = vsel %vm4438, %v4374, %v4502
  %v4567 = vsel %vm4439, %v4375, %v4503
  %v4568 = vsel %vm4440, %v4376, %v4504
  %v4569 = vsel %vm4441, %v4377, %v4505
  %v4570 = vsel %vm4442, %v4378, %v4506
  %v4571 = vsel %vm4443, %v4379, %v4507
  %v4572 = vsel %vm4444, %v4380, %v4508
  %v4573 = vsel %vm4445, %v4381, %v4509
  %v4574 = vsel %vm4446, %v4382, %v4510
  %v4575 = vsel %vm4447, %v4383, %v4511
  %v4576 = vsel %vm4448, %v4384, %v4512
  %v4577 = vsel %vm4449, %v4385, %v4513
  %v4578 = vsel %vm4450, %v4386, %v4514
  %v4579 = vsel %vm4451, %v4387, %v4515
  %v4580 = vsel %vm4452, %v4388, %v4516
  %v4581 = vsel %vm4453, %v4389, %v4517
  %v4582 = vsel %vm4454, %v4390, %v4518
  %v4583 = vsel %vm4455, %v4391, %v4519
  %v4584 = vsel %vm4456, %v4392, %v4520
  %v4585 = vsel %vm4457, %v4393, %v4521
  %v4586 = vsel %vm4458, %v4394, %v4522
  %v4587 = vsel %vm4459, %v4395, %v4523
  %v4588 = vsel %vm4460, %v4396, %v4524
  %v4589 = vsel %vm4461, %v4397, %v4525
  %v4590 = vsel %vm4462, %v4398, %v4526
  %v4591 = vsel %vm4463, %v4399, %v4527
  %v4592 = vsel %vm4464, %v4400, %v4528
  %v4593 = vsel %vm4465, %v4401, %v4529
  %v4594 = vsel %vm4466, %v4402, %v4530
  %v4595 = vsel %vm4467, %v4403, %v4531
  %v4596 = vsel %vm4468, %v4404, %v4532
  %v4597 = vsel %vm4469, %v4405, %v4533
  %v4598 = vsel %vm4470, %v4406, %v4534
  %v4599 = vsel %vm4471, %v4407, %v4535
  %v4600 = vsel %vm4472, %v4408, %v4536
  %v4601 = vsel %vm4473, %v4409, %v4537
  %v4602 = vsel %vm4474, %v4410, %v4538
  %v4603 = vsel %vm4475, %v4411, %v4539
  %v4604 = vsel %vm4476, %v4412, %v4540
  %v4605 = vsel %vm4477, %v4413, %v4541
  %v4606 = vsel %vm4478, %v4414, %v4542
  %v4607 = vsel %vm4479, %v4415, %v4543
  %v4608 = vsel %vm4480, %v4416, %v4544
  %v4609 = vsel %vm4481, %v4417, %v4545
  %v4610 = vsel %vm4482, %v4418, %v4546
  %v4611 = vsel %vm4483, %v4419, %v4547
  %4612 = vst [vmem:[%s8] sm:$0xff] %v4548
  %4613 = vst [vmem:[%s8 + $0x8] sm:$0xff] %v4549
  %4614 = vst [vmem:[%s8 + $0x10] sm:$0xff] %v4550
  %4615 = vst [vmem:[%s8 + $0x18] sm:$0xff] %v4551
  %4616 = vst [vmem:[%s8 + $0x20] sm:$0xff] %v4552
  %4617 = vst [vmem:[%s8 + $0x28] sm:$0xff] %v4553
  %4618 = vst [vmem:[%s8 + $0x30] sm:$0xff] %v4554
  %4619 = vst [vmem:[%s8 + $0x38] sm:$0xff] %v4555
  %4620 = vst [vmem:[%s8 + $0x40] sm:$0xff] %v4556
  %4621 = vst [vmem:[%s8 + $0x48] sm:$0xff] %v4557
  %4622 = vst [vmem:[%s8 + $0x50] sm:$0xff] %v4558
  %4623 = vst [vmem:[%s8 + $0x58] sm:$0xff] %v4559
  %4624 = vst [vmem:[%s8 + $0x60] sm:$0xff] %v4560
  %4625 = vst [vmem:[%s8 + $0x68] sm:$0xff] %v4561
  %4626 = vst [vmem:[%s8 + $0x70] sm:$0xff] %v4562
  %4627 = vst [vmem:[%s8 + $0x78] sm:$0xff] %v4563
  %4628 = vst [vmem:[%s8 + $0x80] sm:$0xff] %v4564
  %4629 = vst [vmem:[%s8 + $0x88] sm:$0xff] %v4565
  %4630 = vst [vmem:[%s8 + $0x90] sm:$0xff] %v4566
  %4631 = vst [vmem:[%s8 + $0x98] sm:$0xff] %v4567
  %4632 = vst [vmem:[%s8 + $0xa0] sm:$0xff] %v4568
  %4633 = vst [vmem:[%s8 + $0xa8] sm:$0xff] %v4569
  %4634 = vst [vmem:[%s8 + $0xb0] sm:$0xff] %v4570
  %4635 = vst [vmem:[%s8 + $0xb8] sm:$0xff] %v4571
  %4636 = vst [vmem:[%s8 + $0xc0] sm:$0xff] %v4572
  %4637 = vst [vmem:[%s8 + $0xc8] sm:$0xff] %v4573
  %4638 = vst [vmem:[%s8 + $0xd0] sm:$0xff] %v4574
  %4639 = vst [vmem:[%s8 + $0xd8] sm:$0xff] %v4575
  %4640 = vst [vmem:[%s8 + $0xe0] sm:$0xff] %v4576
  %4641 = vst [vmem:[%s8 + $0xe8] sm:$0xff] %v4577
  %4642 = vst [vmem:[%s8 + $0xf0] sm:$0xff] %v4578
  %4643 = vst [vmem:[%s8 + $0xf8] sm:$0xff] %v4579
  %4644 = vst [vmem:[%s8 + $0x100] sm:$0xff] %v4580
  %4645 = vst [vmem:[%s8 + $0x108] sm:$0xff] %v4581
  %4646 = vst [vmem:[%s8 + $0x110] sm:$0xff] %v4582
  %4647 = vst [vmem:[%s8 + $0x118] sm:$0xff] %v4583
  %4648 = vst [vmem:[%s8 + $0x120] sm:$0xff] %v4584
  %4649 = vst [vmem:[%s8 + $0x128] sm:$0xff] %v4585
  %4650 = vst [vmem:[%s8 + $0x130] sm:$0xff] %v4586
  %4651 = vst [vmem:[%s8 + $0x138] sm:$0xff] %v4587
  %4652 = vst [vmem:[%s8 + $0x140] sm:$0xff] %v4588
  %4653 = vst [vmem:[%s8 + $0x148] sm:$0xff] %v4589
  %4654 = vst [vmem:[%s8 + $0x150] sm:$0xff] %v4590
  %4655 = vst [vmem:[%s8 + $0x158] sm:$0xff] %v4591
  %4656 = vst [vmem:[%s8 + $0x160] sm:$0xff] %v4592
  %4657 = vst [vmem:[%s8 + $0x168] sm:$0xff] %v4593
  %4658 = vst [vmem:[%s8 + $0x170] sm:$0xff] %v4594
  %4659 = vst [vmem:[%s8 + $0x178] sm:$0xff] %v4595
  %4660 = vst [vmem:[%s8 + $0x180] sm:$0xff] %v4596
  %4661 = vst [vmem:[%s8 + $0x188] sm:$0xff] %v4597
  %4662 = vst [vmem:[%s8 + $0x190] sm:$0xff] %v4598
  %4663 = vst [vmem:[%s8 + $0x198] sm:$0xff] %v4599
  %4664 = vst [vmem:[%s8 + $0x1a0] sm:$0xff] %v4600
  %4665 = vst [vmem:[%s8 + $0x1a8] sm:$0xff] %v4601
  %4666 = vst [vmem:[%s8 + $0x1b0] sm:$0xff] %v4602
  %4667 = vst [vmem:[%s8 + $0x1b8] sm:$0xff] %v4603
  %4668 = vst [vmem:[%s8 + $0x1c0] sm:$0xff] %v4604
  %4669 = vst [vmem:[%s8 + $0x1c8] sm:$0xff] %v4605
  %4670 = vst [vmem:[%s8 + $0x1d0] sm:$0xff] %v4606
  %4671 = vst [vmem:[%s8 + $0x1d8] sm:$0xff] %v4607
  %4672 = vst [vmem:[%s8 + $0x1e0] sm:$0xff] %v4608
  %4673 = vst [vmem:[%s8 + $0x1e8] sm:$0xff] %v4609
  %4674 = vst [vmem:[%s8 + $0x1f0] sm:$0xff] %v4610
  %4675 = vst [vmem:[%s8 + $0x1f8] sm:$0xff] %v4611
  // Predicated region
  $region34: #{generator_forward.4} parent=0 // pred_check
    _
  $region35: #{generator_forward.4} parent=0 // pred_check_branch
    %4677 = sbr.rel (0) target = $region37
  $region36: #{generator_forward.4} parent=0 // pred_region
    _
  $region37: #{generator_forward.4} parent=0 // pred_fallthru
    _
  // Predicated region
  $region38: #{generator_forward.4} parent=0 // pred_check
    _
  $region39: #{generator_forward.4} parent=0 // pred_check_branch
    %4679 = sbr.rel (0) target = $region41
  $region40: #{generator_forward.4} parent=0 // pred_region
    _
  $region41: #{generator_forward.4} parent=0 // pred_fallthru
    _

</llo_original>
